<compile_context>
chip_gen: v5e
topology: v5e:2x2
jax: 0.10.0
libtpu: 0.0.40
codegen_flags: <defaults>
</compile_context>

<pallas_src>
import math

import jax
import jax.numpy as jnp
import numpy as np
from jax.experimental import pallas as pl
from jax.experimental.pallas import tpu as pltpu

HIDDEN = 32            # hidden_channels
NUM_RBF = 16           # num_rbf
MAX_Z = 128            # max_z
CUTOFF_UPPER = 5.0     # cutoff_upper (cutoff_lower = 0)
LN_EPS = 1e-5
EDGE_TILE = 256        # edges per grid step
NODE_TILE = 256        # node tile for the epilogue kernel
NUM_CORE_SPLITS = 2    # leading "parallel" axis -> both v7x TensorCores (cheap on 1-TC parts)


def _silu(x):
    return x * jax.nn.sigmoid(x)


def _selector_constants():
    """Constant 0/±1 matrices that place 32-wide blocks into lane-dense slabs."""
    H = HIDDEN
    W = 19 * H
    OFF_S = 9 * H
    OFF_I = 18 * H
    h = np.arange(H)

    rep3 = np.zeros((H, 3 * H), np.float32)          # Zij -> [Zij|Zij|Zij]
    for r in range(3):
        rep3[h, r * H + h] = 1.0

    expw = np.zeros((3 * H, W), np.float32)          # [W2Z|W3Z|W1Z] -> 19H slab
    for k in range(9):
        expw[h, k * H + h] = 1.0                     # W2Z -> A_k block
        expw[H + h, OFF_S + k * H + h] = 1.0         # W3Z -> S_k block
    expw[2 * H + h, OFF_I + h] = 1.0                 # W1Z -> I block

    # gl/gm/gc folded into one (5, W) constant: rows = [v0, v1, v2, m, 1]
    gl5 = np.zeros((5, W), np.float32)
    gl5[2, 1 * H + h] = -1.0                         # skew part
    gl5[1, 2 * H + h] = 1.0
    gl5[2, 3 * H + h] = 1.0
    gl5[0, 5 * H + h] = -1.0
    gl5[1, 6 * H + h] = -1.0
    gl5[0, 7 * H + h] = 1.0
    for q in (0, 4, 8):
        gl5[3, OFF_S + q * H + h] = -1.0             # -m on sym diagonal blocks
    gl5[4, OFF_I + h] = 1.0                          # +1 on identity block

    ma = np.zeros((3, W), np.float32)                # quadratic (sym) part: v_i * v_j
    mb = np.zeros((3, W), np.float32)
    for q in range(9):
        ma[q // 3, OFF_S + q * H + h] = 1.0
        mb[q % 3, OFF_S + q * H + h] = 1.0

    tn = np.zeros((W, 9 * H), np.float32)            # Scat -> (I + A + S) per component
    for k in range(9):
        tn[k * H + h, k * H + h] = 1.0
        tn[OFF_S + k * H + h, k * H + h] = 1.0
    for k in (0, 4, 8):
        tn[OFF_I + h, k * H + h] = 1.0

    rep9 = np.zeros((H, 9 * H), np.float32)          # gate -> 9 blocks
    repd = np.zeros((H, 9 * H), np.float32)          # gate -> diagonal blocks only
    for k in range(9):
        rep9[h, k * H + h] = 1.0
    for k in (0, 4, 8):
        repd[h, k * H + h] = 1.0
    sum9 = rep9.T.copy()                             # sum over the 9 components

    return dict(
        # hot-path constants in bf16 (exactly representable: 0/±1)
        rep3=jnp.asarray(rep3, jnp.bfloat16),
        expw=jnp.asarray(expw, jnp.bfloat16),
        gl5=jnp.asarray(gl5), ma=jnp.asarray(ma), mb=jnp.asarray(mb),
        # epilogue constants stay f32 (cold path, precision margin)
        tn=jnp.asarray(tn), sum9=jnp.asarray(sum9),
        rep9=jnp.asarray(rep9), repd=jnp.asarray(repd))


# --------------------------------------------------------------------------
# Kernel 1: edge loop -> per-core partial (N, 19H) accumulators
# --------------------------------------------------------------------------
def edge_accumulate_kernel(
    # edge-tiled data (packed)
    edge_i_ref, edge_f_ref, src_r_ref,
    # node data + fused parameters (grid-invariant)
    z_ref, embab_ref, emb2b_ref, dpw_ref, dpb_ref,
    rep3_ref, expw_ref, gl5_ref, ma_ref, mb_ref,
    # output (partial accumulator, revisited across the edge axis) + scratch
    acc_ref, znode_ref,
):
    f32 = jnp.float32
    bf16 = jnp.bfloat16
    H = HIDDEN
    R = NUM_RBF
    TE = edge_i_ref.shape[0]
    Npad = z_ref.shape[0]
    e = pl.program_id(1)                                   # edge-tile step within this core

    @pl.when(e == 0)
    def _init():
        acc_ref[...] = jnp.zeros_like(acc_ref)
        # atom embedding with emb2 folded in (one bf16 one-hot matmul)
        z_oh = (jax.lax.broadcasted_iota(jnp.int32, (Npad, MAX_Z), 1)
                == z_ref[...]).astype(bf16)
        znode_ref[...] = jnp.dot(z_oh, embab_ref[...].astype(bf16),
                                 preferred_element_type=f32)

    # ---- unpack the packed edge features ----
    ew = edge_f_ref[:, 0:1]                                # (TE, 1)
    v = edge_f_ref[:, 1:4]                                 # (TE, 3)
    ea = edge_f_ref[:, 4:4 + R]                            # (TE, R)

    # ---- cosine cutoff + fused radial projections [W2 | W3 | W1] ----
    C = 0.5 * (jnp.cos(ew * (math.pi / CUTOFF_UPPER)) + 1.0)
    C = C * (ew < CUTOFF_UPPER).astype(f32)                # padded edges -> 0
    Wall = (jnp.dot(ea, dpw_ref[...], preferred_element_type=f32)
            + dpb_ref[...]) * C                            # (TE, 3H)

    # ---- per-edge pair embedding Zij (gathers as bf16 one-hot matmuls) ----
    node_iota = jax.lax.broadcasted_iota(jnp.int32, (TE, Npad), 1)
    src_oh = (node_iota == edge_i_ref[:, 0:1]).astype(bf16)
    dst_oh = (node_iota == edge_i_ref[:, 1:2]).astype(bf16)
    znode = znode_ref[...]
    za = znode[:, :H].astype(bf16)
    zb = znode[:, H:].astype(bf16)
    Zij = (jnp.dot(src_oh, za, preferred_element_type=f32)
           + jnp.dot(dst_oh, zb, preferred_element_type=f32)
           + emb2b_ref[...])                               # (TE, H)

    # ---- lane-dense (TE, 19H) edge slab [W2Z*skew | W3Z*sym | W1Z] ----
    WallZ = Wall * jnp.dot(Zij.astype(bf16), rep3_ref[...],
                           preferred_element_type=f32)     # (TE, 3H)
    WZwide = jnp.dot(WallZ.astype(bf16), expw_ref[...],
                     preferred_element_type=f32)           # (TE, 19H)
    m = jnp.sum(v * v, axis=-1, keepdims=True) * (1.0 / 3.0)
    vm1 = jnp.concatenate([v, m, jnp.ones_like(m)], axis=-1)   # (TE, 5)
    G = (jnp.dot(vm1, gl5_ref[...], preferred_element_type=f32)
         + jnp.dot(v, ma_ref[...], preferred_element_type=f32)
           * jnp.dot(v, mb_ref[...], preferred_element_type=f32))  # (TE, 19H)
    slab = (WZwide * G).astype(bf16)

    # ---- scatter-add over edges (by source node): one bf16 MXU matmul ----
    scat_oh = (jax.lax.broadcasted_iota(jnp.int32, (Npad, TE), 0)
               == src_r_ref[...]).astype(bf16)             # (Npad, TE)
    acc_ref[...] += jnp.dot(scat_oh, slab, preferred_element_type=f32)[None, :, :]


# --------------------------------------------------------------------------
# Kernel 2: node-tiled epilogue (tensor_norm / LayerNorm / MLP / tensor linears)
# --------------------------------------------------------------------------
def node_epilogue_kernel(
    acc_ref,
    ls0w_ref, ls0b_ref, ls1w_ref, ls1b_ref, lng_ref, lnb_ref,
    wa_ref, ws_ref, wi_ref, tn_ref, sum9_ref, rep9_ref, repd_ref,
    out_ref,
):
    f32 = jnp.float32
    H = HIDDEN
    Scat = jnp.sum(acc_ref[...], axis=0)                   # sum the per-core partials

    # tensor_norm(I + A + S) -> LayerNorm over H
    tot = jnp.dot(Scat, tn_ref[...], preferred_element_type=f32)          # (TN, 9H)
    tot_sq = jnp.dot(tot * tot, sum9_ref[...], preferred_element_type=f32)  # (TN, H)
    mu = jnp.mean(tot_sq, axis=-1, keepdims=True)
    var = jnp.mean((tot_sq - mu) ** 2, axis=-1, keepdims=True)
    normed = (tot_sq - mu) * jax.lax.rsqrt(var + LN_EPS) * lng_ref[...] + lnb_ref[...]

    # scalar MLP (SiLU); ls1 columns pre-permuted so h2 = [fI | fA | fS]
    h1 = _silu(jnp.dot(normed, ls0w_ref[...], preferred_element_type=f32) + ls0b_ref[...])
    h2 = _silu(jnp.dot(h1, ls1w_ref[...], preferred_element_type=f32) + ls1b_ref[...])
    fI = h2[:, 0:H]
    fA = h2[:, H:2 * H]
    fS = h2[:, 2 * H:3 * H]

    # per-component hidden linears as block-diagonal (lane-dense) matmuls
    Alin = jnp.dot(Scat, wa_ref[...], preferred_element_type=f32)  # (TN, 9H)
    Slin = jnp.dot(Scat, ws_ref[...], preferred_element_type=f32)  # (TN, 9H)
    Ilin = jnp.dot(Scat, wi_ref[...], preferred_element_type=f32)  # (TN, H)

    X = (jnp.dot(fA, rep9_ref[...], preferred_element_type=f32) * Alin
         + jnp.dot(fS, rep9_ref[...], preferred_element_type=f32) * Slin
         + jnp.dot(fI * Ilin, repd_ref[...], preferred_element_type=f32))
    out_ref[...] = X                                       # (TN, 9H), k-major


def tensor_embedding(params, z, edge_index, edge_weight, edge_vec_norm, edge_attr):
    H, R = HIDDEN, NUM_RBF
    f32 = jnp.float32
    N = int(z.shape[0])
    E = int(edge_weight.shape[0])

    TE = EDGE_TILE
    NC = NUM_CORE_SPLITS
    chunk = NC * TE
    E_pad = max(chunk, ((E + chunk - 1) // chunk) * chunk)
    TPC = E_pad // (NC * TE)                               # edge tiles per core

    N_pad = ((N + 7) // 8) * 8
    if N_pad > NODE_TILE:
        N_pad = ((N_pad + NODE_TILE - 1) // NODE_TILE) * NODE_TILE
        TN = NODE_TILE
    else:
        TN = N_pad

    # ---- pad & pack edge / node data; padded edges are killed by the cutoff ----
    src = edge_index[0].astype(jnp.int32)
    dst = edge_index[1].astype(jnp.int32)
    edge_i = jnp.zeros((E_pad, 2), jnp.int32).at[:E, 0].set(src).at[:E, 1].set(dst)
    edge_f = jnp.zeros((E_pad, 4 + R), f32)
    edge_f = edge_f.at[:, 0].set(2.0 * CUTOFF_UPPER)       # padded ew -> cutoff = 0
    edge_f = edge_f.at[:E, 0].set(edge_weight.astype(f32))
    edge_f = edge_f.at[:E, 1:4].set(edge_vec_norm.astype(f32))
    edge_f = edge_f.at[:E, 4:].set(edge_attr.astype(f32))
    src_r = jnp.zeros((1, E_pad), jnp.int32).at[0, :E].set(src)
    z_p = jnp.zeros((N_pad, 1), jnp.int32).at[:N, 0].set(z.astype(jnp.int32))

    # ---- one-time host-side parameter fusion / reordering ----
    dp_w = jnp.concatenate([params["dp2_w"], params["dp3_w"], params["dp1_w"]], axis=1)
    dp_b = jnp.concatenate([params["dp2_b"], params["dp3_b"], params["dp1_b"]], axis=1)
    emb2_w = params["emb2_w"]
    embab = jnp.concatenate([params["emb_w"] @ emb2_w[:H, :],
                             params["emb_w"] @ emb2_w[H:, :]], axis=1)     # (MAX_Z, 2H)
    perm = np.arange(3 * H).reshape(H, 3).T.reshape(-1)    # h2 -> [fI | fA | fS]
    ls1_w = params["ls1_w"][:, perm]
    ls1_b = params["ls1_b"][:, perm]
    eye9 = jnp.eye(9, dtype=f32)
    W_A = jnp.zeros((19 * H, 9 * H), f32).at[0:9 * H, :].set(jnp.kron(eye9, params["lt1_w"]))
    W_S = jnp.zeros((19 * H, 9 * H), f32).at[9 * H:18 * H, :].set(jnp.kron(eye9, params["lt2_w"]))
    W_I = jnp.zeros((19 * H, H), f32).at[18 * H:19 * H, :].set(params["lt0_w"])
    c = _selector_constants()

    # VMEM limit: 3/4 of this chip's physical VMEM (≈96 MiB v5e/v6e, ≈48 MiB v7x)
    try:
        cap = int(pltpu.get_tpu_info().vmem_capacity_bytes)
        vmem_limit = max(32 * 1024 * 1024, (3 * cap) // 4)
    except Exception:
        vmem_limit = 32 * 1024 * 1024

    # ---------------- edge kernel ----------------
    edge_invariant = (z_p, embab, params["emb2_b"], dp_w, dp_b,
                      c["rep3"], c["expw"], c["gl5"], c["ma"], c["mb"])

    edge_in_specs = (
        [pl.BlockSpec((TE, 2), lambda cc, ee: (cc * TPC + ee, 0)),
         pl.BlockSpec((TE, 4 + R), lambda cc, ee: (cc * TPC + ee, 0)),
         pl.BlockSpec((1, TE), lambda cc, ee: (0, cc * TPC + ee))]
        # grid-invariant params; finalize-only weights live in the epilogue kernel
        # (NOTE: pipeline_mode=pl.Buffered(1) would also drop their double buffer,
        #  left out for compile-compatibility — their footprint is now only ~0.2 MB)
        + [pl.BlockSpec(a.shape, lambda cc, ee: (0, 0)) for a in edge_invariant])

    # TODO(synk): for very large graphs, sort edges by src host-side and pass
    # per-tile node-window offsets via scalar prefetch so the gather/scatter
    # one-hots are (window, TE) instead of (N_pad, TE); also tile the node
    # dimension of the resident accumulator.
    acc = pl.pallas_call(
        edge_accumulate_kernel,
        out_shape=jax.ShapeDtypeStruct((NC, N_pad, 19 * H), f32),
        grid_spec=pltpu.PrefetchScalarGridSpec(
            num_scalar_prefetch=0,
            grid=(NC, TPC),
            in_specs=edge_in_specs,
            out_specs=pl.BlockSpec((1, N_pad, 19 * H), lambda cc, ee: (cc, 0, 0)),
            scratch_shapes=[pltpu.VMEM((N_pad, 2 * H), f32)]),
        compiler_params=pltpu.CompilerParams(
            dimension_semantics=("parallel", "arbitrary"),
            vmem_limit_bytes=vmem_limit),
    )(edge_i, edge_f, src_r, *edge_invariant)

    # ---------------- node-tiled epilogue kernel ----------------
    epi_params = (params["ls0_w"], params["ls0_b"], ls1_w, ls1_b,
                  params["ln_g"], params["ln_b"],
                  W_A, W_S, W_I, c["tn"], c["sum9"], c["rep9"], c["repd"])

    out = pl.pallas_call(
        node_epilogue_kernel,
        out_shape=jax.ShapeDtypeStruct((N_pad, 9 * H), f32),
        grid_spec=pltpu.PrefetchScalarGridSpec(
            num_scalar_prefetch=0,
            grid=(N_pad // TN,),
            in_specs=([pl.BlockSpec((NC, TN, 19 * H), lambda i: (0, i, 0))]
                      + [pl.BlockSpec(a.shape, lambda i: (0, 0)) for a in epi_params]),
            out_specs=pl.BlockSpec((TN, 9 * H), lambda i: (i, 0))),
        compiler_params=pltpu.CompilerParams(
            dimension_semantics=("parallel",),
            vmem_limit_bytes=vmem_limit),
    )(acc, *epi_params)

    # (N, 9H) k-major slab -> (N, H, 3, 3) PyTorch layout
    return jnp.transpose(out[:N].reshape(N, 3, 3, H), (0, 3, 1, 2))


def init_params(key):
    H, R = HIDDEN, NUM_RBF
    keys = jax.random.split(key, 16)

    def lin_w(k, fi, fo):
        b = 1.0 / math.sqrt(fi)
        return jax.random.uniform(k, (fi, fo), jnp.float32, -b, b)

    def lin_b(k, fi, fo):
        b = 1.0 / math.sqrt(fi)
        return jax.random.uniform(k, (1, fo), jnp.float32, -b, b)

    p = {}
    p["dp1_w"], p["dp1_b"] = lin_w(keys[0], R, H), lin_b(keys[1], R, H)
    p["dp2_w"], p["dp2_b"] = lin_w(keys[2], R, H), lin_b(keys[3], R, H)
    p["dp3_w"], p["dp3_b"] = lin_w(keys[4], R, H), lin_b(keys[5], R, H)
    p["emb_w"] = jax.random.normal(keys[6], (MAX_Z, H), jnp.float32)
    p["emb2_w"], p["emb2_b"] = lin_w(keys[7], 2 * H, H), lin_b(keys[8], 2 * H, H)
    p["lt0_w"] = lin_w(keys[9], H, H)     # linears_tensor (bias=False), stored (in, out)
    p["lt1_w"] = lin_w(keys[10], H, H)
    p["lt2_w"] = lin_w(keys[11], H, H)
    p["ls0_w"], p["ls0_b"] = lin_w(keys[12], H, 2 * H), lin_b(keys[13], H, 2 * H)
    p["ls1_w"], p["ls1_b"] = lin_w(keys[14], 2 * H, 3 * H), lin_b(keys[15], 2 * H, 3 * H)
    p["ln_g"] = jnp.ones((1, H), jnp.float32)
    p["ln_b"] = jnp.zeros((1, H), jnp.float32)
    return p


def reference(params, z, edge_index, edge_weight, edge_vec, edge_attr):
    """Pure-JAX transliteration of the PyTorch forward (for a correctness check)."""
    src, dst = edge_index[0], edge_index[1]
    N = z.shape[0]
    H = HIDDEN
    C = 0.5 * (jnp.cos(edge_weight * math.pi / CUTOFF_UPPER) + 1.0) * (edge_weight < CUTOFF_UPPER)
    W1 = (edge_attr @ params["dp1_w"] + params["dp1_b"]) * C[:, None]
    W2 = (edge_attr @ params["dp2_w"] + params["dp2_b"]) * C[:, None]
    W3 = (edge_attr @ params["dp3_w"] + params["dp3_b"]) * C[:, None]
    eye = jnp.eye(3, dtype=jnp.float32)
    v = edge_vec
    zero = jnp.zeros_like(v[:, 0])
    skew = jnp.stack([zero, -v[:, 2], v[:, 1],
                      v[:, 2], zero, -v[:, 0],
                      -v[:, 1], v[:, 0], zero], axis=1).reshape(-1, 3, 3)
    outer = v[:, :, None] * v[:, None, :]
    m = jnp.trace(outer, axis1=-2, axis2=-1) / 3.0
    sym = outer - m[:, None, None] * eye
    Iij = W1[:, :, None, None] * eye[None, None]
    Aij = W2[:, :, None, None] * skew[:, None]
    Sij = W3[:, :, None, None] * sym[:, None]
    Z = params["emb_w"][z]
    Zcat = jnp.concatenate([Z[src], Z[dst]], axis=-1)
    Zij = (Zcat @ params["emb2_w"] + params["emb2_b"])[:, :, None, None]
    I = jax.ops.segment_sum(Zij * Iij, src, num_segments=N)
    A = jax.ops.segment_sum(Zij * Aij, src, num_segments=N)
    S = jax.ops.segment_sum(Zij * Sij, src, num_segments=N)
    tn = ((I + A + S) ** 2).sum((-2, -1))
    mu = tn.mean(-1, keepdims=True)
    var = ((tn - mu) ** 2).mean(-1, keepdims=True)
    norm = (tn - mu) / jnp.sqrt(var + LN_EPS) * params["ln_g"] + params["ln_b"]
    I = jnp.einsum("nhij,ho->noij", I, params["lt0_w"])
    A = jnp.einsum("nhij,ho->noij", A, params["lt1_w"])
    S = jnp.einsum("nhij,ho->noij", S, params["lt2_w"])
    h = jax.nn.silu(norm @ params["ls0_w"] + params["ls0_b"])
    h = jax.nn.silu(h @ params["ls1_w"] + params["ls1_b"])
    h = h.reshape(N, H, 3)
    I = h[..., 0][..., None, None] * I
    A = h[..., 1][..., None, None] * A
    S = h[..., 2][..., None, None] * S
    return I + A + S


if __name__ == "__main__":
    key = jax.random.PRNGKey(0)
    kp, kz, ke, kw, kv, ka = jax.random.split(key, 6)
    N, E = 24, 600  # atoms, edges (E > 512 exercises multi-tile accumulation)

    params = init_params(kp)
    z = jax.random.randint(kz, (N,), 0, MAX_Z)
    edge_index = jax.random.randint(ke, (2, E), 0, N)
    edge_weight = jax.random.uniform(kw, (E,), jnp.float32, 0.5, CUTOFF_UPPER - 0.5)
    vec = jax.random.normal(kv, (E, 3), jnp.float32)
    edge_vec_norm = vec / jnp.linalg.norm(vec, axis=-1, keepdims=True)
    edge_attr = jax.random.normal(ka, (E, NUM_RBF), jnp.float32)

    out = tensor_embedding(params, z, edge_index, edge_weight, edge_vec_norm, edge_attr)
    out = jax.block_until_ready(out)

    ref = reference(params, z, edge_index, edge_weight, edge_vec_norm, edge_attr)
    # tolerance accounts for bf16 MXU operands on the gather/scatter/slab matmuls
    np.testing.assert_allclose(np.asarray(out), np.asarray(ref), rtol=5e-2, atol=5e-2)

    print("KERNEL_OK")
</pallas_src>

<mosaic_0001>
module attributes {stable_mosaic.version = 11 : i64} {
  func.func @edge_accumulate_kernel(%arg0: i32, %arg1: i32, %arg2: memref<256x2xi32, #tpu.memory_space<vmem>>, %arg3: memref<256x20xf32, #tpu.memory_space<vmem>>, %arg4: memref<1x256xi32, #tpu.memory_space<vmem>>, %arg5: memref<24x1xi32, #tpu.memory_space<vmem>>, %arg6: memref<128x64xf32, #tpu.memory_space<vmem>>, %arg7: memref<1x32xf32, #tpu.memory_space<vmem>>, %arg8: memref<16x96xf32, #tpu.memory_space<vmem>>, %arg9: memref<1x96xf32, #tpu.memory_space<vmem>>, %arg10: memref<32x96xbf16, #tpu.memory_space<vmem>>, %arg11: memref<96x608xbf16, #tpu.memory_space<vmem>>, %arg12: memref<5x608xf32, #tpu.memory_space<vmem>>, %arg13: memref<3x608xf32, #tpu.memory_space<vmem>>, %arg14: memref<3x608xf32, #tpu.memory_space<vmem>>, %arg15: memref<1x24x608xf32, #tpu.memory_space<vmem>>, %arg16: memref<24x64xf32, #tpu.memory_space<vmem>>) attributes {dimension_semantics = [#tpu.dimension_semantics<parallel>, #tpu.dimension_semantics<arbitrary>], iteration_bounds = array<i64: 2, 2>, scalar_prefetch = 0 : i64, scratch_operands = 1 : i64, tpu.core_type = #tpu.core_type<tc>, window_params = [{transform_indices = @transform_0, window_bounds = array<i64: 256, 2>}, {transform_indices = @transform_1, window_bounds = array<i64: 256, 20>}, {transform_indices = @transform_2, window_bounds = array<i64: 1, 256>}, {pipeline_mode = #tpu.pipeline_mode<synchronous>, transform_indices = @transform_3, window_bounds = array<i64: 24, 1>}, {pipeline_mode = #tpu.pipeline_mode<synchronous>, transform_indices = @transform_4, window_bounds = array<i64: 128, 64>}, {pipeline_mode = #tpu.pipeline_mode<synchronous>, transform_indices = @transform_5, window_bounds = array<i64: 1, 32>}, {pipeline_mode = #tpu.pipeline_mode<synchronous>, transform_indices = @transform_6, window_bounds = array<i64: 16, 96>}, {pipeline_mode = #tpu.pipeline_mode<synchronous>, transform_indices = @transform_7, window_bounds = array<i64: 1, 96>}, {pipeline_mode = #tpu.pipeline_mode<synchronous>, transform_indices = @transform_8, window_bounds = array<i64: 32, 96>}, {pipeline_mode = #tpu.pipeline_mode<synchronous>, transform_indices = @transform_9, window_bounds = array<i64: 96, 608>}, {pipeline_mode = #tpu.pipeline_mode<synchronous>, transform_indices = @transform_10, window_bounds = array<i64: 5, 608>}, {pipeline_mode = #tpu.pipeline_mode<synchronous>, transform_indices = @transform_11, window_bounds = array<i64: 3, 608>}, {pipeline_mode = #tpu.pipeline_mode<synchronous>, transform_indices = @transform_12, window_bounds = array<i64: 3, 608>}, {transform_indices = @transform_13, window_bounds = array<i64: 1, 24, 608>}]} {
    %c0_i32 = arith.constant 0 : i32
    %0 = arith.cmpi eq, %arg1, %c0_i32 : i32
    %1 = arith.extui %0 : i1 to i32
    %c0_i32_0 = arith.constant 0 : i32
    %2 = arith.cmpi ne, %1, %c0_i32_0 : i32
    scf.if %2 {
      %cst_49 = arith.constant 0.000000e+00 : f32
      %85 = vector.broadcast %cst_49 : f32 to vector<1x24x608xf32>
      %c0_50 = arith.constant 0 : index
      %c0_51 = arith.constant 0 : index
      %c0_52 = arith.constant 0 : index
      %86 = vector.load %arg15[%c0_50, %c0_51, %c0_52] : memref<1x24x608xf32, #tpu.memory_space<vmem>>, vector<1x24x608xf32>
      tpu.vector_store %arg15[%c0_50, %c0_51, %c0_52], %85 {strides = array<i32>} : memref<1x24x608xf32, #tpu.memory_space<vmem>>, vector<1x24x608xf32>,
      %87 = tpu.iota {dimensions = array<i32: 1>} : vector<24x128xi32>
      %c0_53 = arith.constant 0 : index
      %c0_54 = arith.constant 0 : index
      %88 = vector.load %arg5[%c0_53, %c0_54] : memref<24x1xi32, #tpu.memory_space<vmem>>, vector<24x1xi32>
      %89 = vector.broadcast %88 : vector<24x1xi32> to vector<24x128xi32>
      %90 = arith.cmpi eq, %87, %89 : vector<24x128xi32>
      %91 = arith.extui %90 : vector<24x128xi1> to vector<24x128xi32>
      %92 = arith.sitofp %91 : vector<24x128xi32> to vector<24x128xf32>
      %93 = arith.truncf %92 : vector<24x128xf32> to vector<24x128xbf16>
      %c0_55 = arith.constant 0 : index
      %c0_56 = arith.constant 0 : index
      %94 = vector.load %arg6[%c0_55, %c0_56] : memref<128x64xf32, #tpu.memory_space<vmem>>, vector<128x64xf32>
      %95 = arith.truncf %94 : vector<128x64xf32> to vector<128x64xbf16>
      %cst_57 = arith.constant dense<0.000000e+00> : vector<24x64xf32>
      %96 = tpu.matmul %93, %95, %cst_57 {dimension_numbers = #tpu.dot_dimension_numbers<[1], [0], [0], [1], [0, 0, 1, 1], [], []>} : vector<24x128xbf16>, vector<128x64xbf16>, vector<24x64xf32> -> vector<24x64xf32>
      %c0_58 = arith.constant 0 : index
      %c0_59 = arith.constant 0 : index
      %97 = vector.load %arg16[%c0_58, %c0_59] : memref<24x64xf32, #tpu.memory_space<vmem>>, vector<24x64xf32>
      tpu.vector_store %arg16[%c0_58, %c0_59], %96 {strides = array<i32>} : memref<24x64xf32, #tpu.memory_space<vmem>>, vector<24x64xf32>,
    } else {
    }
    %c0 = arith.constant 0 : index
    %c0_1 = arith.constant 0 : index
    %3 = vector.load %arg3[%c0, %c0_1] : memref<256x20xf32, #tpu.memory_space<vmem>>, vector<256x1xf32>
    %c0_2 = arith.constant 0 : index
    %c1 = arith.constant 1 : index
    %4 = vector.load %arg3[%c0_2, %c1] : memref<256x20xf32, #tpu.memory_space<vmem>>, vector<256x3xf32>
    %c0_3 = arith.constant 0 : index
    %c4 = arith.constant 4 : index
    %5 = vector.load %arg3[%c0_3, %c4] : memref<256x20xf32, #tpu.memory_space<vmem>>, vector<256x16xf32>
    %cst = arith.constant 0.628318548 : f32
    %6 = vector.broadcast %cst : f32 to vector<256x1xf32>
    %7 = arith.mulf %3, %6 : vector<256x1xf32>
    %8 = math.cos %7 : vector<256x1xf32>
    %cst_4 = arith.constant 1.000000e+00 : f32
    %9 = vector.broadcast %cst_4 : f32 to vector<256x1xf32>
    %10 = arith.addf %8, %9 : vector<256x1xf32>
    %cst_5 = arith.constant 5.000000e-01 : f32
    %11 = vector.broadcast %cst_5 : f32 to vector<256x1xf32>
    %12 = arith.mulf %11, %10 : vector<256x1xf32>
    %cst_6 = arith.constant 5.000000e+00 : f32
    %13 = vector.broadcast %cst_6 : f32 to vector<256x1xf32>
    %14 = arith.cmpf olt, %3, %13 : vector<256x1xf32>
    %15 = arith.extui %14 : vector<256x1xi1> to vector<256x1xi32>
    %16 = arith.sitofp %15 : vector<256x1xi32> to vector<256x1xf32>
    %17 = arith.mulf %12, %16 : vector<256x1xf32>
    %c0_7 = arith.constant 0 : index
    %c0_8 = arith.constant 0 : index
    %18 = vector.load %arg8[%c0_7, %c0_8] : memref<16x96xf32, #tpu.memory_space<vmem>>, vector<16x96xf32>
    %cst_9 = arith.constant dense<0.000000e+00> : vector<256x96xf32>
    %19 = tpu.matmul %5, %18, %cst_9 {dimension_numbers = #tpu.dot_dimension_numbers<[1], [0], [0], [1], [0, 0, 1, 1], [], []>} : vector<256x16xf32>, vector<16x96xf32>, vector<256x96xf32> -> vector<256x96xf32>
    %c0_10 = arith.constant 0 : index
    %c0_11 = arith.constant 0 : index
    %20 = vector.load %arg9[%c0_10, %c0_11] : memref<1x96xf32, #tpu.memory_space<vmem>>, vector<1x96xf32>
    %21 = vector.broadcast %20 : vector<1x96xf32> to vector<256x96xf32>
    %22 = arith.addf %19, %21 : vector<256x96xf32>
    %23 = vector.broadcast %17 : vector<256x1xf32> to vector<256x96xf32>
    %24 = arith.mulf %22, %23 : vector<256x96xf32>
    %25 = tpu.iota {dimensions = array<i32: 1>} : vector<256x24xi32>
    %c0_12 = arith.constant 0 : index
    %c0_13 = arith.constant 0 : index
    %26 = vector.load %arg2[%c0_12, %c0_13] : memref<256x2xi32, #tpu.memory_space<vmem>>, vector<256x1xi32>
    %27 = vector.broadcast %26 : vector<256x1xi32> to vector<256x24xi32>
    %28 = arith.cmpi eq, %25, %27 : vector<256x24xi32>
    %29 = arith.extui %28 : vector<256x24xi1> to vector<256x24xi32>
    %30 = arith.sitofp %29 : vector<256x24xi32> to vector<256x24xf32>
    %31 = arith.truncf %30 : vector<256x24xf32> to vector<256x24xbf16>
    %c0_14 = arith.constant 0 : index
    %c1_15 = arith.constant 1 : index
    %32 = vector.load %arg2[%c0_14, %c1_15] : memref<256x2xi32, #tpu.memory_space<vmem>>, vector<256x1xi32>
    %33 = vector.broadcast %32 : vector<256x1xi32> to vector<256x24xi32>
    %34 = arith.cmpi eq, %25, %33 : vector<256x24xi32>
    %35 = arith.extui %34 : vector<256x24xi1> to vector<256x24xi32>
    %36 = arith.sitofp %35 : vector<256x24xi32> to vector<256x24xf32>
    %37 = arith.truncf %36 : vector<256x24xf32> to vector<256x24xbf16>
    %c0_16 = arith.constant 0 : index
    %c0_17 = arith.constant 0 : index
    %38 = vector.load %arg16[%c0_16, %c0_17] : memref<24x64xf32, #tpu.memory_space<vmem>>, vector<24x64xf32>
    %39 = vector.extract_strided_slice %38 {offsets = [0, 0], sizes = [24, 32], strides = [1, 1]} : vector<24x64xf32> to vector<24x32xf32>
    %40 = arith.truncf %39 : vector<24x32xf32> to vector<24x32xbf16>
    %41 = vector.extract_strided_slice %38 {offsets = [0, 32], sizes = [24, 32], strides = [1, 1]} : vector<24x64xf32> to vector<24x32xf32>
    %42 = arith.truncf %41 : vector<24x32xf32> to vector<24x32xbf16>
    %cst_18 = arith.constant dense<0.000000e+00> : vector<256x32xf32>
    %43 = tpu.matmul %31, %40, %cst_18 {dimension_numbers = #tpu.dot_dimension_numbers<[1], [0], [0], [1], [0, 0, 1, 1], [], []>} : vector<256x24xbf16>, vector<24x32xbf16>, vector<256x32xf32> -> vector<256x32xf32>
    %cst_19 = arith.constant dense<0.000000e+00> : vector<256x32xf32>
    %44 = tpu.matmul %37, %42, %cst_19 {dimension_numbers = #tpu.dot_dimension_numbers<[1], [0], [0], [1], [0, 0, 1, 1], [], []>} : vector<256x24xbf16>, vector<24x32xbf16>, vector<256x32xf32> -> vector<256x32xf32>
    %45 = arith.addf %43, %44 : vector<256x32xf32>
    %c0_20 = arith.constant 0 : index
    %c0_21 = arith.constant 0 : index
    %46 = vector.load %arg7[%c0_20, %c0_21] : memref<1x32xf32, #tpu.memory_space<vmem>>, vector<1x32xf32>
    %47 = vector.broadcast %46 : vector<1x32xf32> to vector<256x32xf32>
    %48 = arith.addf %45, %47 : vector<256x32xf32>
    %49 = arith.truncf %48 : vector<256x32xf32> to vector<256x32xbf16>
    %c0_22 = arith.constant 0 : index
    %c0_23 = arith.constant 0 : index
    %50 = vector.load %arg10[%c0_22, %c0_23] : memref<32x96xbf16, #tpu.memory_space<vmem>>, vector<32x96xbf16>
    %cst_24 = arith.constant dense<0.000000e+00> : vector<256x96xf32>
    %51 = tpu.matmul %49, %50, %cst_24 {dimension_numbers = #tpu.dot_dimension_numbers<[1], [0], [0], [1], [0, 0, 1, 1], [], []>} : vector<256x32xbf16>, vector<32x96xbf16>, vector<256x96xf32> -> vector<256x96xf32>
    %52 = arith.mulf %24, %51 : vector<256x96xf32>
    %53 = arith.truncf %52 : vector<256x96xf32> to vector<256x96xbf16>
    %c0_25 = arith.constant 0 : index
    %c0_26 = arith.constant 0 : index
    %54 = vector.load %arg11[%c0_25, %c0_26] : memref<96x608xbf16, #tpu.memory_space<vmem>>, vector<96x608xbf16>
    %cst_27 = arith.constant dense<0.000000e+00> : vector<256x608xf32>
    %55 = tpu.matmul %53, %54, %cst_27 {dimension_numbers = #tpu.dot_dimension_numbers<[1], [0], [0], [1], [0, 0, 1, 1], [], []>} : vector<256x96xbf16>, vector<96x608xbf16>, vector<256x608xf32> -> vector<256x608xf32>
    %56 = arith.mulf %4, %4 : vector<256x3xf32>
    %cst_28 = arith.constant dense<0.000000e+00> : vector<256xf32>
    %57 = vector.multi_reduction <add>, %56, %cst_28 [1] : vector<256x3xf32> to vector<256xf32>
    %58 = vector.shape_cast %57 : vector<256xf32> to vector<256x1xf32>
    %cst_29 = arith.constant 0.333333343 : f32
    %59 = vector.broadcast %cst_29 : f32 to vector<256x1xf32>
    %60 = arith.mulf %58, %59 : vector<256x1xf32>
    %cst_30 = arith.constant 1.000000e+00 : f32
    %61 = vector.broadcast %cst_30 : f32 to vector<256x1xf32>
    %62 = tpu.concatenate %4, %60, %61 in 1 : vector<256x3xf32>, vector<256x1xf32>, vector<256x1xf32> -> vector<256x5xf32>
    %c0_31 = arith.constant 0 : index
    %c0_32 = arith.constant 0 : index
    %63 = vector.load %arg12[%c0_31, %c0_32] : memref<5x608xf32, #tpu.memory_space<vmem>>, vector<5x608xf32>
    %cst_33 = arith.constant dense<0.000000e+00> : vector<256x608xf32>
    %64 = tpu.matmul %62, %63, %cst_33 {dimension_numbers = #tpu.dot_dimension_numbers<[1], [0], [0], [1], [0, 0, 1, 1], [], []>} : vector<256x5xf32>, vector<5x608xf32>, vector<256x608xf32> -> vector<256x608xf32>
    %c0_34 = arith.constant 0 : index
    %c0_35 = arith.constant 0 : index
    %65 = vector.load %arg13[%c0_34, %c0_35] : memref<3x608xf32, #tpu.memory_space<vmem>>, vector<3x608xf32>
    %cst_36 = arith.constant dense<0.000000e+00> : vector<256x608xf32>
    %66 = tpu.matmul %4, %65, %cst_36 {dimension_numbers = #tpu.dot_dimension_numbers<[1], [0], [0], [1], [0, 0, 1, 1], [], []>} : vector<256x3xf32>, vector<3x608xf32>, vector<256x608xf32> -> vector<256x608xf32>
    %c0_37 = arith.constant 0 : index
    %c0_38 = arith.constant 0 : index
    %67 = vector.load %arg14[%c0_37, %c0_38] : memref<3x608xf32, #tpu.memory_space<vmem>>, vector<3x608xf32>
    %cst_39 = arith.constant dense<0.000000e+00> : vector<256x608xf32>
    %68 = tpu.matmul %4, %67, %cst_39 {dimension_numbers = #tpu.dot_dimension_numbers<[1], [0], [0], [1], [0, 0, 1, 1], [], []>} : vector<256x3xf32>, vector<3x608xf32>, vector<256x608xf32> -> vector<256x608xf32>
    %69 = arith.mulf %66, %68 : vector<256x608xf32>
    %70 = arith.addf %64, %69 : vector<256x608xf32>
    %71 = arith.mulf %55, %70 : vector<256x608xf32>
    %72 = arith.truncf %71 : vector<256x608xf32> to vector<256x608xbf16>
    %73 = tpu.iota {dimensions = array<i32: 0>} : vector<24x256xi32>
    %c0_40 = arith.constant 0 : index
    %c0_41 = arith.constant 0 : index
    %74 = vector.load %arg4[%c0_40, %c0_41] : memref<1x256xi32, #tpu.memory_space<vmem>>, vector<1x256xi32>
    %75 = vector.broadcast %74 : vector<1x256xi32> to vector<24x256xi32>
    %76 = arith.cmpi eq, %73, %75 : vector<24x256xi32>
    %77 = arith.extui %76 : vector<24x256xi1> to vector<24x256xi32>
    %78 = arith.sitofp %77 : vector<24x256xi32> to vector<24x256xf32>
    %79 = arith.truncf %78 : vector<24x256xf32> to vector<24x256xbf16>
    %c0_42 = arith.constant 0 : index
    %c0_43 = arith.constant 0 : index
    %c0_44 = arith.constant 0 : index
    %80 = vector.load %arg15[%c0_42, %c0_43, %c0_44] : memref<1x24x608xf32, #tpu.memory_space<vmem>>, vector<1x24x608xf32>
    %cst_45 = arith.constant dense<0.000000e+00> : vector<24x608xf32>
    %81 = tpu.matmul %79, %72, %cst_45 {dimension_numbers = #tpu.dot_dimension_numbers<[1], [0], [0], [1], [0, 0, 1, 1], [], []>} : vector<24x256xbf16>, vector<256x608xbf16>, vector<24x608xf32> -> vector<24x608xf32>
    %82 = vector.shape_cast %81 : vector<24x608xf32> to vector<1x24x608xf32>
    %83 = arith.addf %80, %82 : vector<1x24x608xf32>
    %c0_46 = arith.constant 0 : index
    %c0_47 = arith.constant 0 : index
    %c0_48 = arith.constant 0 : index
    %84 = vector.load %arg15[%c0_46, %c0_47, %c0_48] : memref<1x24x608xf32, #tpu.memory_space<vmem>>, vector<1x24x608xf32>
    tpu.vector_store %arg15[%c0_46, %c0_47, %c0_48], %83 {strides = array<i32>} : memref<1x24x608xf32, #tpu.memory_space<vmem>>, vector<1x24x608xf32>,
    return
  }
  func.func @transform_0(%arg0: i32, %arg1: i32) -> (i32, i32) {
    %c2_i32 = arith.constant 2 : i32
    %0 = arith.muli %arg0, %c2_i32 : i32
    %1 = arith.addi %0, %arg1 : i32
    %c0_i32 = arith.constant 0 : i32
    %c0_i32_0 = arith.constant 0 : i32
    return %1, %c0_i32 : i32, i32
  }
  func.func @transform_1(%arg0: i32, %arg1: i32) -> (i32, i32) {
    %c2_i32 = arith.constant 2 : i32
    %0 = arith.muli %arg0, %c2_i32 : i32
    %1 = arith.addi %0, %arg1 : i32
    %c0_i32 = arith.constant 0 : i32
    %c0_i32_0 = arith.constant 0 : i32
    return %1, %c0_i32 : i32, i32
  }
  func.func @transform_2(%arg0: i32, %arg1: i32) -> (i32, i32) {
    %c2_i32 = arith.constant 2 : i32
    %0 = arith.muli %arg0, %c2_i32 : i32
    %1 = arith.addi %0, %arg1 : i32
    %c0_i32 = arith.constant 0 : i32
    %c0_i32_0 = arith.constant 0 : i32
    return %c0_i32, %1 : i32, i32
  }
  func.func @transform_3(%arg0: i32, %arg1: i32) -> (i32, i32) {
    %c0_i32 = arith.constant 0 : i32
    %c0_i32_0 = arith.constant 0 : i32
    %c0_i32_1 = arith.constant 0 : i32
    return %c0_i32, %c0_i32_0 : i32, i32
  }
  func.func @transform_4(%arg0: i32, %arg1: i32) -> (i32, i32) {
    %c0_i32 = arith.constant 0 : i32
    %c0_i32_0 = arith.constant 0 : i32
    %c0_i32_1 = arith.constant 0 : i32
    return %c0_i32, %c0_i32_0 : i32, i32
  }
  func.func @transform_5(%arg0: i32, %arg1: i32) -> (i32, i32) {
    %c0_i32 = arith.constant 0 : i32
    %c0_i32_0 = arith.constant 0 : i32
    %c0_i32_1 = arith.constant 0 : i32
    return %c0_i32, %c0_i32_0 : i32, i32
  }
  func.func @transform_6(%arg0: i32, %arg1: i32) -> (i32, i32) {
    %c0_i32 = arith.constant 0 : i32
    %c0_i32_0 = arith.constant 0 : i32
    %c0_i32_1 = arith.constant 0 : i32
    return %c0_i32, %c0_i32_0 : i32, i32
  }
  func.func @transform_7(%arg0: i32, %arg1: i32) -> (i32, i32) {
    %c0_i32 = arith.constant 0 : i32
    %c0_i32_0 = arith.constant 0 : i32
    %c0_i32_1 = arith.constant 0 : i32
    return %c0_i32, %c0_i32_0 : i32, i32
  }
  func.func @transform_8(%arg0: i32, %arg1: i32) -> (i32, i32) {
    %c0_i32 = arith.constant 0 : i32
    %c0_i32_0 = arith.constant 0 : i32
    %c0_i32_1 = arith.constant 0 : i32
    return %c0_i32, %c0_i32_0 : i32, i32
  }
  func.func @transform_9(%arg0: i32, %arg1: i32) -> (i32, i32) {
    %c0_i32 = arith.constant 0 : i32
    %c0_i32_0 = arith.constant 0 : i32
    %c0_i32_1 = arith.constant 0 : i32
    return %c0_i32, %c0_i32_0 : i32, i32
  }
  func.func @transform_10(%arg0: i32, %arg1: i32) -> (i32, i32) {
    %c0_i32 = arith.constant 0 : i32
    %c0_i32_0 = arith.constant 0 : i32
    %c0_i32_1 = arith.constant 0 : i32
    return %c0_i32, %c0_i32_0 : i32, i32
  }
  func.func @transform_11(%arg0: i32, %arg1: i32) -> (i32, i32) {
    %c0_i32 = arith.constant 0 : i32
    %c0_i32_0 = arith.constant 0 : i32
    %c0_i32_1 = arith.constant 0 : i32
    return %c0_i32, %c0_i32_0 : i32, i32
  }
  func.func @transform_12(%arg0: i32, %arg1: i32) -> (i32, i32) {
    %c0_i32 = arith.constant 0 : i32
    %c0_i32_0 = arith.constant 0 : i32
    %c0_i32_1 = arith.constant 0 : i32
    return %c0_i32, %c0_i32_0 : i32, i32
  }
  func.func @transform_13(%arg0: i32, %arg1: i32) -> (i32, i32, i32) {
    %c0_i32 = arith.constant 0 : i32
    %c0_i32_0 = arith.constant 0 : i32
    %c0_i32_1 = arith.constant 0 : i32
    return %arg0, %c0_i32, %c0_i32_0 : i32, i32, i32
  }
}

</mosaic_0001>

<llo_original>
// kernel: tpu_custom_call.1
$region0: #{tpu_custom_call.1}
  #allocation0 [shape = 'u32[]', space=smem, size = 0x4, offset = 0x4, fixed_abs, tag = 'smem constant byte address 0x4 - core index']
  #allocation1 [shape = 'u32[72,128]{1,0:T(1,128)}', space=vmem, size = 0x9000, scoped, tag = 'internal scratch']
  #allocation2 [shape = 'f32[24,64]{1,0:T(8,128)}', space=vmem, size = 0x3000, scoped, tag = 'scratch operand']
  %s0 = inlined_call_operand.vmem [shape: s32[1024,2], index: 0, kind: input, shape index: {}]
  %s1 = inlined_call_operand.vmem [shape: f32[1024,20], index: 1, kind: input, shape index: {}]
  %s2 = inlined_call_operand.vmem [shape: s32[1,1024], index: 2, kind: input, shape index: {}]
  %s3 = inlined_call_operand.vmem [shape: s32[24,1], index: 3, kind: input, shape index: {}]
  %s4 = inlined_call_operand.vmem [shape: f32[128,64], index: 4, kind: input, shape index: {}]
  %s5 = inlined_call_operand.vmem [shape: f32[1,32], index: 5, kind: input, shape index: {}]
  %s6 = inlined_call_operand.vmem [shape: f32[16,96], index: 6, kind: input, shape index: {}]
  %s7 = inlined_call_operand.vmem [shape: f32[1,96], index: 7, kind: input, shape index: {}]
  %s8 = inlined_call_operand.vmem [shape: bf16[32,96], index: 8, kind: input, shape index: {}]
  %s9 = inlined_call_operand.vmem [shape: bf16[96,608], index: 9, kind: input, shape index: {}]
  %s10 = inlined_call_operand.vmem [shape: f32[5,608], index: 10, kind: input, shape index: {}]
  %s11 = inlined_call_operand.vmem [shape: f32[3,608], index: 11, kind: input, shape index: {}]
  %s12 = inlined_call_operand.vmem [shape: f32[3,608], index: 12, kind: input, shape index: {}]
  %s13 = inlined_call_operand.hbm [shape: f32[2,24,608], index: 13, kind: output, shape index: {}]
  %s14 = sld [smem:[#allocation0]]
  $region89: #{tpu_custom_call.1} parent=0
    _
  %s16 = ssub.s32 1, %s14
  %s17 = scalar_select 0, %s16, %s14
  $region1: #{tpu_custom_call.1} parent=0
    #allocation3 [shape = 'u8[122880]{0}', space=vmem, size = 0x1e000, scoped, tag = 'output window, operand 0']
    #allocation4 [shape = 's32[2]{0}', space=sflag, size = 0x8, scoped, tag = 'scoped memory for tpu_custom_call.1']
    %18 = vsyncpa [#allocation4], 0
    %s19 = scalar_lea.sflag [#allocation4], 1
    %20 = vsyncpa %s19, 0
    loop: start=0, step=1, limit=6
    $region2: #{tpu_custom_call.1} parent=1 // loop_pre_header
      _
    $region3: #{tpu_custom_call.1} parent=1 // loop_header
      %s22 = sphi 0, %s26
      %p23 = scmp.ge.s32.totalorder %s22, 6
      %s29 = sphi 0, %s41
      %s30 = sphi 0, %s37
      %s31 = sphi 0, %s29
      %s32 = sphi 0, %s30
      %s33 = sphi 0, %s31
      %s34 = sphi 0, %s32
      %s48 = sphi 0, %s50
      %s51 = sphi 0, %s48
      %s52 = sphi 0, %s51
      %s68 = sphi 0, %s52
      %s78 = sphi 0, %s80
      %s81 = sphi 0, %s78
      %s82 = sphi 0, %s81
      %s98 = sphi 0, %s82
      %s108 = sphi 0, %s110
      %s111 = sphi 0, %s108
      %s112 = sphi 0, %s111
      %s128 = sphi 0, %s112
      %s132 = sphi 0, %s132
      %s134 = sphi 0, %s132
      %s135 = sphi 0, %s134
      %s149 = sphi 0, %s135
      %s153 = sphi 0, %s153
      %s155 = sphi 0, %s153
      %s156 = sphi 0, %s155
      %s170 = sphi 0, %s156
      %s174 = sphi 0, %s174
      %s176 = sphi 0, %s174
      %s177 = sphi 0, %s176
      %s191 = sphi 0, %s177
      %s195 = sphi 0, %s195
      %s197 = sphi 0, %s195
      %s198 = sphi 0, %s197
      %s212 = sphi 0, %s198
      %s216 = sphi 0, %s216
      %s218 = sphi 0, %s216
      %s219 = sphi 0, %s218
      %s233 = sphi 0, %s219
      %s237 = sphi 0, %s237
      %s239 = sphi 0, %s237
      %s240 = sphi 0, %s239
      %s254 = sphi 0, %s240
      %s258 = sphi 0, %s258
      %s260 = sphi 0, %s258
      %s261 = sphi 0, %s260
      %s275 = sphi 0, %s261
      %s279 = sphi 0, %s279
      %s281 = sphi 0, %s279
      %s282 = sphi 0, %s281
      %s296 = sphi 0, %s282
      %s300 = sphi 0, %s300
      %s302 = sphi 0, %s300
      %s303 = sphi 0, %s302
      %s317 = sphi 0, %s303
      %s321 = sphi 0, %s321
      %s323 = sphi 0, %s321
      %s324 = sphi 0, %s323
      %s338 = sphi 0, %s324
      %s344 = sphi 0, %s346
      %s347 = sphi 0, %s344
      %s348 = sphi 0, %s347
      %s364 = sphi 0, %s348
    $region4: #{tpu_custom_call.1} parent=1 // loop_header_branch
      %25 = sbr.rel (%p23) target = $region8
    $region5: #{tpu_custom_call.1} parent=1 // loop_body
      %s27 = ssub.s32 %s22, 1
      %s28 = ssub.s32 %s22, 2
      %s35 = sadd.s32 1, %s30
      %p36 = scmp.ge.s32.totalorder %s35, 2
      %s37 = scalar_select %p36, 0, %s35
      %s38 = sadd.s32 1, %s29
      %s39 = scalar_select %p36, %s38, %s29
      %p40 = scmp.ge.s32.totalorder %s39, 2
      %s41 = scalar_select %p40, 0, %s39
      %s42 = smul.u32 %s29, 2
      %s43 = sadd.s32 %s42, %s30
      %s44 = smul.u32 %s41, 2
      %s45 = sadd.s32 %s44, %s37
      %s46 = ssub.s32 %s43, %s45
      %p47 = scmp.eq.s32.totalorder %s46, 0
      %s49 = sadd.s32 %s48, 1
      %s50 = scalar_select %p47, %s48, %s49
      %p53 = pneg %p47
      %p54 = scmp.eq.s32.totalorder %s22, 3
      %p55 = por %p53, %p54
      %p56 = scmp.ne.s32.totalorder %s48, %s51
      %p57 = scmp.eq.s32.totalorder %s22, 0
      %p58 = por %p56, %p57
      %p59 = scmp.ne.s32.totalorder %s48, %s51
      %p60 = scmp.eq.s32.totalorder %s27, 3
      %p61 = por %p59, %p60
      %p62 = scmp.ne.s32.totalorder %s51, %s52
      %p63 = scmp.eq.s32.totalorder %s27, 0
      %p64 = por %p62, %p63
      %p65 = scmp.ne.s32.totalorder %s51, %s52
      %p66 = scmp.eq.s32.totalorder %s28, 3
      %p67 = por %p65, %p66
      %p69 = scmp.ne.s32.totalorder %s52, %s68
      %p70 = scmp.eq.s32.totalorder %s28, 0
      %p71 = por %p69, %p70
      %s72 = smul.u32 %s29, 2
      %s73 = sadd.s32 %s72, %s30
      %s74 = smul.u32 %s41, 2
      %s75 = sadd.s32 %s74, %s37
      %s76 = ssub.s32 %s73, %s75
      %p77 = scmp.eq.s32.totalorder %s76, 0
      %s79 = sadd.s32 %s78, 1
      %s80 = scalar_select %p77, %s78, %s79
      %p83 = pneg %p77
      %p84 = scmp.eq.s32.totalorder %s22, 3
      %p85 = por %p83, %p84
      %p86 = scmp.ne.s32.totalorder %s78, %s81
      %p87 = scmp.eq.s32.totalorder %s22, 0
      %p88 = por %p86, %p87
      %p89 = scmp.ne.s32.totalorder %s78, %s81
      %p90 = scmp.eq.s32.totalorder %s27, 3
      %p91 = por %p89, %p90
      %p92 = scmp.ne.s32.totalorder %s81, %s82
      %p93 = scmp.eq.s32.totalorder %s27, 0
      %p94 = por %p92, %p93
      %p95 = scmp.ne.s32.totalorder %s81, %s82
      %p96 = scmp.eq.s32.totalorder %s28, 3
      %p97 = por %p95, %p96
      %p99 = scmp.ne.s32.totalorder %s82, %s98
      %p100 = scmp.eq.s32.totalorder %s28, 0
      %p101 = por %p99, %p100
      %s102 = smul.u32 %s29, 2
      %s103 = sadd.s32 %s102, %s30
      %s104 = smul.u32 %s41, 2
      %s105 = sadd.s32 %s104, %s37
      %s106 = ssub.s32 %s103, %s105
      %p107 = scmp.eq.s32.totalorder %s106, 0
      %s109 = sadd.s32 %s108, 1
      %s110 = scalar_select %p107, %s108, %s109
      %p113 = pneg %p107
      %p114 = scmp.eq.s32.totalorder %s22, 3
      %p115 = por %p113, %p114
      %p116 = scmp.ne.s32.totalorder %s108, %s111
      %p117 = scmp.eq.s32.totalorder %s22, 0
      %p118 = por %p116, %p117
      %p119 = scmp.ne.s32.totalorder %s108, %s111
      %p120 = scmp.eq.s32.totalorder %s27, 3
      %p121 = por %p119, %p120
      %p122 = scmp.ne.s32.totalorder %s111, %s112
      %p123 = scmp.eq.s32.totalorder %s27, 0
      %p124 = por %p122, %p123
      %p125 = scmp.ne.s32.totalorder %s111, %s112
      %p126 = scmp.eq.s32.totalorder %s28, 3
      %p127 = por %p125, %p126
      %p129 = scmp.ne.s32.totalorder %s112, %s128
      %p130 = scmp.eq.s32.totalorder %s28, 0
      %p131 = por %p129, %p130
      %s133 = sadd.s32 %s132, 1
      %p136 = scmp.eq.s32.totalorder %s22, 3
      %p137 = scmp.ne.s32.totalorder %s132, %s134
      %p138 = scmp.eq.s32.totalorder %s22, 0
      %p139 = por %p137, %p138
      %p140 = scmp.ne.s32.totalorder %s132, %s134
      %p141 = scmp.eq.s32.totalorder %s27, 3
      %p142 = por %p140, %p141
      %p143 = scmp.ne.s32.totalorder %s134, %s135
      %p144 = scmp.eq.s32.totalorder %s27, 0
      %p145 = por %p143, %p144
      %p146 = scmp.ne.s32.totalorder %s134, %s135
      %p147 = scmp.eq.s32.totalorder %s28, 3
      %p148 = por %p146, %p147
      %p150 = scmp.ne.s32.totalorder %s135, %s149
      %p151 = scmp.eq.s32.totalorder %s28, 0
      %p152 = por %p150, %p151
      %s154 = sadd.s32 %s153, 1
      %p157 = scmp.eq.s32.totalorder %s22, 3
      %p158 = scmp.ne.s32.totalorder %s153, %s155
      %p159 = scmp.eq.s32.totalorder %s22, 0
      %p160 = por %p158, %p159
      %p161 = scmp.ne.s32.totalorder %s153, %s155
      %p162 = scmp.eq.s32.totalorder %s27, 3
      %p163 = por %p161, %p162
      %p164 = scmp.ne.s32.totalorder %s155, %s156
      %p165 = scmp.eq.s32.totalorder %s27, 0
      %p166 = por %p164, %p165
      %p167 = scmp.ne.s32.totalorder %s155, %s156
      %p168 = scmp.eq.s32.totalorder %s28, 3
      %p169 = por %p167, %p168
      %p171 = scmp.ne.s32.totalorder %s156, %s170
      %p172 = scmp.eq.s32.totalorder %s28, 0
      %p173 = por %p171, %p172
      %s175 = sadd.s32 %s174, 1
      %p178 = scmp.eq.s32.totalorder %s22, 3
      %p179 = scmp.ne.s32.totalorder %s174, %s176
      %p180 = scmp.eq.s32.totalorder %s22, 0
      %p181 = por %p179, %p180
      %p182 = scmp.ne.s32.totalorder %s174, %s176
      %p183 = scmp.eq.s32.totalorder %s27, 3
      %p184 = por %p182, %p183
      %p185 = scmp.ne.s32.totalorder %s176, %s177
      %p186 = scmp.eq.s32.totalorder %s27, 0
      %p187 = por %p185, %p186
      %p188 = scmp.ne.s32.totalorder %s176, %s177
      %p189 = scmp.eq.s32.totalorder %s28, 3
      %p190 = por %p188, %p189
      %p192 = scmp.ne.s32.totalorder %s177, %s191
      %p193 = scmp.eq.s32.totalorder %s28, 0
      %p194 = por %p192, %p193
      %s196 = sadd.s32 %s195, 1
      %p199 = scmp.eq.s32.totalorder %s22, 3
      %p200 = scmp.ne.s32.totalorder %s195, %s197
      %p201 = scmp.eq.s32.totalorder %s22, 0
      %p202 = por %p200, %p201
      %p203 = scmp.ne.s32.totalorder %s195, %s197
      %p204 = scmp.eq.s32.totalorder %s27, 3
      %p205 = por %p203, %p204
      %p206 = scmp.ne.s32.totalorder %s197, %s198
      %p207 = scmp.eq.s32.totalorder %s27, 0
      %p208 = por %p206, %p207
      %p209 = scmp.ne.s32.totalorder %s197, %s198
      %p210 = scmp.eq.s32.totalorder %s28, 3
      %p211 = por %p209, %p210
      %p213 = scmp.ne.s32.totalorder %s198, %s212
      %p214 = scmp.eq.s32.totalorder %s28, 0
      %p215 = por %p213, %p214
      %s217 = sadd.s32 %s216, 1
      %p220 = scmp.eq.s32.totalorder %s22, 3
      %p221 = scmp.ne.s32.totalorder %s216, %s218
      %p222 = scmp.eq.s32.totalorder %s22, 0
      %p223 = por %p221, %p222
      %p224 = scmp.ne.s32.totalorder %s216, %s218
      %p225 = scmp.eq.s32.totalorder %s27, 3
      %p226 = por %p224, %p225
      %p227 = scmp.ne.s32.totalorder %s218, %s219
      %p228 = scmp.eq.s32.totalorder %s27, 0
      %p229 = por %p227, %p228
      %p230 = scmp.ne.s32.totalorder %s218, %s219
      %p231 = scmp.eq.s32.totalorder %s28, 3
      %p232 = por %p230, %p231
      %p234 = scmp.ne.s32.totalorder %s219, %s233
      %p235 = scmp.eq.s32.totalorder %s28, 0
      %p236 = por %p234, %p235
      %s238 = sadd.s32 %s237, 1
      %p241 = scmp.eq.s32.totalorder %s22, 3
      %p242 = scmp.ne.s32.totalorder %s237, %s239
      %p243 = scmp.eq.s32.totalorder %s22, 0
      %p244 = por %p242, %p243
      %p245 = scmp.ne.s32.totalorder %s237, %s239
      %p246 = scmp.eq.s32.totalorder %s27, 3
      %p247 = por %p245, %p246
      %p248 = scmp.ne.s32.totalorder %s239, %s240
      %p249 = scmp.eq.s32.totalorder %s27, 0
      %p250 = por %p248, %p249
      %p251 = scmp.ne.s32.totalorder %s239, %s240
      %p252 = scmp.eq.s32.totalorder %s28, 3
      %p253 = por %p251, %p252
      %p255 = scmp.ne.s32.totalorder %s240, %s254
      %p256 = scmp.eq.s32.totalorder %s28, 0
      %p257 = por %p255, %p256
      %s259 = sadd.s32 %s258, 1
      %p262 = scmp.eq.s32.totalorder %s22, 3
      %p263 = scmp.ne.s32.totalorder %s258, %s260
      %p264 = scmp.eq.s32.totalorder %s22, 0
      %p265 = por %p263, %p264
      %p266 = scmp.ne.s32.totalorder %s258, %s260
      %p267 = scmp.eq.s32.totalorder %s27, 3
      %p268 = por %p266, %p267
      %p269 = scmp.ne.s32.totalorder %s260, %s261
      %p270 = scmp.eq.s32.totalorder %s27, 0
      %p271 = por %p269, %p270
      %p272 = scmp.ne.s32.totalorder %s260, %s261
      %p273 = scmp.eq.s32.totalorder %s28, 3
      %p274 = por %p272, %p273
      %p276 = scmp.ne.s32.totalorder %s261, %s275
      %p277 = scmp.eq.s32.totalorder %s28, 0
      %p278 = por %p276, %p277
      %s280 = sadd.s32 %s279, 1
      %p283 = scmp.eq.s32.totalorder %s22, 3
      %p284 = scmp.ne.s32.totalorder %s279, %s281
      %p285 = scmp.eq.s32.totalorder %s22, 0
      %p286 = por %p284, %p285
      %p287 = scmp.ne.s32.totalorder %s279, %s281
      %p288 = scmp.eq.s32.totalorder %s27, 3
      %p289 = por %p287, %p288
      %p290 = scmp.ne.s32.totalorder %s281, %s282
      %p291 = scmp.eq.s32.totalorder %s27, 0
      %p292 = por %p290, %p291
      %p293 = scmp.ne.s32.totalorder %s281, %s282
      %p294 = scmp.eq.s32.totalorder %s28, 3
      %p295 = por %p293, %p294
      %p297 = scmp.ne.s32.totalorder %s282, %s296
      %p298 = scmp.eq.s32.totalorder %s28, 0
      %p299 = por %p297, %p298
      %s301 = sadd.s32 %s300, 1
      %p304 = scmp.eq.s32.totalorder %s22, 3
      %p305 = scmp.ne.s32.totalorder %s300, %s302
      %p306 = scmp.eq.s32.totalorder %s22, 0
      %p307 = por %p305, %p306
      %p308 = scmp.ne.s32.totalorder %s300, %s302
      %p309 = scmp.eq.s32.totalorder %s27, 3
      %p310 = por %p308, %p309
      %p311 = scmp.ne.s32.totalorder %s302, %s303
      %p312 = scmp.eq.s32.totalorder %s27, 0
      %p313 = por %p311, %p312
      %p314 = scmp.ne.s32.totalorder %s302, %s303
      %p315 = scmp.eq.s32.totalorder %s28, 3
      %p316 = por %p314, %p315
      %p318 = scmp.ne.s32.totalorder %s303, %s317
      %p319 = scmp.eq.s32.totalorder %s28, 0
      %p320 = por %p318, %p319
      %s322 = sadd.s32 %s321, 1
      %p325 = scmp.eq.s32.totalorder %s22, 3
      %p326 = scmp.ne.s32.totalorder %s321, %s323
      %p327 = scmp.eq.s32.totalorder %s22, 0
      %p328 = por %p326, %p327
      %p329 = scmp.ne.s32.totalorder %s321, %s323
      %p330 = scmp.eq.s32.totalorder %s27, 3
      %p331 = por %p329, %p330
      %p332 = scmp.ne.s32.totalorder %s323, %s324
      %p333 = scmp.eq.s32.totalorder %s27, 0
      %p334 = por %p332, %p333
      %p335 = scmp.ne.s32.totalorder %s323, %s324
      %p336 = scmp.eq.s32.totalorder %s28, 3
      %p337 = por %p335, %p336
      %p339 = scmp.ne.s32.totalorder %s324, %s338
      %p340 = scmp.eq.s32.totalorder %s28, 0
      %p341 = por %p339, %p340
      %s342 = ssub.s32 %s29, %s41
      %p343 = scmp.eq.s32.totalorder %s342, 0
      %s345 = sadd.s32 %s344, 1
      %s346 = scalar_select %p343, %s344, %s345
      %p349 = pneg %p343
      %p350 = scmp.eq.s32.totalorder %s22, 3
      %p351 = por %p349, %p350
      %p352 = scmp.ne.s32.totalorder %s344, %s347
      %p353 = scmp.eq.s32.totalorder %s22, 0
      %p354 = por %p352, %p353
      %p355 = scmp.ne.s32.totalorder %s344, %s347
      %p356 = scmp.eq.s32.totalorder %s27, 3
      %p357 = por %p355, %p356
      %p358 = scmp.ne.s32.totalorder %s347, %s348
      %p359 = scmp.eq.s32.totalorder %s27, 0
      %p360 = por %p358, %p359
      %p361 = scmp.ne.s32.totalorder %s347, %s348
      %p362 = scmp.eq.s32.totalorder %s28, 3
      %p363 = por %p361, %p362
      %p365 = scmp.ne.s32.totalorder %s348, %s364
      %p366 = scmp.eq.s32.totalorder %s28, 0
      %p367 = por %p365, %p366
      %p368 = scmp.le.s32.totalorder 1, %s22
      %p369 = scmp.lt.s32.totalorder %s22, 5
      %p370 = pnand %p368, %p369
      %p371 = pneg %p370
      // Predicated region
      $region9: #{tpu_custom_call.1} parent=5 // pred_check
        _
      $region10: #{tpu_custom_call.1} parent=5 // pred_check_branch
        %373 = sbr.rel (%p370) target = $region12
      $region11: #{tpu_custom_call.1} parent=5 // pred_region
        %s374 = ssub.s32 %s22, 1
        // Predicated region
        $region13: #{tpu_custom_call.1} parent=11 // pred_check
          %p375 = pneg %p145
        $region14: #{tpu_custom_call.1} parent=11 // pred_check_branch
          %377 = sbr.rel (%p375) target = $region16
        $region15: #{tpu_custom_call.1} parent=11 // pred_region
          _
        $region16: #{tpu_custom_call.1} parent=11 // pred_fallthru
          _
        // Predicated region
        $region17: #{tpu_custom_call.1} parent=11 // pred_check
          %p378 = pneg %p166
        $region18: #{tpu_custom_call.1} parent=11 // pred_check_branch
          %380 = sbr.rel (%p378) target = $region20
        $region19: #{tpu_custom_call.1} parent=11 // pred_region
          _
        $region20: #{tpu_custom_call.1} parent=11 // pred_fallthru
          _
        // Predicated region
        $region21: #{tpu_custom_call.1} parent=11 // pred_check
          %p381 = pneg %p187
        $region22: #{tpu_custom_call.1} parent=11 // pred_check_branch
          %383 = sbr.rel (%p381) target = $region24
        $region23: #{tpu_custom_call.1} parent=11 // pred_region
          _
        $region24: #{tpu_custom_call.1} parent=11 // pred_fallthru
          _
        // Predicated region
        $region25: #{tpu_custom_call.1} parent=11 // pred_check
          %p384 = pneg %p208
        $region26: #{tpu_custom_call.1} parent=11 // pred_check_branch
          %386 = sbr.rel (%p384) target = $region28
        $region27: #{tpu_custom_call.1} parent=11 // pred_region
          _
        $region28: #{tpu_custom_call.1} parent=11 // pred_fallthru
          _
        // Predicated region
        $region29: #{tpu_custom_call.1} parent=11 // pred_check
          %p387 = pneg %p229
        $region30: #{tpu_custom_call.1} parent=11 // pred_check_branch
          %389 = sbr.rel (%p387) target = $region32
        $region31: #{tpu_custom_call.1} parent=11 // pred_region
          _
        $region32: #{tpu_custom_call.1} parent=11 // pred_fallthru
          _
        // Predicated region
        $region33: #{tpu_custom_call.1} parent=11 // pred_check
          %p390 = pneg %p250
        $region34: #{tpu_custom_call.1} parent=11 // pred_check_branch
          %392 = sbr.rel (%p390) target = $region36
        $region35: #{tpu_custom_call.1} parent=11 // pred_region
          _
        $region36: #{tpu_custom_call.1} parent=11 // pred_fallthru
          _
        // Predicated region
        $region37: #{tpu_custom_call.1} parent=11 // pred_check
          %p393 = pneg %p271
        $region38: #{tpu_custom_call.1} parent=11 // pred_check_branch
          %395 = sbr.rel (%p393) target = $region40
        $region39: #{tpu_custom_call.1} parent=11 // pred_region
          _
        $region40: #{tpu_custom_call.1} parent=11 // pred_fallthru
          _
        // Predicated region
        $region41: #{tpu_custom_call.1} parent=11 // pred_check
          %p396 = pneg %p292
        $region42: #{tpu_custom_call.1} parent=11 // pred_check_branch
          %398 = sbr.rel (%p396) target = $region44
        $region43: #{tpu_custom_call.1} parent=11 // pred_region
          _
        $region44: #{tpu_custom_call.1} parent=11 // pred_fallthru
          _
        // Predicated region
        $region45: #{tpu_custom_call.1} parent=11 // pred_check
          %p399 = pneg %p313
        $region46: #{tpu_custom_call.1} parent=11 // pred_check_branch
          %401 = sbr.rel (%p399) target = $region48
        $region47: #{tpu_custom_call.1} parent=11 // pred_region
          _
        $region48: #{tpu_custom_call.1} parent=11 // pred_fallthru
          _
        // Predicated region
        $region49: #{tpu_custom_call.1} parent=11 // pred_check
          %p402 = pneg %p334
        $region50: #{tpu_custom_call.1} parent=11 // pred_check_branch
          %404 = sbr.rel (%p402) target = $region52
        $region51: #{tpu_custom_call.1} parent=11 // pred_region
          _
        $region52: #{tpu_custom_call.1} parent=11 // pred_fallthru
          _
      $region12: #{tpu_custom_call.1} parent=5 // pred_fallthru
        _
      %p405 = scmp.lt.s32.totalorder %s22, 4
      // Predicated region
      $region53: #{tpu_custom_call.1} parent=5 // pred_check
        %p406 = pneg %p405
      $region54: #{tpu_custom_call.1} parent=5 // pred_check_branch
        %408 = sbr.rel (%p406) target = $region56
      $region55: #{tpu_custom_call.1} parent=5 // pred_region
        // Predicated region
        $region57: #{tpu_custom_call.1} parent=55 // pred_check
          %p409 = pneg %p58
        $region58: #{tpu_custom_call.1} parent=55 // pred_check_branch
          %411 = sbr.rel (%p409) target = $region60
        $region59: #{tpu_custom_call.1} parent=55 // pred_region
          %s412 = smul.u32 %s29, 2
          %s413 = sadd.s32 %s412, %s30
          %s414 = smul.u32 32, %s413
          %p415 = scmp.lt.s32.totalorder %s414, 127
          %s416 = scalar_select %p415, %s414, 127
          %s417 = smul.addr %s416, 8
          %s418 = scalar_lea.vmem %s0, %s417
          %s419 = smul.u32 %s29, 2
          %s420 = sadd.s32 %s419, %s30
          %s421 = smul.u32 32, %s420
        $region60: #{tpu_custom_call.1} parent=55 // pred_fallthru
          _
        // Predicated region
        $region61: #{tpu_custom_call.1} parent=55 // pred_check
          %p422 = pneg %p88
        $region62: #{tpu_custom_call.1} parent=55 // pred_check_branch
          %424 = sbr.rel (%p422) target = $region64
        $region63: #{tpu_custom_call.1} parent=55 // pred_region
          %s425 = smul.u32 %s29, 2
          %s426 = sadd.s32 %s425, %s30
          %s427 = smul.u32 32, %s426
          %p428 = scmp.lt.s32.totalorder %s427, 127
          %s429 = scalar_select %p428, %s427, 127
          %s430 = smul.addr %s429, 8
          %s431 = scalar_lea.vmem %s1, %s430
          %s432 = smul.u32 %s29, 2
          %s433 = sadd.s32 %s432, %s30
          %s434 = smul.u32 32, %s433
        $region64: #{tpu_custom_call.1} parent=55 // pred_fallthru
          _
        // Predicated region
        $region65: #{tpu_custom_call.1} parent=55 // pred_check
          %p435 = pneg %p118
        $region66: #{tpu_custom_call.1} parent=55 // pred_check_branch
          %437 = sbr.rel (%p435) target = $region68
        $region67: #{tpu_custom_call.1} parent=55 // pred_region
          %s438 = smul.u32 %s29, 2
          %s439 = sadd.s32 %s438, %s30
          %s440 = smul.u32 2, %s439
          %p441 = scmp.lt.s32.totalorder %s440, 7
          %s442 = scalar_select %p441, %s440, 7
          %s443 = scalar_lea.vmem %s2, %s442
          %s444 = smul.u32 %s29, 2
          %s445 = sadd.s32 %s444, %s30
          %s446 = smul.u32 2, %s445
        $region68: #{tpu_custom_call.1} parent=55 // pred_fallthru
          _
      $region56: #{tpu_custom_call.1} parent=5 // pred_fallthru
        _
      %p447 = scmp.le.s32.totalorder 1, %s22
      %p448 = scmp.lt.s32.totalorder %s22, 5
      %p449 = pnand %p447, %p448
      %p450 = pneg %p449
      // Predicated region
      $region69: #{tpu_custom_call.1} parent=5 // pred_check
        _
      $region70: #{tpu_custom_call.1} parent=5 // pred_check_branch
        %452 = sbr.rel (%p449) target = $region72
      $region71: #{tpu_custom_call.1} parent=5 // pred_region
        %s453 = ssub.s32 %s22, 1
        %s454 = smul.u32 %s31, 2
        %s455 = sadd.s32 %s454, %s32
        %s456 = smul.u32 32, %s455
        %p457 = scmp.lt.s32.totalorder %s456, 127
        %s458 = scalar_select %p457, %s456, 127
        %s459 = smul.addr %s458, 8
        %s460 = scalar_lea.vmem %s0, %s459
        %p461 = pneg %p64
        %p462 = pneg %p61
        %s463 = smul.u32 %s31, 2
        %s464 = sadd.s32 %s463, %s32
        %s465 = smul.u32 32, %s464
        %p466 = scmp.lt.s32.totalorder %s465, 127
        %s467 = scalar_select %p466, %s465, 127
        %s468 = smul.addr %s467, 8
        %s469 = scalar_lea.vmem %s1, %s468
        %p470 = pneg %p94
        %p471 = pneg %p91
        %s472 = smul.u32 %s31, 2
        %s473 = sadd.s32 %s472, %s32
        %s474 = smul.u32 2, %s473
        %p475 = scmp.lt.s32.totalorder %s474, 7
        %s476 = scalar_select %p475, %s474, 7
        %s477 = scalar_lea.vmem %s2, %s476
        %p478 = pneg %p124
        %p479 = pneg %p121
        %p480 = pneg %p145
        %p481 = pneg %p142
        %p482 = pneg %p166
        %p483 = pneg %p163
        %p484 = pneg %p187
        %p485 = pneg %p184
        %p486 = pneg %p208
        %p487 = pneg %p205
        %p488 = pneg %p229
        %p489 = pneg %p226
        %p490 = pneg %p250
        %p491 = pneg %p247
        %p492 = pneg %p271
        %p493 = pneg %p268
        %p494 = pneg %p292
        %p495 = pneg %p289
        %p496 = pneg %p313
        %p497 = pneg %p310
        %p498 = pneg %p334
        %p499 = pneg %p331
        %p500 = pneg %p360
        %p501 = pneg %p357
        %s502 = sand.u32 %s347, 1
        %s503 = scalar_lea.sflag [#allocation4], %s502
        %s504 = sand.u32 %s347, 1
        %s505 = smul.addr %s504, 120
        %s506 = scalar_lea.vmem [#allocation3], %s505
        %s507 = smul.u32 %s31, 2
        %s508 = sadd.s32 %s507, %s32
        %s509 = smul.u32 32, %s508
        %p510 = scmp.lt.s32.totalorder %s509, 127
        %s511 = scalar_select %p510, %s509, 127
        %s512 = smul.addr %s511, 8
        %s513 = scalar_lea.vmem %s0, %s512
        %s514 = smul.u32 %s31, 2
        %s515 = sadd.s32 %s514, %s32
        %s516 = smul.u32 32, %s515
        %s517 = smul.u32 %s31, 2
        %s518 = sadd.s32 %s517, %s32
        %s519 = smul.u32 32, %s518
        %p520 = scmp.lt.s32.totalorder %s519, 127
        %s521 = scalar_select %p520, %s519, 127
        %s522 = smul.addr %s521, 8
        %s523 = scalar_lea.vmem %s1, %s522
        %s524 = smul.u32 %s31, 2
        %s525 = sadd.s32 %s524, %s32
        %s526 = smul.u32 32, %s525
        %s527 = smul.u32 %s31, 2
        %s528 = sadd.s32 %s527, %s32
        %s529 = smul.u32 2, %s528
        %p530 = scmp.lt.s32.totalorder %s529, 7
        %s531 = scalar_select %p530, %s529, 7
        %s532 = scalar_lea.vmem %s2, %s531
        %s533 = smul.u32 %s31, 2
        %s534 = sadd.s32 %s533, %s32
        %s535 = smul.u32 2, %s534
        %p537 = scmp.eq.s32.totalorder %s32, 0
        // Predicated region
        $region73: #{tpu_custom_call.1} parent=71 // pred_check
          %p538 = pneg %p537
        $region74: #{tpu_custom_call.1} parent=71 // pred_check_branch
          %540 = sbr.rel (%p538) target = $region76
        $region75: #{tpu_custom_call.1} parent=71 // pred_region
          %541 = vst [vmem:[%s506] sm:$0xff] 0.0
          %542 = vst [vmem:[%s506 + $0x8] sm:$0xff] 0.0
          %543 = vst [vmem:[%s506 + $0x10] sm:$0xff] 0.0
          %544 = vst [vmem:[%s506 + $0x18] sm:$0xff] 0.0
          %vm545 = vcmask 785408
          %546 = vst.msk [vmem:[%s506 + $0x20] sm:$0xff] %vm545, 0.0
          %547 = vst [vmem:[%s506 + $0x28] sm:$0xff] 0.0
          %548 = vst [vmem:[%s506 + $0x30] sm:$0xff] 0.0
          %549 = vst [vmem:[%s506 + $0x38] sm:$0xff] 0.0
          %550 = vst [vmem:[%s506 + $0x40] sm:$0xff] 0.0
          %551 = vst.msk [vmem:[%s506 + $0x48] sm:$0xff] %vm545, 0.0
          %552 = vst [vmem:[%s506 + $0x50] sm:$0xff] 0.0
          %553 = vst [vmem:[%s506 + $0x58] sm:$0xff] 0.0
          %554 = vst [vmem:[%s506 + $0x60] sm:$0xff] 0.0
          %555 = vst [vmem:[%s506 + $0x68] sm:$0xff] 0.0
          %556 = vst.msk [vmem:[%s506 + $0x70] sm:$0xff] %vm545, 0.0
          %v557 = vlaneseq
          %v558 = vand.u32 %v557, 127
          %v559 = vld [vmem:[%s3] sm:$0xff]
          %v560 = vld [vmem:[%s3 + $0x8] sm:$0xff]
          %v561 = vld [vmem:[%s3 + $0x10] sm:$0xff]
          %562 = vset.pattern.permute.xlu0 0
          %563 = vperm.xlu0 %562, %v559
          %v564 = vpop.permute.xlu0 %563
          %565 = vset.pattern.permute.xlu0 0
          %566 = vperm.xlu0 %565, %v560
          %v567 = vpop.permute.xlu0 %566
          %568 = vset.pattern.permute.xlu0 0
          %569 = vperm.xlu0 %568, %v561
          %v570 = vpop.permute.xlu0 %569
          %vm571 = vcmp.eq.s32.totalorder %v558, %v564
          %vm572 = vcmp.eq.s32.totalorder %v558, %v567
          %vm573 = vcmp.eq.s32.totalorder %v558, %v570
          %v574 = vsel %vm571, 1, 0
          %v575 = vsel %vm572, 1, 0
          %v576 = vsel %vm573, 1, 0
          %v577 = vcvt.s32.f32 %v574
          %v578 = vcvt.s32.f32 %v575
          %v579 = vcvt.s32.f32 %v576
          %v580 = vpack.c.bf16 %v578, %v577
          %v581 = vpack.c.bf16 %v579, %v579
          %v582 = vld [vmem:[%s4] sm:$0xff]
          %v583 = vld [vmem:[%s4 + $0x8] sm:$0xff]
          %v584 = vld [vmem:[%s4 + $0x10] sm:$0xff]
          %v585 = vld [vmem:[%s4 + $0x18] sm:$0xff]
          %v586 = vld [vmem:[%s4 + $0x20] sm:$0xff]
          %v587 = vld [vmem:[%s4 + $0x28] sm:$0xff]
          %v588 = vld [vmem:[%s4 + $0x30] sm:$0xff]
          %v589 = vld [vmem:[%s4 + $0x38] sm:$0xff]
          %v590 = vld [vmem:[%s4 + $0x40] sm:$0xff]
          %v591 = vld [vmem:[%s4 + $0x48] sm:$0xff]
          %v592 = vld [vmem:[%s4 + $0x50] sm:$0xff]
          %v593 = vld [vmem:[%s4 + $0x58] sm:$0xff]
          %v594 = vld [vmem:[%s4 + $0x60] sm:$0xff]
          %v595 = vld [vmem:[%s4 + $0x68] sm:$0xff]
          %v596 = vld [vmem:[%s4 + $0x70] sm:$0xff]
          %v597 = vld [vmem:[%s4 + $0x78] sm:$0xff]
          %v598 = vpack.c.bf16 %v583, %v582
          %v599 = vpack.c.bf16 %v585, %v584
          %v600 = vpack.c.bf16 %v587, %v586
          %v601 = vpack.c.bf16 %v589, %v588
          %v602 = vpack.c.bf16 %v591, %v590
          %v603 = vpack.c.bf16 %v593, %v592
          %v604 = vpack.c.bf16 %v595, %v594
          %v605 = vpack.c.bf16 %v597, %v596
          %606 = vmatpush.bf16.msra.mxu0 %v605
          %607 = vmatpush.bf16.msra.mxu0 %v604
          %608 = vmatpush.bf16.msra.mxu0 %v603
          %609 = vmatpush.bf16.msra.mxu0 %v602
          %610 = vmatpush.bf16.msra.mxu0 %v601
          %611 = vmatpush.bf16.msra.mxu0 %v600
          %612 = vmatpush.bf16.msra.mxu0 %v599
          %613 = vmatpush.bf16.msra.mxu0 %v598
          %614 = vmatmul.bf16.gmra.mxu0 %v580
          %v615 = vpop.f32.mrf.mxu0
          %v616 = vadd.f32 0.0, %v615
          %v617 = vpop.f32.mrf.mxu0
          %v618 = vadd.f32 0.0, %v617
          %619 = vmatmul.bf16.gmra.mxu0 %v581
          %v620 = vpop.f32.mrf.mxu0
          %v621 = vadd.f32 0.0, %v620
          %v622 = vpop.f32.mrf.mxu0
          %623 = vdwg.mxu0
          %vm624 = vcmask 523264
          %625 = vst.msk [vmem:[#allocation2] sm:$0xff] %vm624, %v616
          %626 = vst.msk [vmem:[#allocation2 + $0x8] sm:$0xff] %vm624, %v618
          %627 = vst.msk [vmem:[#allocation2 + $0x10] sm:$0xff] %vm624, %v621
        $region76: #{tpu_custom_call.1} parent=71 // pred_fallthru
          _
        %v628 = vld [vmem:[%s523] sm:$0xff]
        %v629 = vld [vmem:[%s523 + $0x8] sm:$0xff]
        %v630 = vld [vmem:[%s523 + $0x10] sm:$0xff]
        %v631 = vld [vmem:[%s523 + $0x18] sm:$0xff]
        %v632 = vld [vmem:[%s523 + $0x20] sm:$0xff]
        %v633 = vld [vmem:[%s523 + $0x28] sm:$0xff]
        %v634 = vld [vmem:[%s523 + $0x30] sm:$0xff]
        %v635 = vld [vmem:[%s523 + $0x38] sm:$0xff]
        %v636 = vld [vmem:[%s523 + $0x40] sm:$0xff]
        %v637 = vld [vmem:[%s523 + $0x48] sm:$0xff]
        %v638 = vld [vmem:[%s523 + $0x50] sm:$0xff]
        %v639 = vld [vmem:[%s523 + $0x58] sm:$0xff]
        %v640 = vld [vmem:[%s523 + $0x60] sm:$0xff]
        %v641 = vld [vmem:[%s523 + $0x68] sm:$0xff]
        %v642 = vld [vmem:[%s523 + $0x70] sm:$0xff]
        %v643 = vld [vmem:[%s523 + $0x78] sm:$0xff]
        %v644 = vld [vmem:[%s523 + $0x80] sm:$0xff]
        %v645 = vld [vmem:[%s523 + $0x88] sm:$0xff]
        %v646 = vld [vmem:[%s523 + $0x90] sm:$0xff]
        %v647 = vld [vmem:[%s523 + $0x98] sm:$0xff]
        %v648 = vld [vmem:[%s523 + $0xa0] sm:$0xff]
        %v649 = vld [vmem:[%s523 + $0xa8] sm:$0xff]
        %v650 = vld [vmem:[%s523 + $0xb0] sm:$0xff]
        %v651 = vld [vmem:[%s523 + $0xb8] sm:$0xff]
        %v652 = vld [vmem:[%s523 + $0xc0] sm:$0xff]
        %v653 = vld [vmem:[%s523 + $0xc8] sm:$0xff]
        %v654 = vld [vmem:[%s523 + $0xd0] sm:$0xff]
        %v655 = vld [vmem:[%s523 + $0xd8] sm:$0xff]
        %v656 = vld [vmem:[%s523 + $0xe0] sm:$0xff]
        %v657 = vld [vmem:[%s523 + $0xe8] sm:$0xff]
        %v658 = vld [vmem:[%s523 + $0xf0] sm:$0xff]
        %v659 = vld [vmem:[%s523 + $0xf8] sm:$0xff]
        %v660 = vmul.f32 %v628, 0.62831855
        %v661 = vmul.f32 %v629, 0.62831855
        %v662 = vmul.f32 %v630, 0.62831855
        %v663 = vmul.f32 %v631, 0.62831855
        %v664 = vmul.f32 %v632, 0.62831855
        %v665 = vmul.f32 %v633, 0.62831855
        %v666 = vmul.f32 %v634, 0.62831855
        %v667 = vmul.f32 %v635, 0.62831855
        %v668 = vmul.f32 %v636, 0.62831855
        %v669 = vmul.f32 %v637, 0.62831855
        %v670 = vmul.f32 %v638, 0.62831855
        %v671 = vmul.f32 %v639, 0.62831855
        %v672 = vmul.f32 %v640, 0.62831855
        %v673 = vmul.f32 %v641, 0.62831855
        %v674 = vmul.f32 %v642, 0.62831855
        %v675 = vmul.f32 %v643, 0.62831855
        %v676 = vmul.f32 %v644, 0.62831855
        %v677 = vmul.f32 %v645, 0.62831855
        %v678 = vmul.f32 %v646, 0.62831855
        %v679 = vmul.f32 %v647, 0.62831855
        %v680 = vmul.f32 %v648, 0.62831855
        %v681 = vmul.f32 %v649, 0.62831855
        %v682 = vmul.f32 %v650, 0.62831855
        %v683 = vmul.f32 %v651, 0.62831855
        %v684 = vmul.f32 %v652, 0.62831855
        %v685 = vmul.f32 %v653, 0.62831855
        %v686 = vmul.f32 %v654, 0.62831855
        %v687 = vmul.f32 %v655, 0.62831855
        %v688 = vmul.f32 %v656, 0.62831855
        %v689 = vmul.f32 %v657, 0.62831855
        %v690 = vmul.f32 %v658, 0.62831855
        %v691 = vmul.f32 %v659, 0.62831855
        %v692 = vand.u32 2147483647, %v660
        %vm693 = vcmp.le.f32.partialorder %v692, 0.7853982
        %vm694 = vcmp.lt.s32.totalorder %v660, 0
        %v695 = vand.u32 %v660, 2139095040
        %v696 = vshrl.u32 %v695, 23
        %v697 = vsub.s32 %v696, 127
        %v698 = vand.u32 2147483647, %v660
        %v699 = vand.u32 %v698, 8388607
        %v700 = vor.u32 %v699, 8388608
        %v701 = vsub.s32 0, %v700
        %v702 = vadd.s32 %v697, 1
        %vm703 = vcmp.gt.s32.totalorder %v702, 0
        %v704 = vsel %vm703, %v702, 0
        %v705 = vshrl.u32 %v704, 5
        %v706 = vand.u32 %v704, 31
        %v707 = vsub.s32 32, %v706
        %v708 = vshrl.u32 683565275, %v707
        %v709 = vshll.u32 683565275, %v706
        %v710 = vshrl.u32 2475754826, %v707
        %v711 = vor.u32 %v709, %v710
        %v712 = vshll.u32 2475754826, %v706
        %v713 = vshrl.u32 2131351028, %v707
        %v714 = vor.u32 %v712, %v713
        %v715 = vshll.u32 2131351028, %v706
        %v716 = vshrl.u32 2102212464, %v707
        %v717 = vor.u32 %v715, %v716
        %v718 = vshll.u32 2102212464, %v706
        %v719 = vshrl.u32 920167782, %v707
        %v720 = vor.u32 %v718, %v719
        %v721 = vshll.u32 920167782, %v706
        %v722 = vshrl.u32 1326507024, %v707
        %v723 = vor.u32 %v721, %v722
        %vm724 = vcmp.lt.s32.totalorder %v705, 1
        %vm725 = vcmp.lt.s32.totalorder %v705, 2
        %vm726 = vcmp.lt.s32.totalorder %v705, 3
        %vm727 = vcmp.lt.s32.totalorder %v705, 4
        %v728 = vsel %vm724, %v708, %v711
        %v729 = vsel %vm727, %v717, 2102212464
        %v730 = vsel %vm726, %v714, %v729
        %v731 = vsel %vm725, %v728, %v730
        %v732 = vsel %vm724, %v711, %v714
        %v733 = vsel %vm727, %v720, 920167782
        %v734 = vsel %vm726, %v717, %v733
        %v735 = vsel %vm725, %v732, %v734
        %v736 = vsel %vm724, %v714, %v717
        %v737 = vsel %vm727, %v723, 1326507024
        %v738 = vsel %vm726, %v720, %v737
        %v739 = vsel %vm725, %v736, %v738
        %v740 = vshll.u32 %v700, 8
        %v741 = vand.u32 %v740, 65535
        %v742 = vshrl.u32 %v740, 16
        %v743 = vand.u32 %v739, 65535
        %v744 = vshrl.u32 %v739, 16
        %v745 = vmul.u32 %v741, %v743
        %v746 = vmul.u32 %v741, %v744
        %v747 = vmul.u32 %v742, %v743
        %v748 = vmul.u32 %v742, %v744
        %v749 = vshll.u32 %v746, 16
        %v750 = vshrl.u32 %v746, 16
        %v751 = vshll.u32 %v747, 16
        %v752 = vshrl.u32 %v747, 16
        %vm753 = vc.u32 %v745, %v749
        %v754 = vsel %vm753, 1, 0
        %v755 = vadd.s32 %v745, %v749
        %v756 = vadd.s32 %v748, %v754
        %vm757 = vc.u32 %v755, %v751
        %v758 = vsel %vm757, 1, 0
        %v759 = vadd.s32 %v755, %v751
        %v760 = vadd.s32 %v756, %v758
        %v761 = vadd.s32 %v760, %v750
        %v762 = vadd.s32 %v761, %v752
        %v763 = vand.u32 %v740, 65535
        %v764 = vshrl.u32 %v740, 16
        %v765 = vand.u32 %v735, 65535
        %v766 = vshrl.u32 %v735, 16
        %v767 = vmul.u32 %v763, %v765
        %v768 = vmul.u32 %v763, %v766
        %v769 = vmul.u32 %v764, %v765
        %v770 = vmul.u32 %v764, %v766
        %v771 = vshll.u32 %v768, 16
        %v772 = vshrl.u32 %v768, 16
        %v773 = vshll.u32 %v769, 16
        %v774 = vshrl.u32 %v769, 16
        %vm775 = vc.u32 %v767, %v771
        %v776 = vsel %vm775, 1, 0
        %v777 = vadd.s32 %v767, %v771
        %v778 = vadd.s32 %v770, %v776
        %vm779 = vc.u32 %v777, %v773
        %v780 = vsel %vm779, 1, 0
        %v781 = vadd.s32 %v777, %v773
        %v782 = vadd.s32 %v778, %v780
        %v783 = vadd.s32 %v782, %v772
        %v784 = vadd.s32 %v783, %v774
        %v785 = vmul.u32 %v740, %v731
        %v786 = vadd.s32 %v762, %v781
        %vm787 = vc.u32 %v762, %v781
        %v788 = vadd.s32 %v784, 1
        %v789 = vsel %vm787, %v788, %v784
        %v790 = vadd.s32 %v785, %v789
        %v791 = vadd.s32 %v790, 536870912
        %v792 = vshrl.u32 %v791, 30
        %v793 = vshll.u32 %v792, 30
        %v794 = vsub.s32 %v790, %v793
        %vm795 = vcmp.lt.s32.totalorder %v794, 0
        %v796 = vsub.s32 0, %v794
        %v797 = vsel %vm795, %v796, %v794
        %v798 = vclz %v797
        %v799 = vsub.s32 %v798, 2
        %vm800 = vcmp.gt.s32.totalorder 0, %v799
        %v801 = vsel %vm800, 0, %v799
        %v802 = vsub.s32 32, %v801
        %v803 = vshll.u32 %v794, %v801
        %v804 = vshrl.u32 %v786, %v802
        %v805 = vor.u32 %v803, %v804
        %v806 = vsub.s32 4294967266, %v801
        %v807 = vadd.s32 %v806, 127
        %v808 = vshll.u32 %v807, 23
        %v809 = vor.u32 4788187, %v808
        %v810 = vand.u32 2147483647, %v809
        %v812 = vcvt.s32.f32 %v805
        %v813 = vmul.f32 %v812, %v810
        %v814 = vxor.u32 %v813, 2147483648
        %v815 = vsel %vm694, %v814, %v813
        %v816 = vsub.s32 4, %v792
        %v817 = vsel %vm694, %v816, %v792
        %v818 = vsel %vm693, %v660, %v815
        %v819 = vsel %vm693, 0, %v817
        %v820 = vmul.f32 %v818, %v818
        %v821 = vmul.f32 %v820, -0.001358992
        %v822 = vadd.f32 %v821, 0.041655596
        %v823 = vmul.f32 %v820, %v822
        %v824 = vadd.f32 %v823, -0.4999988
        %v825 = vmul.f32 %v820, %v824
        %v826 = vadd.f32 1.0, %v825
        %v827 = vmul.f32 %v818, %v818
        %v828 = vmul.f32 %v827, -0.00019511016
        %v829 = vadd.f32 %v828, 0.008332121
        %v830 = vmul.f32 %v827, %v829
        %v831 = vadd.f32 %v830, -0.16666654
        %v832 = vmul.f32 %v827, %v831
        %v833 = vadd.f32 %v832, 1.0
        %v834 = vmul.f32 %v833, %v818
        %vm835 = vweird.f32 %v660
        %v836 = vand.u32 %v819, 3
        %vm837 = vcmp.lt.s32.totalorder %v836, 2
        %vm838 = vcmp.eq.s32.totalorder %v836, 0
        %v839 = vxor.u32 %v834, 2147483648
        %v840 = vsel %vm838, %v826, %v839
        %vm841 = vcmp.eq.s32.totalorder %v836, 2
        %v842 = vxor.u32 %v826, 2147483648
        %v843 = vsel %vm841, %v842, %v834
        %v844 = vsel %vm837, %v840, %v843
        %v845 = vsel %vm835, nan, %v844
        %v846 = vand.u32 2147483647, %v661
        %vm847 = vcmp.le.f32.partialorder %v846, 0.7853982
        %vm848 = vcmp.lt.s32.totalorder %v661, 0
        %v849 = vand.u32 %v661, 2139095040
        %v850 = vshrl.u32 %v849, 23
        %v851 = vsub.s32 %v850, 127
        %v852 = vand.u32 2147483647, %v661
        %v853 = vand.u32 %v852, 8388607
        %v854 = vor.u32 %v853, 8388608
        %v855 = vsub.s32 0, %v854
        %v856 = vadd.s32 %v851, 1
        %vm857 = vcmp.gt.s32.totalorder %v856, 0
        %v858 = vsel %vm857, %v856, 0
        %v859 = vshrl.u32 %v858, 5
        %v860 = vand.u32 %v858, 31
        %v861 = vsub.s32 32, %v860
        %v862 = vshrl.u32 683565275, %v861
        %v863 = vshll.u32 683565275, %v860
        %v864 = vshrl.u32 2475754826, %v861
        %v865 = vor.u32 %v863, %v864
        %v866 = vshll.u32 2475754826, %v860
        %v867 = vshrl.u32 2131351028, %v861
        %v868 = vor.u32 %v866, %v867
        %v869 = vshll.u32 2131351028, %v860
        %v870 = vshrl.u32 2102212464, %v861
        %v871 = vor.u32 %v869, %v870
        %v872 = vshll.u32 2102212464, %v860
        %v873 = vshrl.u32 920167782, %v861
        %v874 = vor.u32 %v872, %v873
        %v875 = vshll.u32 920167782, %v860
        %v876 = vshrl.u32 1326507024, %v861
        %v877 = vor.u32 %v875, %v876
        %vm878 = vcmp.lt.s32.totalorder %v859, 1
        %vm879 = vcmp.lt.s32.totalorder %v859, 2
        %vm880 = vcmp.lt.s32.totalorder %v859, 3
        %vm881 = vcmp.lt.s32.totalorder %v859, 4
        %v882 = vsel %vm878, %v862, %v865
        %v883 = vsel %vm881, %v871, 2102212464
        %v884 = vsel %vm880, %v868, %v883
        %v885 = vsel %vm879, %v882, %v884
        %v886 = vsel %vm878, %v865, %v868
        %v887 = vsel %vm881, %v874, 920167782
        %v888 = vsel %vm880, %v871, %v887
        %v889 = vsel %vm879, %v886, %v888
        %v890 = vsel %vm878, %v868, %v871
        %v891 = vsel %vm881, %v877, 1326507024
        %v892 = vsel %vm880, %v874, %v891
        %v893 = vsel %vm879, %v890, %v892
        %v894 = vshll.u32 %v854, 8
        %v895 = vand.u32 %v894, 65535
        %v896 = vshrl.u32 %v894, 16
        %v897 = vand.u32 %v893, 65535
        %v898 = vshrl.u32 %v893, 16
        %v899 = vmul.u32 %v895, %v897
        %v900 = vmul.u32 %v895, %v898
        %v901 = vmul.u32 %v896, %v897
        %v902 = vmul.u32 %v896, %v898
        %v903 = vshll.u32 %v900, 16
        %v904 = vshrl.u32 %v900, 16
        %v905 = vshll.u32 %v901, 16
        %v906 = vshrl.u32 %v901, 16
        %vm907 = vc.u32 %v899, %v903
        %v908 = vsel %vm907, 1, 0
        %v909 = vadd.s32 %v899, %v903
        %v910 = vadd.s32 %v902, %v908
        %vm911 = vc.u32 %v909, %v905
        %v912 = vsel %vm911, 1, 0
        %v913 = vadd.s32 %v909, %v905
        %v914 = vadd.s32 %v910, %v912
        %v915 = vadd.s32 %v914, %v904
        %v916 = vadd.s32 %v915, %v906
        %v917 = vand.u32 %v894, 65535
        %v918 = vshrl.u32 %v894, 16
        %v919 = vand.u32 %v889, 65535
        %v920 = vshrl.u32 %v889, 16
        %v921 = vmul.u32 %v917, %v919
        %v922 = vmul.u32 %v917, %v920
        %v923 = vmul.u32 %v918, %v919
        %v924 = vmul.u32 %v918, %v920
        %v925 = vshll.u32 %v922, 16
        %v926 = vshrl.u32 %v922, 16
        %v927 = vshll.u32 %v923, 16
        %v928 = vshrl.u32 %v923, 16
        %vm929 = vc.u32 %v921, %v925
        %v930 = vsel %vm929, 1, 0
        %v931 = vadd.s32 %v921, %v925
        %v932 = vadd.s32 %v924, %v930
        %vm933 = vc.u32 %v931, %v927
        %v934 = vsel %vm933, 1, 0
        %v935 = vadd.s32 %v931, %v927
        %v936 = vadd.s32 %v932, %v934
        %v937 = vadd.s32 %v936, %v926
        %v938 = vadd.s32 %v937, %v928
        %v939 = vmul.u32 %v894, %v885
        %v940 = vadd.s32 %v916, %v935
        %vm941 = vc.u32 %v916, %v935
        %v942 = vadd.s32 %v938, 1
        %v943 = vsel %vm941, %v942, %v938
        %v944 = vadd.s32 %v939, %v943
        %v945 = vadd.s32 %v944, 536870912
        %v946 = vshrl.u32 %v945, 30
        %v947 = vshll.u32 %v946, 30
        %v948 = vsub.s32 %v944, %v947
        %vm949 = vcmp.lt.s32.totalorder %v948, 0
        %v950 = vsub.s32 0, %v948
        %v951 = vsel %vm949, %v950, %v948
        %v952 = vclz %v951
        %v953 = vsub.s32 %v952, 2
        %vm954 = vcmp.gt.s32.totalorder 0, %v953
        %v955 = vsel %vm954, 0, %v953
        %v956 = vsub.s32 32, %v955
        %v957 = vshll.u32 %v948, %v955
        %v958 = vshrl.u32 %v940, %v956
        %v959 = vor.u32 %v957, %v958
        %v960 = vsub.s32 4294967266, %v955
        %v961 = vadd.s32 %v960, 127
        %v962 = vshll.u32 %v961, 23
        %v963 = vor.u32 4788187, %v962
        %v964 = vand.u32 2147483647, %v963
        %v966 = vcvt.s32.f32 %v959
        %v967 = vmul.f32 %v966, %v964
        %v968 = vxor.u32 %v967, 2147483648
        %v969 = vsel %vm848, %v968, %v967
        %v970 = vsub.s32 4, %v946
        %v971 = vsel %vm848, %v970, %v946
        %v972 = vsel %vm847, %v661, %v969
        %v973 = vsel %vm847, 0, %v971
        %v974 = vmul.f32 %v972, %v972
        %v975 = vmul.f32 %v974, -0.001358992
        %v976 = vadd.f32 %v975, 0.041655596
        %v977 = vmul.f32 %v974, %v976
        %v978 = vadd.f32 %v977, -0.4999988
        %v979 = vmul.f32 %v974, %v978
        %v980 = vadd.f32 1.0, %v979
        %v981 = vmul.f32 %v972, %v972
        %v982 = vmul.f32 %v981, -0.00019511016
        %v983 = vadd.f32 %v982, 0.008332121
        %v984 = vmul.f32 %v981, %v983
        %v985 = vadd.f32 %v984, -0.16666654
        %v986 = vmul.f32 %v981, %v985
        %v987 = vadd.f32 %v986, 1.0
        %v988 = vmul.f32 %v987, %v972
        %vm989 = vweird.f32 %v661
        %v990 = vand.u32 %v973, 3
        %vm991 = vcmp.lt.s32.totalorder %v990, 2
        %vm992 = vcmp.eq.s32.totalorder %v990, 0
        %v993 = vxor.u32 %v988, 2147483648
        %v994 = vsel %vm992, %v980, %v993
        %vm995 = vcmp.eq.s32.totalorder %v990, 2
        %v996 = vxor.u32 %v980, 2147483648
        %v997 = vsel %vm995, %v996, %v988
        %v998 = vsel %vm991, %v994, %v997
        %v999 = vsel %vm989, nan, %v998
        %v1000 = vand.u32 2147483647, %v662
        %vm1001 = vcmp.le.f32.partialorder %v1000, 0.7853982
        %vm1002 = vcmp.lt.s32.totalorder %v662, 0
        %v1003 = vand.u32 %v662, 2139095040
        %v1004 = vshrl.u32 %v1003, 23
        %v1005 = vsub.s32 %v1004, 127
        %v1006 = vand.u32 2147483647, %v662
        %v1007 = vand.u32 %v1006, 8388607
        %v1008 = vor.u32 %v1007, 8388608
        %v1009 = vsub.s32 0, %v1008
        %v1010 = vadd.s32 %v1005, 1
        %vm1011 = vcmp.gt.s32.totalorder %v1010, 0
        %v1012 = vsel %vm1011, %v1010, 0
        %v1013 = vshrl.u32 %v1012, 5
        %v1014 = vand.u32 %v1012, 31
        %v1015 = vsub.s32 32, %v1014
        %v1016 = vshrl.u32 683565275, %v1015
        %v1017 = vshll.u32 683565275, %v1014
        %v1018 = vshrl.u32 2475754826, %v1015
        %v1019 = vor.u32 %v1017, %v1018
        %v1020 = vshll.u32 2475754826, %v1014
        %v1021 = vshrl.u32 2131351028, %v1015
        %v1022 = vor.u32 %v1020, %v1021
        %v1023 = vshll.u32 2131351028, %v1014
        %v1024 = vshrl.u32 2102212464, %v1015
        %v1025 = vor.u32 %v1023, %v1024
        %v1026 = vshll.u32 2102212464, %v1014
        %v1027 = vshrl.u32 920167782, %v1015
        %v1028 = vor.u32 %v1026, %v1027
        %v1029 = vshll.u32 920167782, %v1014
        %v1030 = vshrl.u32 1326507024, %v1015
        %v1031 = vor.u32 %v1029, %v1030
        %vm1032 = vcmp.lt.s32.totalorder %v1013, 1
        %vm1033 = vcmp.lt.s32.totalorder %v1013, 2
        %vm1034 = vcmp.lt.s32.totalorder %v1013, 3
        %vm1035 = vcmp.lt.s32.totalorder %v1013, 4
        %v1036 = vsel %vm1032, %v1016, %v1019
        %v1037 = vsel %vm1035, %v1025, 2102212464
        %v1038 = vsel %vm1034, %v1022, %v1037
        %v1039 = vsel %vm1033, %v1036, %v1038
        %v1040 = vsel %vm1032, %v1019, %v1022
        %v1041 = vsel %vm1035, %v1028, 920167782
        %v1042 = vsel %vm1034, %v1025, %v1041
        %v1043 = vsel %vm1033, %v1040, %v1042
        %v1044 = vsel %vm1032, %v1022, %v1025
        %v1045 = vsel %vm1035, %v1031, 1326507024
        %v1046 = vsel %vm1034, %v1028, %v1045
        %v1047 = vsel %vm1033, %v1044, %v1046
        %v1048 = vshll.u32 %v1008, 8
        %v1049 = vand.u32 %v1048, 65535
        %v1050 = vshrl.u32 %v1048, 16
        %v1051 = vand.u32 %v1047, 65535
        %v1052 = vshrl.u32 %v1047, 16
        %v1053 = vmul.u32 %v1049, %v1051
        %v1054 = vmul.u32 %v1049, %v1052
        %v1055 = vmul.u32 %v1050, %v1051
        %v1056 = vmul.u32 %v1050, %v1052
        %v1057 = vshll.u32 %v1054, 16
        %v1058 = vshrl.u32 %v1054, 16
        %v1059 = vshll.u32 %v1055, 16
        %v1060 = vshrl.u32 %v1055, 16
        %vm1061 = vc.u32 %v1053, %v1057
        %v1062 = vsel %vm1061, 1, 0
        %v1063 = vadd.s32 %v1053, %v1057
        %v1064 = vadd.s32 %v1056, %v1062
        %vm1065 = vc.u32 %v1063, %v1059
        %v1066 = vsel %vm1065, 1, 0
        %v1067 = vadd.s32 %v1063, %v1059
        %v1068 = vadd.s32 %v1064, %v1066
        %v1069 = vadd.s32 %v1068, %v1058
        %v1070 = vadd.s32 %v1069, %v1060
        %v1071 = vand.u32 %v1048, 65535
        %v1072 = vshrl.u32 %v1048, 16
        %v1073 = vand.u32 %v1043, 65535
        %v1074 = vshrl.u32 %v1043, 16
        %v1075 = vmul.u32 %v1071, %v1073
        %v1076 = vmul.u32 %v1071, %v1074
        %v1077 = vmul.u32 %v1072, %v1073
        %v1078 = vmul.u32 %v1072, %v1074
        %v1079 = vshll.u32 %v1076, 16
        %v1080 = vshrl.u32 %v1076, 16
        %v1081 = vshll.u32 %v1077, 16
        %v1082 = vshrl.u32 %v1077, 16
        %vm1083 = vc.u32 %v1075, %v1079
        %v1084 = vsel %vm1083, 1, 0
        %v1085 = vadd.s32 %v1075, %v1079
        %v1086 = vadd.s32 %v1078, %v1084
        %vm1087 = vc.u32 %v1085, %v1081
        %v1088 = vsel %vm1087, 1, 0
        %v1089 = vadd.s32 %v1085, %v1081
        %v1090 = vadd.s32 %v1086, %v1088
        %v1091 = vadd.s32 %v1090, %v1080
        %v1092 = vadd.s32 %v1091, %v1082
        %v1093 = vmul.u32 %v1048, %v1039
        %v1094 = vadd.s32 %v1070, %v1089
        %vm1095 = vc.u32 %v1070, %v1089
        %v1096 = vadd.s32 %v1092, 1
        %v1097 = vsel %vm1095, %v1096, %v1092
        %v1098 = vadd.s32 %v1093, %v1097
        %v1099 = vadd.s32 %v1098, 536870912
        %v1100 = vshrl.u32 %v1099, 30
        %v1101 = vshll.u32 %v1100, 30
        %v1102 = vsub.s32 %v1098, %v1101
        %vm1103 = vcmp.lt.s32.totalorder %v1102, 0
        %v1104 = vsub.s32 0, %v1102
        %v1105 = vsel %vm1103, %v1104, %v1102
        %v1106 = vclz %v1105
        %v1107 = vsub.s32 %v1106, 2
        %vm1108 = vcmp.gt.s32.totalorder 0, %v1107
        %v1109 = vsel %vm1108, 0, %v1107
        %v1110 = vsub.s32 32, %v1109
        %v1111 = vshll.u32 %v1102, %v1109
        %v1112 = vshrl.u32 %v1094, %v1110
        %v1113 = vor.u32 %v1111, %v1112
        %v1114 = vsub.s32 4294967266, %v1109
        %v1115 = vadd.s32 %v1114, 127
        %v1116 = vshll.u32 %v1115, 23
        %v1117 = vor.u32 4788187, %v1116
        %v1118 = vand.u32 2147483647, %v1117
        %v1120 = vcvt.s32.f32 %v1113
        %v1121 = vmul.f32 %v1120, %v1118
        %v1122 = vxor.u32 %v1121, 2147483648
        %v1123 = vsel %vm1002, %v1122, %v1121
        %v1124 = vsub.s32 4, %v1100
        %v1125 = vsel %vm1002, %v1124, %v1100
        %v1126 = vsel %vm1001, %v662, %v1123
        %v1127 = vsel %vm1001, 0, %v1125
        %v1128 = vmul.f32 %v1126, %v1126
        %v1129 = vmul.f32 %v1128, -0.001358992
        %v1130 = vadd.f32 %v1129, 0.041655596
        %v1131 = vmul.f32 %v1128, %v1130
        %v1132 = vadd.f32 %v1131, -0.4999988
        %v1133 = vmul.f32 %v1128, %v1132
        %v1134 = vadd.f32 1.0, %v1133
        %v1135 = vmul.f32 %v1126, %v1126
        %v1136 = vmul.f32 %v1135, -0.00019511016
        %v1137 = vadd.f32 %v1136, 0.008332121
        %v1138 = vmul.f32 %v1135, %v1137
        %v1139 = vadd.f32 %v1138, -0.16666654
        %v1140 = vmul.f32 %v1135, %v1139
        %v1141 = vadd.f32 %v1140, 1.0
        %v1142 = vmul.f32 %v1141, %v1126
        %vm1143 = vweird.f32 %v662
        %v1144 = vand.u32 %v1127, 3
        %vm1145 = vcmp.lt.s32.totalorder %v1144, 2
        %vm1146 = vcmp.eq.s32.totalorder %v1144, 0
        %v1147 = vxor.u32 %v1142, 2147483648
        %v1148 = vsel %vm1146, %v1134, %v1147
        %vm1149 = vcmp.eq.s32.totalorder %v1144, 2
        %v1150 = vxor.u32 %v1134, 2147483648
        %v1151 = vsel %vm1149, %v1150, %v1142
        %v1152 = vsel %vm1145, %v1148, %v1151
        %v1153 = vsel %vm1143, nan, %v1152
        %v1154 = vand.u32 2147483647, %v663
        %vm1155 = vcmp.le.f32.partialorder %v1154, 0.7853982
        %vm1156 = vcmp.lt.s32.totalorder %v663, 0
        %v1157 = vand.u32 %v663, 2139095040
        %v1158 = vshrl.u32 %v1157, 23
        %v1159 = vsub.s32 %v1158, 127
        %v1160 = vand.u32 2147483647, %v663
        %v1161 = vand.u32 %v1160, 8388607
        %v1162 = vor.u32 %v1161, 8388608
        %v1163 = vsub.s32 0, %v1162
        %v1164 = vadd.s32 %v1159, 1
        %vm1165 = vcmp.gt.s32.totalorder %v1164, 0
        %v1166 = vsel %vm1165, %v1164, 0
        %v1167 = vshrl.u32 %v1166, 5
        %v1168 = vand.u32 %v1166, 31
        %v1169 = vsub.s32 32, %v1168
        %v1170 = vshrl.u32 683565275, %v1169
        %v1171 = vshll.u32 683565275, %v1168
        %v1172 = vshrl.u32 2475754826, %v1169
        %v1173 = vor.u32 %v1171, %v1172
        %v1174 = vshll.u32 2475754826, %v1168
        %v1175 = vshrl.u32 2131351028, %v1169
        %v1176 = vor.u32 %v1174, %v1175
        %v1177 = vshll.u32 2131351028, %v1168
        %v1178 = vshrl.u32 2102212464, %v1169
        %v1179 = vor.u32 %v1177, %v1178
        %v1180 = vshll.u32 2102212464, %v1168
        %v1181 = vshrl.u32 920167782, %v1169
        %v1182 = vor.u32 %v1180, %v1181
        %v1183 = vshll.u32 920167782, %v1168
        %v1184 = vshrl.u32 1326507024, %v1169
        %v1185 = vor.u32 %v1183, %v1184
        %vm1186 = vcmp.lt.s32.totalorder %v1167, 1
        %vm1187 = vcmp.lt.s32.totalorder %v1167, 2
        %vm1188 = vcmp.lt.s32.totalorder %v1167, 3
        %vm1189 = vcmp.lt.s32.totalorder %v1167, 4
        %v1190 = vsel %vm1186, %v1170, %v1173
        %v1191 = vsel %vm1189, %v1179, 2102212464
        %v1192 = vsel %vm1188, %v1176, %v1191
        %v1193 = vsel %vm1187, %v1190, %v1192
        %v1194 = vsel %vm1186, %v1173, %v1176
        %v1195 = vsel %vm1189, %v1182, 920167782
        %v1196 = vsel %vm1188, %v1179, %v1195
        %v1197 = vsel %vm1187, %v1194, %v1196
        %v1198 = vsel %vm1186, %v1176, %v1179
        %v1199 = vsel %vm1189, %v1185, 1326507024
        %v1200 = vsel %vm1188, %v1182, %v1199
        %v1201 = vsel %vm1187, %v1198, %v1200
        %v1202 = vshll.u32 %v1162, 8
        %v1203 = vand.u32 %v1202, 65535
        %v1204 = vshrl.u32 %v1202, 16
        %v1205 = vand.u32 %v1201, 65535
        %v1206 = vshrl.u32 %v1201, 16
        %v1207 = vmul.u32 %v1203, %v1205
        %v1208 = vmul.u32 %v1203, %v1206
        %v1209 = vmul.u32 %v1204, %v1205
        %v1210 = vmul.u32 %v1204, %v1206
        %v1211 = vshll.u32 %v1208, 16
        %v1212 = vshrl.u32 %v1208, 16
        %v1213 = vshll.u32 %v1209, 16
        %v1214 = vshrl.u32 %v1209, 16
        %vm1215 = vc.u32 %v1207, %v1211
        %v1216 = vsel %vm1215, 1, 0
        %v1217 = vadd.s32 %v1207, %v1211
        %v1218 = vadd.s32 %v1210, %v1216
        %vm1219 = vc.u32 %v1217, %v1213
        %v1220 = vsel %vm1219, 1, 0
        %v1221 = vadd.s32 %v1217, %v1213
        %v1222 = vadd.s32 %v1218, %v1220
        %v1223 = vadd.s32 %v1222, %v1212
        %v1224 = vadd.s32 %v1223, %v1214
        %v1225 = vand.u32 %v1202, 65535
        %v1226 = vshrl.u32 %v1202, 16
        %v1227 = vand.u32 %v1197, 65535
        %v1228 = vshrl.u32 %v1197, 16
        %v1229 = vmul.u32 %v1225, %v1227
        %v1230 = vmul.u32 %v1225, %v1228
        %v1231 = vmul.u32 %v1226, %v1227
        %v1232 = vmul.u32 %v1226, %v1228
        %v1233 = vshll.u32 %v1230, 16
        %v1234 = vshrl.u32 %v1230, 16
        %v1235 = vshll.u32 %v1231, 16
        %v1236 = vshrl.u32 %v1231, 16
        %vm1237 = vc.u32 %v1229, %v1233
        %v1238 = vsel %vm1237, 1, 0
        %v1239 = vadd.s32 %v1229, %v1233
        %v1240 = vadd.s32 %v1232, %v1238
        %vm1241 = vc.u32 %v1239, %v1235
        %v1242 = vsel %vm1241, 1, 0
        %v1243 = vadd.s32 %v1239, %v1235
        %v1244 = vadd.s32 %v1240, %v1242
        %v1245 = vadd.s32 %v1244, %v1234
        %v1246 = vadd.s32 %v1245, %v1236
        %v1247 = vmul.u32 %v1202, %v1193
        %v1248 = vadd.s32 %v1224, %v1243
        %vm1249 = vc.u32 %v1224, %v1243
        %v1250 = vadd.s32 %v1246, 1
        %v1251 = vsel %vm1249, %v1250, %v1246
        %v1252 = vadd.s32 %v1247, %v1251
        %v1253 = vadd.s32 %v1252, 536870912
        %v1254 = vshrl.u32 %v1253, 30
        %v1255 = vshll.u32 %v1254, 30
        %v1256 = vsub.s32 %v1252, %v1255
        %vm1257 = vcmp.lt.s32.totalorder %v1256, 0
        %v1258 = vsub.s32 0, %v1256
        %v1259 = vsel %vm1257, %v1258, %v1256
        %v1260 = vclz %v1259
        %v1261 = vsub.s32 %v1260, 2
        %vm1262 = vcmp.gt.s32.totalorder 0, %v1261
        %v1263 = vsel %vm1262, 0, %v1261
        %v1264 = vsub.s32 32, %v1263
        %v1265 = vshll.u32 %v1256, %v1263
        %v1266 = vshrl.u32 %v1248, %v1264
        %v1267 = vor.u32 %v1265, %v1266
        %v1268 = vsub.s32 4294967266, %v1263
        %v1269 = vadd.s32 %v1268, 127
        %v1270 = vshll.u32 %v1269, 23
        %v1271 = vor.u32 4788187, %v1270
        %v1272 = vand.u32 2147483647, %v1271
        %v1274 = vcvt.s32.f32 %v1267
        %v1275 = vmul.f32 %v1274, %v1272
        %v1276 = vxor.u32 %v1275, 2147483648
        %v1277 = vsel %vm1156, %v1276, %v1275
        %v1278 = vsub.s32 4, %v1254
        %v1279 = vsel %vm1156, %v1278, %v1254
        %v1280 = vsel %vm1155, %v663, %v1277
        %v1281 = vsel %vm1155, 0, %v1279
        %v1282 = vmul.f32 %v1280, %v1280
        %v1283 = vmul.f32 %v1282, -0.001358992
        %v1284 = vadd.f32 %v1283, 0.041655596
        %v1285 = vmul.f32 %v1282, %v1284
        %v1286 = vadd.f32 %v1285, -0.4999988
        %v1287 = vmul.f32 %v1282, %v1286
        %v1288 = vadd.f32 1.0, %v1287
        %v1289 = vmul.f32 %v1280, %v1280
        %v1290 = vmul.f32 %v1289, -0.00019511016
        %v1291 = vadd.f32 %v1290, 0.008332121
        %v1292 = vmul.f32 %v1289, %v1291
        %v1293 = vadd.f32 %v1292, -0.16666654
        %v1294 = vmul.f32 %v1289, %v1293
        %v1295 = vadd.f32 %v1294, 1.0
        %v1296 = vmul.f32 %v1295, %v1280
        %vm1297 = vweird.f32 %v663
        %v1298 = vand.u32 %v1281, 3
        %vm1299 = vcmp.lt.s32.totalorder %v1298, 2
        %vm1300 = vcmp.eq.s32.totalorder %v1298, 0
        %v1301 = vxor.u32 %v1296, 2147483648
        %v1302 = vsel %vm1300, %v1288, %v1301
        %vm1303 = vcmp.eq.s32.totalorder %v1298, 2
        %v1304 = vxor.u32 %v1288, 2147483648
        %v1305 = vsel %vm1303, %v1304, %v1296
        %v1306 = vsel %vm1299, %v1302, %v1305
        %v1307 = vsel %vm1297, nan, %v1306
        %v1308 = vand.u32 2147483647, %v664
        %vm1309 = vcmp.le.f32.partialorder %v1308, 0.7853982
        %vm1310 = vcmp.lt.s32.totalorder %v664, 0
        %v1311 = vand.u32 %v664, 2139095040
        %v1312 = vshrl.u32 %v1311, 23
        %v1313 = vsub.s32 %v1312, 127
        %v1314 = vand.u32 2147483647, %v664
        %v1315 = vand.u32 %v1314, 8388607
        %v1316 = vor.u32 %v1315, 8388608
        %v1317 = vsub.s32 0, %v1316
        %v1318 = vadd.s32 %v1313, 1
        %vm1319 = vcmp.gt.s32.totalorder %v1318, 0
        %v1320 = vsel %vm1319, %v1318, 0
        %v1321 = vshrl.u32 %v1320, 5
        %v1322 = vand.u32 %v1320, 31
        %v1323 = vsub.s32 32, %v1322
        %v1324 = vshrl.u32 683565275, %v1323
        %v1325 = vshll.u32 683565275, %v1322
        %v1326 = vshrl.u32 2475754826, %v1323
        %v1327 = vor.u32 %v1325, %v1326
        %v1328 = vshll.u32 2475754826, %v1322
        %v1329 = vshrl.u32 2131351028, %v1323
        %v1330 = vor.u32 %v1328, %v1329
        %v1331 = vshll.u32 2131351028, %v1322
        %v1332 = vshrl.u32 2102212464, %v1323
        %v1333 = vor.u32 %v1331, %v1332
        %v1334 = vshll.u32 2102212464, %v1322
        %v1335 = vshrl.u32 920167782, %v1323
        %v1336 = vor.u32 %v1334, %v1335
        %v1337 = vshll.u32 920167782, %v1322
        %v1338 = vshrl.u32 1326507024, %v1323
        %v1339 = vor.u32 %v1337, %v1338
        %vm1340 = vcmp.lt.s32.totalorder %v1321, 1
        %vm1341 = vcmp.lt.s32.totalorder %v1321, 2
        %vm1342 = vcmp.lt.s32.totalorder %v1321, 3
        %vm1343 = vcmp.lt.s32.totalorder %v1321, 4
        %v1344 = vsel %vm1340, %v1324, %v1327
        %v1345 = vsel %vm1343, %v1333, 2102212464
        %v1346 = vsel %vm1342, %v1330, %v1345
        %v1347 = vsel %vm1341, %v1344, %v1346
        %v1348 = vsel %vm1340, %v1327, %v1330
        %v1349 = vsel %vm1343, %v1336, 920167782
        %v1350 = vsel %vm1342, %v1333, %v1349
        %v1351 = vsel %vm1341, %v1348, %v1350
        %v1352 = vsel %vm1340, %v1330, %v1333
        %v1353 = vsel %vm1343, %v1339, 1326507024
        %v1354 = vsel %vm1342, %v1336, %v1353
        %v1355 = vsel %vm1341, %v1352, %v1354
        %v1356 = vshll.u32 %v1316, 8
        %v1357 = vand.u32 %v1356, 65535
        %v1358 = vshrl.u32 %v1356, 16
        %v1359 = vand.u32 %v1355, 65535
        %v1360 = vshrl.u32 %v1355, 16
        %v1361 = vmul.u32 %v1357, %v1359
        %v1362 = vmul.u32 %v1357, %v1360
        %v1363 = vmul.u32 %v1358, %v1359
        %v1364 = vmul.u32 %v1358, %v1360
        %v1365 = vshll.u32 %v1362, 16
        %v1366 = vshrl.u32 %v1362, 16
        %v1367 = vshll.u32 %v1363, 16
        %v1368 = vshrl.u32 %v1363, 16
        %vm1369 = vc.u32 %v1361, %v1365
        %v1370 = vsel %vm1369, 1, 0
        %v1371 = vadd.s32 %v1361, %v1365
        %v1372 = vadd.s32 %v1364, %v1370
        %vm1373 = vc.u32 %v1371, %v1367
        %v1374 = vsel %vm1373, 1, 0
        %v1375 = vadd.s32 %v1371, %v1367
        %v1376 = vadd.s32 %v1372, %v1374
        %v1377 = vadd.s32 %v1376, %v1366
        %v1378 = vadd.s32 %v1377, %v1368
        %v1379 = vand.u32 %v1356, 65535
        %v1380 = vshrl.u32 %v1356, 16
        %v1381 = vand.u32 %v1351, 65535
        %v1382 = vshrl.u32 %v1351, 16
        %v1383 = vmul.u32 %v1379, %v1381
        %v1384 = vmul.u32 %v1379, %v1382
        %v1385 = vmul.u32 %v1380, %v1381
        %v1386 = vmul.u32 %v1380, %v1382
        %v1387 = vshll.u32 %v1384, 16
        %v1388 = vshrl.u32 %v1384, 16
        %v1389 = vshll.u32 %v1385, 16
        %v1390 = vshrl.u32 %v1385, 16
        %vm1391 = vc.u32 %v1383, %v1387
        %v1392 = vsel %vm1391, 1, 0
        %v1393 = vadd.s32 %v1383, %v1387
        %v1394 = vadd.s32 %v1386, %v1392
        %vm1395 = vc.u32 %v1393, %v1389
        %v1396 = vsel %vm1395, 1, 0
        %v1397 = vadd.s32 %v1393, %v1389
        %v1398 = vadd.s32 %v1394, %v1396
        %v1399 = vadd.s32 %v1398, %v1388
        %v1400 = vadd.s32 %v1399, %v1390
        %v1401 = vmul.u32 %v1356, %v1347
        %v1402 = vadd.s32 %v1378, %v1397
        %vm1403 = vc.u32 %v1378, %v1397
        %v1404 = vadd.s32 %v1400, 1
        %v1405 = vsel %vm1403, %v1404, %v1400
        %v1406 = vadd.s32 %v1401, %v1405
        %v1407 = vadd.s32 %v1406, 536870912
        %v1408 = vshrl.u32 %v1407, 30
        %v1409 = vshll.u32 %v1408, 30
        %v1410 = vsub.s32 %v1406, %v1409
        %vm1411 = vcmp.lt.s32.totalorder %v1410, 0
        %v1412 = vsub.s32 0, %v1410
        %v1413 = vsel %vm1411, %v1412, %v1410
        %v1414 = vclz %v1413
        %v1415 = vsub.s32 %v1414, 2
        %vm1416 = vcmp.gt.s32.totalorder 0, %v1415
        %v1417 = vsel %vm1416, 0, %v1415
        %v1418 = vsub.s32 32, %v1417
        %v1419 = vshll.u32 %v1410, %v1417
        %v1420 = vshrl.u32 %v1402, %v1418
        %v1421 = vor.u32 %v1419, %v1420
        %v1422 = vsub.s32 4294967266, %v1417
        %v1423 = vadd.s32 %v1422, 127
        %v1424 = vshll.u32 %v1423, 23
        %v1425 = vor.u32 4788187, %v1424
        %v1426 = vand.u32 2147483647, %v1425
        %v1428 = vcvt.s32.f32 %v1421
        %v1429 = vmul.f32 %v1428, %v1426
        %v1430 = vxor.u32 %v1429, 2147483648
        %v1431 = vsel %vm1310, %v1430, %v1429
        %v1432 = vsub.s32 4, %v1408
        %v1433 = vsel %vm1310, %v1432, %v1408
        %v1434 = vsel %vm1309, %v664, %v1431
        %v1435 = vsel %vm1309, 0, %v1433
        %v1436 = vmul.f32 %v1434, %v1434
        %v1437 = vmul.f32 %v1436, -0.001358992
        %v1438 = vadd.f32 %v1437, 0.041655596
        %v1439 = vmul.f32 %v1436, %v1438
        %v1440 = vadd.f32 %v1439, -0.4999988
        %v1441 = vmul.f32 %v1436, %v1440
        %v1442 = vadd.f32 1.0, %v1441
        %v1443 = vmul.f32 %v1434, %v1434
        %v1444 = vmul.f32 %v1443, -0.00019511016
        %v1445 = vadd.f32 %v1444, 0.008332121
        %v1446 = vmul.f32 %v1443, %v1445
        %v1447 = vadd.f32 %v1446, -0.16666654
        %v1448 = vmul.f32 %v1443, %v1447
        %v1449 = vadd.f32 %v1448, 1.0
        %v1450 = vmul.f32 %v1449, %v1434
        %vm1451 = vweird.f32 %v664
        %v1452 = vand.u32 %v1435, 3
        %vm1453 = vcmp.lt.s32.totalorder %v1452, 2
        %vm1454 = vcmp.eq.s32.totalorder %v1452, 0
        %v1455 = vxor.u32 %v1450, 2147483648
        %v1456 = vsel %vm1454, %v1442, %v1455
        %vm1457 = vcmp.eq.s32.totalorder %v1452, 2
        %v1458 = vxor.u32 %v1442, 2147483648
        %v1459 = vsel %vm1457, %v1458, %v1450
        %v1460 = vsel %vm1453, %v1456, %v1459
        %v1461 = vsel %vm1451, nan, %v1460
        %v1462 = vand.u32 2147483647, %v665
        %vm1463 = vcmp.le.f32.partialorder %v1462, 0.7853982
        %vm1464 = vcmp.lt.s32.totalorder %v665, 0
        %v1465 = vand.u32 %v665, 2139095040
        %v1466 = vshrl.u32 %v1465, 23
        %v1467 = vsub.s32 %v1466, 127
        %v1468 = vand.u32 2147483647, %v665
        %v1469 = vand.u32 %v1468, 8388607
        %v1470 = vor.u32 %v1469, 8388608
        %v1471 = vsub.s32 0, %v1470
        %v1472 = vadd.s32 %v1467, 1
        %vm1473 = vcmp.gt.s32.totalorder %v1472, 0
        %v1474 = vsel %vm1473, %v1472, 0
        %v1475 = vshrl.u32 %v1474, 5
        %v1476 = vand.u32 %v1474, 31
        %v1477 = vsub.s32 32, %v1476
        %v1478 = vshrl.u32 683565275, %v1477
        %v1479 = vshll.u32 683565275, %v1476
        %v1480 = vshrl.u32 2475754826, %v1477
        %v1481 = vor.u32 %v1479, %v1480
        %v1482 = vshll.u32 2475754826, %v1476
        %v1483 = vshrl.u32 2131351028, %v1477
        %v1484 = vor.u32 %v1482, %v1483
        %v1485 = vshll.u32 2131351028, %v1476
        %v1486 = vshrl.u32 2102212464, %v1477
        %v1487 = vor.u32 %v1485, %v1486
        %v1488 = vshll.u32 2102212464, %v1476
        %v1489 = vshrl.u32 920167782, %v1477
        %v1490 = vor.u32 %v1488, %v1489
        %v1491 = vshll.u32 920167782, %v1476
        %v1492 = vshrl.u32 1326507024, %v1477
        %v1493 = vor.u32 %v1491, %v1492
        %vm1494 = vcmp.lt.s32.totalorder %v1475, 1
        %vm1495 = vcmp.lt.s32.totalorder %v1475, 2
        %vm1496 = vcmp.lt.s32.totalorder %v1475, 3
        %vm1497 = vcmp.lt.s32.totalorder %v1475, 4
        %v1498 = vsel %vm1494, %v1478, %v1481
        %v1499 = vsel %vm1497, %v1487, 2102212464
        %v1500 = vsel %vm1496, %v1484, %v1499
        %v1501 = vsel %vm1495, %v1498, %v1500
        %v1502 = vsel %vm1494, %v1481, %v1484
        %v1503 = vsel %vm1497, %v1490, 920167782
        %v1504 = vsel %vm1496, %v1487, %v1503
        %v1505 = vsel %vm1495, %v1502, %v1504
        %v1506 = vsel %vm1494, %v1484, %v1487
        %v1507 = vsel %vm1497, %v1493, 1326507024
        %v1508 = vsel %vm1496, %v1490, %v1507
        %v1509 = vsel %vm1495, %v1506, %v1508
        %v1510 = vshll.u32 %v1470, 8
        %v1511 = vand.u32 %v1510, 65535
        %v1512 = vshrl.u32 %v1510, 16
        %v1513 = vand.u32 %v1509, 65535
        %v1514 = vshrl.u32 %v1509, 16
        %v1515 = vmul.u32 %v1511, %v1513
        %v1516 = vmul.u32 %v1511, %v1514
        %v1517 = vmul.u32 %v1512, %v1513
        %v1518 = vmul.u32 %v1512, %v1514
        %v1519 = vshll.u32 %v1516, 16
        %v1520 = vshrl.u32 %v1516, 16
        %v1521 = vshll.u32 %v1517, 16
        %v1522 = vshrl.u32 %v1517, 16
        %vm1523 = vc.u32 %v1515, %v1519
        %v1524 = vsel %vm1523, 1, 0
        %v1525 = vadd.s32 %v1515, %v1519
        %v1526 = vadd.s32 %v1518, %v1524
        %vm1527 = vc.u32 %v1525, %v1521
        %v1528 = vsel %vm1527, 1, 0
        %v1529 = vadd.s32 %v1525, %v1521
        %v1530 = vadd.s32 %v1526, %v1528
        %v1531 = vadd.s32 %v1530, %v1520
        %v1532 = vadd.s32 %v1531, %v1522
        %v1533 = vand.u32 %v1510, 65535
        %v1534 = vshrl.u32 %v1510, 16
        %v1535 = vand.u32 %v1505, 65535
        %v1536 = vshrl.u32 %v1505, 16
        %v1537 = vmul.u32 %v1533, %v1535
        %v1538 = vmul.u32 %v1533, %v1536
        %v1539 = vmul.u32 %v1534, %v1535
        %v1540 = vmul.u32 %v1534, %v1536
        %v1541 = vshll.u32 %v1538, 16
        %v1542 = vshrl.u32 %v1538, 16
        %v1543 = vshll.u32 %v1539, 16
        %v1544 = vshrl.u32 %v1539, 16
        %vm1545 = vc.u32 %v1537, %v1541
        %v1546 = vsel %vm1545, 1, 0
        %v1547 = vadd.s32 %v1537, %v1541
        %v1548 = vadd.s32 %v1540, %v1546
        %vm1549 = vc.u32 %v1547, %v1543
        %v1550 = vsel %vm1549, 1, 0
        %v1551 = vadd.s32 %v1547, %v1543
        %v1552 = vadd.s32 %v1548, %v1550
        %v1553 = vadd.s32 %v1552, %v1542
        %v1554 = vadd.s32 %v1553, %v1544
        %v1555 = vmul.u32 %v1510, %v1501
        %v1556 = vadd.s32 %v1532, %v1551
        %vm1557 = vc.u32 %v1532, %v1551
        %v1558 = vadd.s32 %v1554, 1
        %v1559 = vsel %vm1557, %v1558, %v1554
        %v1560 = vadd.s32 %v1555, %v1559
        %v1561 = vadd.s32 %v1560, 536870912
        %v1562 = vshrl.u32 %v1561, 30
        %v1563 = vshll.u32 %v1562, 30
        %v1564 = vsub.s32 %v1560, %v1563
        %vm1565 = vcmp.lt.s32.totalorder %v1564, 0
        %v1566 = vsub.s32 0, %v1564
        %v1567 = vsel %vm1565, %v1566, %v1564
        %v1568 = vclz %v1567
        %v1569 = vsub.s32 %v1568, 2
        %vm1570 = vcmp.gt.s32.totalorder 0, %v1569
        %v1571 = vsel %vm1570, 0, %v1569
        %v1572 = vsub.s32 32, %v1571
        %v1573 = vshll.u32 %v1564, %v1571
        %v1574 = vshrl.u32 %v1556, %v1572
        %v1575 = vor.u32 %v1573, %v1574
        %v1576 = vsub.s32 4294967266, %v1571
        %v1577 = vadd.s32 %v1576, 127
        %v1578 = vshll.u32 %v1577, 23
        %v1579 = vor.u32 4788187, %v1578
        %v1580 = vand.u32 2147483647, %v1579
        %v1582 = vcvt.s32.f32 %v1575
        %v1583 = vmul.f32 %v1582, %v1580
        %v1584 = vxor.u32 %v1583, 2147483648
        %v1585 = vsel %vm1464, %v1584, %v1583
        %v1586 = vsub.s32 4, %v1562
        %v1587 = vsel %vm1464, %v1586, %v1562
        %v1588 = vsel %vm1463, %v665, %v1585
        %v1589 = vsel %vm1463, 0, %v1587
        %v1590 = vmul.f32 %v1588, %v1588
        %v1591 = vmul.f32 %v1590, -0.001358992
        %v1592 = vadd.f32 %v1591, 0.041655596
        %v1593 = vmul.f32 %v1590, %v1592
        %v1594 = vadd.f32 %v1593, -0.4999988
        %v1595 = vmul.f32 %v1590, %v1594
        %v1596 = vadd.f32 1.0, %v1595
        %v1597 = vmul.f32 %v1588, %v1588
        %v1598 = vmul.f32 %v1597, -0.00019511016
        %v1599 = vadd.f32 %v1598, 0.008332121
        %v1600 = vmul.f32 %v1597, %v1599
        %v1601 = vadd.f32 %v1600, -0.16666654
        %v1602 = vmul.f32 %v1597, %v1601
        %v1603 = vadd.f32 %v1602, 1.0
        %v1604 = vmul.f32 %v1603, %v1588
        %vm1605 = vweird.f32 %v665
        %v1606 = vand.u32 %v1589, 3
        %vm1607 = vcmp.lt.s32.totalorder %v1606, 2
        %vm1608 = vcmp.eq.s32.totalorder %v1606, 0
        %v1609 = vxor.u32 %v1604, 2147483648
        %v1610 = vsel %vm1608, %v1596, %v1609
        %vm1611 = vcmp.eq.s32.totalorder %v1606, 2
        %v1612 = vxor.u32 %v1596, 2147483648
        %v1613 = vsel %vm1611, %v1612, %v1604
        %v1614 = vsel %vm1607, %v1610, %v1613
        %v1615 = vsel %vm1605, nan, %v1614
        %v1616 = vand.u32 2147483647, %v666
        %vm1617 = vcmp.le.f32.partialorder %v1616, 0.7853982
        %vm1618 = vcmp.lt.s32.totalorder %v666, 0
        %v1619 = vand.u32 %v666, 2139095040
        %v1620 = vshrl.u32 %v1619, 23
        %v1621 = vsub.s32 %v1620, 127
        %v1622 = vand.u32 2147483647, %v666
        %v1623 = vand.u32 %v1622, 8388607
        %v1624 = vor.u32 %v1623, 8388608
        %v1625 = vsub.s32 0, %v1624
        %v1626 = vadd.s32 %v1621, 1
        %vm1627 = vcmp.gt.s32.totalorder %v1626, 0
        %v1628 = vsel %vm1627, %v1626, 0
        %v1629 = vshrl.u32 %v1628, 5
        %v1630 = vand.u32 %v1628, 31
        %v1631 = vsub.s32 32, %v1630
        %v1632 = vshrl.u32 683565275, %v1631
        %v1633 = vshll.u32 683565275, %v1630
        %v1634 = vshrl.u32 2475754826, %v1631
        %v1635 = vor.u32 %v1633, %v1634
        %v1636 = vshll.u32 2475754826, %v1630
        %v1637 = vshrl.u32 2131351028, %v1631
        %v1638 = vor.u32 %v1636, %v1637
        %v1639 = vshll.u32 2131351028, %v1630
        %v1640 = vshrl.u32 2102212464, %v1631
        %v1641 = vor.u32 %v1639, %v1640
        %v1642 = vshll.u32 2102212464, %v1630
        %v1643 = vshrl.u32 920167782, %v1631
        %v1644 = vor.u32 %v1642, %v1643
        %v1645 = vshll.u32 920167782, %v1630
        %v1646 = vshrl.u32 1326507024, %v1631
        %v1647 = vor.u32 %v1645, %v1646
        %vm1648 = vcmp.lt.s32.totalorder %v1629, 1
        %vm1649 = vcmp.lt.s32.totalorder %v1629, 2
        %vm1650 = vcmp.lt.s32.totalorder %v1629, 3
        %vm1651 = vcmp.lt.s32.totalorder %v1629, 4
        %v1652 = vsel %vm1648, %v1632, %v1635
        %v1653 = vsel %vm1651, %v1641, 2102212464
        %v1654 = vsel %vm1650, %v1638, %v1653
        %v1655 = vsel %vm1649, %v1652, %v1654
        %v1656 = vsel %vm1648, %v1635, %v1638
        %v1657 = vsel %vm1651, %v1644, 920167782
        %v1658 = vsel %vm1650, %v1641, %v1657
        %v1659 = vsel %vm1649, %v1656, %v1658
        %v1660 = vsel %vm1648, %v1638, %v1641
        %v1661 = vsel %vm1651, %v1647, 1326507024
        %v1662 = vsel %vm1650, %v1644, %v1661
        %v1663 = vsel %vm1649, %v1660, %v1662
        %v1664 = vshll.u32 %v1624, 8
        %v1665 = vand.u32 %v1664, 65535
        %v1666 = vshrl.u32 %v1664, 16
        %v1667 = vand.u32 %v1663, 65535
        %v1668 = vshrl.u32 %v1663, 16
        %v1669 = vmul.u32 %v1665, %v1667
        %v1670 = vmul.u32 %v1665, %v1668
        %v1671 = vmul.u32 %v1666, %v1667
        %v1672 = vmul.u32 %v1666, %v1668
        %v1673 = vshll.u32 %v1670, 16
        %v1674 = vshrl.u32 %v1670, 16
        %v1675 = vshll.u32 %v1671, 16
        %v1676 = vshrl.u32 %v1671, 16
        %vm1677 = vc.u32 %v1669, %v1673
        %v1678 = vsel %vm1677, 1, 0
        %v1679 = vadd.s32 %v1669, %v1673
        %v1680 = vadd.s32 %v1672, %v1678
        %vm1681 = vc.u32 %v1679, %v1675
        %v1682 = vsel %vm1681, 1, 0
        %v1683 = vadd.s32 %v1679, %v1675
        %v1684 = vadd.s32 %v1680, %v1682
        %v1685 = vadd.s32 %v1684, %v1674
        %v1686 = vadd.s32 %v1685, %v1676
        %v1687 = vand.u32 %v1664, 65535
        %v1688 = vshrl.u32 %v1664, 16
        %v1689 = vand.u32 %v1659, 65535
        %v1690 = vshrl.u32 %v1659, 16
        %v1691 = vmul.u32 %v1687, %v1689
        %v1692 = vmul.u32 %v1687, %v1690
        %v1693 = vmul.u32 %v1688, %v1689
        %v1694 = vmul.u32 %v1688, %v1690
        %v1695 = vshll.u32 %v1692, 16
        %v1696 = vshrl.u32 %v1692, 16
        %v1697 = vshll.u32 %v1693, 16
        %v1698 = vshrl.u32 %v1693, 16
        %vm1699 = vc.u32 %v1691, %v1695
        %v1700 = vsel %vm1699, 1, 0
        %v1701 = vadd.s32 %v1691, %v1695
        %v1702 = vadd.s32 %v1694, %v1700
        %vm1703 = vc.u32 %v1701, %v1697
        %v1704 = vsel %vm1703, 1, 0
        %v1705 = vadd.s32 %v1701, %v1697
        %v1706 = vadd.s32 %v1702, %v1704
        %v1707 = vadd.s32 %v1706, %v1696
        %v1708 = vadd.s32 %v1707, %v1698
        %v1709 = vmul.u32 %v1664, %v1655
        %v1710 = vadd.s32 %v1686, %v1705
        %vm1711 = vc.u32 %v1686, %v1705
        %v1712 = vadd.s32 %v1708, 1
        %v1713 = vsel %vm1711, %v1712, %v1708
        %v1714 = vadd.s32 %v1709, %v1713
        %v1715 = vadd.s32 %v1714, 536870912
        %v1716 = vshrl.u32 %v1715, 30
        %v1717 = vshll.u32 %v1716, 30
        %v1718 = vsub.s32 %v1714, %v1717
        %vm1719 = vcmp.lt.s32.totalorder %v1718, 0
        %v1720 = vsub.s32 0, %v1718
        %v1721 = vsel %vm1719, %v1720, %v1718
        %v1722 = vclz %v1721
        %v1723 = vsub.s32 %v1722, 2
        %vm1724 = vcmp.gt.s32.totalorder 0, %v1723
        %v1725 = vsel %vm1724, 0, %v1723
        %v1726 = vsub.s32 32, %v1725
        %v1727 = vshll.u32 %v1718, %v1725
        %v1728 = vshrl.u32 %v1710, %v1726
        %v1729 = vor.u32 %v1727, %v1728
        %v1730 = vsub.s32 4294967266, %v1725
        %v1731 = vadd.s32 %v1730, 127
        %v1732 = vshll.u32 %v1731, 23
        %v1733 = vor.u32 4788187, %v1732
        %v1734 = vand.u32 2147483647, %v1733
        %v1736 = vcvt.s32.f32 %v1729
        %v1737 = vmul.f32 %v1736, %v1734
        %v1738 = vxor.u32 %v1737, 2147483648
        %v1739 = vsel %vm1618, %v1738, %v1737
        %v1740 = vsub.s32 4, %v1716
        %v1741 = vsel %vm1618, %v1740, %v1716
        %v1742 = vsel %vm1617, %v666, %v1739
        %v1743 = vsel %vm1617, 0, %v1741
        %v1744 = vmul.f32 %v1742, %v1742
        %v1745 = vmul.f32 %v1744, -0.001358992
        %v1746 = vadd.f32 %v1745, 0.041655596
        %v1747 = vmul.f32 %v1744, %v1746
        %v1748 = vadd.f32 %v1747, -0.4999988
        %v1749 = vmul.f32 %v1744, %v1748
        %v1750 = vadd.f32 1.0, %v1749
        %v1751 = vmul.f32 %v1742, %v1742
        %v1752 = vmul.f32 %v1751, -0.00019511016
        %v1753 = vadd.f32 %v1752, 0.008332121
        %v1754 = vmul.f32 %v1751, %v1753
        %v1755 = vadd.f32 %v1754, -0.16666654
        %v1756 = vmul.f32 %v1751, %v1755
        %v1757 = vadd.f32 %v1756, 1.0
        %v1758 = vmul.f32 %v1757, %v1742
        %vm1759 = vweird.f32 %v666
        %v1760 = vand.u32 %v1743, 3
        %vm1761 = vcmp.lt.s32.totalorder %v1760, 2
        %vm1762 = vcmp.eq.s32.totalorder %v1760, 0
        %v1763 = vxor.u32 %v1758, 2147483648
        %v1764 = vsel %vm1762, %v1750, %v1763
        %vm1765 = vcmp.eq.s32.totalorder %v1760, 2
        %v1766 = vxor.u32 %v1750, 2147483648
        %v1767 = vsel %vm1765, %v1766, %v1758
        %v1768 = vsel %vm1761, %v1764, %v1767
        %v1769 = vsel %vm1759, nan, %v1768
        %v1770 = vand.u32 2147483647, %v667
        %vm1771 = vcmp.le.f32.partialorder %v1770, 0.7853982
        %vm1772 = vcmp.lt.s32.totalorder %v667, 0
        %v1773 = vand.u32 %v667, 2139095040
        %v1774 = vshrl.u32 %v1773, 23
        %v1775 = vsub.s32 %v1774, 127
        %v1776 = vand.u32 2147483647, %v667
        %v1777 = vand.u32 %v1776, 8388607
        %v1778 = vor.u32 %v1777, 8388608
        %v1779 = vsub.s32 0, %v1778
        %v1780 = vadd.s32 %v1775, 1
        %vm1781 = vcmp.gt.s32.totalorder %v1780, 0
        %v1782 = vsel %vm1781, %v1780, 0
        %v1783 = vshrl.u32 %v1782, 5
        %v1784 = vand.u32 %v1782, 31
        %v1785 = vsub.s32 32, %v1784
        %v1786 = vshrl.u32 683565275, %v1785
        %v1787 = vshll.u32 683565275, %v1784
        %v1788 = vshrl.u32 2475754826, %v1785
        %v1789 = vor.u32 %v1787, %v1788
        %v1790 = vshll.u32 2475754826, %v1784
        %v1791 = vshrl.u32 2131351028, %v1785
        %v1792 = vor.u32 %v1790, %v1791
        %v1793 = vshll.u32 2131351028, %v1784
        %v1794 = vshrl.u32 2102212464, %v1785
        %v1795 = vor.u32 %v1793, %v1794
        %v1796 = vshll.u32 2102212464, %v1784
        %v1797 = vshrl.u32 920167782, %v1785
        %v1798 = vor.u32 %v1796, %v1797
        %v1799 = vshll.u32 920167782, %v1784
        %v1800 = vshrl.u32 1326507024, %v1785
        %v1801 = vor.u32 %v1799, %v1800
        %vm1802 = vcmp.lt.s32.totalorder %v1783, 1
        %vm1803 = vcmp.lt.s32.totalorder %v1783, 2
        %vm1804 = vcmp.lt.s32.totalorder %v1783, 3
        %vm1805 = vcmp.lt.s32.totalorder %v1783, 4
        %v1806 = vsel %vm1802, %v1786, %v1789
        %v1807 = vsel %vm1805, %v1795, 2102212464
        %v1808 = vsel %vm1804, %v1792, %v1807
        %v1809 = vsel %vm1803, %v1806, %v1808
        %v1810 = vsel %vm1802, %v1789, %v1792
        %v1811 = vsel %vm1805, %v1798, 920167782
        %v1812 = vsel %vm1804, %v1795, %v1811
        %v1813 = vsel %vm1803, %v1810, %v1812
        %v1814 = vsel %vm1802, %v1792, %v1795
        %v1815 = vsel %vm1805, %v1801, 1326507024
        %v1816 = vsel %vm1804, %v1798, %v1815
        %v1817 = vsel %vm1803, %v1814, %v1816
        %v1818 = vshll.u32 %v1778, 8
        %v1819 = vand.u32 %v1818, 65535
        %v1820 = vshrl.u32 %v1818, 16
        %v1821 = vand.u32 %v1817, 65535
        %v1822 = vshrl.u32 %v1817, 16
        %v1823 = vmul.u32 %v1819, %v1821
        %v1824 = vmul.u32 %v1819, %v1822
        %v1825 = vmul.u32 %v1820, %v1821
        %v1826 = vmul.u32 %v1820, %v1822
        %v1827 = vshll.u32 %v1824, 16
        %v1828 = vshrl.u32 %v1824, 16
        %v1829 = vshll.u32 %v1825, 16
        %v1830 = vshrl.u32 %v1825, 16
        %vm1831 = vc.u32 %v1823, %v1827
        %v1832 = vsel %vm1831, 1, 0
        %v1833 = vadd.s32 %v1823, %v1827
        %v1834 = vadd.s32 %v1826, %v1832
        %vm1835 = vc.u32 %v1833, %v1829
        %v1836 = vsel %vm1835, 1, 0
        %v1837 = vadd.s32 %v1833, %v1829
        %v1838 = vadd.s32 %v1834, %v1836
        %v1839 = vadd.s32 %v1838, %v1828
        %v1840 = vadd.s32 %v1839, %v1830
        %v1841 = vand.u32 %v1818, 65535
        %v1842 = vshrl.u32 %v1818, 16
        %v1843 = vand.u32 %v1813, 65535
        %v1844 = vshrl.u32 %v1813, 16
        %v1845 = vmul.u32 %v1841, %v1843
        %v1846 = vmul.u32 %v1841, %v1844
        %v1847 = vmul.u32 %v1842, %v1843
        %v1848 = vmul.u32 %v1842, %v1844
        %v1849 = vshll.u32 %v1846, 16
        %v1850 = vshrl.u32 %v1846, 16
        %v1851 = vshll.u32 %v1847, 16
        %v1852 = vshrl.u32 %v1847, 16
        %vm1853 = vc.u32 %v1845, %v1849
        %v1854 = vsel %vm1853, 1, 0
        %v1855 = vadd.s32 %v1845, %v1849
        %v1856 = vadd.s32 %v1848, %v1854
        %vm1857 = vc.u32 %v1855, %v1851
        %v1858 = vsel %vm1857, 1, 0
        %v1859 = vadd.s32 %v1855, %v1851
        %v1860 = vadd.s32 %v1856, %v1858
        %v1861 = vadd.s32 %v1860, %v1850
        %v1862 = vadd.s32 %v1861, %v1852
        %v1863 = vmul.u32 %v1818, %v1809
        %v1864 = vadd.s32 %v1840, %v1859
        %vm1865 = vc.u32 %v1840, %v1859
        %v1866 = vadd.s32 %v1862, 1
        %v1867 = vsel %vm1865, %v1866, %v1862
        %v1868 = vadd.s32 %v1863, %v1867
        %v1869 = vadd.s32 %v1868, 536870912
        %v1870 = vshrl.u32 %v1869, 30
        %v1871 = vshll.u32 %v1870, 30
        %v1872 = vsub.s32 %v1868, %v1871
        %vm1873 = vcmp.lt.s32.totalorder %v1872, 0
        %v1874 = vsub.s32 0, %v1872
        %v1875 = vsel %vm1873, %v1874, %v1872
        %v1876 = vclz %v1875
        %v1877 = vsub.s32 %v1876, 2
        %vm1878 = vcmp.gt.s32.totalorder 0, %v1877
        %v1879 = vsel %vm1878, 0, %v1877
        %v1880 = vsub.s32 32, %v1879
        %v1881 = vshll.u32 %v1872, %v1879
        %v1882 = vshrl.u32 %v1864, %v1880
        %v1883 = vor.u32 %v1881, %v1882
        %v1884 = vsub.s32 4294967266, %v1879
        %v1885 = vadd.s32 %v1884, 127
        %v1886 = vshll.u32 %v1885, 23
        %v1887 = vor.u32 4788187, %v1886
        %v1888 = vand.u32 2147483647, %v1887
        %v1890 = vcvt.s32.f32 %v1883
        %v1891 = vmul.f32 %v1890, %v1888
        %v1892 = vxor.u32 %v1891, 2147483648
        %v1893 = vsel %vm1772, %v1892, %v1891
        %v1894 = vsub.s32 4, %v1870
        %v1895 = vsel %vm1772, %v1894, %v1870
        %v1896 = vsel %vm1771, %v667, %v1893
        %v1897 = vsel %vm1771, 0, %v1895
        %v1898 = vmul.f32 %v1896, %v1896
        %v1899 = vmul.f32 %v1898, -0.001358992
        %v1900 = vadd.f32 %v1899, 0.041655596
        %v1901 = vmul.f32 %v1898, %v1900
        %v1902 = vadd.f32 %v1901, -0.4999988
        %v1903 = vmul.f32 %v1898, %v1902
        %v1904 = vadd.f32 1.0, %v1903
        %v1905 = vmul.f32 %v1896, %v1896
        %v1906 = vmul.f32 %v1905, -0.00019511016
        %v1907 = vadd.f32 %v1906, 0.008332121
        %v1908 = vmul.f32 %v1905, %v1907
        %v1909 = vadd.f32 %v1908, -0.16666654
        %v1910 = vmul.f32 %v1905, %v1909
        %v1911 = vadd.f32 %v1910, 1.0
        %v1912 = vmul.f32 %v1911, %v1896
        %vm1913 = vweird.f32 %v667
        %v1914 = vand.u32 %v1897, 3
        %vm1915 = vcmp.lt.s32.totalorder %v1914, 2
        %vm1916 = vcmp.eq.s32.totalorder %v1914, 0
        %v1917 = vxor.u32 %v1912, 2147483648
        %v1918 = vsel %vm1916, %v1904, %v1917
        %vm1919 = vcmp.eq.s32.totalorder %v1914, 2
        %v1920 = vxor.u32 %v1904, 2147483648
        %v1921 = vsel %vm1919, %v1920, %v1912
        %v1922 = vsel %vm1915, %v1918, %v1921
        %v1923 = vsel %vm1913, nan, %v1922
        %v1924 = vand.u32 2147483647, %v668
        %vm1925 = vcmp.le.f32.partialorder %v1924, 0.7853982
        %vm1926 = vcmp.lt.s32.totalorder %v668, 0
        %v1927 = vand.u32 %v668, 2139095040
        %v1928 = vshrl.u32 %v1927, 23
        %v1929 = vsub.s32 %v1928, 127
        %v1930 = vand.u32 2147483647, %v668
        %v1931 = vand.u32 %v1930, 8388607
        %v1932 = vor.u32 %v1931, 8388608
        %v1933 = vsub.s32 0, %v1932
        %v1934 = vadd.s32 %v1929, 1
        %vm1935 = vcmp.gt.s32.totalorder %v1934, 0
        %v1936 = vsel %vm1935, %v1934, 0
        %v1937 = vshrl.u32 %v1936, 5
        %v1938 = vand.u32 %v1936, 31
        %v1939 = vsub.s32 32, %v1938
        %v1940 = vshrl.u32 683565275, %v1939
        %v1941 = vshll.u32 683565275, %v1938
        %v1942 = vshrl.u32 2475754826, %v1939
        %v1943 = vor.u32 %v1941, %v1942
        %v1944 = vshll.u32 2475754826, %v1938
        %v1945 = vshrl.u32 2131351028, %v1939
        %v1946 = vor.u32 %v1944, %v1945
        %v1947 = vshll.u32 2131351028, %v1938
        %v1948 = vshrl.u32 2102212464, %v1939
        %v1949 = vor.u32 %v1947, %v1948
        %v1950 = vshll.u32 2102212464, %v1938
        %v1951 = vshrl.u32 920167782, %v1939
        %v1952 = vor.u32 %v1950, %v1951
        %v1953 = vshll.u32 920167782, %v1938
        %v1954 = vshrl.u32 1326507024, %v1939
        %v1955 = vor.u32 %v1953, %v1954
        %vm1956 = vcmp.lt.s32.totalorder %v1937, 1
        %vm1957 = vcmp.lt.s32.totalorder %v1937, 2
        %vm1958 = vcmp.lt.s32.totalorder %v1937, 3
        %vm1959 = vcmp.lt.s32.totalorder %v1937, 4
        %v1960 = vsel %vm1956, %v1940, %v1943
        %v1961 = vsel %vm1959, %v1949, 2102212464
        %v1962 = vsel %vm1958, %v1946, %v1961
        %v1963 = vsel %vm1957, %v1960, %v1962
        %v1964 = vsel %vm1956, %v1943, %v1946
        %v1965 = vsel %vm1959, %v1952, 920167782
        %v1966 = vsel %vm1958, %v1949, %v1965
        %v1967 = vsel %vm1957, %v1964, %v1966
        %v1968 = vsel %vm1956, %v1946, %v1949
        %v1969 = vsel %vm1959, %v1955, 1326507024
        %v1970 = vsel %vm1958, %v1952, %v1969
        %v1971 = vsel %vm1957, %v1968, %v1970
        %v1972 = vshll.u32 %v1932, 8
        %v1973 = vand.u32 %v1972, 65535
        %v1974 = vshrl.u32 %v1972, 16
        %v1975 = vand.u32 %v1971, 65535
        %v1976 = vshrl.u32 %v1971, 16
        %v1977 = vmul.u32 %v1973, %v1975
        %v1978 = vmul.u32 %v1973, %v1976
        %v1979 = vmul.u32 %v1974, %v1975
        %v1980 = vmul.u32 %v1974, %v1976
        %v1981 = vshll.u32 %v1978, 16
        %v1982 = vshrl.u32 %v1978, 16
        %v1983 = vshll.u32 %v1979, 16
        %v1984 = vshrl.u32 %v1979, 16
        %vm1985 = vc.u32 %v1977, %v1981
        %v1986 = vsel %vm1985, 1, 0
        %v1987 = vadd.s32 %v1977, %v1981
        %v1988 = vadd.s32 %v1980, %v1986
        %vm1989 = vc.u32 %v1987, %v1983
        %v1990 = vsel %vm1989, 1, 0
        %v1991 = vadd.s32 %v1987, %v1983
        %v1992 = vadd.s32 %v1988, %v1990
        %v1993 = vadd.s32 %v1992, %v1982
        %v1994 = vadd.s32 %v1993, %v1984
        %v1995 = vand.u32 %v1972, 65535
        %v1996 = vshrl.u32 %v1972, 16
        %v1997 = vand.u32 %v1967, 65535
        %v1998 = vshrl.u32 %v1967, 16
        %v1999 = vmul.u32 %v1995, %v1997
        %v2000 = vmul.u32 %v1995, %v1998
        %v2001 = vmul.u32 %v1996, %v1997
        %v2002 = vmul.u32 %v1996, %v1998
        %v2003 = vshll.u32 %v2000, 16
        %v2004 = vshrl.u32 %v2000, 16
        %v2005 = vshll.u32 %v2001, 16
        %v2006 = vshrl.u32 %v2001, 16
        %vm2007 = vc.u32 %v1999, %v2003
        %v2008 = vsel %vm2007, 1, 0
        %v2009 = vadd.s32 %v1999, %v2003
        %v2010 = vadd.s32 %v2002, %v2008
        %vm2011 = vc.u32 %v2009, %v2005
        %v2012 = vsel %vm2011, 1, 0
        %v2013 = vadd.s32 %v2009, %v2005
        %v2014 = vadd.s32 %v2010, %v2012
        %v2015 = vadd.s32 %v2014, %v2004
        %v2016 = vadd.s32 %v2015, %v2006
        %v2017 = vmul.u32 %v1972, %v1963
        %v2018 = vadd.s32 %v1994, %v2013
        %vm2019 = vc.u32 %v1994, %v2013
        %v2020 = vadd.s32 %v2016, 1
        %v2021 = vsel %vm2019, %v2020, %v2016
        %v2022 = vadd.s32 %v2017, %v2021
        %v2023 = vadd.s32 %v2022, 536870912
        %v2024 = vshrl.u32 %v2023, 30
        %v2025 = vshll.u32 %v2024, 30
        %v2026 = vsub.s32 %v2022, %v2025
        %vm2027 = vcmp.lt.s32.totalorder %v2026, 0
        %v2028 = vsub.s32 0, %v2026
        %v2029 = vsel %vm2027, %v2028, %v2026
        %v2030 = vclz %v2029
        %v2031 = vsub.s32 %v2030, 2
        %vm2032 = vcmp.gt.s32.totalorder 0, %v2031
        %v2033 = vsel %vm2032, 0, %v2031
        %v2034 = vsub.s32 32, %v2033
        %v2035 = vshll.u32 %v2026, %v2033
        %v2036 = vshrl.u32 %v2018, %v2034
        %v2037 = vor.u32 %v2035, %v2036
        %v2038 = vsub.s32 4294967266, %v2033
        %v2039 = vadd.s32 %v2038, 127
        %v2040 = vshll.u32 %v2039, 23
        %v2041 = vor.u32 4788187, %v2040
        %v2042 = vand.u32 2147483647, %v2041
        %v2044 = vcvt.s32.f32 %v2037
        %v2045 = vmul.f32 %v2044, %v2042
        %v2046 = vxor.u32 %v2045, 2147483648
        %v2047 = vsel %vm1926, %v2046, %v2045
        %v2048 = vsub.s32 4, %v2024
        %v2049 = vsel %vm1926, %v2048, %v2024
        %v2050 = vsel %vm1925, %v668, %v2047
        %v2051 = vsel %vm1925, 0, %v2049
        %v2052 = vmul.f32 %v2050, %v2050
        %v2053 = vmul.f32 %v2052, -0.001358992
        %v2054 = vadd.f32 %v2053, 0.041655596
        %v2055 = vmul.f32 %v2052, %v2054
        %v2056 = vadd.f32 %v2055, -0.4999988
        %v2057 = vmul.f32 %v2052, %v2056
        %v2058 = vadd.f32 1.0, %v2057
        %v2059 = vmul.f32 %v2050, %v2050
        %v2060 = vmul.f32 %v2059, -0.00019511016
        %v2061 = vadd.f32 %v2060, 0.008332121
        %v2062 = vmul.f32 %v2059, %v2061
        %v2063 = vadd.f32 %v2062, -0.16666654
        %v2064 = vmul.f32 %v2059, %v2063
        %v2065 = vadd.f32 %v2064, 1.0
        %v2066 = vmul.f32 %v2065, %v2050
        %vm2067 = vweird.f32 %v668
        %v2068 = vand.u32 %v2051, 3
        %vm2069 = vcmp.lt.s32.totalorder %v2068, 2
        %vm2070 = vcmp.eq.s32.totalorder %v2068, 0
        %v2071 = vxor.u32 %v2066, 2147483648
        %v2072 = vsel %vm2070, %v2058, %v2071
        %vm2073 = vcmp.eq.s32.totalorder %v2068, 2
        %v2074 = vxor.u32 %v2058, 2147483648
        %v2075 = vsel %vm2073, %v2074, %v2066
        %v2076 = vsel %vm2069, %v2072, %v2075
        %v2077 = vsel %vm2067, nan, %v2076
        %v2078 = vand.u32 2147483647, %v669
        %vm2079 = vcmp.le.f32.partialorder %v2078, 0.7853982
        %vm2080 = vcmp.lt.s32.totalorder %v669, 0
        %v2081 = vand.u32 %v669, 2139095040
        %v2082 = vshrl.u32 %v2081, 23
        %v2083 = vsub.s32 %v2082, 127
        %v2084 = vand.u32 2147483647, %v669
        %v2085 = vand.u32 %v2084, 8388607
        %v2086 = vor.u32 %v2085, 8388608
        %v2087 = vsub.s32 0, %v2086
        %v2088 = vadd.s32 %v2083, 1
        %vm2089 = vcmp.gt.s32.totalorder %v2088, 0
        %v2090 = vsel %vm2089, %v2088, 0
        %v2091 = vshrl.u32 %v2090, 5
        %v2092 = vand.u32 %v2090, 31
        %v2093 = vsub.s32 32, %v2092
        %v2094 = vshrl.u32 683565275, %v2093
        %v2095 = vshll.u32 683565275, %v2092
        %v2096 = vshrl.u32 2475754826, %v2093
        %v2097 = vor.u32 %v2095, %v2096
        %v2098 = vshll.u32 2475754826, %v2092
        %v2099 = vshrl.u32 2131351028, %v2093
        %v2100 = vor.u32 %v2098, %v2099
        %v2101 = vshll.u32 2131351028, %v2092
        %v2102 = vshrl.u32 2102212464, %v2093
        %v2103 = vor.u32 %v2101, %v2102
        %v2104 = vshll.u32 2102212464, %v2092
        %v2105 = vshrl.u32 920167782, %v2093
        %v2106 = vor.u32 %v2104, %v2105
        %v2107 = vshll.u32 920167782, %v2092
        %v2108 = vshrl.u32 1326507024, %v2093
        %v2109 = vor.u32 %v2107, %v2108
        %vm2110 = vcmp.lt.s32.totalorder %v2091, 1
        %vm2111 = vcmp.lt.s32.totalorder %v2091, 2
        %vm2112 = vcmp.lt.s32.totalorder %v2091, 3
        %vm2113 = vcmp.lt.s32.totalorder %v2091, 4
        %v2114 = vsel %vm2110, %v2094, %v2097
        %v2115 = vsel %vm2113, %v2103, 2102212464
        %v2116 = vsel %vm2112, %v2100, %v2115
        %v2117 = vsel %vm2111, %v2114, %v2116
        %v2118 = vsel %vm2110, %v2097, %v2100
        %v2119 = vsel %vm2113, %v2106, 920167782
        %v2120 = vsel %vm2112, %v2103, %v2119
        %v2121 = vsel %vm2111, %v2118, %v2120
        %v2122 = vsel %vm2110, %v2100, %v2103
        %v2123 = vsel %vm2113, %v2109, 1326507024
        %v2124 = vsel %vm2112, %v2106, %v2123
        %v2125 = vsel %vm2111, %v2122, %v2124
        %v2126 = vshll.u32 %v2086, 8
        %v2127 = vand.u32 %v2126, 65535
        %v2128 = vshrl.u32 %v2126, 16
        %v2129 = vand.u32 %v2125, 65535
        %v2130 = vshrl.u32 %v2125, 16
        %v2131 = vmul.u32 %v2127, %v2129
        %v2132 = vmul.u32 %v2127, %v2130
        %v2133 = vmul.u32 %v2128, %v2129
        %v2134 = vmul.u32 %v2128, %v2130
        %v2135 = vshll.u32 %v2132, 16
        %v2136 = vshrl.u32 %v2132, 16
        %v2137 = vshll.u32 %v2133, 16
        %v2138 = vshrl.u32 %v2133, 16
        %vm2139 = vc.u32 %v2131, %v2135
        %v2140 = vsel %vm2139, 1, 0
        %v2141 = vadd.s32 %v2131, %v2135
        %v2142 = vadd.s32 %v2134, %v2140
        %vm2143 = vc.u32 %v2141, %v2137
        %v2144 = vsel %vm2143, 1, 0
        %v2145 = vadd.s32 %v2141, %v2137
        %v2146 = vadd.s32 %v2142, %v2144
        %v2147 = vadd.s32 %v2146, %v2136
        %v2148 = vadd.s32 %v2147, %v2138
        %v2149 = vand.u32 %v2126, 65535
        %v2150 = vshrl.u32 %v2126, 16
        %v2151 = vand.u32 %v2121, 65535
        %v2152 = vshrl.u32 %v2121, 16
        %v2153 = vmul.u32 %v2149, %v2151
        %v2154 = vmul.u32 %v2149, %v2152
        %v2155 = vmul.u32 %v2150, %v2151
        %v2156 = vmul.u32 %v2150, %v2152
        %v2157 = vshll.u32 %v2154, 16
        %v2158 = vshrl.u32 %v2154, 16
        %v2159 = vshll.u32 %v2155, 16
        %v2160 = vshrl.u32 %v2155, 16
        %vm2161 = vc.u32 %v2153, %v2157
        %v2162 = vsel %vm2161, 1, 0
        %v2163 = vadd.s32 %v2153, %v2157
        %v2164 = vadd.s32 %v2156, %v2162
        %vm2165 = vc.u32 %v2163, %v2159
        %v2166 = vsel %vm2165, 1, 0
        %v2167 = vadd.s32 %v2163, %v2159
        %v2168 = vadd.s32 %v2164, %v2166
        %v2169 = vadd.s32 %v2168, %v2158
        %v2170 = vadd.s32 %v2169, %v2160
        %v2171 = vmul.u32 %v2126, %v2117
        %v2172 = vadd.s32 %v2148, %v2167
        %vm2173 = vc.u32 %v2148, %v2167
        %v2174 = vadd.s32 %v2170, 1
        %v2175 = vsel %vm2173, %v2174, %v2170
        %v2176 = vadd.s32 %v2171, %v2175
        %v2177 = vadd.s32 %v2176, 536870912
        %v2178 = vshrl.u32 %v2177, 30
        %v2179 = vshll.u32 %v2178, 30
        %v2180 = vsub.s32 %v2176, %v2179
        %vm2181 = vcmp.lt.s32.totalorder %v2180, 0
        %v2182 = vsub.s32 0, %v2180
        %v2183 = vsel %vm2181, %v2182, %v2180
        %v2184 = vclz %v2183
        %v2185 = vsub.s32 %v2184, 2
        %vm2186 = vcmp.gt.s32.totalorder 0, %v2185
        %v2187 = vsel %vm2186, 0, %v2185
        %v2188 = vsub.s32 32, %v2187
        %v2189 = vshll.u32 %v2180, %v2187
        %v2190 = vshrl.u32 %v2172, %v2188
        %v2191 = vor.u32 %v2189, %v2190
        %v2192 = vsub.s32 4294967266, %v2187
        %v2193 = vadd.s32 %v2192, 127
        %v2194 = vshll.u32 %v2193, 23
        %v2195 = vor.u32 4788187, %v2194
        %v2196 = vand.u32 2147483647, %v2195
        %v2198 = vcvt.s32.f32 %v2191
        %v2199 = vmul.f32 %v2198, %v2196
        %v2200 = vxor.u32 %v2199, 2147483648
        %v2201 = vsel %vm2080, %v2200, %v2199
        %v2202 = vsub.s32 4, %v2178
        %v2203 = vsel %vm2080, %v2202, %v2178
        %v2204 = vsel %vm2079, %v669, %v2201
        %v2205 = vsel %vm2079, 0, %v2203
        %v2206 = vmul.f32 %v2204, %v2204
        %v2207 = vmul.f32 %v2206, -0.001358992
        %v2208 = vadd.f32 %v2207, 0.041655596
        %v2209 = vmul.f32 %v2206, %v2208
        %v2210 = vadd.f32 %v2209, -0.4999988
        %v2211 = vmul.f32 %v2206, %v2210
        %v2212 = vadd.f32 1.0, %v2211
        %v2213 = vmul.f32 %v2204, %v2204
        %v2214 = vmul.f32 %v2213, -0.00019511016
        %v2215 = vadd.f32 %v2214, 0.008332121
        %v2216 = vmul.f32 %v2213, %v2215
        %v2217 = vadd.f32 %v2216, -0.16666654
        %v2218 = vmul.f32 %v2213, %v2217
        %v2219 = vadd.f32 %v2218, 1.0
        %v2220 = vmul.f32 %v2219, %v2204
        %vm2221 = vweird.f32 %v669
        %v2222 = vand.u32 %v2205, 3
        %vm2223 = vcmp.lt.s32.totalorder %v2222, 2
        %vm2224 = vcmp.eq.s32.totalorder %v2222, 0
        %v2225 = vxor.u32 %v2220, 2147483648
        %v2226 = vsel %vm2224, %v2212, %v2225
        %vm2227 = vcmp.eq.s32.totalorder %v2222, 2
        %v2228 = vxor.u32 %v2212, 2147483648
        %v2229 = vsel %vm2227, %v2228, %v2220
        %v2230 = vsel %vm2223, %v2226, %v2229
        %v2231 = vsel %vm2221, nan, %v2230
        %v2232 = vand.u32 2147483647, %v670
        %vm2233 = vcmp.le.f32.partialorder %v2232, 0.7853982
        %vm2234 = vcmp.lt.s32.totalorder %v670, 0
        %v2235 = vand.u32 %v670, 2139095040
        %v2236 = vshrl.u32 %v2235, 23
        %v2237 = vsub.s32 %v2236, 127
        %v2238 = vand.u32 2147483647, %v670
        %v2239 = vand.u32 %v2238, 8388607
        %v2240 = vor.u32 %v2239, 8388608
        %v2241 = vsub.s32 0, %v2240
        %v2242 = vadd.s32 %v2237, 1
        %vm2243 = vcmp.gt.s32.totalorder %v2242, 0
        %v2244 = vsel %vm2243, %v2242, 0
        %v2245 = vshrl.u32 %v2244, 5
        %v2246 = vand.u32 %v2244, 31
        %v2247 = vsub.s32 32, %v2246
        %v2248 = vshrl.u32 683565275, %v2247
        %v2249 = vshll.u32 683565275, %v2246
        %v2250 = vshrl.u32 2475754826, %v2247
        %v2251 = vor.u32 %v2249, %v2250
        %v2252 = vshll.u32 2475754826, %v2246
        %v2253 = vshrl.u32 2131351028, %v2247
        %v2254 = vor.u32 %v2252, %v2253
        %v2255 = vshll.u32 2131351028, %v2246
        %v2256 = vshrl.u32 2102212464, %v2247
        %v2257 = vor.u32 %v2255, %v2256
        %v2258 = vshll.u32 2102212464, %v2246
        %v2259 = vshrl.u32 920167782, %v2247
        %v2260 = vor.u32 %v2258, %v2259
        %v2261 = vshll.u32 920167782, %v2246
        %v2262 = vshrl.u32 1326507024, %v2247
        %v2263 = vor.u32 %v2261, %v2262
        %vm2264 = vcmp.lt.s32.totalorder %v2245, 1
        %vm2265 = vcmp.lt.s32.totalorder %v2245, 2
        %vm2266 = vcmp.lt.s32.totalorder %v2245, 3
        %vm2267 = vcmp.lt.s32.totalorder %v2245, 4
        %v2268 = vsel %vm2264, %v2248, %v2251
        %v2269 = vsel %vm2267, %v2257, 2102212464
        %v2270 = vsel %vm2266, %v2254, %v2269
        %v2271 = vsel %vm2265, %v2268, %v2270
        %v2272 = vsel %vm2264, %v2251, %v2254
        %v2273 = vsel %vm2267, %v2260, 920167782
        %v2274 = vsel %vm2266, %v2257, %v2273
        %v2275 = vsel %vm2265, %v2272, %v2274
        %v2276 = vsel %vm2264, %v2254, %v2257
        %v2277 = vsel %vm2267, %v2263, 1326507024
        %v2278 = vsel %vm2266, %v2260, %v2277
        %v2279 = vsel %vm2265, %v2276, %v2278
        %v2280 = vshll.u32 %v2240, 8
        %v2281 = vand.u32 %v2280, 65535
        %v2282 = vshrl.u32 %v2280, 16
        %v2283 = vand.u32 %v2279, 65535
        %v2284 = vshrl.u32 %v2279, 16
        %v2285 = vmul.u32 %v2281, %v2283
        %v2286 = vmul.u32 %v2281, %v2284
        %v2287 = vmul.u32 %v2282, %v2283
        %v2288 = vmul.u32 %v2282, %v2284
        %v2289 = vshll.u32 %v2286, 16
        %v2290 = vshrl.u32 %v2286, 16
        %v2291 = vshll.u32 %v2287, 16
        %v2292 = vshrl.u32 %v2287, 16
        %vm2293 = vc.u32 %v2285, %v2289
        %v2294 = vsel %vm2293, 1, 0
        %v2295 = vadd.s32 %v2285, %v2289
        %v2296 = vadd.s32 %v2288, %v2294
        %vm2297 = vc.u32 %v2295, %v2291
        %v2298 = vsel %vm2297, 1, 0
        %v2299 = vadd.s32 %v2295, %v2291
        %v2300 = vadd.s32 %v2296, %v2298
        %v2301 = vadd.s32 %v2300, %v2290
        %v2302 = vadd.s32 %v2301, %v2292
        %v2303 = vand.u32 %v2280, 65535
        %v2304 = vshrl.u32 %v2280, 16
        %v2305 = vand.u32 %v2275, 65535
        %v2306 = vshrl.u32 %v2275, 16
        %v2307 = vmul.u32 %v2303, %v2305
        %v2308 = vmul.u32 %v2303, %v2306
        %v2309 = vmul.u32 %v2304, %v2305
        %v2310 = vmul.u32 %v2304, %v2306
        %v2311 = vshll.u32 %v2308, 16
        %v2312 = vshrl.u32 %v2308, 16
        %v2313 = vshll.u32 %v2309, 16
        %v2314 = vshrl.u32 %v2309, 16
        %vm2315 = vc.u32 %v2307, %v2311
        %v2316 = vsel %vm2315, 1, 0
        %v2317 = vadd.s32 %v2307, %v2311
        %v2318 = vadd.s32 %v2310, %v2316
        %vm2319 = vc.u32 %v2317, %v2313
        %v2320 = vsel %vm2319, 1, 0
        %v2321 = vadd.s32 %v2317, %v2313
        %v2322 = vadd.s32 %v2318, %v2320
        %v2323 = vadd.s32 %v2322, %v2312
        %v2324 = vadd.s32 %v2323, %v2314
        %v2325 = vmul.u32 %v2280, %v2271
        %v2326 = vadd.s32 %v2302, %v2321
        %vm2327 = vc.u32 %v2302, %v2321
        %v2328 = vadd.s32 %v2324, 1
        %v2329 = vsel %vm2327, %v2328, %v2324
        %v2330 = vadd.s32 %v2325, %v2329
        %v2331 = vadd.s32 %v2330, 536870912
        %v2332 = vshrl.u32 %v2331, 30
        %v2333 = vshll.u32 %v2332, 30
        %v2334 = vsub.s32 %v2330, %v2333
        %vm2335 = vcmp.lt.s32.totalorder %v2334, 0
        %v2336 = vsub.s32 0, %v2334
        %v2337 = vsel %vm2335, %v2336, %v2334
        %v2338 = vclz %v2337
        %v2339 = vsub.s32 %v2338, 2
        %vm2340 = vcmp.gt.s32.totalorder 0, %v2339
        %v2341 = vsel %vm2340, 0, %v2339
        %v2342 = vsub.s32 32, %v2341
        %v2343 = vshll.u32 %v2334, %v2341
        %v2344 = vshrl.u32 %v2326, %v2342
        %v2345 = vor.u32 %v2343, %v2344
        %v2346 = vsub.s32 4294967266, %v2341
        %v2347 = vadd.s32 %v2346, 127
        %v2348 = vshll.u32 %v2347, 23
        %v2349 = vor.u32 4788187, %v2348
        %v2350 = vand.u32 2147483647, %v2349
        %v2352 = vcvt.s32.f32 %v2345
        %v2353 = vmul.f32 %v2352, %v2350
        %v2354 = vxor.u32 %v2353, 2147483648
        %v2355 = vsel %vm2234, %v2354, %v2353
        %v2356 = vsub.s32 4, %v2332
        %v2357 = vsel %vm2234, %v2356, %v2332
        %v2358 = vsel %vm2233, %v670, %v2355
        %v2359 = vsel %vm2233, 0, %v2357
        %v2360 = vmul.f32 %v2358, %v2358
        %v2361 = vmul.f32 %v2360, -0.001358992
        %v2362 = vadd.f32 %v2361, 0.041655596
        %v2363 = vmul.f32 %v2360, %v2362
        %v2364 = vadd.f32 %v2363, -0.4999988
        %v2365 = vmul.f32 %v2360, %v2364
        %v2366 = vadd.f32 1.0, %v2365
        %v2367 = vmul.f32 %v2358, %v2358
        %v2368 = vmul.f32 %v2367, -0.00019511016
        %v2369 = vadd.f32 %v2368, 0.008332121
        %v2370 = vmul.f32 %v2367, %v2369
        %v2371 = vadd.f32 %v2370, -0.16666654
        %v2372 = vmul.f32 %v2367, %v2371
        %v2373 = vadd.f32 %v2372, 1.0
        %v2374 = vmul.f32 %v2373, %v2358
        %vm2375 = vweird.f32 %v670
        %v2376 = vand.u32 %v2359, 3
        %vm2377 = vcmp.lt.s32.totalorder %v2376, 2
        %vm2378 = vcmp.eq.s32.totalorder %v2376, 0
        %v2379 = vxor.u32 %v2374, 2147483648
        %v2380 = vsel %vm2378, %v2366, %v2379
        %vm2381 = vcmp.eq.s32.totalorder %v2376, 2
        %v2382 = vxor.u32 %v2366, 2147483648
        %v2383 = vsel %vm2381, %v2382, %v2374
        %v2384 = vsel %vm2377, %v2380, %v2383
        %v2385 = vsel %vm2375, nan, %v2384
        %v2386 = vand.u32 2147483647, %v671
        %vm2387 = vcmp.le.f32.partialorder %v2386, 0.7853982
        %vm2388 = vcmp.lt.s32.totalorder %v671, 0
        %v2389 = vand.u32 %v671, 2139095040
        %v2390 = vshrl.u32 %v2389, 23
        %v2391 = vsub.s32 %v2390, 127
        %v2392 = vand.u32 2147483647, %v671
        %v2393 = vand.u32 %v2392, 8388607
        %v2394 = vor.u32 %v2393, 8388608
        %v2395 = vsub.s32 0, %v2394
        %v2396 = vadd.s32 %v2391, 1
        %vm2397 = vcmp.gt.s32.totalorder %v2396, 0
        %v2398 = vsel %vm2397, %v2396, 0
        %v2399 = vshrl.u32 %v2398, 5
        %v2400 = vand.u32 %v2398, 31
        %v2401 = vsub.s32 32, %v2400
        %v2402 = vshrl.u32 683565275, %v2401
        %v2403 = vshll.u32 683565275, %v2400
        %v2404 = vshrl.u32 2475754826, %v2401
        %v2405 = vor.u32 %v2403, %v2404
        %v2406 = vshll.u32 2475754826, %v2400
        %v2407 = vshrl.u32 2131351028, %v2401
        %v2408 = vor.u32 %v2406, %v2407
        %v2409 = vshll.u32 2131351028, %v2400
        %v2410 = vshrl.u32 2102212464, %v2401
        %v2411 = vor.u32 %v2409, %v2410
        %v2412 = vshll.u32 2102212464, %v2400
        %v2413 = vshrl.u32 920167782, %v2401
        %v2414 = vor.u32 %v2412, %v2413
        %v2415 = vshll.u32 920167782, %v2400
        %v2416 = vshrl.u32 1326507024, %v2401
        %v2417 = vor.u32 %v2415, %v2416
        %vm2418 = vcmp.lt.s32.totalorder %v2399, 1
        %vm2419 = vcmp.lt.s32.totalorder %v2399, 2
        %vm2420 = vcmp.lt.s32.totalorder %v2399, 3
        %vm2421 = vcmp.lt.s32.totalorder %v2399, 4
        %v2422 = vsel %vm2418, %v2402, %v2405
        %v2423 = vsel %vm2421, %v2411, 2102212464
        %v2424 = vsel %vm2420, %v2408, %v2423
        %v2425 = vsel %vm2419, %v2422, %v2424
        %v2426 = vsel %vm2418, %v2405, %v2408
        %v2427 = vsel %vm2421, %v2414, 920167782
        %v2428 = vsel %vm2420, %v2411, %v2427
        %v2429 = vsel %vm2419, %v2426, %v2428
        %v2430 = vsel %vm2418, %v2408, %v2411
        %v2431 = vsel %vm2421, %v2417, 1326507024
        %v2432 = vsel %vm2420, %v2414, %v2431
        %v2433 = vsel %vm2419, %v2430, %v2432
        %v2434 = vshll.u32 %v2394, 8
        %v2435 = vand.u32 %v2434, 65535
        %v2436 = vshrl.u32 %v2434, 16
        %v2437 = vand.u32 %v2433, 65535
        %v2438 = vshrl.u32 %v2433, 16
        %v2439 = vmul.u32 %v2435, %v2437
        %v2440 = vmul.u32 %v2435, %v2438
        %v2441 = vmul.u32 %v2436, %v2437
        %v2442 = vmul.u32 %v2436, %v2438
        %v2443 = vshll.u32 %v2440, 16
        %v2444 = vshrl.u32 %v2440, 16
        %v2445 = vshll.u32 %v2441, 16
        %v2446 = vshrl.u32 %v2441, 16
        %vm2447 = vc.u32 %v2439, %v2443
        %v2448 = vsel %vm2447, 1, 0
        %v2449 = vadd.s32 %v2439, %v2443
        %v2450 = vadd.s32 %v2442, %v2448
        %vm2451 = vc.u32 %v2449, %v2445
        %v2452 = vsel %vm2451, 1, 0
        %v2453 = vadd.s32 %v2449, %v2445
        %v2454 = vadd.s32 %v2450, %v2452
        %v2455 = vadd.s32 %v2454, %v2444
        %v2456 = vadd.s32 %v2455, %v2446
        %v2457 = vand.u32 %v2434, 65535
        %v2458 = vshrl.u32 %v2434, 16
        %v2459 = vand.u32 %v2429, 65535
        %v2460 = vshrl.u32 %v2429, 16
        %v2461 = vmul.u32 %v2457, %v2459
        %v2462 = vmul.u32 %v2457, %v2460
        %v2463 = vmul.u32 %v2458, %v2459
        %v2464 = vmul.u32 %v2458, %v2460
        %v2465 = vshll.u32 %v2462, 16
        %v2466 = vshrl.u32 %v2462, 16
        %v2467 = vshll.u32 %v2463, 16
        %v2468 = vshrl.u32 %v2463, 16
        %vm2469 = vc.u32 %v2461, %v2465
        %v2470 = vsel %vm2469, 1, 0
        %v2471 = vadd.s32 %v2461, %v2465
        %v2472 = vadd.s32 %v2464, %v2470
        %vm2473 = vc.u32 %v2471, %v2467
        %v2474 = vsel %vm2473, 1, 0
        %v2475 = vadd.s32 %v2471, %v2467
        %v2476 = vadd.s32 %v2472, %v2474
        %v2477 = vadd.s32 %v2476, %v2466
        %v2478 = vadd.s32 %v2477, %v2468
        %v2479 = vmul.u32 %v2434, %v2425
        %v2480 = vadd.s32 %v2456, %v2475
        %vm2481 = vc.u32 %v2456, %v2475
        %v2482 = vadd.s32 %v2478, 1
        %v2483 = vsel %vm2481, %v2482, %v2478
        %v2484 = vadd.s32 %v2479, %v2483
        %v2485 = vadd.s32 %v2484, 536870912
        %v2486 = vshrl.u32 %v2485, 30
        %v2487 = vshll.u32 %v2486, 30
        %v2488 = vsub.s32 %v2484, %v2487
        %vm2489 = vcmp.lt.s32.totalorder %v2488, 0
        %v2490 = vsub.s32 0, %v2488
        %v2491 = vsel %vm2489, %v2490, %v2488
        %v2492 = vclz %v2491
        %v2493 = vsub.s32 %v2492, 2
        %vm2494 = vcmp.gt.s32.totalorder 0, %v2493
        %v2495 = vsel %vm2494, 0, %v2493
        %v2496 = vsub.s32 32, %v2495
        %v2497 = vshll.u32 %v2488, %v2495
        %v2498 = vshrl.u32 %v2480, %v2496
        %v2499 = vor.u32 %v2497, %v2498
        %v2500 = vsub.s32 4294967266, %v2495
        %v2501 = vadd.s32 %v2500, 127
        %v2502 = vshll.u32 %v2501, 23
        %v2503 = vor.u32 4788187, %v2502
        %v2504 = vand.u32 2147483647, %v2503
        %v2506 = vcvt.s32.f32 %v2499
        %v2507 = vmul.f32 %v2506, %v2504
        %v2508 = vxor.u32 %v2507, 2147483648
        %v2509 = vsel %vm2388, %v2508, %v2507
        %v2510 = vsub.s32 4, %v2486
        %v2511 = vsel %vm2388, %v2510, %v2486
        %v2512 = vsel %vm2387, %v671, %v2509
        %v2513 = vsel %vm2387, 0, %v2511
        %v2514 = vmul.f32 %v2512, %v2512
        %v2515 = vmul.f32 %v2514, -0.001358992
        %v2516 = vadd.f32 %v2515, 0.041655596
        %v2517 = vmul.f32 %v2514, %v2516
        %v2518 = vadd.f32 %v2517, -0.4999988
        %v2519 = vmul.f32 %v2514, %v2518
        %v2520 = vadd.f32 1.0, %v2519
        %v2521 = vmul.f32 %v2512, %v2512
        %v2522 = vmul.f32 %v2521, -0.00019511016
        %v2523 = vadd.f32 %v2522, 0.008332121
        %v2524 = vmul.f32 %v2521, %v2523
        %v2525 = vadd.f32 %v2524, -0.16666654
        %v2526 = vmul.f32 %v2521, %v2525
        %v2527 = vadd.f32 %v2526, 1.0
        %v2528 = vmul.f32 %v2527, %v2512
        %vm2529 = vweird.f32 %v671
        %v2530 = vand.u32 %v2513, 3
        %vm2531 = vcmp.lt.s32.totalorder %v2530, 2
        %vm2532 = vcmp.eq.s32.totalorder %v2530, 0
        %v2533 = vxor.u32 %v2528, 2147483648
        %v2534 = vsel %vm2532, %v2520, %v2533
        %vm2535 = vcmp.eq.s32.totalorder %v2530, 2
        %v2536 = vxor.u32 %v2520, 2147483648
        %v2537 = vsel %vm2535, %v2536, %v2528
        %v2538 = vsel %vm2531, %v2534, %v2537
        %v2539 = vsel %vm2529, nan, %v2538
        %v2540 = vand.u32 2147483647, %v672
        %vm2541 = vcmp.le.f32.partialorder %v2540, 0.7853982
        %vm2542 = vcmp.lt.s32.totalorder %v672, 0
        %v2543 = vand.u32 %v672, 2139095040
        %v2544 = vshrl.u32 %v2543, 23
        %v2545 = vsub.s32 %v2544, 127
        %v2546 = vand.u32 2147483647, %v672
        %v2547 = vand.u32 %v2546, 8388607
        %v2548 = vor.u32 %v2547, 8388608
        %v2549 = vsub.s32 0, %v2548
        %v2550 = vadd.s32 %v2545, 1
        %vm2551 = vcmp.gt.s32.totalorder %v2550, 0
        %v2552 = vsel %vm2551, %v2550, 0
        %v2553 = vshrl.u32 %v2552, 5
        %v2554 = vand.u32 %v2552, 31
        %v2555 = vsub.s32 32, %v2554
        %v2556 = vshrl.u32 683565275, %v2555
        %v2557 = vshll.u32 683565275, %v2554
        %v2558 = vshrl.u32 2475754826, %v2555
        %v2559 = vor.u32 %v2557, %v2558
        %v2560 = vshll.u32 2475754826, %v2554
        %v2561 = vshrl.u32 2131351028, %v2555
        %v2562 = vor.u32 %v2560, %v2561
        %v2563 = vshll.u32 2131351028, %v2554
        %v2564 = vshrl.u32 2102212464, %v2555
        %v2565 = vor.u32 %v2563, %v2564
        %v2566 = vshll.u32 2102212464, %v2554
        %v2567 = vshrl.u32 920167782, %v2555
        %v2568 = vor.u32 %v2566, %v2567
        %v2569 = vshll.u32 920167782, %v2554
        %v2570 = vshrl.u32 1326507024, %v2555
        %v2571 = vor.u32 %v2569, %v2570
        %vm2572 = vcmp.lt.s32.totalorder %v2553, 1
        %vm2573 = vcmp.lt.s32.totalorder %v2553, 2
        %vm2574 = vcmp.lt.s32.totalorder %v2553, 3
        %vm2575 = vcmp.lt.s32.totalorder %v2553, 4
        %v2576 = vsel %vm2572, %v2556, %v2559
        %v2577 = vsel %vm2575, %v2565, 2102212464
        %v2578 = vsel %vm2574, %v2562, %v2577
        %v2579 = vsel %vm2573, %v2576, %v2578
        %v2580 = vsel %vm2572, %v2559, %v2562
        %v2581 = vsel %vm2575, %v2568, 920167782
        %v2582 = vsel %vm2574, %v2565, %v2581
        %v2583 = vsel %vm2573, %v2580, %v2582
        %v2584 = vsel %vm2572, %v2562, %v2565
        %v2585 = vsel %vm2575, %v2571, 1326507024
        %v2586 = vsel %vm2574, %v2568, %v2585
        %v2587 = vsel %vm2573, %v2584, %v2586
        %v2588 = vshll.u32 %v2548, 8
        %v2589 = vand.u32 %v2588, 65535
        %v2590 = vshrl.u32 %v2588, 16
        %v2591 = vand.u32 %v2587, 65535
        %v2592 = vshrl.u32 %v2587, 16
        %v2593 = vmul.u32 %v2589, %v2591
        %v2594 = vmul.u32 %v2589, %v2592
        %v2595 = vmul.u32 %v2590, %v2591
        %v2596 = vmul.u32 %v2590, %v2592
        %v2597 = vshll.u32 %v2594, 16
        %v2598 = vshrl.u32 %v2594, 16
        %v2599 = vshll.u32 %v2595, 16
        %v2600 = vshrl.u32 %v2595, 16
        %vm2601 = vc.u32 %v2593, %v2597
        %v2602 = vsel %vm2601, 1, 0
        %v2603 = vadd.s32 %v2593, %v2597
        %v2604 = vadd.s32 %v2596, %v2602
        %vm2605 = vc.u32 %v2603, %v2599
        %v2606 = vsel %vm2605, 1, 0
        %v2607 = vadd.s32 %v2603, %v2599
        %v2608 = vadd.s32 %v2604, %v2606
        %v2609 = vadd.s32 %v2608, %v2598
        %v2610 = vadd.s32 %v2609, %v2600
        %v2611 = vand.u32 %v2588, 65535
        %v2612 = vshrl.u32 %v2588, 16
        %v2613 = vand.u32 %v2583, 65535
        %v2614 = vshrl.u32 %v2583, 16
        %v2615 = vmul.u32 %v2611, %v2613
        %v2616 = vmul.u32 %v2611, %v2614
        %v2617 = vmul.u32 %v2612, %v2613
        %v2618 = vmul.u32 %v2612, %v2614
        %v2619 = vshll.u32 %v2616, 16
        %v2620 = vshrl.u32 %v2616, 16
        %v2621 = vshll.u32 %v2617, 16
        %v2622 = vshrl.u32 %v2617, 16
        %vm2623 = vc.u32 %v2615, %v2619
        %v2624 = vsel %vm2623, 1, 0
        %v2625 = vadd.s32 %v2615, %v2619
        %v2626 = vadd.s32 %v2618, %v2624
        %vm2627 = vc.u32 %v2625, %v2621
        %v2628 = vsel %vm2627, 1, 0
        %v2629 = vadd.s32 %v2625, %v2621
        %v2630 = vadd.s32 %v2626, %v2628
        %v2631 = vadd.s32 %v2630, %v2620
        %v2632 = vadd.s32 %v2631, %v2622
        %v2633 = vmul.u32 %v2588, %v2579
        %v2634 = vadd.s32 %v2610, %v2629
        %vm2635 = vc.u32 %v2610, %v2629
        %v2636 = vadd.s32 %v2632, 1
        %v2637 = vsel %vm2635, %v2636, %v2632
        %v2638 = vadd.s32 %v2633, %v2637
        %v2639 = vadd.s32 %v2638, 536870912
        %v2640 = vshrl.u32 %v2639, 30
        %v2641 = vshll.u32 %v2640, 30
        %v2642 = vsub.s32 %v2638, %v2641
        %vm2643 = vcmp.lt.s32.totalorder %v2642, 0
        %v2644 = vsub.s32 0, %v2642
        %v2645 = vsel %vm2643, %v2644, %v2642
        %v2646 = vclz %v2645
        %v2647 = vsub.s32 %v2646, 2
        %vm2648 = vcmp.gt.s32.totalorder 0, %v2647
        %v2649 = vsel %vm2648, 0, %v2647
        %v2650 = vsub.s32 32, %v2649
        %v2651 = vshll.u32 %v2642, %v2649
        %v2652 = vshrl.u32 %v2634, %v2650
        %v2653 = vor.u32 %v2651, %v2652
        %v2654 = vsub.s32 4294967266, %v2649
        %v2655 = vadd.s32 %v2654, 127
        %v2656 = vshll.u32 %v2655, 23
        %v2657 = vor.u32 4788187, %v2656
        %v2658 = vand.u32 2147483647, %v2657
        %v2660 = vcvt.s32.f32 %v2653
        %v2661 = vmul.f32 %v2660, %v2658
        %v2662 = vxor.u32 %v2661, 2147483648
        %v2663 = vsel %vm2542, %v2662, %v2661
        %v2664 = vsub.s32 4, %v2640
        %v2665 = vsel %vm2542, %v2664, %v2640
        %v2666 = vsel %vm2541, %v672, %v2663
        %v2667 = vsel %vm2541, 0, %v2665
        %v2668 = vmul.f32 %v2666, %v2666
        %v2669 = vmul.f32 %v2668, -0.001358992
        %v2670 = vadd.f32 %v2669, 0.041655596
        %v2671 = vmul.f32 %v2668, %v2670
        %v2672 = vadd.f32 %v2671, -0.4999988
        %v2673 = vmul.f32 %v2668, %v2672
        %v2674 = vadd.f32 1.0, %v2673
        %v2675 = vmul.f32 %v2666, %v2666
        %v2676 = vmul.f32 %v2675, -0.00019511016
        %v2677 = vadd.f32 %v2676, 0.008332121
        %v2678 = vmul.f32 %v2675, %v2677
        %v2679 = vadd.f32 %v2678, -0.16666654
        %v2680 = vmul.f32 %v2675, %v2679
        %v2681 = vadd.f32 %v2680, 1.0
        %v2682 = vmul.f32 %v2681, %v2666
        %vm2683 = vweird.f32 %v672
        %v2684 = vand.u32 %v2667, 3
        %vm2685 = vcmp.lt.s32.totalorder %v2684, 2
        %vm2686 = vcmp.eq.s32.totalorder %v2684, 0
        %v2687 = vxor.u32 %v2682, 2147483648
        %v2688 = vsel %vm2686, %v2674, %v2687
        %vm2689 = vcmp.eq.s32.totalorder %v2684, 2
        %v2690 = vxor.u32 %v2674, 2147483648
        %v2691 = vsel %vm2689, %v2690, %v2682
        %v2692 = vsel %vm2685, %v2688, %v2691
        %v2693 = vsel %vm2683, nan, %v2692
        %v2694 = vand.u32 2147483647, %v673
        %vm2695 = vcmp.le.f32.partialorder %v2694, 0.7853982
        %vm2696 = vcmp.lt.s32.totalorder %v673, 0
        %v2697 = vand.u32 %v673, 2139095040
        %v2698 = vshrl.u32 %v2697, 23
        %v2699 = vsub.s32 %v2698, 127
        %v2700 = vand.u32 2147483647, %v673
        %v2701 = vand.u32 %v2700, 8388607
        %v2702 = vor.u32 %v2701, 8388608
        %v2703 = vsub.s32 0, %v2702
        %v2704 = vadd.s32 %v2699, 1
        %vm2705 = vcmp.gt.s32.totalorder %v2704, 0
        %v2706 = vsel %vm2705, %v2704, 0
        %v2707 = vshrl.u32 %v2706, 5
        %v2708 = vand.u32 %v2706, 31
        %v2709 = vsub.s32 32, %v2708
        %v2710 = vshrl.u32 683565275, %v2709
        %v2711 = vshll.u32 683565275, %v2708
        %v2712 = vshrl.u32 2475754826, %v2709
        %v2713 = vor.u32 %v2711, %v2712
        %v2714 = vshll.u32 2475754826, %v2708
        %v2715 = vshrl.u32 2131351028, %v2709
        %v2716 = vor.u32 %v2714, %v2715
        %v2717 = vshll.u32 2131351028, %v2708
        %v2718 = vshrl.u32 2102212464, %v2709
        %v2719 = vor.u32 %v2717, %v2718
        %v2720 = vshll.u32 2102212464, %v2708
        %v2721 = vshrl.u32 920167782, %v2709
        %v2722 = vor.u32 %v2720, %v2721
        %v2723 = vshll.u32 920167782, %v2708
        %v2724 = vshrl.u32 1326507024, %v2709
        %v2725 = vor.u32 %v2723, %v2724
        %vm2726 = vcmp.lt.s32.totalorder %v2707, 1
        %vm2727 = vcmp.lt.s32.totalorder %v2707, 2
        %vm2728 = vcmp.lt.s32.totalorder %v2707, 3
        %vm2729 = vcmp.lt.s32.totalorder %v2707, 4
        %v2730 = vsel %vm2726, %v2710, %v2713
        %v2731 = vsel %vm2729, %v2719, 2102212464
        %v2732 = vsel %vm2728, %v2716, %v2731
        %v2733 = vsel %vm2727, %v2730, %v2732
        %v2734 = vsel %vm2726, %v2713, %v2716
        %v2735 = vsel %vm2729, %v2722, 920167782
        %v2736 = vsel %vm2728, %v2719, %v2735
        %v2737 = vsel %vm2727, %v2734, %v2736
        %v2738 = vsel %vm2726, %v2716, %v2719
        %v2739 = vsel %vm2729, %v2725, 1326507024
        %v2740 = vsel %vm2728, %v2722, %v2739
        %v2741 = vsel %vm2727, %v2738, %v2740
        %v2742 = vshll.u32 %v2702, 8
        %v2743 = vand.u32 %v2742, 65535
        %v2744 = vshrl.u32 %v2742, 16
        %v2745 = vand.u32 %v2741, 65535
        %v2746 = vshrl.u32 %v2741, 16
        %v2747 = vmul.u32 %v2743, %v2745
        %v2748 = vmul.u32 %v2743, %v2746
        %v2749 = vmul.u32 %v2744, %v2745
        %v2750 = vmul.u32 %v2744, %v2746
        %v2751 = vshll.u32 %v2748, 16
        %v2752 = vshrl.u32 %v2748, 16
        %v2753 = vshll.u32 %v2749, 16
        %v2754 = vshrl.u32 %v2749, 16
        %vm2755 = vc.u32 %v2747, %v2751
        %v2756 = vsel %vm2755, 1, 0
        %v2757 = vadd.s32 %v2747, %v2751
        %v2758 = vadd.s32 %v2750, %v2756
        %vm2759 = vc.u32 %v2757, %v2753
        %v2760 = vsel %vm2759, 1, 0
        %v2761 = vadd.s32 %v2757, %v2753
        %v2762 = vadd.s32 %v2758, %v2760
        %v2763 = vadd.s32 %v2762, %v2752
        %v2764 = vadd.s32 %v2763, %v2754
        %v2765 = vand.u32 %v2742, 65535
        %v2766 = vshrl.u32 %v2742, 16
        %v2767 = vand.u32 %v2737, 65535
        %v2768 = vshrl.u32 %v2737, 16
        %v2769 = vmul.u32 %v2765, %v2767
        %v2770 = vmul.u32 %v2765, %v2768
        %v2771 = vmul.u32 %v2766, %v2767
        %v2772 = vmul.u32 %v2766, %v2768
        %v2773 = vshll.u32 %v2770, 16
        %v2774 = vshrl.u32 %v2770, 16
        %v2775 = vshll.u32 %v2771, 16
        %v2776 = vshrl.u32 %v2771, 16
        %vm2777 = vc.u32 %v2769, %v2773
        %v2778 = vsel %vm2777, 1, 0
        %v2779 = vadd.s32 %v2769, %v2773
        %v2780 = vadd.s32 %v2772, %v2778
        %vm2781 = vc.u32 %v2779, %v2775
        %v2782 = vsel %vm2781, 1, 0
        %v2783 = vadd.s32 %v2779, %v2775
        %v2784 = vadd.s32 %v2780, %v2782
        %v2785 = vadd.s32 %v2784, %v2774
        %v2786 = vadd.s32 %v2785, %v2776
        %v2787 = vmul.u32 %v2742, %v2733
        %v2788 = vadd.s32 %v2764, %v2783
        %vm2789 = vc.u32 %v2764, %v2783
        %v2790 = vadd.s32 %v2786, 1
        %v2791 = vsel %vm2789, %v2790, %v2786
        %v2792 = vadd.s32 %v2787, %v2791
        %v2793 = vadd.s32 %v2792, 536870912
        %v2794 = vshrl.u32 %v2793, 30
        %v2795 = vshll.u32 %v2794, 30
        %v2796 = vsub.s32 %v2792, %v2795
        %vm2797 = vcmp.lt.s32.totalorder %v2796, 0
        %v2798 = vsub.s32 0, %v2796
        %v2799 = vsel %vm2797, %v2798, %v2796
        %v2800 = vclz %v2799
        %v2801 = vsub.s32 %v2800, 2
        %vm2802 = vcmp.gt.s32.totalorder 0, %v2801
        %v2803 = vsel %vm2802, 0, %v2801
        %v2804 = vsub.s32 32, %v2803
        %v2805 = vshll.u32 %v2796, %v2803
        %v2806 = vshrl.u32 %v2788, %v2804
        %v2807 = vor.u32 %v2805, %v2806
        %v2808 = vsub.s32 4294967266, %v2803
        %v2809 = vadd.s32 %v2808, 127
        %v2810 = vshll.u32 %v2809, 23
        %v2811 = vor.u32 4788187, %v2810
        %v2812 = vand.u32 2147483647, %v2811
        %v2814 = vcvt.s32.f32 %v2807
        %v2815 = vmul.f32 %v2814, %v2812
        %v2816 = vxor.u32 %v2815, 2147483648
        %v2817 = vsel %vm2696, %v2816, %v2815
        %v2818 = vsub.s32 4, %v2794
        %v2819 = vsel %vm2696, %v2818, %v2794
        %v2820 = vsel %vm2695, %v673, %v2817
        %v2821 = vsel %vm2695, 0, %v2819
        %v2822 = vmul.f32 %v2820, %v2820
        %v2823 = vmul.f32 %v2822, -0.001358992
        %v2824 = vadd.f32 %v2823, 0.041655596
        %v2825 = vmul.f32 %v2822, %v2824
        %v2826 = vadd.f32 %v2825, -0.4999988
        %v2827 = vmul.f32 %v2822, %v2826
        %v2828 = vadd.f32 1.0, %v2827
        %v2829 = vmul.f32 %v2820, %v2820
        %v2830 = vmul.f32 %v2829, -0.00019511016
        %v2831 = vadd.f32 %v2830, 0.008332121
        %v2832 = vmul.f32 %v2829, %v2831
        %v2833 = vadd.f32 %v2832, -0.16666654
        %v2834 = vmul.f32 %v2829, %v2833
        %v2835 = vadd.f32 %v2834, 1.0
        %v2836 = vmul.f32 %v2835, %v2820
        %vm2837 = vweird.f32 %v673
        %v2838 = vand.u32 %v2821, 3
        %vm2839 = vcmp.lt.s32.totalorder %v2838, 2
        %vm2840 = vcmp.eq.s32.totalorder %v2838, 0
        %v2841 = vxor.u32 %v2836, 2147483648
        %v2842 = vsel %vm2840, %v2828, %v2841
        %vm2843 = vcmp.eq.s32.totalorder %v2838, 2
        %v2844 = vxor.u32 %v2828, 2147483648
        %v2845 = vsel %vm2843, %v2844, %v2836
        %v2846 = vsel %vm2839, %v2842, %v2845
        %v2847 = vsel %vm2837, nan, %v2846
        %v2848 = vand.u32 2147483647, %v674
        %vm2849 = vcmp.le.f32.partialorder %v2848, 0.7853982
        %vm2850 = vcmp.lt.s32.totalorder %v674, 0
        %v2851 = vand.u32 %v674, 2139095040
        %v2852 = vshrl.u32 %v2851, 23
        %v2853 = vsub.s32 %v2852, 127
        %v2854 = vand.u32 2147483647, %v674
        %v2855 = vand.u32 %v2854, 8388607
        %v2856 = vor.u32 %v2855, 8388608
        %v2857 = vsub.s32 0, %v2856
        %v2858 = vadd.s32 %v2853, 1
        %vm2859 = vcmp.gt.s32.totalorder %v2858, 0
        %v2860 = vsel %vm2859, %v2858, 0
        %v2861 = vshrl.u32 %v2860, 5
        %v2862 = vand.u32 %v2860, 31
        %v2863 = vsub.s32 32, %v2862
        %v2864 = vshrl.u32 683565275, %v2863
        %v2865 = vshll.u32 683565275, %v2862
        %v2866 = vshrl.u32 2475754826, %v2863
        %v2867 = vor.u32 %v2865, %v2866
        %v2868 = vshll.u32 2475754826, %v2862
        %v2869 = vshrl.u32 2131351028, %v2863
        %v2870 = vor.u32 %v2868, %v2869
        %v2871 = vshll.u32 2131351028, %v2862
        %v2872 = vshrl.u32 2102212464, %v2863
        %v2873 = vor.u32 %v2871, %v2872
        %v2874 = vshll.u32 2102212464, %v2862
        %v2875 = vshrl.u32 920167782, %v2863
        %v2876 = vor.u32 %v2874, %v2875
        %v2877 = vshll.u32 920167782, %v2862
        %v2878 = vshrl.u32 1326507024, %v2863
        %v2879 = vor.u32 %v2877, %v2878
        %vm2880 = vcmp.lt.s32.totalorder %v2861, 1
        %vm2881 = vcmp.lt.s32.totalorder %v2861, 2
        %vm2882 = vcmp.lt.s32.totalorder %v2861, 3
        %vm2883 = vcmp.lt.s32.totalorder %v2861, 4
        %v2884 = vsel %vm2880, %v2864, %v2867
        %v2885 = vsel %vm2883, %v2873, 2102212464
        %v2886 = vsel %vm2882, %v2870, %v2885
        %v2887 = vsel %vm2881, %v2884, %v2886
        %v2888 = vsel %vm2880, %v2867, %v2870
        %v2889 = vsel %vm2883, %v2876, 920167782
        %v2890 = vsel %vm2882, %v2873, %v2889
        %v2891 = vsel %vm2881, %v2888, %v2890
        %v2892 = vsel %vm2880, %v2870, %v2873
        %v2893 = vsel %vm2883, %v2879, 1326507024
        %v2894 = vsel %vm2882, %v2876, %v2893
        %v2895 = vsel %vm2881, %v2892, %v2894
        %v2896 = vshll.u32 %v2856, 8
        %v2897 = vand.u32 %v2896, 65535
        %v2898 = vshrl.u32 %v2896, 16
        %v2899 = vand.u32 %v2895, 65535
        %v2900 = vshrl.u32 %v2895, 16
        %v2901 = vmul.u32 %v2897, %v2899
        %v2902 = vmul.u32 %v2897, %v2900
        %v2903 = vmul.u32 %v2898, %v2899
        %v2904 = vmul.u32 %v2898, %v2900
        %v2905 = vshll.u32 %v2902, 16
        %v2906 = vshrl.u32 %v2902, 16
        %v2907 = vshll.u32 %v2903, 16
        %v2908 = vshrl.u32 %v2903, 16
        %vm2909 = vc.u32 %v2901, %v2905
        %v2910 = vsel %vm2909, 1, 0
        %v2911 = vadd.s32 %v2901, %v2905
        %v2912 = vadd.s32 %v2904, %v2910
        %vm2913 = vc.u32 %v2911, %v2907
        %v2914 = vsel %vm2913, 1, 0
        %v2915 = vadd.s32 %v2911, %v2907
        %v2916 = vadd.s32 %v2912, %v2914
        %v2917 = vadd.s32 %v2916, %v2906
        %v2918 = vadd.s32 %v2917, %v2908
        %v2919 = vand.u32 %v2896, 65535
        %v2920 = vshrl.u32 %v2896, 16
        %v2921 = vand.u32 %v2891, 65535
        %v2922 = vshrl.u32 %v2891, 16
        %v2923 = vmul.u32 %v2919, %v2921
        %v2924 = vmul.u32 %v2919, %v2922
        %v2925 = vmul.u32 %v2920, %v2921
        %v2926 = vmul.u32 %v2920, %v2922
        %v2927 = vshll.u32 %v2924, 16
        %v2928 = vshrl.u32 %v2924, 16
        %v2929 = vshll.u32 %v2925, 16
        %v2930 = vshrl.u32 %v2925, 16
        %vm2931 = vc.u32 %v2923, %v2927
        %v2932 = vsel %vm2931, 1, 0
        %v2933 = vadd.s32 %v2923, %v2927
        %v2934 = vadd.s32 %v2926, %v2932
        %vm2935 = vc.u32 %v2933, %v2929
        %v2936 = vsel %vm2935, 1, 0
        %v2937 = vadd.s32 %v2933, %v2929
        %v2938 = vadd.s32 %v2934, %v2936
        %v2939 = vadd.s32 %v2938, %v2928
        %v2940 = vadd.s32 %v2939, %v2930
        %v2941 = vmul.u32 %v2896, %v2887
        %v2942 = vadd.s32 %v2918, %v2937
        %vm2943 = vc.u32 %v2918, %v2937
        %v2944 = vadd.s32 %v2940, 1
        %v2945 = vsel %vm2943, %v2944, %v2940
        %v2946 = vadd.s32 %v2941, %v2945
        %v2947 = vadd.s32 %v2946, 536870912
        %v2948 = vshrl.u32 %v2947, 30
        %v2949 = vshll.u32 %v2948, 30
        %v2950 = vsub.s32 %v2946, %v2949
        %vm2951 = vcmp.lt.s32.totalorder %v2950, 0
        %v2952 = vsub.s32 0, %v2950
        %v2953 = vsel %vm2951, %v2952, %v2950
        %v2954 = vclz %v2953
        %v2955 = vsub.s32 %v2954, 2
        %vm2956 = vcmp.gt.s32.totalorder 0, %v2955
        %v2957 = vsel %vm2956, 0, %v2955
        %v2958 = vsub.s32 32, %v2957
        %v2959 = vshll.u32 %v2950, %v2957
        %v2960 = vshrl.u32 %v2942, %v2958
        %v2961 = vor.u32 %v2959, %v2960
        %v2962 = vsub.s32 4294967266, %v2957
        %v2963 = vadd.s32 %v2962, 127
        %v2964 = vshll.u32 %v2963, 23
        %v2965 = vor.u32 4788187, %v2964
        %v2966 = vand.u32 2147483647, %v2965
        %v2968 = vcvt.s32.f32 %v2961
        %v2969 = vmul.f32 %v2968, %v2966
        %v2970 = vxor.u32 %v2969, 2147483648
        %v2971 = vsel %vm2850, %v2970, %v2969
        %v2972 = vsub.s32 4, %v2948
        %v2973 = vsel %vm2850, %v2972, %v2948
        %v2974 = vsel %vm2849, %v674, %v2971
        %v2975 = vsel %vm2849, 0, %v2973
        %v2976 = vmul.f32 %v2974, %v2974
        %v2977 = vmul.f32 %v2976, -0.001358992
        %v2978 = vadd.f32 %v2977, 0.041655596
        %v2979 = vmul.f32 %v2976, %v2978
        %v2980 = vadd.f32 %v2979, -0.4999988
        %v2981 = vmul.f32 %v2976, %v2980
        %v2982 = vadd.f32 1.0, %v2981
        %v2983 = vmul.f32 %v2974, %v2974
        %v2984 = vmul.f32 %v2983, -0.00019511016
        %v2985 = vadd.f32 %v2984, 0.008332121
        %v2986 = vmul.f32 %v2983, %v2985
        %v2987 = vadd.f32 %v2986, -0.16666654
        %v2988 = vmul.f32 %v2983, %v2987
        %v2989 = vadd.f32 %v2988, 1.0
        %v2990 = vmul.f32 %v2989, %v2974
        %vm2991 = vweird.f32 %v674
        %v2992 = vand.u32 %v2975, 3
        %vm2993 = vcmp.lt.s32.totalorder %v2992, 2
        %vm2994 = vcmp.eq.s32.totalorder %v2992, 0
        %v2995 = vxor.u32 %v2990, 2147483648
        %v2996 = vsel %vm2994, %v2982, %v2995
        %vm2997 = vcmp.eq.s32.totalorder %v2992, 2
        %v2998 = vxor.u32 %v2982, 2147483648
        %v2999 = vsel %vm2997, %v2998, %v2990
        %v3000 = vsel %vm2993, %v2996, %v2999
        %v3001 = vsel %vm2991, nan, %v3000
        %v3002 = vand.u32 2147483647, %v675
        %vm3003 = vcmp.le.f32.partialorder %v3002, 0.7853982
        %vm3004 = vcmp.lt.s32.totalorder %v675, 0
        %v3005 = vand.u32 %v675, 2139095040
        %v3006 = vshrl.u32 %v3005, 23
        %v3007 = vsub.s32 %v3006, 127
        %v3008 = vand.u32 2147483647, %v675
        %v3009 = vand.u32 %v3008, 8388607
        %v3010 = vor.u32 %v3009, 8388608
        %v3011 = vsub.s32 0, %v3010
        %v3012 = vadd.s32 %v3007, 1
        %vm3013 = vcmp.gt.s32.totalorder %v3012, 0
        %v3014 = vsel %vm3013, %v3012, 0
        %v3015 = vshrl.u32 %v3014, 5
        %v3016 = vand.u32 %v3014, 31
        %v3017 = vsub.s32 32, %v3016
        %v3018 = vshrl.u32 683565275, %v3017
        %v3019 = vshll.u32 683565275, %v3016
        %v3020 = vshrl.u32 2475754826, %v3017
        %v3021 = vor.u32 %v3019, %v3020
        %v3022 = vshll.u32 2475754826, %v3016
        %v3023 = vshrl.u32 2131351028, %v3017
        %v3024 = vor.u32 %v3022, %v3023
        %v3025 = vshll.u32 2131351028, %v3016
        %v3026 = vshrl.u32 2102212464, %v3017
        %v3027 = vor.u32 %v3025, %v3026
        %v3028 = vshll.u32 2102212464, %v3016
        %v3029 = vshrl.u32 920167782, %v3017
        %v3030 = vor.u32 %v3028, %v3029
        %v3031 = vshll.u32 920167782, %v3016
        %v3032 = vshrl.u32 1326507024, %v3017
        %v3033 = vor.u32 %v3031, %v3032
        %vm3034 = vcmp.lt.s32.totalorder %v3015, 1
        %vm3035 = vcmp.lt.s32.totalorder %v3015, 2
        %vm3036 = vcmp.lt.s32.totalorder %v3015, 3
        %vm3037 = vcmp.lt.s32.totalorder %v3015, 4
        %v3038 = vsel %vm3034, %v3018, %v3021
        %v3039 = vsel %vm3037, %v3027, 2102212464
        %v3040 = vsel %vm3036, %v3024, %v3039
        %v3041 = vsel %vm3035, %v3038, %v3040
        %v3042 = vsel %vm3034, %v3021, %v3024
        %v3043 = vsel %vm3037, %v3030, 920167782
        %v3044 = vsel %vm3036, %v3027, %v3043
        %v3045 = vsel %vm3035, %v3042, %v3044
        %v3046 = vsel %vm3034, %v3024, %v3027
        %v3047 = vsel %vm3037, %v3033, 1326507024
        %v3048 = vsel %vm3036, %v3030, %v3047
        %v3049 = vsel %vm3035, %v3046, %v3048
        %v3050 = vshll.u32 %v3010, 8
        %v3051 = vand.u32 %v3050, 65535
        %v3052 = vshrl.u32 %v3050, 16
        %v3053 = vand.u32 %v3049, 65535
        %v3054 = vshrl.u32 %v3049, 16
        %v3055 = vmul.u32 %v3051, %v3053
        %v3056 = vmul.u32 %v3051, %v3054
        %v3057 = vmul.u32 %v3052, %v3053
        %v3058 = vmul.u32 %v3052, %v3054
        %v3059 = vshll.u32 %v3056, 16
        %v3060 = vshrl.u32 %v3056, 16
        %v3061 = vshll.u32 %v3057, 16
        %v3062 = vshrl.u32 %v3057, 16
        %vm3063 = vc.u32 %v3055, %v3059
        %v3064 = vsel %vm3063, 1, 0
        %v3065 = vadd.s32 %v3055, %v3059
        %v3066 = vadd.s32 %v3058, %v3064
        %vm3067 = vc.u32 %v3065, %v3061
        %v3068 = vsel %vm3067, 1, 0
        %v3069 = vadd.s32 %v3065, %v3061
        %v3070 = vadd.s32 %v3066, %v3068
        %v3071 = vadd.s32 %v3070, %v3060
        %v3072 = vadd.s32 %v3071, %v3062
        %v3073 = vand.u32 %v3050, 65535
        %v3074 = vshrl.u32 %v3050, 16
        %v3075 = vand.u32 %v3045, 65535
        %v3076 = vshrl.u32 %v3045, 16
        %v3077 = vmul.u32 %v3073, %v3075
        %v3078 = vmul.u32 %v3073, %v3076
        %v3079 = vmul.u32 %v3074, %v3075
        %v3080 = vmul.u32 %v3074, %v3076
        %v3081 = vshll.u32 %v3078, 16
        %v3082 = vshrl.u32 %v3078, 16
        %v3083 = vshll.u32 %v3079, 16
        %v3084 = vshrl.u32 %v3079, 16
        %vm3085 = vc.u32 %v3077, %v3081
        %v3086 = vsel %vm3085, 1, 0
        %v3087 = vadd.s32 %v3077, %v3081
        %v3088 = vadd.s32 %v3080, %v3086
        %vm3089 = vc.u32 %v3087, %v3083
        %v3090 = vsel %vm3089, 1, 0
        %v3091 = vadd.s32 %v3087, %v3083
        %v3092 = vadd.s32 %v3088, %v3090
        %v3093 = vadd.s32 %v3092, %v3082
        %v3094 = vadd.s32 %v3093, %v3084
        %v3095 = vmul.u32 %v3050, %v3041
        %v3096 = vadd.s32 %v3072, %v3091
        %vm3097 = vc.u32 %v3072, %v3091
        %v3098 = vadd.s32 %v3094, 1
        %v3099 = vsel %vm3097, %v3098, %v3094
        %v3100 = vadd.s32 %v3095, %v3099
        %v3101 = vadd.s32 %v3100, 536870912
        %v3102 = vshrl.u32 %v3101, 30
        %v3103 = vshll.u32 %v3102, 30
        %v3104 = vsub.s32 %v3100, %v3103
        %vm3105 = vcmp.lt.s32.totalorder %v3104, 0
        %v3106 = vsub.s32 0, %v3104
        %v3107 = vsel %vm3105, %v3106, %v3104
        %v3108 = vclz %v3107
        %v3109 = vsub.s32 %v3108, 2
        %vm3110 = vcmp.gt.s32.totalorder 0, %v3109
        %v3111 = vsel %vm3110, 0, %v3109
        %v3112 = vsub.s32 32, %v3111
        %v3113 = vshll.u32 %v3104, %v3111
        %v3114 = vshrl.u32 %v3096, %v3112
        %v3115 = vor.u32 %v3113, %v3114
        %v3116 = vsub.s32 4294967266, %v3111
        %v3117 = vadd.s32 %v3116, 127
        %v3118 = vshll.u32 %v3117, 23
        %v3119 = vor.u32 4788187, %v3118
        %v3120 = vand.u32 2147483647, %v3119
        %v3122 = vcvt.s32.f32 %v3115
        %v3123 = vmul.f32 %v3122, %v3120
        %v3124 = vxor.u32 %v3123, 2147483648
        %v3125 = vsel %vm3004, %v3124, %v3123
        %v3126 = vsub.s32 4, %v3102
        %v3127 = vsel %vm3004, %v3126, %v3102
        %v3128 = vsel %vm3003, %v675, %v3125
        %v3129 = vsel %vm3003, 0, %v3127
        %v3130 = vmul.f32 %v3128, %v3128
        %v3131 = vmul.f32 %v3130, -0.001358992
        %v3132 = vadd.f32 %v3131, 0.041655596
        %v3133 = vmul.f32 %v3130, %v3132
        %v3134 = vadd.f32 %v3133, -0.4999988
        %v3135 = vmul.f32 %v3130, %v3134
        %v3136 = vadd.f32 1.0, %v3135
        %v3137 = vmul.f32 %v3128, %v3128
        %v3138 = vmul.f32 %v3137, -0.00019511016
        %v3139 = vadd.f32 %v3138, 0.008332121
        %v3140 = vmul.f32 %v3137, %v3139
        %v3141 = vadd.f32 %v3140, -0.16666654
        %v3142 = vmul.f32 %v3137, %v3141
        %v3143 = vadd.f32 %v3142, 1.0
        %v3144 = vmul.f32 %v3143, %v3128
        %vm3145 = vweird.f32 %v675
        %v3146 = vand.u32 %v3129, 3
        %vm3147 = vcmp.lt.s32.totalorder %v3146, 2
        %vm3148 = vcmp.eq.s32.totalorder %v3146, 0
        %v3149 = vxor.u32 %v3144, 2147483648
        %v3150 = vsel %vm3148, %v3136, %v3149
        %vm3151 = vcmp.eq.s32.totalorder %v3146, 2
        %v3152 = vxor.u32 %v3136, 2147483648
        %v3153 = vsel %vm3151, %v3152, %v3144
        %v3154 = vsel %vm3147, %v3150, %v3153
        %v3155 = vsel %vm3145, nan, %v3154
        %v3156 = vand.u32 2147483647, %v676
        %vm3157 = vcmp.le.f32.partialorder %v3156, 0.7853982
        %vm3158 = vcmp.lt.s32.totalorder %v676, 0
        %v3159 = vand.u32 %v676, 2139095040
        %v3160 = vshrl.u32 %v3159, 23
        %v3161 = vsub.s32 %v3160, 127
        %v3162 = vand.u32 2147483647, %v676
        %v3163 = vand.u32 %v3162, 8388607
        %v3164 = vor.u32 %v3163, 8388608
        %v3165 = vsub.s32 0, %v3164
        %v3166 = vadd.s32 %v3161, 1
        %vm3167 = vcmp.gt.s32.totalorder %v3166, 0
        %v3168 = vsel %vm3167, %v3166, 0
        %v3169 = vshrl.u32 %v3168, 5
        %v3170 = vand.u32 %v3168, 31
        %v3171 = vsub.s32 32, %v3170
        %v3172 = vshrl.u32 683565275, %v3171
        %v3173 = vshll.u32 683565275, %v3170
        %v3174 = vshrl.u32 2475754826, %v3171
        %v3175 = vor.u32 %v3173, %v3174
        %v3176 = vshll.u32 2475754826, %v3170
        %v3177 = vshrl.u32 2131351028, %v3171
        %v3178 = vor.u32 %v3176, %v3177
        %v3179 = vshll.u32 2131351028, %v3170
        %v3180 = vshrl.u32 2102212464, %v3171
        %v3181 = vor.u32 %v3179, %v3180
        %v3182 = vshll.u32 2102212464, %v3170
        %v3183 = vshrl.u32 920167782, %v3171
        %v3184 = vor.u32 %v3182, %v3183
        %v3185 = vshll.u32 920167782, %v3170
        %v3186 = vshrl.u32 1326507024, %v3171
        %v3187 = vor.u32 %v3185, %v3186
        %vm3188 = vcmp.lt.s32.totalorder %v3169, 1
        %vm3189 = vcmp.lt.s32.totalorder %v3169, 2
        %vm3190 = vcmp.lt.s32.totalorder %v3169, 3
        %vm3191 = vcmp.lt.s32.totalorder %v3169, 4
        %v3192 = vsel %vm3188, %v3172, %v3175
        %v3193 = vsel %vm3191, %v3181, 2102212464
        %v3194 = vsel %vm3190, %v3178, %v3193
        %v3195 = vsel %vm3189, %v3192, %v3194
        %v3196 = vsel %vm3188, %v3175, %v3178
        %v3197 = vsel %vm3191, %v3184, 920167782
        %v3198 = vsel %vm3190, %v3181, %v3197
        %v3199 = vsel %vm3189, %v3196, %v3198
        %v3200 = vsel %vm3188, %v3178, %v3181
        %v3201 = vsel %vm3191, %v3187, 1326507024
        %v3202 = vsel %vm3190, %v3184, %v3201
        %v3203 = vsel %vm3189, %v3200, %v3202
        %v3204 = vshll.u32 %v3164, 8
        %v3205 = vand.u32 %v3204, 65535
        %v3206 = vshrl.u32 %v3204, 16
        %v3207 = vand.u32 %v3203, 65535
        %v3208 = vshrl.u32 %v3203, 16
        %v3209 = vmul.u32 %v3205, %v3207
        %v3210 = vmul.u32 %v3205, %v3208
        %v3211 = vmul.u32 %v3206, %v3207
        %v3212 = vmul.u32 %v3206, %v3208
        %v3213 = vshll.u32 %v3210, 16
        %v3214 = vshrl.u32 %v3210, 16
        %v3215 = vshll.u32 %v3211, 16
        %v3216 = vshrl.u32 %v3211, 16
        %vm3217 = vc.u32 %v3209, %v3213
        %v3218 = vsel %vm3217, 1, 0
        %v3219 = vadd.s32 %v3209, %v3213
        %v3220 = vadd.s32 %v3212, %v3218
        %vm3221 = vc.u32 %v3219, %v3215
        %v3222 = vsel %vm3221, 1, 0
        %v3223 = vadd.s32 %v3219, %v3215
        %v3224 = vadd.s32 %v3220, %v3222
        %v3225 = vadd.s32 %v3224, %v3214
        %v3226 = vadd.s32 %v3225, %v3216
        %v3227 = vand.u32 %v3204, 65535
        %v3228 = vshrl.u32 %v3204, 16
        %v3229 = vand.u32 %v3199, 65535
        %v3230 = vshrl.u32 %v3199, 16
        %v3231 = vmul.u32 %v3227, %v3229
        %v3232 = vmul.u32 %v3227, %v3230
        %v3233 = vmul.u32 %v3228, %v3229
        %v3234 = vmul.u32 %v3228, %v3230
        %v3235 = vshll.u32 %v3232, 16
        %v3236 = vshrl.u32 %v3232, 16
        %v3237 = vshll.u32 %v3233, 16
        %v3238 = vshrl.u32 %v3233, 16
        %vm3239 = vc.u32 %v3231, %v3235
        %v3240 = vsel %vm3239, 1, 0
        %v3241 = vadd.s32 %v3231, %v3235
        %v3242 = vadd.s32 %v3234, %v3240
        %vm3243 = vc.u32 %v3241, %v3237
        %v3244 = vsel %vm3243, 1, 0
        %v3245 = vadd.s32 %v3241, %v3237
        %v3246 = vadd.s32 %v3242, %v3244
        %v3247 = vadd.s32 %v3246, %v3236
        %v3248 = vadd.s32 %v3247, %v3238
        %v3249 = vmul.u32 %v3204, %v3195
        %v3250 = vadd.s32 %v3226, %v3245
        %vm3251 = vc.u32 %v3226, %v3245
        %v3252 = vadd.s32 %v3248, 1
        %v3253 = vsel %vm3251, %v3252, %v3248
        %v3254 = vadd.s32 %v3249, %v3253
        %v3255 = vadd.s32 %v3254, 536870912
        %v3256 = vshrl.u32 %v3255, 30
        %v3257 = vshll.u32 %v3256, 30
        %v3258 = vsub.s32 %v3254, %v3257
        %vm3259 = vcmp.lt.s32.totalorder %v3258, 0
        %v3260 = vsub.s32 0, %v3258
        %v3261 = vsel %vm3259, %v3260, %v3258
        %v3262 = vclz %v3261
        %v3263 = vsub.s32 %v3262, 2
        %vm3264 = vcmp.gt.s32.totalorder 0, %v3263
        %v3265 = vsel %vm3264, 0, %v3263
        %v3266 = vsub.s32 32, %v3265
        %v3267 = vshll.u32 %v3258, %v3265
        %v3268 = vshrl.u32 %v3250, %v3266
        %v3269 = vor.u32 %v3267, %v3268
        %v3270 = vsub.s32 4294967266, %v3265
        %v3271 = vadd.s32 %v3270, 127
        %v3272 = vshll.u32 %v3271, 23
        %v3273 = vor.u32 4788187, %v3272
        %v3274 = vand.u32 2147483647, %v3273
        %v3276 = vcvt.s32.f32 %v3269
        %v3277 = vmul.f32 %v3276, %v3274
        %v3278 = vxor.u32 %v3277, 2147483648
        %v3279 = vsel %vm3158, %v3278, %v3277
        %v3280 = vsub.s32 4, %v3256
        %v3281 = vsel %vm3158, %v3280, %v3256
        %v3282 = vsel %vm3157, %v676, %v3279
        %v3283 = vsel %vm3157, 0, %v3281
        %v3284 = vmul.f32 %v3282, %v3282
        %v3285 = vmul.f32 %v3284, -0.001358992
        %v3286 = vadd.f32 %v3285, 0.041655596
        %v3287 = vmul.f32 %v3284, %v3286
        %v3288 = vadd.f32 %v3287, -0.4999988
        %v3289 = vmul.f32 %v3284, %v3288
        %v3290 = vadd.f32 1.0, %v3289
        %v3291 = vmul.f32 %v3282, %v3282
        %v3292 = vmul.f32 %v3291, -0.00019511016
        %v3293 = vadd.f32 %v3292, 0.008332121
        %v3294 = vmul.f32 %v3291, %v3293
        %v3295 = vadd.f32 %v3294, -0.16666654
        %v3296 = vmul.f32 %v3291, %v3295
        %v3297 = vadd.f32 %v3296, 1.0
        %v3298 = vmul.f32 %v3297, %v3282
        %vm3299 = vweird.f32 %v676
        %v3300 = vand.u32 %v3283, 3
        %vm3301 = vcmp.lt.s32.totalorder %v3300, 2
        %vm3302 = vcmp.eq.s32.totalorder %v3300, 0
        %v3303 = vxor.u32 %v3298, 2147483648
        %v3304 = vsel %vm3302, %v3290, %v3303
        %vm3305 = vcmp.eq.s32.totalorder %v3300, 2
        %v3306 = vxor.u32 %v3290, 2147483648
        %v3307 = vsel %vm3305, %v3306, %v3298
        %v3308 = vsel %vm3301, %v3304, %v3307
        %v3309 = vsel %vm3299, nan, %v3308
        %v3310 = vand.u32 2147483647, %v677
        %vm3311 = vcmp.le.f32.partialorder %v3310, 0.7853982
        %vm3312 = vcmp.lt.s32.totalorder %v677, 0
        %v3313 = vand.u32 %v677, 2139095040
        %v3314 = vshrl.u32 %v3313, 23
        %v3315 = vsub.s32 %v3314, 127
        %v3316 = vand.u32 2147483647, %v677
        %v3317 = vand.u32 %v3316, 8388607
        %v3318 = vor.u32 %v3317, 8388608
        %v3319 = vsub.s32 0, %v3318
        %v3320 = vadd.s32 %v3315, 1
        %vm3321 = vcmp.gt.s32.totalorder %v3320, 0
        %v3322 = vsel %vm3321, %v3320, 0
        %v3323 = vshrl.u32 %v3322, 5
        %v3324 = vand.u32 %v3322, 31
        %v3325 = vsub.s32 32, %v3324
        %v3326 = vshrl.u32 683565275, %v3325
        %v3327 = vshll.u32 683565275, %v3324
        %v3328 = vshrl.u32 2475754826, %v3325
        %v3329 = vor.u32 %v3327, %v3328
        %v3330 = vshll.u32 2475754826, %v3324
        %v3331 = vshrl.u32 2131351028, %v3325
        %v3332 = vor.u32 %v3330, %v3331
        %v3333 = vshll.u32 2131351028, %v3324
        %v3334 = vshrl.u32 2102212464, %v3325
        %v3335 = vor.u32 %v3333, %v3334
        %v3336 = vshll.u32 2102212464, %v3324
        %v3337 = vshrl.u32 920167782, %v3325
        %v3338 = vor.u32 %v3336, %v3337
        %v3339 = vshll.u32 920167782, %v3324
        %v3340 = vshrl.u32 1326507024, %v3325
        %v3341 = vor.u32 %v3339, %v3340
        %vm3342 = vcmp.lt.s32.totalorder %v3323, 1
        %vm3343 = vcmp.lt.s32.totalorder %v3323, 2
        %vm3344 = vcmp.lt.s32.totalorder %v3323, 3
        %vm3345 = vcmp.lt.s32.totalorder %v3323, 4
        %v3346 = vsel %vm3342, %v3326, %v3329
        %v3347 = vsel %vm3345, %v3335, 2102212464
        %v3348 = vsel %vm3344, %v3332, %v3347
        %v3349 = vsel %vm3343, %v3346, %v3348
        %v3350 = vsel %vm3342, %v3329, %v3332
        %v3351 = vsel %vm3345, %v3338, 920167782
        %v3352 = vsel %vm3344, %v3335, %v3351
        %v3353 = vsel %vm3343, %v3350, %v3352
        %v3354 = vsel %vm3342, %v3332, %v3335
        %v3355 = vsel %vm3345, %v3341, 1326507024
        %v3356 = vsel %vm3344, %v3338, %v3355
        %v3357 = vsel %vm3343, %v3354, %v3356
        %v3358 = vshll.u32 %v3318, 8
        %v3359 = vand.u32 %v3358, 65535
        %v3360 = vshrl.u32 %v3358, 16
        %v3361 = vand.u32 %v3357, 65535
        %v3362 = vshrl.u32 %v3357, 16
        %v3363 = vmul.u32 %v3359, %v3361
        %v3364 = vmul.u32 %v3359, %v3362
        %v3365 = vmul.u32 %v3360, %v3361
        %v3366 = vmul.u32 %v3360, %v3362
        %v3367 = vshll.u32 %v3364, 16
        %v3368 = vshrl.u32 %v3364, 16
        %v3369 = vshll.u32 %v3365, 16
        %v3370 = vshrl.u32 %v3365, 16
        %vm3371 = vc.u32 %v3363, %v3367
        %v3372 = vsel %vm3371, 1, 0
        %v3373 = vadd.s32 %v3363, %v3367
        %v3374 = vadd.s32 %v3366, %v3372
        %vm3375 = vc.u32 %v3373, %v3369
        %v3376 = vsel %vm3375, 1, 0
        %v3377 = vadd.s32 %v3373, %v3369
        %v3378 = vadd.s32 %v3374, %v3376
        %v3379 = vadd.s32 %v3378, %v3368
        %v3380 = vadd.s32 %v3379, %v3370
        %v3381 = vand.u32 %v3358, 65535
        %v3382 = vshrl.u32 %v3358, 16
        %v3383 = vand.u32 %v3353, 65535
        %v3384 = vshrl.u32 %v3353, 16
        %v3385 = vmul.u32 %v3381, %v3383
        %v3386 = vmul.u32 %v3381, %v3384
        %v3387 = vmul.u32 %v3382, %v3383
        %v3388 = vmul.u32 %v3382, %v3384
        %v3389 = vshll.u32 %v3386, 16
        %v3390 = vshrl.u32 %v3386, 16
        %v3391 = vshll.u32 %v3387, 16
        %v3392 = vshrl.u32 %v3387, 16
        %vm3393 = vc.u32 %v3385, %v3389
        %v3394 = vsel %vm3393, 1, 0
        %v3395 = vadd.s32 %v3385, %v3389
        %v3396 = vadd.s32 %v3388, %v3394
        %vm3397 = vc.u32 %v3395, %v3391
        %v3398 = vsel %vm3397, 1, 0
        %v3399 = vadd.s32 %v3395, %v3391
        %v3400 = vadd.s32 %v3396, %v3398
        %v3401 = vadd.s32 %v3400, %v3390
        %v3402 = vadd.s32 %v3401, %v3392
        %v3403 = vmul.u32 %v3358, %v3349
        %v3404 = vadd.s32 %v3380, %v3399
        %vm3405 = vc.u32 %v3380, %v3399
        %v3406 = vadd.s32 %v3402, 1
        %v3407 = vsel %vm3405, %v3406, %v3402
        %v3408 = vadd.s32 %v3403, %v3407
        %v3409 = vadd.s32 %v3408, 536870912
        %v3410 = vshrl.u32 %v3409, 30
        %v3411 = vshll.u32 %v3410, 30
        %v3412 = vsub.s32 %v3408, %v3411
        %vm3413 = vcmp.lt.s32.totalorder %v3412, 0
        %v3414 = vsub.s32 0, %v3412
        %v3415 = vsel %vm3413, %v3414, %v3412
        %v3416 = vclz %v3415
        %v3417 = vsub.s32 %v3416, 2
        %vm3418 = vcmp.gt.s32.totalorder 0, %v3417
        %v3419 = vsel %vm3418, 0, %v3417
        %v3420 = vsub.s32 32, %v3419
        %v3421 = vshll.u32 %v3412, %v3419
        %v3422 = vshrl.u32 %v3404, %v3420
        %v3423 = vor.u32 %v3421, %v3422
        %v3424 = vsub.s32 4294967266, %v3419
        %v3425 = vadd.s32 %v3424, 127
        %v3426 = vshll.u32 %v3425, 23
        %v3427 = vor.u32 4788187, %v3426
        %v3428 = vand.u32 2147483647, %v3427
        %v3430 = vcvt.s32.f32 %v3423
        %v3431 = vmul.f32 %v3430, %v3428
        %v3432 = vxor.u32 %v3431, 2147483648
        %v3433 = vsel %vm3312, %v3432, %v3431
        %v3434 = vsub.s32 4, %v3410
        %v3435 = vsel %vm3312, %v3434, %v3410
        %v3436 = vsel %vm3311, %v677, %v3433
        %v3437 = vsel %vm3311, 0, %v3435
        %v3438 = vmul.f32 %v3436, %v3436
        %v3439 = vmul.f32 %v3438, -0.001358992
        %v3440 = vadd.f32 %v3439, 0.041655596
        %v3441 = vmul.f32 %v3438, %v3440
        %v3442 = vadd.f32 %v3441, -0.4999988
        %v3443 = vmul.f32 %v3438, %v3442
        %v3444 = vadd.f32 1.0, %v3443
        %v3445 = vmul.f32 %v3436, %v3436
        %v3446 = vmul.f32 %v3445, -0.00019511016
        %v3447 = vadd.f32 %v3446, 0.008332121
        %v3448 = vmul.f32 %v3445, %v3447
        %v3449 = vadd.f32 %v3448, -0.16666654
        %v3450 = vmul.f32 %v3445, %v3449
        %v3451 = vadd.f32 %v3450, 1.0
        %v3452 = vmul.f32 %v3451, %v3436
        %vm3453 = vweird.f32 %v677
        %v3454 = vand.u32 %v3437, 3
        %vm3455 = vcmp.lt.s32.totalorder %v3454, 2
        %vm3456 = vcmp.eq.s32.totalorder %v3454, 0
        %v3457 = vxor.u32 %v3452, 2147483648
        %v3458 = vsel %vm3456, %v3444, %v3457
        %vm3459 = vcmp.eq.s32.totalorder %v3454, 2
        %v3460 = vxor.u32 %v3444, 2147483648
        %v3461 = vsel %vm3459, %v3460, %v3452
        %v3462 = vsel %vm3455, %v3458, %v3461
        %v3463 = vsel %vm3453, nan, %v3462
        %v3464 = vand.u32 2147483647, %v678
        %vm3465 = vcmp.le.f32.partialorder %v3464, 0.7853982
        %vm3466 = vcmp.lt.s32.totalorder %v678, 0
        %v3467 = vand.u32 %v678, 2139095040
        %v3468 = vshrl.u32 %v3467, 23
        %v3469 = vsub.s32 %v3468, 127
        %v3470 = vand.u32 2147483647, %v678
        %v3471 = vand.u32 %v3470, 8388607
        %v3472 = vor.u32 %v3471, 8388608
        %v3473 = vsub.s32 0, %v3472
        %v3474 = vadd.s32 %v3469, 1
        %vm3475 = vcmp.gt.s32.totalorder %v3474, 0
        %v3476 = vsel %vm3475, %v3474, 0
        %v3477 = vshrl.u32 %v3476, 5
        %v3478 = vand.u32 %v3476, 31
        %v3479 = vsub.s32 32, %v3478
        %v3480 = vshrl.u32 683565275, %v3479
        %v3481 = vshll.u32 683565275, %v3478
        %v3482 = vshrl.u32 2475754826, %v3479
        %v3483 = vor.u32 %v3481, %v3482
        %v3484 = vshll.u32 2475754826, %v3478
        %v3485 = vshrl.u32 2131351028, %v3479
        %v3486 = vor.u32 %v3484, %v3485
        %v3487 = vshll.u32 2131351028, %v3478
        %v3488 = vshrl.u32 2102212464, %v3479
        %v3489 = vor.u32 %v3487, %v3488
        %v3490 = vshll.u32 2102212464, %v3478
        %v3491 = vshrl.u32 920167782, %v3479
        %v3492 = vor.u32 %v3490, %v3491
        %v3493 = vshll.u32 920167782, %v3478
        %v3494 = vshrl.u32 1326507024, %v3479
        %v3495 = vor.u32 %v3493, %v3494
        %vm3496 = vcmp.lt.s32.totalorder %v3477, 1
        %vm3497 = vcmp.lt.s32.totalorder %v3477, 2
        %vm3498 = vcmp.lt.s32.totalorder %v3477, 3
        %vm3499 = vcmp.lt.s32.totalorder %v3477, 4
        %v3500 = vsel %vm3496, %v3480, %v3483
        %v3501 = vsel %vm3499, %v3489, 2102212464
        %v3502 = vsel %vm3498, %v3486, %v3501
        %v3503 = vsel %vm3497, %v3500, %v3502
        %v3504 = vsel %vm3496, %v3483, %v3486
        %v3505 = vsel %vm3499, %v3492, 920167782
        %v3506 = vsel %vm3498, %v3489, %v3505
        %v3507 = vsel %vm3497, %v3504, %v3506
        %v3508 = vsel %vm3496, %v3486, %v3489
        %v3509 = vsel %vm3499, %v3495, 1326507024
        %v3510 = vsel %vm3498, %v3492, %v3509
        %v3511 = vsel %vm3497, %v3508, %v3510
        %v3512 = vshll.u32 %v3472, 8
        %v3513 = vand.u32 %v3512, 65535
        %v3514 = vshrl.u32 %v3512, 16
        %v3515 = vand.u32 %v3511, 65535
        %v3516 = vshrl.u32 %v3511, 16
        %v3517 = vmul.u32 %v3513, %v3515
        %v3518 = vmul.u32 %v3513, %v3516
        %v3519 = vmul.u32 %v3514, %v3515
        %v3520 = vmul.u32 %v3514, %v3516
        %v3521 = vshll.u32 %v3518, 16
        %v3522 = vshrl.u32 %v3518, 16
        %v3523 = vshll.u32 %v3519, 16
        %v3524 = vshrl.u32 %v3519, 16
        %vm3525 = vc.u32 %v3517, %v3521
        %v3526 = vsel %vm3525, 1, 0
        %v3527 = vadd.s32 %v3517, %v3521
        %v3528 = vadd.s32 %v3520, %v3526
        %vm3529 = vc.u32 %v3527, %v3523
        %v3530 = vsel %vm3529, 1, 0
        %v3531 = vadd.s32 %v3527, %v3523
        %v3532 = vadd.s32 %v3528, %v3530
        %v3533 = vadd.s32 %v3532, %v3522
        %v3534 = vadd.s32 %v3533, %v3524
        %v3535 = vand.u32 %v3512, 65535
        %v3536 = vshrl.u32 %v3512, 16
        %v3537 = vand.u32 %v3507, 65535
        %v3538 = vshrl.u32 %v3507, 16
        %v3539 = vmul.u32 %v3535, %v3537
        %v3540 = vmul.u32 %v3535, %v3538
        %v3541 = vmul.u32 %v3536, %v3537
        %v3542 = vmul.u32 %v3536, %v3538
        %v3543 = vshll.u32 %v3540, 16
        %v3544 = vshrl.u32 %v3540, 16
        %v3545 = vshll.u32 %v3541, 16
        %v3546 = vshrl.u32 %v3541, 16
        %vm3547 = vc.u32 %v3539, %v3543
        %v3548 = vsel %vm3547, 1, 0
        %v3549 = vadd.s32 %v3539, %v3543
        %v3550 = vadd.s32 %v3542, %v3548
        %vm3551 = vc.u32 %v3549, %v3545
        %v3552 = vsel %vm3551, 1, 0
        %v3553 = vadd.s32 %v3549, %v3545
        %v3554 = vadd.s32 %v3550, %v3552
        %v3555 = vadd.s32 %v3554, %v3544
        %v3556 = vadd.s32 %v3555, %v3546
        %v3557 = vmul.u32 %v3512, %v3503
        %v3558 = vadd.s32 %v3534, %v3553
        %vm3559 = vc.u32 %v3534, %v3553
        %v3560 = vadd.s32 %v3556, 1
        %v3561 = vsel %vm3559, %v3560, %v3556
        %v3562 = vadd.s32 %v3557, %v3561
        %v3563 = vadd.s32 %v3562, 536870912
        %v3564 = vshrl.u32 %v3563, 30
        %v3565 = vshll.u32 %v3564, 30
        %v3566 = vsub.s32 %v3562, %v3565
        %vm3567 = vcmp.lt.s32.totalorder %v3566, 0
        %v3568 = vsub.s32 0, %v3566
        %v3569 = vsel %vm3567, %v3568, %v3566
        %v3570 = vclz %v3569
        %v3571 = vsub.s32 %v3570, 2
        %vm3572 = vcmp.gt.s32.totalorder 0, %v3571
        %v3573 = vsel %vm3572, 0, %v3571
        %v3574 = vsub.s32 32, %v3573
        %v3575 = vshll.u32 %v3566, %v3573
        %v3576 = vshrl.u32 %v3558, %v3574
        %v3577 = vor.u32 %v3575, %v3576
        %v3578 = vsub.s32 4294967266, %v3573
        %v3579 = vadd.s32 %v3578, 127
        %v3580 = vshll.u32 %v3579, 23
        %v3581 = vor.u32 4788187, %v3580
        %v3582 = vand.u32 2147483647, %v3581
        %v3584 = vcvt.s32.f32 %v3577
        %v3585 = vmul.f32 %v3584, %v3582
        %v3586 = vxor.u32 %v3585, 2147483648
        %v3587 = vsel %vm3466, %v3586, %v3585
        %v3588 = vsub.s32 4, %v3564
        %v3589 = vsel %vm3466, %v3588, %v3564
        %v3590 = vsel %vm3465, %v678, %v3587
        %v3591 = vsel %vm3465, 0, %v3589
        %v3592 = vmul.f32 %v3590, %v3590
        %v3593 = vmul.f32 %v3592, -0.001358992
        %v3594 = vadd.f32 %v3593, 0.041655596
        %v3595 = vmul.f32 %v3592, %v3594
        %v3596 = vadd.f32 %v3595, -0.4999988
        %v3597 = vmul.f32 %v3592, %v3596
        %v3598 = vadd.f32 1.0, %v3597
        %v3599 = vmul.f32 %v3590, %v3590
        %v3600 = vmul.f32 %v3599, -0.00019511016
        %v3601 = vadd.f32 %v3600, 0.008332121
        %v3602 = vmul.f32 %v3599, %v3601
        %v3603 = vadd.f32 %v3602, -0.16666654
        %v3604 = vmul.f32 %v3599, %v3603
        %v3605 = vadd.f32 %v3604, 1.0
        %v3606 = vmul.f32 %v3605, %v3590
        %vm3607 = vweird.f32 %v678
        %v3608 = vand.u32 %v3591, 3
        %vm3609 = vcmp.lt.s32.totalorder %v3608, 2
        %vm3610 = vcmp.eq.s32.totalorder %v3608, 0
        %v3611 = vxor.u32 %v3606, 2147483648
        %v3612 = vsel %vm3610, %v3598, %v3611
        %vm3613 = vcmp.eq.s32.totalorder %v3608, 2
        %v3614 = vxor.u32 %v3598, 2147483648
        %v3615 = vsel %vm3613, %v3614, %v3606
        %v3616 = vsel %vm3609, %v3612, %v3615
        %v3617 = vsel %vm3607, nan, %v3616
        %v3618 = vand.u32 2147483647, %v679
        %vm3619 = vcmp.le.f32.partialorder %v3618, 0.7853982
        %vm3620 = vcmp.lt.s32.totalorder %v679, 0
        %v3621 = vand.u32 %v679, 2139095040
        %v3622 = vshrl.u32 %v3621, 23
        %v3623 = vsub.s32 %v3622, 127
        %v3624 = vand.u32 2147483647, %v679
        %v3625 = vand.u32 %v3624, 8388607
        %v3626 = vor.u32 %v3625, 8388608
        %v3627 = vsub.s32 0, %v3626
        %v3628 = vadd.s32 %v3623, 1
        %vm3629 = vcmp.gt.s32.totalorder %v3628, 0
        %v3630 = vsel %vm3629, %v3628, 0
        %v3631 = vshrl.u32 %v3630, 5
        %v3632 = vand.u32 %v3630, 31
        %v3633 = vsub.s32 32, %v3632
        %v3634 = vshrl.u32 683565275, %v3633
        %v3635 = vshll.u32 683565275, %v3632
        %v3636 = vshrl.u32 2475754826, %v3633
        %v3637 = vor.u32 %v3635, %v3636
        %v3638 = vshll.u32 2475754826, %v3632
        %v3639 = vshrl.u32 2131351028, %v3633
        %v3640 = vor.u32 %v3638, %v3639
        %v3641 = vshll.u32 2131351028, %v3632
        %v3642 = vshrl.u32 2102212464, %v3633
        %v3643 = vor.u32 %v3641, %v3642
        %v3644 = vshll.u32 2102212464, %v3632
        %v3645 = vshrl.u32 920167782, %v3633
        %v3646 = vor.u32 %v3644, %v3645
        %v3647 = vshll.u32 920167782, %v3632
        %v3648 = vshrl.u32 1326507024, %v3633
        %v3649 = vor.u32 %v3647, %v3648
        %vm3650 = vcmp.lt.s32.totalorder %v3631, 1
        %vm3651 = vcmp.lt.s32.totalorder %v3631, 2
        %vm3652 = vcmp.lt.s32.totalorder %v3631, 3
        %vm3653 = vcmp.lt.s32.totalorder %v3631, 4
        %v3654 = vsel %vm3650, %v3634, %v3637
        %v3655 = vsel %vm3653, %v3643, 2102212464
        %v3656 = vsel %vm3652, %v3640, %v3655
        %v3657 = vsel %vm3651, %v3654, %v3656
        %v3658 = vsel %vm3650, %v3637, %v3640
        %v3659 = vsel %vm3653, %v3646, 920167782
        %v3660 = vsel %vm3652, %v3643, %v3659
        %v3661 = vsel %vm3651, %v3658, %v3660
        %v3662 = vsel %vm3650, %v3640, %v3643
        %v3663 = vsel %vm3653, %v3649, 1326507024
        %v3664 = vsel %vm3652, %v3646, %v3663
        %v3665 = vsel %vm3651, %v3662, %v3664
        %v3666 = vshll.u32 %v3626, 8
        %v3667 = vand.u32 %v3666, 65535
        %v3668 = vshrl.u32 %v3666, 16
        %v3669 = vand.u32 %v3665, 65535
        %v3670 = vshrl.u32 %v3665, 16
        %v3671 = vmul.u32 %v3667, %v3669
        %v3672 = vmul.u32 %v3667, %v3670
        %v3673 = vmul.u32 %v3668, %v3669
        %v3674 = vmul.u32 %v3668, %v3670
        %v3675 = vshll.u32 %v3672, 16
        %v3676 = vshrl.u32 %v3672, 16
        %v3677 = vshll.u32 %v3673, 16
        %v3678 = vshrl.u32 %v3673, 16
        %vm3679 = vc.u32 %v3671, %v3675
        %v3680 = vsel %vm3679, 1, 0
        %v3681 = vadd.s32 %v3671, %v3675
        %v3682 = vadd.s32 %v3674, %v3680
        %vm3683 = vc.u32 %v3681, %v3677
        %v3684 = vsel %vm3683, 1, 0
        %v3685 = vadd.s32 %v3681, %v3677
        %v3686 = vadd.s32 %v3682, %v3684
        %v3687 = vadd.s32 %v3686, %v3676
        %v3688 = vadd.s32 %v3687, %v3678
        %v3689 = vand.u32 %v3666, 65535
        %v3690 = vshrl.u32 %v3666, 16
        %v3691 = vand.u32 %v3661, 65535
        %v3692 = vshrl.u32 %v3661, 16
        %v3693 = vmul.u32 %v3689, %v3691
        %v3694 = vmul.u32 %v3689, %v3692
        %v3695 = vmul.u32 %v3690, %v3691
        %v3696 = vmul.u32 %v3690, %v3692
        %v3697 = vshll.u32 %v3694, 16
        %v3698 = vshrl.u32 %v3694, 16
        %v3699 = vshll.u32 %v3695, 16
        %v3700 = vshrl.u32 %v3695, 16
        %vm3701 = vc.u32 %v3693, %v3697
        %v3702 = vsel %vm3701, 1, 0
        %v3703 = vadd.s32 %v3693, %v3697
        %v3704 = vadd.s32 %v3696, %v3702
        %vm3705 = vc.u32 %v3703, %v3699
        %v3706 = vsel %vm3705, 1, 0
        %v3707 = vadd.s32 %v3703, %v3699
        %v3708 = vadd.s32 %v3704, %v3706
        %v3709 = vadd.s32 %v3708, %v3698
        %v3710 = vadd.s32 %v3709, %v3700
        %v3711 = vmul.u32 %v3666, %v3657
        %v3712 = vadd.s32 %v3688, %v3707
        %vm3713 = vc.u32 %v3688, %v3707
        %v3714 = vadd.s32 %v3710, 1
        %v3715 = vsel %vm3713, %v3714, %v3710
        %v3716 = vadd.s32 %v3711, %v3715
        %v3717 = vadd.s32 %v3716, 536870912
        %v3718 = vshrl.u32 %v3717, 30
        %v3719 = vshll.u32 %v3718, 30
        %v3720 = vsub.s32 %v3716, %v3719
        %vm3721 = vcmp.lt.s32.totalorder %v3720, 0
        %v3722 = vsub.s32 0, %v3720
        %v3723 = vsel %vm3721, %v3722, %v3720
        %v3724 = vclz %v3723
        %v3725 = vsub.s32 %v3724, 2
        %vm3726 = vcmp.gt.s32.totalorder 0, %v3725
        %v3727 = vsel %vm3726, 0, %v3725
        %v3728 = vsub.s32 32, %v3727
        %v3729 = vshll.u32 %v3720, %v3727
        %v3730 = vshrl.u32 %v3712, %v3728
        %v3731 = vor.u32 %v3729, %v3730
        %v3732 = vsub.s32 4294967266, %v3727
        %v3733 = vadd.s32 %v3732, 127
        %v3734 = vshll.u32 %v3733, 23
        %v3735 = vor.u32 4788187, %v3734
        %v3736 = vand.u32 2147483647, %v3735
        %v3738 = vcvt.s32.f32 %v3731
        %v3739 = vmul.f32 %v3738, %v3736
        %v3740 = vxor.u32 %v3739, 2147483648
        %v3741 = vsel %vm3620, %v3740, %v3739
        %v3742 = vsub.s32 4, %v3718
        %v3743 = vsel %vm3620, %v3742, %v3718
        %v3744 = vsel %vm3619, %v679, %v3741
        %v3745 = vsel %vm3619, 0, %v3743
        %v3746 = vmul.f32 %v3744, %v3744
        %v3747 = vmul.f32 %v3746, -0.001358992
        %v3748 = vadd.f32 %v3747, 0.041655596
        %v3749 = vmul.f32 %v3746, %v3748
        %v3750 = vadd.f32 %v3749, -0.4999988
        %v3751 = vmul.f32 %v3746, %v3750
        %v3752 = vadd.f32 1.0, %v3751
        %v3753 = vmul.f32 %v3744, %v3744
        %v3754 = vmul.f32 %v3753, -0.00019511016
        %v3755 = vadd.f32 %v3754, 0.008332121
        %v3756 = vmul.f32 %v3753, %v3755
        %v3757 = vadd.f32 %v3756, -0.16666654
        %v3758 = vmul.f32 %v3753, %v3757
        %v3759 = vadd.f32 %v3758, 1.0
        %v3760 = vmul.f32 %v3759, %v3744
        %vm3761 = vweird.f32 %v679
        %v3762 = vand.u32 %v3745, 3
        %vm3763 = vcmp.lt.s32.totalorder %v3762, 2
        %vm3764 = vcmp.eq.s32.totalorder %v3762, 0
        %v3765 = vxor.u32 %v3760, 2147483648
        %v3766 = vsel %vm3764, %v3752, %v3765
        %vm3767 = vcmp.eq.s32.totalorder %v3762, 2
        %v3768 = vxor.u32 %v3752, 2147483648
        %v3769 = vsel %vm3767, %v3768, %v3760
        %v3770 = vsel %vm3763, %v3766, %v3769
        %v3771 = vsel %vm3761, nan, %v3770
        %v3772 = vand.u32 2147483647, %v680
        %vm3773 = vcmp.le.f32.partialorder %v3772, 0.7853982
        %vm3774 = vcmp.lt.s32.totalorder %v680, 0
        %v3775 = vand.u32 %v680, 2139095040
        %v3776 = vshrl.u32 %v3775, 23
        %v3777 = vsub.s32 %v3776, 127
        %v3778 = vand.u32 2147483647, %v680
        %v3779 = vand.u32 %v3778, 8388607
        %v3780 = vor.u32 %v3779, 8388608
        %v3781 = vsub.s32 0, %v3780
        %v3782 = vadd.s32 %v3777, 1
        %vm3783 = vcmp.gt.s32.totalorder %v3782, 0
        %v3784 = vsel %vm3783, %v3782, 0
        %v3785 = vshrl.u32 %v3784, 5
        %v3786 = vand.u32 %v3784, 31
        %v3787 = vsub.s32 32, %v3786
        %v3788 = vshrl.u32 683565275, %v3787
        %v3789 = vshll.u32 683565275, %v3786
        %v3790 = vshrl.u32 2475754826, %v3787
        %v3791 = vor.u32 %v3789, %v3790
        %v3792 = vshll.u32 2475754826, %v3786
        %v3793 = vshrl.u32 2131351028, %v3787
        %v3794 = vor.u32 %v3792, %v3793
        %v3795 = vshll.u32 2131351028, %v3786
        %v3796 = vshrl.u32 2102212464, %v3787
        %v3797 = vor.u32 %v3795, %v3796
        %v3798 = vshll.u32 2102212464, %v3786
        %v3799 = vshrl.u32 920167782, %v3787
        %v3800 = vor.u32 %v3798, %v3799
        %v3801 = vshll.u32 920167782, %v3786
        %v3802 = vshrl.u32 1326507024, %v3787
        %v3803 = vor.u32 %v3801, %v3802
        %vm3804 = vcmp.lt.s32.totalorder %v3785, 1
        %vm3805 = vcmp.lt.s32.totalorder %v3785, 2
        %vm3806 = vcmp.lt.s32.totalorder %v3785, 3
        %vm3807 = vcmp.lt.s32.totalorder %v3785, 4
        %v3808 = vsel %vm3804, %v3788, %v3791
        %v3809 = vsel %vm3807, %v3797, 2102212464
        %v3810 = vsel %vm3806, %v3794, %v3809
        %v3811 = vsel %vm3805, %v3808, %v3810
        %v3812 = vsel %vm3804, %v3791, %v3794
        %v3813 = vsel %vm3807, %v3800, 920167782
        %v3814 = vsel %vm3806, %v3797, %v3813
        %v3815 = vsel %vm3805, %v3812, %v3814
        %v3816 = vsel %vm3804, %v3794, %v3797
        %v3817 = vsel %vm3807, %v3803, 1326507024
        %v3818 = vsel %vm3806, %v3800, %v3817
        %v3819 = vsel %vm3805, %v3816, %v3818
        %v3820 = vshll.u32 %v3780, 8
        %v3821 = vand.u32 %v3820, 65535
        %v3822 = vshrl.u32 %v3820, 16
        %v3823 = vand.u32 %v3819, 65535
        %v3824 = vshrl.u32 %v3819, 16
        %v3825 = vmul.u32 %v3821, %v3823
        %v3826 = vmul.u32 %v3821, %v3824
        %v3827 = vmul.u32 %v3822, %v3823
        %v3828 = vmul.u32 %v3822, %v3824
        %v3829 = vshll.u32 %v3826, 16
        %v3830 = vshrl.u32 %v3826, 16
        %v3831 = vshll.u32 %v3827, 16
        %v3832 = vshrl.u32 %v3827, 16
        %vm3833 = vc.u32 %v3825, %v3829
        %v3834 = vsel %vm3833, 1, 0
        %v3835 = vadd.s32 %v3825, %v3829
        %v3836 = vadd.s32 %v3828, %v3834
        %vm3837 = vc.u32 %v3835, %v3831
        %v3838 = vsel %vm3837, 1, 0
        %v3839 = vadd.s32 %v3835, %v3831
        %v3840 = vadd.s32 %v3836, %v3838
        %v3841 = vadd.s32 %v3840, %v3830
        %v3842 = vadd.s32 %v3841, %v3832
        %v3843 = vand.u32 %v3820, 65535
        %v3844 = vshrl.u32 %v3820, 16
        %v3845 = vand.u32 %v3815, 65535
        %v3846 = vshrl.u32 %v3815, 16
        %v3847 = vmul.u32 %v3843, %v3845
        %v3848 = vmul.u32 %v3843, %v3846
        %v3849 = vmul.u32 %v3844, %v3845
        %v3850 = vmul.u32 %v3844, %v3846
        %v3851 = vshll.u32 %v3848, 16
        %v3852 = vshrl.u32 %v3848, 16
        %v3853 = vshll.u32 %v3849, 16
        %v3854 = vshrl.u32 %v3849, 16
        %vm3855 = vc.u32 %v3847, %v3851
        %v3856 = vsel %vm3855, 1, 0
        %v3857 = vadd.s32 %v3847, %v3851
        %v3858 = vadd.s32 %v3850, %v3856
        %vm3859 = vc.u32 %v3857, %v3853
        %v3860 = vsel %vm3859, 1, 0
        %v3861 = vadd.s32 %v3857, %v3853
        %v3862 = vadd.s32 %v3858, %v3860
        %v3863 = vadd.s32 %v3862, %v3852
        %v3864 = vadd.s32 %v3863, %v3854
        %v3865 = vmul.u32 %v3820, %v3811
        %v3866 = vadd.s32 %v3842, %v3861
        %vm3867 = vc.u32 %v3842, %v3861
        %v3868 = vadd.s32 %v3864, 1
        %v3869 = vsel %vm3867, %v3868, %v3864
        %v3870 = vadd.s32 %v3865, %v3869
        %v3871 = vadd.s32 %v3870, 536870912
        %v3872 = vshrl.u32 %v3871, 30
        %v3873 = vshll.u32 %v3872, 30
        %v3874 = vsub.s32 %v3870, %v3873
        %vm3875 = vcmp.lt.s32.totalorder %v3874, 0
        %v3876 = vsub.s32 0, %v3874
        %v3877 = vsel %vm3875, %v3876, %v3874
        %v3878 = vclz %v3877
        %v3879 = vsub.s32 %v3878, 2
        %vm3880 = vcmp.gt.s32.totalorder 0, %v3879
        %v3881 = vsel %vm3880, 0, %v3879
        %v3882 = vsub.s32 32, %v3881
        %v3883 = vshll.u32 %v3874, %v3881
        %v3884 = vshrl.u32 %v3866, %v3882
        %v3885 = vor.u32 %v3883, %v3884
        %v3886 = vsub.s32 4294967266, %v3881
        %v3887 = vadd.s32 %v3886, 127
        %v3888 = vshll.u32 %v3887, 23
        %v3889 = vor.u32 4788187, %v3888
        %v3890 = vand.u32 2147483647, %v3889
        %v3892 = vcvt.s32.f32 %v3885
        %v3893 = vmul.f32 %v3892, %v3890
        %v3894 = vxor.u32 %v3893, 2147483648
        %v3895 = vsel %vm3774, %v3894, %v3893
        %v3896 = vsub.s32 4, %v3872
        %v3897 = vsel %vm3774, %v3896, %v3872
        %v3898 = vsel %vm3773, %v680, %v3895
        %v3899 = vsel %vm3773, 0, %v3897
        %v3900 = vmul.f32 %v3898, %v3898
        %v3901 = vmul.f32 %v3900, -0.001358992
        %v3902 = vadd.f32 %v3901, 0.041655596
        %v3903 = vmul.f32 %v3900, %v3902
        %v3904 = vadd.f32 %v3903, -0.4999988
        %v3905 = vmul.f32 %v3900, %v3904
        %v3906 = vadd.f32 1.0, %v3905
        %v3907 = vmul.f32 %v3898, %v3898
        %v3908 = vmul.f32 %v3907, -0.00019511016
        %v3909 = vadd.f32 %v3908, 0.008332121
        %v3910 = vmul.f32 %v3907, %v3909
        %v3911 = vadd.f32 %v3910, -0.16666654
        %v3912 = vmul.f32 %v3907, %v3911
        %v3913 = vadd.f32 %v3912, 1.0
        %v3914 = vmul.f32 %v3913, %v3898
        %vm3915 = vweird.f32 %v680
        %v3916 = vand.u32 %v3899, 3
        %vm3917 = vcmp.lt.s32.totalorder %v3916, 2
        %vm3918 = vcmp.eq.s32.totalorder %v3916, 0
        %v3919 = vxor.u32 %v3914, 2147483648
        %v3920 = vsel %vm3918, %v3906, %v3919
        %vm3921 = vcmp.eq.s32.totalorder %v3916, 2
        %v3922 = vxor.u32 %v3906, 2147483648
        %v3923 = vsel %vm3921, %v3922, %v3914
        %v3924 = vsel %vm3917, %v3920, %v3923
        %v3925 = vsel %vm3915, nan, %v3924
        %v3926 = vand.u32 2147483647, %v681
        %vm3927 = vcmp.le.f32.partialorder %v3926, 0.7853982
        %vm3928 = vcmp.lt.s32.totalorder %v681, 0
        %v3929 = vand.u32 %v681, 2139095040
        %v3930 = vshrl.u32 %v3929, 23
        %v3931 = vsub.s32 %v3930, 127
        %v3932 = vand.u32 2147483647, %v681
        %v3933 = vand.u32 %v3932, 8388607
        %v3934 = vor.u32 %v3933, 8388608
        %v3935 = vsub.s32 0, %v3934
        %v3936 = vadd.s32 %v3931, 1
        %vm3937 = vcmp.gt.s32.totalorder %v3936, 0
        %v3938 = vsel %vm3937, %v3936, 0
        %v3939 = vshrl.u32 %v3938, 5
        %v3940 = vand.u32 %v3938, 31
        %v3941 = vsub.s32 32, %v3940
        %v3942 = vshrl.u32 683565275, %v3941
        %v3943 = vshll.u32 683565275, %v3940
        %v3944 = vshrl.u32 2475754826, %v3941
        %v3945 = vor.u32 %v3943, %v3944
        %v3946 = vshll.u32 2475754826, %v3940
        %v3947 = vshrl.u32 2131351028, %v3941
        %v3948 = vor.u32 %v3946, %v3947
        %v3949 = vshll.u32 2131351028, %v3940
        %v3950 = vshrl.u32 2102212464, %v3941
        %v3951 = vor.u32 %v3949, %v3950
        %v3952 = vshll.u32 2102212464, %v3940
        %v3953 = vshrl.u32 920167782, %v3941
        %v3954 = vor.u32 %v3952, %v3953
        %v3955 = vshll.u32 920167782, %v3940
        %v3956 = vshrl.u32 1326507024, %v3941
        %v3957 = vor.u32 %v3955, %v3956
        %vm3958 = vcmp.lt.s32.totalorder %v3939, 1
        %vm3959 = vcmp.lt.s32.totalorder %v3939, 2
        %vm3960 = vcmp.lt.s32.totalorder %v3939, 3
        %vm3961 = vcmp.lt.s32.totalorder %v3939, 4
        %v3962 = vsel %vm3958, %v3942, %v3945
        %v3963 = vsel %vm3961, %v3951, 2102212464
        %v3964 = vsel %vm3960, %v3948, %v3963
        %v3965 = vsel %vm3959, %v3962, %v3964
        %v3966 = vsel %vm3958, %v3945, %v3948
        %v3967 = vsel %vm3961, %v3954, 920167782
        %v3968 = vsel %vm3960, %v3951, %v3967
        %v3969 = vsel %vm3959, %v3966, %v3968
        %v3970 = vsel %vm3958, %v3948, %v3951
        %v3971 = vsel %vm3961, %v3957, 1326507024
        %v3972 = vsel %vm3960, %v3954, %v3971
        %v3973 = vsel %vm3959, %v3970, %v3972
        %v3974 = vshll.u32 %v3934, 8
        %v3975 = vand.u32 %v3974, 65535
        %v3976 = vshrl.u32 %v3974, 16
        %v3977 = vand.u32 %v3973, 65535
        %v3978 = vshrl.u32 %v3973, 16
        %v3979 = vmul.u32 %v3975, %v3977
        %v3980 = vmul.u32 %v3975, %v3978
        %v3981 = vmul.u32 %v3976, %v3977
        %v3982 = vmul.u32 %v3976, %v3978
        %v3983 = vshll.u32 %v3980, 16
        %v3984 = vshrl.u32 %v3980, 16
        %v3985 = vshll.u32 %v3981, 16
        %v3986 = vshrl.u32 %v3981, 16
        %vm3987 = vc.u32 %v3979, %v3983
        %v3988 = vsel %vm3987, 1, 0
        %v3989 = vadd.s32 %v3979, %v3983
        %v3990 = vadd.s32 %v3982, %v3988
        %vm3991 = vc.u32 %v3989, %v3985
        %v3992 = vsel %vm3991, 1, 0
        %v3993 = vadd.s32 %v3989, %v3985
        %v3994 = vadd.s32 %v3990, %v3992
        %v3995 = vadd.s32 %v3994, %v3984
        %v3996 = vadd.s32 %v3995, %v3986
        %v3997 = vand.u32 %v3974, 65535
        %v3998 = vshrl.u32 %v3974, 16
        %v3999 = vand.u32 %v3969, 65535
        %v4000 = vshrl.u32 %v3969, 16
        %v4001 = vmul.u32 %v3997, %v3999
        %v4002 = vmul.u32 %v3997, %v4000
        %v4003 = vmul.u32 %v3998, %v3999
        %v4004 = vmul.u32 %v3998, %v4000
        %v4005 = vshll.u32 %v4002, 16
        %v4006 = vshrl.u32 %v4002, 16
        %v4007 = vshll.u32 %v4003, 16
        %v4008 = vshrl.u32 %v4003, 16
        %vm4009 = vc.u32 %v4001, %v4005
        %v4010 = vsel %vm4009, 1, 0
        %v4011 = vadd.s32 %v4001, %v4005
        %v4012 = vadd.s32 %v4004, %v4010
        %vm4013 = vc.u32 %v4011, %v4007
        %v4014 = vsel %vm4013, 1, 0
        %v4015 = vadd.s32 %v4011, %v4007
        %v4016 = vadd.s32 %v4012, %v4014
        %v4017 = vadd.s32 %v4016, %v4006
        %v4018 = vadd.s32 %v4017, %v4008
        %v4019 = vmul.u32 %v3974, %v3965
        %v4020 = vadd.s32 %v3996, %v4015
        %vm4021 = vc.u32 %v3996, %v4015
        %v4022 = vadd.s32 %v4018, 1
        %v4023 = vsel %vm4021, %v4022, %v4018
        %v4024 = vadd.s32 %v4019, %v4023
        %v4025 = vadd.s32 %v4024, 536870912
        %v4026 = vshrl.u32 %v4025, 30
        %v4027 = vshll.u32 %v4026, 30
        %v4028 = vsub.s32 %v4024, %v4027
        %vm4029 = vcmp.lt.s32.totalorder %v4028, 0
        %v4030 = vsub.s32 0, %v4028
        %v4031 = vsel %vm4029, %v4030, %v4028
        %v4032 = vclz %v4031
        %v4033 = vsub.s32 %v4032, 2
        %vm4034 = vcmp.gt.s32.totalorder 0, %v4033
        %v4035 = vsel %vm4034, 0, %v4033
        %v4036 = vsub.s32 32, %v4035
        %v4037 = vshll.u32 %v4028, %v4035
        %v4038 = vshrl.u32 %v4020, %v4036
        %v4039 = vor.u32 %v4037, %v4038
        %v4040 = vsub.s32 4294967266, %v4035
        %v4041 = vadd.s32 %v4040, 127
        %v4042 = vshll.u32 %v4041, 23
        %v4043 = vor.u32 4788187, %v4042
        %v4044 = vand.u32 2147483647, %v4043
        %v4046 = vcvt.s32.f32 %v4039
        %v4047 = vmul.f32 %v4046, %v4044
        %v4048 = vxor.u32 %v4047, 2147483648
        %v4049 = vsel %vm3928, %v4048, %v4047
        %v4050 = vsub.s32 4, %v4026
        %v4051 = vsel %vm3928, %v4050, %v4026
        %v4052 = vsel %vm3927, %v681, %v4049
        %v4053 = vsel %vm3927, 0, %v4051
        %v4054 = vmul.f32 %v4052, %v4052
        %v4055 = vmul.f32 %v4054, -0.001358992
        %v4056 = vadd.f32 %v4055, 0.041655596
        %v4057 = vmul.f32 %v4054, %v4056
        %v4058 = vadd.f32 %v4057, -0.4999988
        %v4059 = vmul.f32 %v4054, %v4058
        %v4060 = vadd.f32 1.0, %v4059
        %v4061 = vmul.f32 %v4052, %v4052
        %v4062 = vmul.f32 %v4061, -0.00019511016
        %v4063 = vadd.f32 %v4062, 0.008332121
        %v4064 = vmul.f32 %v4061, %v4063
        %v4065 = vadd.f32 %v4064, -0.16666654
        %v4066 = vmul.f32 %v4061, %v4065
        %v4067 = vadd.f32 %v4066, 1.0
        %v4068 = vmul.f32 %v4067, %v4052
        %vm4069 = vweird.f32 %v681
        %v4070 = vand.u32 %v4053, 3
        %vm4071 = vcmp.lt.s32.totalorder %v4070, 2
        %vm4072 = vcmp.eq.s32.totalorder %v4070, 0
        %v4073 = vxor.u32 %v4068, 2147483648
        %v4074 = vsel %vm4072, %v4060, %v4073
        %vm4075 = vcmp.eq.s32.totalorder %v4070, 2
        %v4076 = vxor.u32 %v4060, 2147483648
        %v4077 = vsel %vm4075, %v4076, %v4068
        %v4078 = vsel %vm4071, %v4074, %v4077
        %v4079 = vsel %vm4069, nan, %v4078
        %v4080 = vand.u32 2147483647, %v682
        %vm4081 = vcmp.le.f32.partialorder %v4080, 0.7853982
        %vm4082 = vcmp.lt.s32.totalorder %v682, 0
        %v4083 = vand.u32 %v682, 2139095040
        %v4084 = vshrl.u32 %v4083, 23
        %v4085 = vsub.s32 %v4084, 127
        %v4086 = vand.u32 2147483647, %v682
        %v4087 = vand.u32 %v4086, 8388607
        %v4088 = vor.u32 %v4087, 8388608
        %v4089 = vsub.s32 0, %v4088
        %v4090 = vadd.s32 %v4085, 1
        %vm4091 = vcmp.gt.s32.totalorder %v4090, 0
        %v4092 = vsel %vm4091, %v4090, 0
        %v4093 = vshrl.u32 %v4092, 5
        %v4094 = vand.u32 %v4092, 31
        %v4095 = vsub.s32 32, %v4094
        %v4096 = vshrl.u32 683565275, %v4095
        %v4097 = vshll.u32 683565275, %v4094
        %v4098 = vshrl.u32 2475754826, %v4095
        %v4099 = vor.u32 %v4097, %v4098
        %v4100 = vshll.u32 2475754826, %v4094
        %v4101 = vshrl.u32 2131351028, %v4095
        %v4102 = vor.u32 %v4100, %v4101
        %v4103 = vshll.u32 2131351028, %v4094
        %v4104 = vshrl.u32 2102212464, %v4095
        %v4105 = vor.u32 %v4103, %v4104
        %v4106 = vshll.u32 2102212464, %v4094
        %v4107 = vshrl.u32 920167782, %v4095
        %v4108 = vor.u32 %v4106, %v4107
        %v4109 = vshll.u32 920167782, %v4094
        %v4110 = vshrl.u32 1326507024, %v4095
        %v4111 = vor.u32 %v4109, %v4110
        %vm4112 = vcmp.lt.s32.totalorder %v4093, 1
        %vm4113 = vcmp.lt.s32.totalorder %v4093, 2
        %vm4114 = vcmp.lt.s32.totalorder %v4093, 3
        %vm4115 = vcmp.lt.s32.totalorder %v4093, 4
        %v4116 = vsel %vm4112, %v4096, %v4099
        %v4117 = vsel %vm4115, %v4105, 2102212464
        %v4118 = vsel %vm4114, %v4102, %v4117
        %v4119 = vsel %vm4113, %v4116, %v4118
        %v4120 = vsel %vm4112, %v4099, %v4102
        %v4121 = vsel %vm4115, %v4108, 920167782
        %v4122 = vsel %vm4114, %v4105, %v4121
        %v4123 = vsel %vm4113, %v4120, %v4122
        %v4124 = vsel %vm4112, %v4102, %v4105
        %v4125 = vsel %vm4115, %v4111, 1326507024
        %v4126 = vsel %vm4114, %v4108, %v4125
        %v4127 = vsel %vm4113, %v4124, %v4126
        %v4128 = vshll.u32 %v4088, 8
        %v4129 = vand.u32 %v4128, 65535
        %v4130 = vshrl.u32 %v4128, 16
        %v4131 = vand.u32 %v4127, 65535
        %v4132 = vshrl.u32 %v4127, 16
        %v4133 = vmul.u32 %v4129, %v4131
        %v4134 = vmul.u32 %v4129, %v4132
        %v4135 = vmul.u32 %v4130, %v4131
        %v4136 = vmul.u32 %v4130, %v4132
        %v4137 = vshll.u32 %v4134, 16
        %v4138 = vshrl.u32 %v4134, 16
        %v4139 = vshll.u32 %v4135, 16
        %v4140 = vshrl.u32 %v4135, 16
        %vm4141 = vc.u32 %v4133, %v4137
        %v4142 = vsel %vm4141, 1, 0
        %v4143 = vadd.s32 %v4133, %v4137
        %v4144 = vadd.s32 %v4136, %v4142
        %vm4145 = vc.u32 %v4143, %v4139
        %v4146 = vsel %vm4145, 1, 0
        %v4147 = vadd.s32 %v4143, %v4139
        %v4148 = vadd.s32 %v4144, %v4146
        %v4149 = vadd.s32 %v4148, %v4138
        %v4150 = vadd.s32 %v4149, %v4140
        %v4151 = vand.u32 %v4128, 65535
        %v4152 = vshrl.u32 %v4128, 16
        %v4153 = vand.u32 %v4123, 65535
        %v4154 = vshrl.u32 %v4123, 16
        %v4155 = vmul.u32 %v4151, %v4153
        %v4156 = vmul.u32 %v4151, %v4154
        %v4157 = vmul.u32 %v4152, %v4153
        %v4158 = vmul.u32 %v4152, %v4154
        %v4159 = vshll.u32 %v4156, 16
        %v4160 = vshrl.u32 %v4156, 16
        %v4161 = vshll.u32 %v4157, 16
        %v4162 = vshrl.u32 %v4157, 16
        %vm4163 = vc.u32 %v4155, %v4159
        %v4164 = vsel %vm4163, 1, 0
        %v4165 = vadd.s32 %v4155, %v4159
        %v4166 = vadd.s32 %v4158, %v4164
        %vm4167 = vc.u32 %v4165, %v4161
        %v4168 = vsel %vm4167, 1, 0
        %v4169 = vadd.s32 %v4165, %v4161
        %v4170 = vadd.s32 %v4166, %v4168
        %v4171 = vadd.s32 %v4170, %v4160
        %v4172 = vadd.s32 %v4171, %v4162
        %v4173 = vmul.u32 %v4128, %v4119
        %v4174 = vadd.s32 %v4150, %v4169
        %vm4175 = vc.u32 %v4150, %v4169
        %v4176 = vadd.s32 %v4172, 1
        %v4177 = vsel %vm4175, %v4176, %v4172
        %v4178 = vadd.s32 %v4173, %v4177
        %v4179 = vadd.s32 %v4178, 536870912
        %v4180 = vshrl.u32 %v4179, 30
        %v4181 = vshll.u32 %v4180, 30
        %v4182 = vsub.s32 %v4178, %v4181
        %vm4183 = vcmp.lt.s32.totalorder %v4182, 0
        %v4184 = vsub.s32 0, %v4182
        %v4185 = vsel %vm4183, %v4184, %v4182
        %v4186 = vclz %v4185
        %v4187 = vsub.s32 %v4186, 2
        %vm4188 = vcmp.gt.s32.totalorder 0, %v4187
        %v4189 = vsel %vm4188, 0, %v4187
        %v4190 = vsub.s32 32, %v4189
        %v4191 = vshll.u32 %v4182, %v4189
        %v4192 = vshrl.u32 %v4174, %v4190
        %v4193 = vor.u32 %v4191, %v4192
        %v4194 = vsub.s32 4294967266, %v4189
        %v4195 = vadd.s32 %v4194, 127
        %v4196 = vshll.u32 %v4195, 23
        %v4197 = vor.u32 4788187, %v4196
        %v4198 = vand.u32 2147483647, %v4197
        %v4200 = vcvt.s32.f32 %v4193
        %v4201 = vmul.f32 %v4200, %v4198
        %v4202 = vxor.u32 %v4201, 2147483648
        %v4203 = vsel %vm4082, %v4202, %v4201
        %v4204 = vsub.s32 4, %v4180
        %v4205 = vsel %vm4082, %v4204, %v4180
        %v4206 = vsel %vm4081, %v682, %v4203
        %v4207 = vsel %vm4081, 0, %v4205
        %v4208 = vmul.f32 %v4206, %v4206
        %v4209 = vmul.f32 %v4208, -0.001358992
        %v4210 = vadd.f32 %v4209, 0.041655596
        %v4211 = vmul.f32 %v4208, %v4210
        %v4212 = vadd.f32 %v4211, -0.4999988
        %v4213 = vmul.f32 %v4208, %v4212
        %v4214 = vadd.f32 1.0, %v4213
        %v4215 = vmul.f32 %v4206, %v4206
        %v4216 = vmul.f32 %v4215, -0.00019511016
        %v4217 = vadd.f32 %v4216, 0.008332121
        %v4218 = vmul.f32 %v4215, %v4217
        %v4219 = vadd.f32 %v4218, -0.16666654
        %v4220 = vmul.f32 %v4215, %v4219
        %v4221 = vadd.f32 %v4220, 1.0
        %v4222 = vmul.f32 %v4221, %v4206
        %vm4223 = vweird.f32 %v682
        %v4224 = vand.u32 %v4207, 3
        %vm4225 = vcmp.lt.s32.totalorder %v4224, 2
        %vm4226 = vcmp.eq.s32.totalorder %v4224, 0
        %v4227 = vxor.u32 %v4222, 2147483648
        %v4228 = vsel %vm4226, %v4214, %v4227
        %vm4229 = vcmp.eq.s32.totalorder %v4224, 2
        %v4230 = vxor.u32 %v4214, 2147483648
        %v4231 = vsel %vm4229, %v4230, %v4222
        %v4232 = vsel %vm4225, %v4228, %v4231
        %v4233 = vsel %vm4223, nan, %v4232
        %v4234 = vand.u32 2147483647, %v683
        %vm4235 = vcmp.le.f32.partialorder %v4234, 0.7853982
        %vm4236 = vcmp.lt.s32.totalorder %v683, 0
        %v4237 = vand.u32 %v683, 2139095040
        %v4238 = vshrl.u32 %v4237, 23
        %v4239 = vsub.s32 %v4238, 127
        %v4240 = vand.u32 2147483647, %v683
        %v4241 = vand.u32 %v4240, 8388607
        %v4242 = vor.u32 %v4241, 8388608
        %v4243 = vsub.s32 0, %v4242
        %v4244 = vadd.s32 %v4239, 1
        %vm4245 = vcmp.gt.s32.totalorder %v4244, 0
        %v4246 = vsel %vm4245, %v4244, 0
        %v4247 = vshrl.u32 %v4246, 5
        %v4248 = vand.u32 %v4246, 31
        %v4249 = vsub.s32 32, %v4248
        %v4250 = vshrl.u32 683565275, %v4249
        %v4251 = vshll.u32 683565275, %v4248
        %v4252 = vshrl.u32 2475754826, %v4249
        %v4253 = vor.u32 %v4251, %v4252
        %v4254 = vshll.u32 2475754826, %v4248
        %v4255 = vshrl.u32 2131351028, %v4249
        %v4256 = vor.u32 %v4254, %v4255
        %v4257 = vshll.u32 2131351028, %v4248
        %v4258 = vshrl.u32 2102212464, %v4249
        %v4259 = vor.u32 %v4257, %v4258
        %v4260 = vshll.u32 2102212464, %v4248
        %v4261 = vshrl.u32 920167782, %v4249
        %v4262 = vor.u32 %v4260, %v4261
        %v4263 = vshll.u32 920167782, %v4248
        %v4264 = vshrl.u32 1326507024, %v4249
        %v4265 = vor.u32 %v4263, %v4264
        %vm4266 = vcmp.lt.s32.totalorder %v4247, 1
        %vm4267 = vcmp.lt.s32.totalorder %v4247, 2
        %vm4268 = vcmp.lt.s32.totalorder %v4247, 3
        %vm4269 = vcmp.lt.s32.totalorder %v4247, 4
        %v4270 = vsel %vm4266, %v4250, %v4253
        %v4271 = vsel %vm4269, %v4259, 2102212464
        %v4272 = vsel %vm4268, %v4256, %v4271
        %v4273 = vsel %vm4267, %v4270, %v4272
        %v4274 = vsel %vm4266, %v4253, %v4256
        %v4275 = vsel %vm4269, %v4262, 920167782
        %v4276 = vsel %vm4268, %v4259, %v4275
        %v4277 = vsel %vm4267, %v4274, %v4276
        %v4278 = vsel %vm4266, %v4256, %v4259
        %v4279 = vsel %vm4269, %v4265, 1326507024
        %v4280 = vsel %vm4268, %v4262, %v4279
        %v4281 = vsel %vm4267, %v4278, %v4280
        %v4282 = vshll.u32 %v4242, 8
        %v4283 = vand.u32 %v4282, 65535
        %v4284 = vshrl.u32 %v4282, 16
        %v4285 = vand.u32 %v4281, 65535
        %v4286 = vshrl.u32 %v4281, 16
        %v4287 = vmul.u32 %v4283, %v4285
        %v4288 = vmul.u32 %v4283, %v4286
        %v4289 = vmul.u32 %v4284, %v4285
        %v4290 = vmul.u32 %v4284, %v4286
        %v4291 = vshll.u32 %v4288, 16
        %v4292 = vshrl.u32 %v4288, 16
        %v4293 = vshll.u32 %v4289, 16
        %v4294 = vshrl.u32 %v4289, 16
        %vm4295 = vc.u32 %v4287, %v4291
        %v4296 = vsel %vm4295, 1, 0
        %v4297 = vadd.s32 %v4287, %v4291
        %v4298 = vadd.s32 %v4290, %v4296
        %vm4299 = vc.u32 %v4297, %v4293
        %v4300 = vsel %vm4299, 1, 0
        %v4301 = vadd.s32 %v4297, %v4293
        %v4302 = vadd.s32 %v4298, %v4300
        %v4303 = vadd.s32 %v4302, %v4292
        %v4304 = vadd.s32 %v4303, %v4294
        %v4305 = vand.u32 %v4282, 65535
        %v4306 = vshrl.u32 %v4282, 16
        %v4307 = vand.u32 %v4277, 65535
        %v4308 = vshrl.u32 %v4277, 16
        %v4309 = vmul.u32 %v4305, %v4307
        %v4310 = vmul.u32 %v4305, %v4308
        %v4311 = vmul.u32 %v4306, %v4307
        %v4312 = vmul.u32 %v4306, %v4308
        %v4313 = vshll.u32 %v4310, 16
        %v4314 = vshrl.u32 %v4310, 16
        %v4315 = vshll.u32 %v4311, 16
        %v4316 = vshrl.u32 %v4311, 16
        %vm4317 = vc.u32 %v4309, %v4313
        %v4318 = vsel %vm4317, 1, 0
        %v4319 = vadd.s32 %v4309, %v4313
        %v4320 = vadd.s32 %v4312, %v4318
        %vm4321 = vc.u32 %v4319, %v4315
        %v4322 = vsel %vm4321, 1, 0
        %v4323 = vadd.s32 %v4319, %v4315
        %v4324 = vadd.s32 %v4320, %v4322
        %v4325 = vadd.s32 %v4324, %v4314
        %v4326 = vadd.s32 %v4325, %v4316
        %v4327 = vmul.u32 %v4282, %v4273
        %v4328 = vadd.s32 %v4304, %v4323
        %vm4329 = vc.u32 %v4304, %v4323
        %v4330 = vadd.s32 %v4326, 1
        %v4331 = vsel %vm4329, %v4330, %v4326
        %v4332 = vadd.s32 %v4327, %v4331
        %v4333 = vadd.s32 %v4332, 536870912
        %v4334 = vshrl.u32 %v4333, 30
        %v4335 = vshll.u32 %v4334, 30
        %v4336 = vsub.s32 %v4332, %v4335
        %vm4337 = vcmp.lt.s32.totalorder %v4336, 0
        %v4338 = vsub.s32 0, %v4336
        %v4339 = vsel %vm4337, %v4338, %v4336
        %v4340 = vclz %v4339
        %v4341 = vsub.s32 %v4340, 2
        %vm4342 = vcmp.gt.s32.totalorder 0, %v4341
        %v4343 = vsel %vm4342, 0, %v4341
        %v4344 = vsub.s32 32, %v4343
        %v4345 = vshll.u32 %v4336, %v4343
        %v4346 = vshrl.u32 %v4328, %v4344
        %v4347 = vor.u32 %v4345, %v4346
        %v4348 = vsub.s32 4294967266, %v4343
        %v4349 = vadd.s32 %v4348, 127
        %v4350 = vshll.u32 %v4349, 23
        %v4351 = vor.u32 4788187, %v4350
        %v4352 = vand.u32 2147483647, %v4351
        %v4354 = vcvt.s32.f32 %v4347
        %v4355 = vmul.f32 %v4354, %v4352
        %v4356 = vxor.u32 %v4355, 2147483648
        %v4357 = vsel %vm4236, %v4356, %v4355
        %v4358 = vsub.s32 4, %v4334
        %v4359 = vsel %vm4236, %v4358, %v4334
        %v4360 = vsel %vm4235, %v683, %v4357
        %v4361 = vsel %vm4235, 0, %v4359
        %v4362 = vmul.f32 %v4360, %v4360
        %v4363 = vmul.f32 %v4362, -0.001358992
        %v4364 = vadd.f32 %v4363, 0.041655596
        %v4365 = vmul.f32 %v4362, %v4364
        %v4366 = vadd.f32 %v4365, -0.4999988
        %v4367 = vmul.f32 %v4362, %v4366
        %v4368 = vadd.f32 1.0, %v4367
        %v4369 = vmul.f32 %v4360, %v4360
        %v4370 = vmul.f32 %v4369, -0.00019511016
        %v4371 = vadd.f32 %v4370, 0.008332121
        %v4372 = vmul.f32 %v4369, %v4371
        %v4373 = vadd.f32 %v4372, -0.16666654
        %v4374 = vmul.f32 %v4369, %v4373
        %v4375 = vadd.f32 %v4374, 1.0
        %v4376 = vmul.f32 %v4375, %v4360
        %vm4377 = vweird.f32 %v683
        %v4378 = vand.u32 %v4361, 3
        %vm4379 = vcmp.lt.s32.totalorder %v4378, 2
        %vm4380 = vcmp.eq.s32.totalorder %v4378, 0
        %v4381 = vxor.u32 %v4376, 2147483648
        %v4382 = vsel %vm4380, %v4368, %v4381
        %vm4383 = vcmp.eq.s32.totalorder %v4378, 2
        %v4384 = vxor.u32 %v4368, 2147483648
        %v4385 = vsel %vm4383, %v4384, %v4376
        %v4386 = vsel %vm4379, %v4382, %v4385
        %v4387 = vsel %vm4377, nan, %v4386
        %v4388 = vand.u32 2147483647, %v684
        %vm4389 = vcmp.le.f32.partialorder %v4388, 0.7853982
        %vm4390 = vcmp.lt.s32.totalorder %v684, 0
        %v4391 = vand.u32 %v684, 2139095040
        %v4392 = vshrl.u32 %v4391, 23
        %v4393 = vsub.s32 %v4392, 127
        %v4394 = vand.u32 2147483647, %v684
        %v4395 = vand.u32 %v4394, 8388607
        %v4396 = vor.u32 %v4395, 8388608
        %v4397 = vsub.s32 0, %v4396
        %v4398 = vadd.s32 %v4393, 1
        %vm4399 = vcmp.gt.s32.totalorder %v4398, 0
        %v4400 = vsel %vm4399, %v4398, 0
        %v4401 = vshrl.u32 %v4400, 5
        %v4402 = vand.u32 %v4400, 31
        %v4403 = vsub.s32 32, %v4402
        %v4404 = vshrl.u32 683565275, %v4403
        %v4405 = vshll.u32 683565275, %v4402
        %v4406 = vshrl.u32 2475754826, %v4403
        %v4407 = vor.u32 %v4405, %v4406
        %v4408 = vshll.u32 2475754826, %v4402
        %v4409 = vshrl.u32 2131351028, %v4403
        %v4410 = vor.u32 %v4408, %v4409
        %v4411 = vshll.u32 2131351028, %v4402
        %v4412 = vshrl.u32 2102212464, %v4403
        %v4413 = vor.u32 %v4411, %v4412
        %v4414 = vshll.u32 2102212464, %v4402
        %v4415 = vshrl.u32 920167782, %v4403
        %v4416 = vor.u32 %v4414, %v4415
        %v4417 = vshll.u32 920167782, %v4402
        %v4418 = vshrl.u32 1326507024, %v4403
        %v4419 = vor.u32 %v4417, %v4418
        %vm4420 = vcmp.lt.s32.totalorder %v4401, 1
        %vm4421 = vcmp.lt.s32.totalorder %v4401, 2
        %vm4422 = vcmp.lt.s32.totalorder %v4401, 3
        %vm4423 = vcmp.lt.s32.totalorder %v4401, 4
        %v4424 = vsel %vm4420, %v4404, %v4407
        %v4425 = vsel %vm4423, %v4413, 2102212464
        %v4426 = vsel %vm4422, %v4410, %v4425
        %v4427 = vsel %vm4421, %v4424, %v4426
        %v4428 = vsel %vm4420, %v4407, %v4410
        %v4429 = vsel %vm4423, %v4416, 920167782
        %v4430 = vsel %vm4422, %v4413, %v4429
        %v4431 = vsel %vm4421, %v4428, %v4430
        %v4432 = vsel %vm4420, %v4410, %v4413
        %v4433 = vsel %vm4423, %v4419, 1326507024
        %v4434 = vsel %vm4422, %v4416, %v4433
        %v4435 = vsel %vm4421, %v4432, %v4434
        %v4436 = vshll.u32 %v4396, 8
        %v4437 = vand.u32 %v4436, 65535
        %v4438 = vshrl.u32 %v4436, 16
        %v4439 = vand.u32 %v4435, 65535
        %v4440 = vshrl.u32 %v4435, 16
        %v4441 = vmul.u32 %v4437, %v4439
        %v4442 = vmul.u32 %v4437, %v4440
        %v4443 = vmul.u32 %v4438, %v4439
        %v4444 = vmul.u32 %v4438, %v4440
        %v4445 = vshll.u32 %v4442, 16
        %v4446 = vshrl.u32 %v4442, 16
        %v4447 = vshll.u32 %v4443, 16
        %v4448 = vshrl.u32 %v4443, 16
        %vm4449 = vc.u32 %v4441, %v4445
        %v4450 = vsel %vm4449, 1, 0
        %v4451 = vadd.s32 %v4441, %v4445
        %v4452 = vadd.s32 %v4444, %v4450
        %vm4453 = vc.u32 %v4451, %v4447
        %v4454 = vsel %vm4453, 1, 0
        %v4455 = vadd.s32 %v4451, %v4447
        %v4456 = vadd.s32 %v4452, %v4454
        %v4457 = vadd.s32 %v4456, %v4446
        %v4458 = vadd.s32 %v4457, %v4448
        %v4459 = vand.u32 %v4436, 65535
        %v4460 = vshrl.u32 %v4436, 16
        %v4461 = vand.u32 %v4431, 65535
        %v4462 = vshrl.u32 %v4431, 16
        %v4463 = vmul.u32 %v4459, %v4461
        %v4464 = vmul.u32 %v4459, %v4462
        %v4465 = vmul.u32 %v4460, %v4461
        %v4466 = vmul.u32 %v4460, %v4462
        %v4467 = vshll.u32 %v4464, 16
        %v4468 = vshrl.u32 %v4464, 16
        %v4469 = vshll.u32 %v4465, 16
        %v4470 = vshrl.u32 %v4465, 16
        %vm4471 = vc.u32 %v4463, %v4467
        %v4472 = vsel %vm4471, 1, 0
        %v4473 = vadd.s32 %v4463, %v4467
        %v4474 = vadd.s32 %v4466, %v4472
        %vm4475 = vc.u32 %v4473, %v4469
        %v4476 = vsel %vm4475, 1, 0
        %v4477 = vadd.s32 %v4473, %v4469
        %v4478 = vadd.s32 %v4474, %v4476
        %v4479 = vadd.s32 %v4478, %v4468
        %v4480 = vadd.s32 %v4479, %v4470
        %v4481 = vmul.u32 %v4436, %v4427
        %v4482 = vadd.s32 %v4458, %v4477
        %vm4483 = vc.u32 %v4458, %v4477
        %v4484 = vadd.s32 %v4480, 1
        %v4485 = vsel %vm4483, %v4484, %v4480
        %v4486 = vadd.s32 %v4481, %v4485
        %v4487 = vadd.s32 %v4486, 536870912
        %v4488 = vshrl.u32 %v4487, 30
        %v4489 = vshll.u32 %v4488, 30
        %v4490 = vsub.s32 %v4486, %v4489
        %vm4491 = vcmp.lt.s32.totalorder %v4490, 0
        %v4492 = vsub.s32 0, %v4490
        %v4493 = vsel %vm4491, %v4492, %v4490
        %v4494 = vclz %v4493
        %v4495 = vsub.s32 %v4494, 2
        %vm4496 = vcmp.gt.s32.totalorder 0, %v4495
        %v4497 = vsel %vm4496, 0, %v4495
        %v4498 = vsub.s32 32, %v4497
        %v4499 = vshll.u32 %v4490, %v4497
        %v4500 = vshrl.u32 %v4482, %v4498
        %v4501 = vor.u32 %v4499, %v4500
        %v4502 = vsub.s32 4294967266, %v4497
        %v4503 = vadd.s32 %v4502, 127
        %v4504 = vshll.u32 %v4503, 23
        %v4505 = vor.u32 4788187, %v4504
        %v4506 = vand.u32 2147483647, %v4505
        %v4508 = vcvt.s32.f32 %v4501
        %v4509 = vmul.f32 %v4508, %v4506
        %v4510 = vxor.u32 %v4509, 2147483648
        %v4511 = vsel %vm4390, %v4510, %v4509
        %v4512 = vsub.s32 4, %v4488
        %v4513 = vsel %vm4390, %v4512, %v4488
        %v4514 = vsel %vm4389, %v684, %v4511
        %v4515 = vsel %vm4389, 0, %v4513
        %v4516 = vmul.f32 %v4514, %v4514
        %v4517 = vmul.f32 %v4516, -0.001358992
        %v4518 = vadd.f32 %v4517, 0.041655596
        %v4519 = vmul.f32 %v4516, %v4518
        %v4520 = vadd.f32 %v4519, -0.4999988
        %v4521 = vmul.f32 %v4516, %v4520
        %v4522 = vadd.f32 1.0, %v4521
        %v4523 = vmul.f32 %v4514, %v4514
        %v4524 = vmul.f32 %v4523, -0.00019511016
        %v4525 = vadd.f32 %v4524, 0.008332121
        %v4526 = vmul.f32 %v4523, %v4525
        %v4527 = vadd.f32 %v4526, -0.16666654
        %v4528 = vmul.f32 %v4523, %v4527
        %v4529 = vadd.f32 %v4528, 1.0
        %v4530 = vmul.f32 %v4529, %v4514
        %vm4531 = vweird.f32 %v684
        %v4532 = vand.u32 %v4515, 3
        %vm4533 = vcmp.lt.s32.totalorder %v4532, 2
        %vm4534 = vcmp.eq.s32.totalorder %v4532, 0
        %v4535 = vxor.u32 %v4530, 2147483648
        %v4536 = vsel %vm4534, %v4522, %v4535
        %vm4537 = vcmp.eq.s32.totalorder %v4532, 2
        %v4538 = vxor.u32 %v4522, 2147483648
        %v4539 = vsel %vm4537, %v4538, %v4530
        %v4540 = vsel %vm4533, %v4536, %v4539
        %v4541 = vsel %vm4531, nan, %v4540
        %v4542 = vand.u32 2147483647, %v685
        %vm4543 = vcmp.le.f32.partialorder %v4542, 0.7853982
        %vm4544 = vcmp.lt.s32.totalorder %v685, 0
        %v4545 = vand.u32 %v685, 2139095040
        %v4546 = vshrl.u32 %v4545, 23
        %v4547 = vsub.s32 %v4546, 127
        %v4548 = vand.u32 2147483647, %v685
        %v4549 = vand.u32 %v4548, 8388607
        %v4550 = vor.u32 %v4549, 8388608
        %v4551 = vsub.s32 0, %v4550
        %v4552 = vadd.s32 %v4547, 1
        %vm4553 = vcmp.gt.s32.totalorder %v4552, 0
        %v4554 = vsel %vm4553, %v4552, 0
        %v4555 = vshrl.u32 %v4554, 5
        %v4556 = vand.u32 %v4554, 31
        %v4557 = vsub.s32 32, %v4556
        %v4558 = vshrl.u32 683565275, %v4557
        %v4559 = vshll.u32 683565275, %v4556
        %v4560 = vshrl.u32 2475754826, %v4557
        %v4561 = vor.u32 %v4559, %v4560
        %v4562 = vshll.u32 2475754826, %v4556
        %v4563 = vshrl.u32 2131351028, %v4557
        %v4564 = vor.u32 %v4562, %v4563
        %v4565 = vshll.u32 2131351028, %v4556
        %v4566 = vshrl.u32 2102212464, %v4557
        %v4567 = vor.u32 %v4565, %v4566
        %v4568 = vshll.u32 2102212464, %v4556
        %v4569 = vshrl.u32 920167782, %v4557
        %v4570 = vor.u32 %v4568, %v4569
        %v4571 = vshll.u32 920167782, %v4556
        %v4572 = vshrl.u32 1326507024, %v4557
        %v4573 = vor.u32 %v4571, %v4572
        %vm4574 = vcmp.lt.s32.totalorder %v4555, 1
        %vm4575 = vcmp.lt.s32.totalorder %v4555, 2
        %vm4576 = vcmp.lt.s32.totalorder %v4555, 3
        %vm4577 = vcmp.lt.s32.totalorder %v4555, 4
        %v4578 = vsel %vm4574, %v4558, %v4561
        %v4579 = vsel %vm4577, %v4567, 2102212464
        %v4580 = vsel %vm4576, %v4564, %v4579
        %v4581 = vsel %vm4575, %v4578, %v4580
        %v4582 = vsel %vm4574, %v4561, %v4564
        %v4583 = vsel %vm4577, %v4570, 920167782
        %v4584 = vsel %vm4576, %v4567, %v4583
        %v4585 = vsel %vm4575, %v4582, %v4584
        %v4586 = vsel %vm4574, %v4564, %v4567
        %v4587 = vsel %vm4577, %v4573, 1326507024
        %v4588 = vsel %vm4576, %v4570, %v4587
        %v4589 = vsel %vm4575, %v4586, %v4588
        %v4590 = vshll.u32 %v4550, 8
        %v4591 = vand.u32 %v4590, 65535
        %v4592 = vshrl.u32 %v4590, 16
        %v4593 = vand.u32 %v4589, 65535
        %v4594 = vshrl.u32 %v4589, 16
        %v4595 = vmul.u32 %v4591, %v4593
        %v4596 = vmul.u32 %v4591, %v4594
        %v4597 = vmul.u32 %v4592, %v4593
        %v4598 = vmul.u32 %v4592, %v4594
        %v4599 = vshll.u32 %v4596, 16
        %v4600 = vshrl.u32 %v4596, 16
        %v4601 = vshll.u32 %v4597, 16
        %v4602 = vshrl.u32 %v4597, 16
        %vm4603 = vc.u32 %v4595, %v4599
        %v4604 = vsel %vm4603, 1, 0
        %v4605 = vadd.s32 %v4595, %v4599
        %v4606 = vadd.s32 %v4598, %v4604
        %vm4607 = vc.u32 %v4605, %v4601
        %v4608 = vsel %vm4607, 1, 0
        %v4609 = vadd.s32 %v4605, %v4601
        %v4610 = vadd.s32 %v4606, %v4608
        %v4611 = vadd.s32 %v4610, %v4600
        %v4612 = vadd.s32 %v4611, %v4602
        %v4613 = vand.u32 %v4590, 65535
        %v4614 = vshrl.u32 %v4590, 16
        %v4615 = vand.u32 %v4585, 65535
        %v4616 = vshrl.u32 %v4585, 16
        %v4617 = vmul.u32 %v4613, %v4615
        %v4618 = vmul.u32 %v4613, %v4616
        %v4619 = vmul.u32 %v4614, %v4615
        %v4620 = vmul.u32 %v4614, %v4616
        %v4621 = vshll.u32 %v4618, 16
        %v4622 = vshrl.u32 %v4618, 16
        %v4623 = vshll.u32 %v4619, 16
        %v4624 = vshrl.u32 %v4619, 16
        %vm4625 = vc.u32 %v4617, %v4621
        %v4626 = vsel %vm4625, 1, 0
        %v4627 = vadd.s32 %v4617, %v4621
        %v4628 = vadd.s32 %v4620, %v4626
        %vm4629 = vc.u32 %v4627, %v4623
        %v4630 = vsel %vm4629, 1, 0
        %v4631 = vadd.s32 %v4627, %v4623
        %v4632 = vadd.s32 %v4628, %v4630
        %v4633 = vadd.s32 %v4632, %v4622
        %v4634 = vadd.s32 %v4633, %v4624
        %v4635 = vmul.u32 %v4590, %v4581
        %v4636 = vadd.s32 %v4612, %v4631
        %vm4637 = vc.u32 %v4612, %v4631
        %v4638 = vadd.s32 %v4634, 1
        %v4639 = vsel %vm4637, %v4638, %v4634
        %v4640 = vadd.s32 %v4635, %v4639
        %v4641 = vadd.s32 %v4640, 536870912
        %v4642 = vshrl.u32 %v4641, 30
        %v4643 = vshll.u32 %v4642, 30
        %v4644 = vsub.s32 %v4640, %v4643
        %vm4645 = vcmp.lt.s32.totalorder %v4644, 0
        %v4646 = vsub.s32 0, %v4644
        %v4647 = vsel %vm4645, %v4646, %v4644
        %v4648 = vclz %v4647
        %v4649 = vsub.s32 %v4648, 2
        %vm4650 = vcmp.gt.s32.totalorder 0, %v4649
        %v4651 = vsel %vm4650, 0, %v4649
        %v4652 = vsub.s32 32, %v4651
        %v4653 = vshll.u32 %v4644, %v4651
        %v4654 = vshrl.u32 %v4636, %v4652
        %v4655 = vor.u32 %v4653, %v4654
        %v4656 = vsub.s32 4294967266, %v4651
        %v4657 = vadd.s32 %v4656, 127
        %v4658 = vshll.u32 %v4657, 23
        %v4659 = vor.u32 4788187, %v4658
        %v4660 = vand.u32 2147483647, %v4659
        %v4662 = vcvt.s32.f32 %v4655
        %v4663 = vmul.f32 %v4662, %v4660
        %v4664 = vxor.u32 %v4663, 2147483648
        %v4665 = vsel %vm4544, %v4664, %v4663
        %v4666 = vsub.s32 4, %v4642
        %v4667 = vsel %vm4544, %v4666, %v4642
        %v4668 = vsel %vm4543, %v685, %v4665
        %v4669 = vsel %vm4543, 0, %v4667
        %v4670 = vmul.f32 %v4668, %v4668
        %v4671 = vmul.f32 %v4670, -0.001358992
        %v4672 = vadd.f32 %v4671, 0.041655596
        %v4673 = vmul.f32 %v4670, %v4672
        %v4674 = vadd.f32 %v4673, -0.4999988
        %v4675 = vmul.f32 %v4670, %v4674
        %v4676 = vadd.f32 1.0, %v4675
        %v4677 = vmul.f32 %v4668, %v4668
        %v4678 = vmul.f32 %v4677, -0.00019511016
        %v4679 = vadd.f32 %v4678, 0.008332121
        %v4680 = vmul.f32 %v4677, %v4679
        %v4681 = vadd.f32 %v4680, -0.16666654
        %v4682 = vmul.f32 %v4677, %v4681
        %v4683 = vadd.f32 %v4682, 1.0
        %v4684 = vmul.f32 %v4683, %v4668
        %vm4685 = vweird.f32 %v685
        %v4686 = vand.u32 %v4669, 3
        %vm4687 = vcmp.lt.s32.totalorder %v4686, 2
        %vm4688 = vcmp.eq.s32.totalorder %v4686, 0
        %v4689 = vxor.u32 %v4684, 2147483648
        %v4690 = vsel %vm4688, %v4676, %v4689
        %vm4691 = vcmp.eq.s32.totalorder %v4686, 2
        %v4692 = vxor.u32 %v4676, 2147483648
        %v4693 = vsel %vm4691, %v4692, %v4684
        %v4694 = vsel %vm4687, %v4690, %v4693
        %v4695 = vsel %vm4685, nan, %v4694
        %v4696 = vand.u32 2147483647, %v686
        %vm4697 = vcmp.le.f32.partialorder %v4696, 0.7853982
        %vm4698 = vcmp.lt.s32.totalorder %v686, 0
        %v4699 = vand.u32 %v686, 2139095040
        %v4700 = vshrl.u32 %v4699, 23
        %v4701 = vsub.s32 %v4700, 127
        %v4702 = vand.u32 2147483647, %v686
        %v4703 = vand.u32 %v4702, 8388607
        %v4704 = vor.u32 %v4703, 8388608
        %v4705 = vsub.s32 0, %v4704
        %v4706 = vadd.s32 %v4701, 1
        %vm4707 = vcmp.gt.s32.totalorder %v4706, 0
        %v4708 = vsel %vm4707, %v4706, 0
        %v4709 = vshrl.u32 %v4708, 5
        %v4710 = vand.u32 %v4708, 31
        %v4711 = vsub.s32 32, %v4710
        %v4712 = vshrl.u32 683565275, %v4711
        %v4713 = vshll.u32 683565275, %v4710
        %v4714 = vshrl.u32 2475754826, %v4711
        %v4715 = vor.u32 %v4713, %v4714
        %v4716 = vshll.u32 2475754826, %v4710
        %v4717 = vshrl.u32 2131351028, %v4711
        %v4718 = vor.u32 %v4716, %v4717
        %v4719 = vshll.u32 2131351028, %v4710
        %v4720 = vshrl.u32 2102212464, %v4711
        %v4721 = vor.u32 %v4719, %v4720
        %v4722 = vshll.u32 2102212464, %v4710
        %v4723 = vshrl.u32 920167782, %v4711
        %v4724 = vor.u32 %v4722, %v4723
        %v4725 = vshll.u32 920167782, %v4710
        %v4726 = vshrl.u32 1326507024, %v4711
        %v4727 = vor.u32 %v4725, %v4726
        %vm4728 = vcmp.lt.s32.totalorder %v4709, 1
        %vm4729 = vcmp.lt.s32.totalorder %v4709, 2
        %vm4730 = vcmp.lt.s32.totalorder %v4709, 3
        %vm4731 = vcmp.lt.s32.totalorder %v4709, 4
        %v4732 = vsel %vm4728, %v4712, %v4715
        %v4733 = vsel %vm4731, %v4721, 2102212464
        %v4734 = vsel %vm4730, %v4718, %v4733
        %v4735 = vsel %vm4729, %v4732, %v4734
        %v4736 = vsel %vm4728, %v4715, %v4718
        %v4737 = vsel %vm4731, %v4724, 920167782
        %v4738 = vsel %vm4730, %v4721, %v4737
        %v4739 = vsel %vm4729, %v4736, %v4738
        %v4740 = vsel %vm4728, %v4718, %v4721
        %v4741 = vsel %vm4731, %v4727, 1326507024
        %v4742 = vsel %vm4730, %v4724, %v4741
        %v4743 = vsel %vm4729, %v4740, %v4742
        %v4744 = vshll.u32 %v4704, 8
        %v4745 = vand.u32 %v4744, 65535
        %v4746 = vshrl.u32 %v4744, 16
        %v4747 = vand.u32 %v4743, 65535
        %v4748 = vshrl.u32 %v4743, 16
        %v4749 = vmul.u32 %v4745, %v4747
        %v4750 = vmul.u32 %v4745, %v4748
        %v4751 = vmul.u32 %v4746, %v4747
        %v4752 = vmul.u32 %v4746, %v4748
        %v4753 = vshll.u32 %v4750, 16
        %v4754 = vshrl.u32 %v4750, 16
        %v4755 = vshll.u32 %v4751, 16
        %v4756 = vshrl.u32 %v4751, 16
        %vm4757 = vc.u32 %v4749, %v4753
        %v4758 = vsel %vm4757, 1, 0
        %v4759 = vadd.s32 %v4749, %v4753
        %v4760 = vadd.s32 %v4752, %v4758
        %vm4761 = vc.u32 %v4759, %v4755
        %v4762 = vsel %vm4761, 1, 0
        %v4763 = vadd.s32 %v4759, %v4755
        %v4764 = vadd.s32 %v4760, %v4762
        %v4765 = vadd.s32 %v4764, %v4754
        %v4766 = vadd.s32 %v4765, %v4756
        %v4767 = vand.u32 %v4744, 65535
        %v4768 = vshrl.u32 %v4744, 16
        %v4769 = vand.u32 %v4739, 65535
        %v4770 = vshrl.u32 %v4739, 16
        %v4771 = vmul.u32 %v4767, %v4769
        %v4772 = vmul.u32 %v4767, %v4770
        %v4773 = vmul.u32 %v4768, %v4769
        %v4774 = vmul.u32 %v4768, %v4770
        %v4775 = vshll.u32 %v4772, 16
        %v4776 = vshrl.u32 %v4772, 16
        %v4777 = vshll.u32 %v4773, 16
        %v4778 = vshrl.u32 %v4773, 16
        %vm4779 = vc.u32 %v4771, %v4775
        %v4780 = vsel %vm4779, 1, 0
        %v4781 = vadd.s32 %v4771, %v4775
        %v4782 = vadd.s32 %v4774, %v4780
        %vm4783 = vc.u32 %v4781, %v4777
        %v4784 = vsel %vm4783, 1, 0
        %v4785 = vadd.s32 %v4781, %v4777
        %v4786 = vadd.s32 %v4782, %v4784
        %v4787 = vadd.s32 %v4786, %v4776
        %v4788 = vadd.s32 %v4787, %v4778
        %v4789 = vmul.u32 %v4744, %v4735
        %v4790 = vadd.s32 %v4766, %v4785
        %vm4791 = vc.u32 %v4766, %v4785
        %v4792 = vadd.s32 %v4788, 1
        %v4793 = vsel %vm4791, %v4792, %v4788
        %v4794 = vadd.s32 %v4789, %v4793
        %v4795 = vadd.s32 %v4794, 536870912
        %v4796 = vshrl.u32 %v4795, 30
        %v4797 = vshll.u32 %v4796, 30
        %v4798 = vsub.s32 %v4794, %v4797
        %vm4799 = vcmp.lt.s32.totalorder %v4798, 0
        %v4800 = vsub.s32 0, %v4798
        %v4801 = vsel %vm4799, %v4800, %v4798
        %v4802 = vclz %v4801
        %v4803 = vsub.s32 %v4802, 2
        %vm4804 = vcmp.gt.s32.totalorder 0, %v4803
        %v4805 = vsel %vm4804, 0, %v4803
        %v4806 = vsub.s32 32, %v4805
        %v4807 = vshll.u32 %v4798, %v4805
        %v4808 = vshrl.u32 %v4790, %v4806
        %v4809 = vor.u32 %v4807, %v4808
        %v4810 = vsub.s32 4294967266, %v4805
        %v4811 = vadd.s32 %v4810, 127
        %v4812 = vshll.u32 %v4811, 23
        %v4813 = vor.u32 4788187, %v4812
        %v4814 = vand.u32 2147483647, %v4813
        %v4816 = vcvt.s32.f32 %v4809
        %v4817 = vmul.f32 %v4816, %v4814
        %v4818 = vxor.u32 %v4817, 2147483648
        %v4819 = vsel %vm4698, %v4818, %v4817
        %v4820 = vsub.s32 4, %v4796
        %v4821 = vsel %vm4698, %v4820, %v4796
        %v4822 = vsel %vm4697, %v686, %v4819
        %v4823 = vsel %vm4697, 0, %v4821
        %v4824 = vmul.f32 %v4822, %v4822
        %v4825 = vmul.f32 %v4824, -0.001358992
        %v4826 = vadd.f32 %v4825, 0.041655596
        %v4827 = vmul.f32 %v4824, %v4826
        %v4828 = vadd.f32 %v4827, -0.4999988
        %v4829 = vmul.f32 %v4824, %v4828
        %v4830 = vadd.f32 1.0, %v4829
        %v4831 = vmul.f32 %v4822, %v4822
        %v4832 = vmul.f32 %v4831, -0.00019511016
        %v4833 = vadd.f32 %v4832, 0.008332121
        %v4834 = vmul.f32 %v4831, %v4833
        %v4835 = vadd.f32 %v4834, -0.16666654
        %v4836 = vmul.f32 %v4831, %v4835
        %v4837 = vadd.f32 %v4836, 1.0
        %v4838 = vmul.f32 %v4837, %v4822
        %vm4839 = vweird.f32 %v686
        %v4840 = vand.u32 %v4823, 3
        %vm4841 = vcmp.lt.s32.totalorder %v4840, 2
        %vm4842 = vcmp.eq.s32.totalorder %v4840, 0
        %v4843 = vxor.u32 %v4838, 2147483648
        %v4844 = vsel %vm4842, %v4830, %v4843
        %vm4845 = vcmp.eq.s32.totalorder %v4840, 2
        %v4846 = vxor.u32 %v4830, 2147483648
        %v4847 = vsel %vm4845, %v4846, %v4838
        %v4848 = vsel %vm4841, %v4844, %v4847
        %v4849 = vsel %vm4839, nan, %v4848
        %v4850 = vand.u32 2147483647, %v687
        %vm4851 = vcmp.le.f32.partialorder %v4850, 0.7853982
        %vm4852 = vcmp.lt.s32.totalorder %v687, 0
        %v4853 = vand.u32 %v687, 2139095040
        %v4854 = vshrl.u32 %v4853, 23
        %v4855 = vsub.s32 %v4854, 127
        %v4856 = vand.u32 2147483647, %v687
        %v4857 = vand.u32 %v4856, 8388607
        %v4858 = vor.u32 %v4857, 8388608
        %v4859 = vsub.s32 0, %v4858
        %v4860 = vadd.s32 %v4855, 1
        %vm4861 = vcmp.gt.s32.totalorder %v4860, 0
        %v4862 = vsel %vm4861, %v4860, 0
        %v4863 = vshrl.u32 %v4862, 5
        %v4864 = vand.u32 %v4862, 31
        %v4865 = vsub.s32 32, %v4864
        %v4866 = vshrl.u32 683565275, %v4865
        %v4867 = vshll.u32 683565275, %v4864
        %v4868 = vshrl.u32 2475754826, %v4865
        %v4869 = vor.u32 %v4867, %v4868
        %v4870 = vshll.u32 2475754826, %v4864
        %v4871 = vshrl.u32 2131351028, %v4865
        %v4872 = vor.u32 %v4870, %v4871
        %v4873 = vshll.u32 2131351028, %v4864
        %v4874 = vshrl.u32 2102212464, %v4865
        %v4875 = vor.u32 %v4873, %v4874
        %v4876 = vshll.u32 2102212464, %v4864
        %v4877 = vshrl.u32 920167782, %v4865
        %v4878 = vor.u32 %v4876, %v4877
        %v4879 = vshll.u32 920167782, %v4864
        %v4880 = vshrl.u32 1326507024, %v4865
        %v4881 = vor.u32 %v4879, %v4880
        %vm4882 = vcmp.lt.s32.totalorder %v4863, 1
        %vm4883 = vcmp.lt.s32.totalorder %v4863, 2
        %vm4884 = vcmp.lt.s32.totalorder %v4863, 3
        %vm4885 = vcmp.lt.s32.totalorder %v4863, 4
        %v4886 = vsel %vm4882, %v4866, %v4869
        %v4887 = vsel %vm4885, %v4875, 2102212464
        %v4888 = vsel %vm4884, %v4872, %v4887
        %v4889 = vsel %vm4883, %v4886, %v4888
        %v4890 = vsel %vm4882, %v4869, %v4872
        %v4891 = vsel %vm4885, %v4878, 920167782
        %v4892 = vsel %vm4884, %v4875, %v4891
        %v4893 = vsel %vm4883, %v4890, %v4892
        %v4894 = vsel %vm4882, %v4872, %v4875
        %v4895 = vsel %vm4885, %v4881, 1326507024
        %v4896 = vsel %vm4884, %v4878, %v4895
        %v4897 = vsel %vm4883, %v4894, %v4896
        %v4898 = vshll.u32 %v4858, 8
        %v4899 = vand.u32 %v4898, 65535
        %v4900 = vshrl.u32 %v4898, 16
        %v4901 = vand.u32 %v4897, 65535
        %v4902 = vshrl.u32 %v4897, 16
        %v4903 = vmul.u32 %v4899, %v4901
        %v4904 = vmul.u32 %v4899, %v4902
        %v4905 = vmul.u32 %v4900, %v4901
        %v4906 = vmul.u32 %v4900, %v4902
        %v4907 = vshll.u32 %v4904, 16
        %v4908 = vshrl.u32 %v4904, 16
        %v4909 = vshll.u32 %v4905, 16
        %v4910 = vshrl.u32 %v4905, 16
        %vm4911 = vc.u32 %v4903, %v4907
        %v4912 = vsel %vm4911, 1, 0
        %v4913 = vadd.s32 %v4903, %v4907
        %v4914 = vadd.s32 %v4906, %v4912
        %vm4915 = vc.u32 %v4913, %v4909
        %v4916 = vsel %vm4915, 1, 0
        %v4917 = vadd.s32 %v4913, %v4909
        %v4918 = vadd.s32 %v4914, %v4916
        %v4919 = vadd.s32 %v4918, %v4908
        %v4920 = vadd.s32 %v4919, %v4910
        %v4921 = vand.u32 %v4898, 65535
        %v4922 = vshrl.u32 %v4898, 16
        %v4923 = vand.u32 %v4893, 65535
        %v4924 = vshrl.u32 %v4893, 16
        %v4925 = vmul.u32 %v4921, %v4923
        %v4926 = vmul.u32 %v4921, %v4924
        %v4927 = vmul.u32 %v4922, %v4923
        %v4928 = vmul.u32 %v4922, %v4924
        %v4929 = vshll.u32 %v4926, 16
        %v4930 = vshrl.u32 %v4926, 16
        %v4931 = vshll.u32 %v4927, 16
        %v4932 = vshrl.u32 %v4927, 16
        %vm4933 = vc.u32 %v4925, %v4929
        %v4934 = vsel %vm4933, 1, 0
        %v4935 = vadd.s32 %v4925, %v4929
        %v4936 = vadd.s32 %v4928, %v4934
        %vm4937 = vc.u32 %v4935, %v4931
        %v4938 = vsel %vm4937, 1, 0
        %v4939 = vadd.s32 %v4935, %v4931
        %v4940 = vadd.s32 %v4936, %v4938
        %v4941 = vadd.s32 %v4940, %v4930
        %v4942 = vadd.s32 %v4941, %v4932
        %v4943 = vmul.u32 %v4898, %v4889
        %v4944 = vadd.s32 %v4920, %v4939
        %vm4945 = vc.u32 %v4920, %v4939
        %v4946 = vadd.s32 %v4942, 1
        %v4947 = vsel %vm4945, %v4946, %v4942
        %v4948 = vadd.s32 %v4943, %v4947
        %v4949 = vadd.s32 %v4948, 536870912
        %v4950 = vshrl.u32 %v4949, 30
        %v4951 = vshll.u32 %v4950, 30
        %v4952 = vsub.s32 %v4948, %v4951
        %vm4953 = vcmp.lt.s32.totalorder %v4952, 0
        %v4954 = vsub.s32 0, %v4952
        %v4955 = vsel %vm4953, %v4954, %v4952
        %v4956 = vclz %v4955
        %v4957 = vsub.s32 %v4956, 2
        %vm4958 = vcmp.gt.s32.totalorder 0, %v4957
        %v4959 = vsel %vm4958, 0, %v4957
        %v4960 = vsub.s32 32, %v4959
        %v4961 = vshll.u32 %v4952, %v4959
        %v4962 = vshrl.u32 %v4944, %v4960
        %v4963 = vor.u32 %v4961, %v4962
        %v4964 = vsub.s32 4294967266, %v4959
        %v4965 = vadd.s32 %v4964, 127
        %v4966 = vshll.u32 %v4965, 23
        %v4967 = vor.u32 4788187, %v4966
        %v4968 = vand.u32 2147483647, %v4967
        %v4970 = vcvt.s32.f32 %v4963
        %v4971 = vmul.f32 %v4970, %v4968
        %v4972 = vxor.u32 %v4971, 2147483648
        %v4973 = vsel %vm4852, %v4972, %v4971
        %v4974 = vsub.s32 4, %v4950
        %v4975 = vsel %vm4852, %v4974, %v4950
        %v4976 = vsel %vm4851, %v687, %v4973
        %v4977 = vsel %vm4851, 0, %v4975
        %v4978 = vmul.f32 %v4976, %v4976
        %v4979 = vmul.f32 %v4978, -0.001358992
        %v4980 = vadd.f32 %v4979, 0.041655596
        %v4981 = vmul.f32 %v4978, %v4980
        %v4982 = vadd.f32 %v4981, -0.4999988
        %v4983 = vmul.f32 %v4978, %v4982
        %v4984 = vadd.f32 1.0, %v4983
        %v4985 = vmul.f32 %v4976, %v4976
        %v4986 = vmul.f32 %v4985, -0.00019511016
        %v4987 = vadd.f32 %v4986, 0.008332121
        %v4988 = vmul.f32 %v4985, %v4987
        %v4989 = vadd.f32 %v4988, -0.16666654
        %v4990 = vmul.f32 %v4985, %v4989
        %v4991 = vadd.f32 %v4990, 1.0
        %v4992 = vmul.f32 %v4991, %v4976
        %vm4993 = vweird.f32 %v687
        %v4994 = vand.u32 %v4977, 3
        %vm4995 = vcmp.lt.s32.totalorder %v4994, 2
        %vm4996 = vcmp.eq.s32.totalorder %v4994, 0
        %v4997 = vxor.u32 %v4992, 2147483648
        %v4998 = vsel %vm4996, %v4984, %v4997
        %vm4999 = vcmp.eq.s32.totalorder %v4994, 2
        %v5000 = vxor.u32 %v4984, 2147483648
        %v5001 = vsel %vm4999, %v5000, %v4992
        %v5002 = vsel %vm4995, %v4998, %v5001
        %v5003 = vsel %vm4993, nan, %v5002
        %v5004 = vand.u32 2147483647, %v688
        %vm5005 = vcmp.le.f32.partialorder %v5004, 0.7853982
        %vm5006 = vcmp.lt.s32.totalorder %v688, 0
        %v5007 = vand.u32 %v688, 2139095040
        %v5008 = vshrl.u32 %v5007, 23
        %v5009 = vsub.s32 %v5008, 127
        %v5010 = vand.u32 2147483647, %v688
        %v5011 = vand.u32 %v5010, 8388607
        %v5012 = vor.u32 %v5011, 8388608
        %v5013 = vsub.s32 0, %v5012
        %v5014 = vadd.s32 %v5009, 1
        %vm5015 = vcmp.gt.s32.totalorder %v5014, 0
        %v5016 = vsel %vm5015, %v5014, 0
        %v5017 = vshrl.u32 %v5016, 5
        %v5018 = vand.u32 %v5016, 31
        %v5019 = vsub.s32 32, %v5018
        %v5020 = vshrl.u32 683565275, %v5019
        %v5021 = vshll.u32 683565275, %v5018
        %v5022 = vshrl.u32 2475754826, %v5019
        %v5023 = vor.u32 %v5021, %v5022
        %v5024 = vshll.u32 2475754826, %v5018
        %v5025 = vshrl.u32 2131351028, %v5019
        %v5026 = vor.u32 %v5024, %v5025
        %v5027 = vshll.u32 2131351028, %v5018
        %v5028 = vshrl.u32 2102212464, %v5019
        %v5029 = vor.u32 %v5027, %v5028
        %v5030 = vshll.u32 2102212464, %v5018
        %v5031 = vshrl.u32 920167782, %v5019
        %v5032 = vor.u32 %v5030, %v5031
        %v5033 = vshll.u32 920167782, %v5018
        %v5034 = vshrl.u32 1326507024, %v5019
        %v5035 = vor.u32 %v5033, %v5034
        %vm5036 = vcmp.lt.s32.totalorder %v5017, 1
        %vm5037 = vcmp.lt.s32.totalorder %v5017, 2
        %vm5038 = vcmp.lt.s32.totalorder %v5017, 3
        %vm5039 = vcmp.lt.s32.totalorder %v5017, 4
        %v5040 = vsel %vm5036, %v5020, %v5023
        %v5041 = vsel %vm5039, %v5029, 2102212464
        %v5042 = vsel %vm5038, %v5026, %v5041
        %v5043 = vsel %vm5037, %v5040, %v5042
        %v5044 = vsel %vm5036, %v5023, %v5026
        %v5045 = vsel %vm5039, %v5032, 920167782
        %v5046 = vsel %vm5038, %v5029, %v5045
        %v5047 = vsel %vm5037, %v5044, %v5046
        %v5048 = vsel %vm5036, %v5026, %v5029
        %v5049 = vsel %vm5039, %v5035, 1326507024
        %v5050 = vsel %vm5038, %v5032, %v5049
        %v5051 = vsel %vm5037, %v5048, %v5050
        %v5052 = vshll.u32 %v5012, 8
        %v5053 = vand.u32 %v5052, 65535
        %v5054 = vshrl.u32 %v5052, 16
        %v5055 = vand.u32 %v5051, 65535
        %v5056 = vshrl.u32 %v5051, 16
        %v5057 = vmul.u32 %v5053, %v5055
        %v5058 = vmul.u32 %v5053, %v5056
        %v5059 = vmul.u32 %v5054, %v5055
        %v5060 = vmul.u32 %v5054, %v5056
        %v5061 = vshll.u32 %v5058, 16
        %v5062 = vshrl.u32 %v5058, 16
        %v5063 = vshll.u32 %v5059, 16
        %v5064 = vshrl.u32 %v5059, 16
        %vm5065 = vc.u32 %v5057, %v5061
        %v5066 = vsel %vm5065, 1, 0
        %v5067 = vadd.s32 %v5057, %v5061
        %v5068 = vadd.s32 %v5060, %v5066
        %vm5069 = vc.u32 %v5067, %v5063
        %v5070 = vsel %vm5069, 1, 0
        %v5071 = vadd.s32 %v5067, %v5063
        %v5072 = vadd.s32 %v5068, %v5070
        %v5073 = vadd.s32 %v5072, %v5062
        %v5074 = vadd.s32 %v5073, %v5064
        %v5075 = vand.u32 %v5052, 65535
        %v5076 = vshrl.u32 %v5052, 16
        %v5077 = vand.u32 %v5047, 65535
        %v5078 = vshrl.u32 %v5047, 16
        %v5079 = vmul.u32 %v5075, %v5077
        %v5080 = vmul.u32 %v5075, %v5078
        %v5081 = vmul.u32 %v5076, %v5077
        %v5082 = vmul.u32 %v5076, %v5078
        %v5083 = vshll.u32 %v5080, 16
        %v5084 = vshrl.u32 %v5080, 16
        %v5085 = vshll.u32 %v5081, 16
        %v5086 = vshrl.u32 %v5081, 16
        %vm5087 = vc.u32 %v5079, %v5083
        %v5088 = vsel %vm5087, 1, 0
        %v5089 = vadd.s32 %v5079, %v5083
        %v5090 = vadd.s32 %v5082, %v5088
        %vm5091 = vc.u32 %v5089, %v5085
        %v5092 = vsel %vm5091, 1, 0
        %v5093 = vadd.s32 %v5089, %v5085
        %v5094 = vadd.s32 %v5090, %v5092
        %v5095 = vadd.s32 %v5094, %v5084
        %v5096 = vadd.s32 %v5095, %v5086
        %v5097 = vmul.u32 %v5052, %v5043
        %v5098 = vadd.s32 %v5074, %v5093
        %vm5099 = vc.u32 %v5074, %v5093
        %v5100 = vadd.s32 %v5096, 1
        %v5101 = vsel %vm5099, %v5100, %v5096
        %v5102 = vadd.s32 %v5097, %v5101
        %v5103 = vadd.s32 %v5102, 536870912
        %v5104 = vshrl.u32 %v5103, 30
        %v5105 = vshll.u32 %v5104, 30
        %v5106 = vsub.s32 %v5102, %v5105
        %vm5107 = vcmp.lt.s32.totalorder %v5106, 0
        %v5108 = vsub.s32 0, %v5106
        %v5109 = vsel %vm5107, %v5108, %v5106
        %v5110 = vclz %v5109
        %v5111 = vsub.s32 %v5110, 2
        %vm5112 = vcmp.gt.s32.totalorder 0, %v5111
        %v5113 = vsel %vm5112, 0, %v5111
        %v5114 = vsub.s32 32, %v5113
        %v5115 = vshll.u32 %v5106, %v5113
        %v5116 = vshrl.u32 %v5098, %v5114
        %v5117 = vor.u32 %v5115, %v5116
        %v5118 = vsub.s32 4294967266, %v5113
        %v5119 = vadd.s32 %v5118, 127
        %v5120 = vshll.u32 %v5119, 23
        %v5121 = vor.u32 4788187, %v5120
        %v5122 = vand.u32 2147483647, %v5121
        %v5124 = vcvt.s32.f32 %v5117
        %v5125 = vmul.f32 %v5124, %v5122
        %v5126 = vxor.u32 %v5125, 2147483648
        %v5127 = vsel %vm5006, %v5126, %v5125
        %v5128 = vsub.s32 4, %v5104
        %v5129 = vsel %vm5006, %v5128, %v5104
        %v5130 = vsel %vm5005, %v688, %v5127
        %v5131 = vsel %vm5005, 0, %v5129
        %v5132 = vmul.f32 %v5130, %v5130
        %v5133 = vmul.f32 %v5132, -0.001358992
        %v5134 = vadd.f32 %v5133, 0.041655596
        %v5135 = vmul.f32 %v5132, %v5134
        %v5136 = vadd.f32 %v5135, -0.4999988
        %v5137 = vmul.f32 %v5132, %v5136
        %v5138 = vadd.f32 1.0, %v5137
        %v5139 = vmul.f32 %v5130, %v5130
        %v5140 = vmul.f32 %v5139, -0.00019511016
        %v5141 = vadd.f32 %v5140, 0.008332121
        %v5142 = vmul.f32 %v5139, %v5141
        %v5143 = vadd.f32 %v5142, -0.16666654
        %v5144 = vmul.f32 %v5139, %v5143
        %v5145 = vadd.f32 %v5144, 1.0
        %v5146 = vmul.f32 %v5145, %v5130
        %vm5147 = vweird.f32 %v688
        %v5148 = vand.u32 %v5131, 3
        %vm5149 = vcmp.lt.s32.totalorder %v5148, 2
        %vm5150 = vcmp.eq.s32.totalorder %v5148, 0
        %v5151 = vxor.u32 %v5146, 2147483648
        %v5152 = vsel %vm5150, %v5138, %v5151
        %vm5153 = vcmp.eq.s32.totalorder %v5148, 2
        %v5154 = vxor.u32 %v5138, 2147483648
        %v5155 = vsel %vm5153, %v5154, %v5146
        %v5156 = vsel %vm5149, %v5152, %v5155
        %v5157 = vsel %vm5147, nan, %v5156
        %v5158 = vand.u32 2147483647, %v689
        %vm5159 = vcmp.le.f32.partialorder %v5158, 0.7853982
        %vm5160 = vcmp.lt.s32.totalorder %v689, 0
        %v5161 = vand.u32 %v689, 2139095040
        %v5162 = vshrl.u32 %v5161, 23
        %v5163 = vsub.s32 %v5162, 127
        %v5164 = vand.u32 2147483647, %v689
        %v5165 = vand.u32 %v5164, 8388607
        %v5166 = vor.u32 %v5165, 8388608
        %v5167 = vsub.s32 0, %v5166
        %v5168 = vadd.s32 %v5163, 1
        %vm5169 = vcmp.gt.s32.totalorder %v5168, 0
        %v5170 = vsel %vm5169, %v5168, 0
        %v5171 = vshrl.u32 %v5170, 5
        %v5172 = vand.u32 %v5170, 31
        %v5173 = vsub.s32 32, %v5172
        %v5174 = vshrl.u32 683565275, %v5173
        %v5175 = vshll.u32 683565275, %v5172
        %v5176 = vshrl.u32 2475754826, %v5173
        %v5177 = vor.u32 %v5175, %v5176
        %v5178 = vshll.u32 2475754826, %v5172
        %v5179 = vshrl.u32 2131351028, %v5173
        %v5180 = vor.u32 %v5178, %v5179
        %v5181 = vshll.u32 2131351028, %v5172
        %v5182 = vshrl.u32 2102212464, %v5173
        %v5183 = vor.u32 %v5181, %v5182
        %v5184 = vshll.u32 2102212464, %v5172
        %v5185 = vshrl.u32 920167782, %v5173
        %v5186 = vor.u32 %v5184, %v5185
        %v5187 = vshll.u32 920167782, %v5172
        %v5188 = vshrl.u32 1326507024, %v5173
        %v5189 = vor.u32 %v5187, %v5188
        %vm5190 = vcmp.lt.s32.totalorder %v5171, 1
        %vm5191 = vcmp.lt.s32.totalorder %v5171, 2
        %vm5192 = vcmp.lt.s32.totalorder %v5171, 3
        %vm5193 = vcmp.lt.s32.totalorder %v5171, 4
        %v5194 = vsel %vm5190, %v5174, %v5177
        %v5195 = vsel %vm5193, %v5183, 2102212464
        %v5196 = vsel %vm5192, %v5180, %v5195
        %v5197 = vsel %vm5191, %v5194, %v5196
        %v5198 = vsel %vm5190, %v5177, %v5180
        %v5199 = vsel %vm5193, %v5186, 920167782
        %v5200 = vsel %vm5192, %v5183, %v5199
        %v5201 = vsel %vm5191, %v5198, %v5200
        %v5202 = vsel %vm5190, %v5180, %v5183
        %v5203 = vsel %vm5193, %v5189, 1326507024
        %v5204 = vsel %vm5192, %v5186, %v5203
        %v5205 = vsel %vm5191, %v5202, %v5204
        %v5206 = vshll.u32 %v5166, 8
        %v5207 = vand.u32 %v5206, 65535
        %v5208 = vshrl.u32 %v5206, 16
        %v5209 = vand.u32 %v5205, 65535
        %v5210 = vshrl.u32 %v5205, 16
        %v5211 = vmul.u32 %v5207, %v5209
        %v5212 = vmul.u32 %v5207, %v5210
        %v5213 = vmul.u32 %v5208, %v5209
        %v5214 = vmul.u32 %v5208, %v5210
        %v5215 = vshll.u32 %v5212, 16
        %v5216 = vshrl.u32 %v5212, 16
        %v5217 = vshll.u32 %v5213, 16
        %v5218 = vshrl.u32 %v5213, 16
        %vm5219 = vc.u32 %v5211, %v5215
        %v5220 = vsel %vm5219, 1, 0
        %v5221 = vadd.s32 %v5211, %v5215
        %v5222 = vadd.s32 %v5214, %v5220
        %vm5223 = vc.u32 %v5221, %v5217
        %v5224 = vsel %vm5223, 1, 0
        %v5225 = vadd.s32 %v5221, %v5217
        %v5226 = vadd.s32 %v5222, %v5224
        %v5227 = vadd.s32 %v5226, %v5216
        %v5228 = vadd.s32 %v5227, %v5218
        %v5229 = vand.u32 %v5206, 65535
        %v5230 = vshrl.u32 %v5206, 16
        %v5231 = vand.u32 %v5201, 65535
        %v5232 = vshrl.u32 %v5201, 16
        %v5233 = vmul.u32 %v5229, %v5231
        %v5234 = vmul.u32 %v5229, %v5232
        %v5235 = vmul.u32 %v5230, %v5231
        %v5236 = vmul.u32 %v5230, %v5232
        %v5237 = vshll.u32 %v5234, 16
        %v5238 = vshrl.u32 %v5234, 16
        %v5239 = vshll.u32 %v5235, 16
        %v5240 = vshrl.u32 %v5235, 16
        %vm5241 = vc.u32 %v5233, %v5237
        %v5242 = vsel %vm5241, 1, 0
        %v5243 = vadd.s32 %v5233, %v5237
        %v5244 = vadd.s32 %v5236, %v5242
        %vm5245 = vc.u32 %v5243, %v5239
        %v5246 = vsel %vm5245, 1, 0
        %v5247 = vadd.s32 %v5243, %v5239
        %v5248 = vadd.s32 %v5244, %v5246
        %v5249 = vadd.s32 %v5248, %v5238
        %v5250 = vadd.s32 %v5249, %v5240
        %v5251 = vmul.u32 %v5206, %v5197
        %v5252 = vadd.s32 %v5228, %v5247
        %vm5253 = vc.u32 %v5228, %v5247
        %v5254 = vadd.s32 %v5250, 1
        %v5255 = vsel %vm5253, %v5254, %v5250
        %v5256 = vadd.s32 %v5251, %v5255
        %v5257 = vadd.s32 %v5256, 536870912
        %v5258 = vshrl.u32 %v5257, 30
        %v5259 = vshll.u32 %v5258, 30
        %v5260 = vsub.s32 %v5256, %v5259
        %vm5261 = vcmp.lt.s32.totalorder %v5260, 0
        %v5262 = vsub.s32 0, %v5260
        %v5263 = vsel %vm5261, %v5262, %v5260
        %v5264 = vclz %v5263
        %v5265 = vsub.s32 %v5264, 2
        %vm5266 = vcmp.gt.s32.totalorder 0, %v5265
        %v5267 = vsel %vm5266, 0, %v5265
        %v5268 = vsub.s32 32, %v5267
        %v5269 = vshll.u32 %v5260, %v5267
        %v5270 = vshrl.u32 %v5252, %v5268
        %v5271 = vor.u32 %v5269, %v5270
        %v5272 = vsub.s32 4294967266, %v5267
        %v5273 = vadd.s32 %v5272, 127
        %v5274 = vshll.u32 %v5273, 23
        %v5275 = vor.u32 4788187, %v5274
        %v5276 = vand.u32 2147483647, %v5275
        %v5278 = vcvt.s32.f32 %v5271
        %v5279 = vmul.f32 %v5278, %v5276
        %v5280 = vxor.u32 %v5279, 2147483648
        %v5281 = vsel %vm5160, %v5280, %v5279
        %v5282 = vsub.s32 4, %v5258
        %v5283 = vsel %vm5160, %v5282, %v5258
        %v5284 = vsel %vm5159, %v689, %v5281
        %v5285 = vsel %vm5159, 0, %v5283
        %v5286 = vmul.f32 %v5284, %v5284
        %v5287 = vmul.f32 %v5286, -0.001358992
        %v5288 = vadd.f32 %v5287, 0.041655596
        %v5289 = vmul.f32 %v5286, %v5288
        %v5290 = vadd.f32 %v5289, -0.4999988
        %v5291 = vmul.f32 %v5286, %v5290
        %v5292 = vadd.f32 1.0, %v5291
        %v5293 = vmul.f32 %v5284, %v5284
        %v5294 = vmul.f32 %v5293, -0.00019511016
        %v5295 = vadd.f32 %v5294, 0.008332121
        %v5296 = vmul.f32 %v5293, %v5295
        %v5297 = vadd.f32 %v5296, -0.16666654
        %v5298 = vmul.f32 %v5293, %v5297
        %v5299 = vadd.f32 %v5298, 1.0
        %v5300 = vmul.f32 %v5299, %v5284
        %vm5301 = vweird.f32 %v689
        %v5302 = vand.u32 %v5285, 3
        %vm5303 = vcmp.lt.s32.totalorder %v5302, 2
        %vm5304 = vcmp.eq.s32.totalorder %v5302, 0
        %v5305 = vxor.u32 %v5300, 2147483648
        %v5306 = vsel %vm5304, %v5292, %v5305
        %vm5307 = vcmp.eq.s32.totalorder %v5302, 2
        %v5308 = vxor.u32 %v5292, 2147483648
        %v5309 = vsel %vm5307, %v5308, %v5300
        %v5310 = vsel %vm5303, %v5306, %v5309
        %v5311 = vsel %vm5301, nan, %v5310
        %v5312 = vand.u32 2147483647, %v690
        %vm5313 = vcmp.le.f32.partialorder %v5312, 0.7853982
        %vm5314 = vcmp.lt.s32.totalorder %v690, 0
        %v5315 = vand.u32 %v690, 2139095040
        %v5316 = vshrl.u32 %v5315, 23
        %v5317 = vsub.s32 %v5316, 127
        %v5318 = vand.u32 2147483647, %v690
        %v5319 = vand.u32 %v5318, 8388607
        %v5320 = vor.u32 %v5319, 8388608
        %v5321 = vsub.s32 0, %v5320
        %v5322 = vadd.s32 %v5317, 1
        %vm5323 = vcmp.gt.s32.totalorder %v5322, 0
        %v5324 = vsel %vm5323, %v5322, 0
        %v5325 = vshrl.u32 %v5324, 5
        %v5326 = vand.u32 %v5324, 31
        %v5327 = vsub.s32 32, %v5326
        %v5328 = vshrl.u32 683565275, %v5327
        %v5329 = vshll.u32 683565275, %v5326
        %v5330 = vshrl.u32 2475754826, %v5327
        %v5331 = vor.u32 %v5329, %v5330
        %v5332 = vshll.u32 2475754826, %v5326
        %v5333 = vshrl.u32 2131351028, %v5327
        %v5334 = vor.u32 %v5332, %v5333
        %v5335 = vshll.u32 2131351028, %v5326
        %v5336 = vshrl.u32 2102212464, %v5327
        %v5337 = vor.u32 %v5335, %v5336
        %v5338 = vshll.u32 2102212464, %v5326
        %v5339 = vshrl.u32 920167782, %v5327
        %v5340 = vor.u32 %v5338, %v5339
        %v5341 = vshll.u32 920167782, %v5326
        %v5342 = vshrl.u32 1326507024, %v5327
        %v5343 = vor.u32 %v5341, %v5342
        %vm5344 = vcmp.lt.s32.totalorder %v5325, 1
        %vm5345 = vcmp.lt.s32.totalorder %v5325, 2
        %vm5346 = vcmp.lt.s32.totalorder %v5325, 3
        %vm5347 = vcmp.lt.s32.totalorder %v5325, 4
        %v5348 = vsel %vm5344, %v5328, %v5331
        %v5349 = vsel %vm5347, %v5337, 2102212464
        %v5350 = vsel %vm5346, %v5334, %v5349
        %v5351 = vsel %vm5345, %v5348, %v5350
        %v5352 = vsel %vm5344, %v5331, %v5334
        %v5353 = vsel %vm5347, %v5340, 920167782
        %v5354 = vsel %vm5346, %v5337, %v5353
        %v5355 = vsel %vm5345, %v5352, %v5354
        %v5356 = vsel %vm5344, %v5334, %v5337
        %v5357 = vsel %vm5347, %v5343, 1326507024
        %v5358 = vsel %vm5346, %v5340, %v5357
        %v5359 = vsel %vm5345, %v5356, %v5358
        %v5360 = vshll.u32 %v5320, 8
        %v5361 = vand.u32 %v5360, 65535
        %v5362 = vshrl.u32 %v5360, 16
        %v5363 = vand.u32 %v5359, 65535
        %v5364 = vshrl.u32 %v5359, 16
        %v5365 = vmul.u32 %v5361, %v5363
        %v5366 = vmul.u32 %v5361, %v5364
        %v5367 = vmul.u32 %v5362, %v5363
        %v5368 = vmul.u32 %v5362, %v5364
        %v5369 = vshll.u32 %v5366, 16
        %v5370 = vshrl.u32 %v5366, 16
        %v5371 = vshll.u32 %v5367, 16
        %v5372 = vshrl.u32 %v5367, 16
        %vm5373 = vc.u32 %v5365, %v5369
        %v5374 = vsel %vm5373, 1, 0
        %v5375 = vadd.s32 %v5365, %v5369
        %v5376 = vadd.s32 %v5368, %v5374
        %vm5377 = vc.u32 %v5375, %v5371
        %v5378 = vsel %vm5377, 1, 0
        %v5379 = vadd.s32 %v5375, %v5371
        %v5380 = vadd.s32 %v5376, %v5378
        %v5381 = vadd.s32 %v5380, %v5370
        %v5382 = vadd.s32 %v5381, %v5372
        %v5383 = vand.u32 %v5360, 65535
        %v5384 = vshrl.u32 %v5360, 16
        %v5385 = vand.u32 %v5355, 65535
        %v5386 = vshrl.u32 %v5355, 16
        %v5387 = vmul.u32 %v5383, %v5385
        %v5388 = vmul.u32 %v5383, %v5386
        %v5389 = vmul.u32 %v5384, %v5385
        %v5390 = vmul.u32 %v5384, %v5386
        %v5391 = vshll.u32 %v5388, 16
        %v5392 = vshrl.u32 %v5388, 16
        %v5393 = vshll.u32 %v5389, 16
        %v5394 = vshrl.u32 %v5389, 16
        %vm5395 = vc.u32 %v5387, %v5391
        %v5396 = vsel %vm5395, 1, 0
        %v5397 = vadd.s32 %v5387, %v5391
        %v5398 = vadd.s32 %v5390, %v5396
        %vm5399 = vc.u32 %v5397, %v5393
        %v5400 = vsel %vm5399, 1, 0
        %v5401 = vadd.s32 %v5397, %v5393
        %v5402 = vadd.s32 %v5398, %v5400
        %v5403 = vadd.s32 %v5402, %v5392
        %v5404 = vadd.s32 %v5403, %v5394
        %v5405 = vmul.u32 %v5360, %v5351
        %v5406 = vadd.s32 %v5382, %v5401
        %vm5407 = vc.u32 %v5382, %v5401
        %v5408 = vadd.s32 %v5404, 1
        %v5409 = vsel %vm5407, %v5408, %v5404
        %v5410 = vadd.s32 %v5405, %v5409
        %v5411 = vadd.s32 %v5410, 536870912
        %v5412 = vshrl.u32 %v5411, 30
        %v5413 = vshll.u32 %v5412, 30
        %v5414 = vsub.s32 %v5410, %v5413
        %vm5415 = vcmp.lt.s32.totalorder %v5414, 0
        %v5416 = vsub.s32 0, %v5414
        %v5417 = vsel %vm5415, %v5416, %v5414
        %v5418 = vclz %v5417
        %v5419 = vsub.s32 %v5418, 2
        %vm5420 = vcmp.gt.s32.totalorder 0, %v5419
        %v5421 = vsel %vm5420, 0, %v5419
        %v5422 = vsub.s32 32, %v5421
        %v5423 = vshll.u32 %v5414, %v5421
        %v5424 = vshrl.u32 %v5406, %v5422
        %v5425 = vor.u32 %v5423, %v5424
        %v5426 = vsub.s32 4294967266, %v5421
        %v5427 = vadd.s32 %v5426, 127
        %v5428 = vshll.u32 %v5427, 23
        %v5429 = vor.u32 4788187, %v5428
        %v5430 = vand.u32 2147483647, %v5429
        %v5432 = vcvt.s32.f32 %v5425
        %v5433 = vmul.f32 %v5432, %v5430
        %v5434 = vxor.u32 %v5433, 2147483648
        %v5435 = vsel %vm5314, %v5434, %v5433
        %v5436 = vsub.s32 4, %v5412
        %v5437 = vsel %vm5314, %v5436, %v5412
        %v5438 = vsel %vm5313, %v690, %v5435
        %v5439 = vsel %vm5313, 0, %v5437
        %v5440 = vmul.f32 %v5438, %v5438
        %v5441 = vmul.f32 %v5440, -0.001358992
        %v5442 = vadd.f32 %v5441, 0.041655596
        %v5443 = vmul.f32 %v5440, %v5442
        %v5444 = vadd.f32 %v5443, -0.4999988
        %v5445 = vmul.f32 %v5440, %v5444
        %v5446 = vadd.f32 1.0, %v5445
        %v5447 = vmul.f32 %v5438, %v5438
        %v5448 = vmul.f32 %v5447, -0.00019511016
        %v5449 = vadd.f32 %v5448, 0.008332121
        %v5450 = vmul.f32 %v5447, %v5449
        %v5451 = vadd.f32 %v5450, -0.16666654
        %v5452 = vmul.f32 %v5447, %v5451
        %v5453 = vadd.f32 %v5452, 1.0
        %v5454 = vmul.f32 %v5453, %v5438
        %vm5455 = vweird.f32 %v690
        %v5456 = vand.u32 %v5439, 3
        %vm5457 = vcmp.lt.s32.totalorder %v5456, 2
        %vm5458 = vcmp.eq.s32.totalorder %v5456, 0
        %v5459 = vxor.u32 %v5454, 2147483648
        %v5460 = vsel %vm5458, %v5446, %v5459
        %vm5461 = vcmp.eq.s32.totalorder %v5456, 2
        %v5462 = vxor.u32 %v5446, 2147483648
        %v5463 = vsel %vm5461, %v5462, %v5454
        %v5464 = vsel %vm5457, %v5460, %v5463
        %v5465 = vsel %vm5455, nan, %v5464
        %v5466 = vand.u32 2147483647, %v691
        %vm5467 = vcmp.le.f32.partialorder %v5466, 0.7853982
        %vm5468 = vcmp.lt.s32.totalorder %v691, 0
        %v5469 = vand.u32 %v691, 2139095040
        %v5470 = vshrl.u32 %v5469, 23
        %v5471 = vsub.s32 %v5470, 127
        %v5472 = vand.u32 2147483647, %v691
        %v5473 = vand.u32 %v5472, 8388607
        %v5474 = vor.u32 %v5473, 8388608
        %v5475 = vsub.s32 0, %v5474
        %v5476 = vadd.s32 %v5471, 1
        %vm5477 = vcmp.gt.s32.totalorder %v5476, 0
        %v5478 = vsel %vm5477, %v5476, 0
        %v5479 = vshrl.u32 %v5478, 5
        %v5480 = vand.u32 %v5478, 31
        %v5481 = vsub.s32 32, %v5480
        %v5482 = vshrl.u32 683565275, %v5481
        %v5483 = vshll.u32 683565275, %v5480
        %v5484 = vshrl.u32 2475754826, %v5481
        %v5485 = vor.u32 %v5483, %v5484
        %v5486 = vshll.u32 2475754826, %v5480
        %v5487 = vshrl.u32 2131351028, %v5481
        %v5488 = vor.u32 %v5486, %v5487
        %v5489 = vshll.u32 2131351028, %v5480
        %v5490 = vshrl.u32 2102212464, %v5481
        %v5491 = vor.u32 %v5489, %v5490
        %v5492 = vshll.u32 2102212464, %v5480
        %v5493 = vshrl.u32 920167782, %v5481
        %v5494 = vor.u32 %v5492, %v5493
        %v5495 = vshll.u32 920167782, %v5480
        %v5496 = vshrl.u32 1326507024, %v5481
        %v5497 = vor.u32 %v5495, %v5496
        %vm5498 = vcmp.lt.s32.totalorder %v5479, 1
        %vm5499 = vcmp.lt.s32.totalorder %v5479, 2
        %vm5500 = vcmp.lt.s32.totalorder %v5479, 3
        %vm5501 = vcmp.lt.s32.totalorder %v5479, 4
        %v5502 = vsel %vm5498, %v5482, %v5485
        %v5503 = vsel %vm5501, %v5491, 2102212464
        %v5504 = vsel %vm5500, %v5488, %v5503
        %v5505 = vsel %vm5499, %v5502, %v5504
        %v5506 = vsel %vm5498, %v5485, %v5488
        %v5507 = vsel %vm5501, %v5494, 920167782
        %v5508 = vsel %vm5500, %v5491, %v5507
        %v5509 = vsel %vm5499, %v5506, %v5508
        %v5510 = vsel %vm5498, %v5488, %v5491
        %v5511 = vsel %vm5501, %v5497, 1326507024
        %v5512 = vsel %vm5500, %v5494, %v5511
        %v5513 = vsel %vm5499, %v5510, %v5512
        %v5514 = vshll.u32 %v5474, 8
        %v5515 = vand.u32 %v5514, 65535
        %v5516 = vshrl.u32 %v5514, 16
        %v5517 = vand.u32 %v5513, 65535
        %v5518 = vshrl.u32 %v5513, 16
        %v5519 = vmul.u32 %v5515, %v5517
        %v5520 = vmul.u32 %v5515, %v5518
        %v5521 = vmul.u32 %v5516, %v5517
        %v5522 = vmul.u32 %v5516, %v5518
        %v5523 = vshll.u32 %v5520, 16
        %v5524 = vshrl.u32 %v5520, 16
        %v5525 = vshll.u32 %v5521, 16
        %v5526 = vshrl.u32 %v5521, 16
        %vm5527 = vc.u32 %v5519, %v5523
        %v5528 = vsel %vm5527, 1, 0
        %v5529 = vadd.s32 %v5519, %v5523
        %v5530 = vadd.s32 %v5522, %v5528
        %vm5531 = vc.u32 %v5529, %v5525
        %v5532 = vsel %vm5531, 1, 0
        %v5533 = vadd.s32 %v5529, %v5525
        %v5534 = vadd.s32 %v5530, %v5532
        %v5535 = vadd.s32 %v5534, %v5524
        %v5536 = vadd.s32 %v5535, %v5526
        %v5537 = vand.u32 %v5514, 65535
        %v5538 = vshrl.u32 %v5514, 16
        %v5539 = vand.u32 %v5509, 65535
        %v5540 = vshrl.u32 %v5509, 16
        %v5541 = vmul.u32 %v5537, %v5539
        %v5542 = vmul.u32 %v5537, %v5540
        %v5543 = vmul.u32 %v5538, %v5539
        %v5544 = vmul.u32 %v5538, %v5540
        %v5545 = vshll.u32 %v5542, 16
        %v5546 = vshrl.u32 %v5542, 16
        %v5547 = vshll.u32 %v5543, 16
        %v5548 = vshrl.u32 %v5543, 16
        %vm5549 = vc.u32 %v5541, %v5545
        %v5550 = vsel %vm5549, 1, 0
        %v5551 = vadd.s32 %v5541, %v5545
        %v5552 = vadd.s32 %v5544, %v5550
        %vm5553 = vc.u32 %v5551, %v5547
        %v5554 = vsel %vm5553, 1, 0
        %v5555 = vadd.s32 %v5551, %v5547
        %v5556 = vadd.s32 %v5552, %v5554
        %v5557 = vadd.s32 %v5556, %v5546
        %v5558 = vadd.s32 %v5557, %v5548
        %v5559 = vmul.u32 %v5514, %v5505
        %v5560 = vadd.s32 %v5536, %v5555
        %vm5561 = vc.u32 %v5536, %v5555
        %v5562 = vadd.s32 %v5558, 1
        %v5563 = vsel %vm5561, %v5562, %v5558
        %v5564 = vadd.s32 %v5559, %v5563
        %v5565 = vadd.s32 %v5564, 536870912
        %v5566 = vshrl.u32 %v5565, 30
        %v5567 = vshll.u32 %v5566, 30
        %v5568 = vsub.s32 %v5564, %v5567
        %vm5569 = vcmp.lt.s32.totalorder %v5568, 0
        %v5570 = vsub.s32 0, %v5568
        %v5571 = vsel %vm5569, %v5570, %v5568
        %v5572 = vclz %v5571
        %v5573 = vsub.s32 %v5572, 2
        %vm5574 = vcmp.gt.s32.totalorder 0, %v5573
        %v5575 = vsel %vm5574, 0, %v5573
        %v5576 = vsub.s32 32, %v5575
        %v5577 = vshll.u32 %v5568, %v5575
        %v5578 = vshrl.u32 %v5560, %v5576
        %v5579 = vor.u32 %v5577, %v5578
        %v5580 = vsub.s32 4294967266, %v5575
        %v5581 = vadd.s32 %v5580, 127
        %v5582 = vshll.u32 %v5581, 23
        %v5583 = vor.u32 4788187, %v5582
        %v5584 = vand.u32 2147483647, %v5583
        %v5586 = vcvt.s32.f32 %v5579
        %v5587 = vmul.f32 %v5586, %v5584
        %v5588 = vxor.u32 %v5587, 2147483648
        %v5589 = vsel %vm5468, %v5588, %v5587
        %v5590 = vsub.s32 4, %v5566
        %v5591 = vsel %vm5468, %v5590, %v5566
        %v5592 = vsel %vm5467, %v691, %v5589
        %v5593 = vsel %vm5467, 0, %v5591
        %v5594 = vmul.f32 %v5592, %v5592
        %v5595 = vmul.f32 %v5594, -0.001358992
        %v5596 = vadd.f32 %v5595, 0.041655596
        %v5597 = vmul.f32 %v5594, %v5596
        %v5598 = vadd.f32 %v5597, -0.4999988
        %v5599 = vmul.f32 %v5594, %v5598
        %v5600 = vadd.f32 1.0, %v5599
        %v5601 = vmul.f32 %v5592, %v5592
        %v5602 = vmul.f32 %v5601, -0.00019511016
        %v5603 = vadd.f32 %v5602, 0.008332121
        %v5604 = vmul.f32 %v5601, %v5603
        %v5605 = vadd.f32 %v5604, -0.16666654
        %v5606 = vmul.f32 %v5601, %v5605
        %v5607 = vadd.f32 %v5606, 1.0
        %v5608 = vmul.f32 %v5607, %v5592
        %vm5609 = vweird.f32 %v691
        %v5610 = vand.u32 %v5593, 3
        %vm5611 = vcmp.lt.s32.totalorder %v5610, 2
        %vm5612 = vcmp.eq.s32.totalorder %v5610, 0
        %v5613 = vxor.u32 %v5608, 2147483648
        %v5614 = vsel %vm5612, %v5600, %v5613
        %vm5615 = vcmp.eq.s32.totalorder %v5610, 2
        %v5616 = vxor.u32 %v5600, 2147483648
        %v5617 = vsel %vm5615, %v5616, %v5608
        %v5618 = vsel %vm5611, %v5614, %v5617
        %v5619 = vsel %vm5609, nan, %v5618
        %v5620 = vadd.f32 %v845, 1.0
        %v5621 = vadd.f32 %v999, 1.0
        %v5622 = vadd.f32 %v1153, 1.0
        %v5623 = vadd.f32 %v1307, 1.0
        %v5624 = vadd.f32 %v1461, 1.0
        %v5625 = vadd.f32 %v1615, 1.0
        %v5626 = vadd.f32 %v1769, 1.0
        %v5627 = vadd.f32 %v1923, 1.0
        %v5628 = vadd.f32 %v2077, 1.0
        %v5629 = vadd.f32 %v2231, 1.0
        %v5630 = vadd.f32 %v2385, 1.0
        %v5631 = vadd.f32 %v2539, 1.0
        %v5632 = vadd.f32 %v2693, 1.0
        %v5633 = vadd.f32 %v2847, 1.0
        %v5634 = vadd.f32 %v3001, 1.0
        %v5635 = vadd.f32 %v3155, 1.0
        %v5636 = vadd.f32 %v3309, 1.0
        %v5637 = vadd.f32 %v3463, 1.0
        %v5638 = vadd.f32 %v3617, 1.0
        %v5639 = vadd.f32 %v3771, 1.0
        %v5640 = vadd.f32 %v3925, 1.0
        %v5641 = vadd.f32 %v4079, 1.0
        %v5642 = vadd.f32 %v4233, 1.0
        %v5643 = vadd.f32 %v4387, 1.0
        %v5644 = vadd.f32 %v4541, 1.0
        %v5645 = vadd.f32 %v4695, 1.0
        %v5646 = vadd.f32 %v4849, 1.0
        %v5647 = vadd.f32 %v5003, 1.0
        %v5648 = vadd.f32 %v5157, 1.0
        %v5649 = vadd.f32 %v5311, 1.0
        %v5650 = vadd.f32 %v5465, 1.0
        %v5651 = vadd.f32 %v5619, 1.0
        %v5652 = vmul.f32 %v5620, 0.5
        %v5653 = vmul.f32 %v5621, 0.5
        %v5654 = vmul.f32 %v5622, 0.5
        %v5655 = vmul.f32 %v5623, 0.5
        %v5656 = vmul.f32 %v5624, 0.5
        %v5657 = vmul.f32 %v5625, 0.5
        %v5658 = vmul.f32 %v5626, 0.5
        %v5659 = vmul.f32 %v5627, 0.5
        %v5660 = vmul.f32 %v5628, 0.5
        %v5661 = vmul.f32 %v5629, 0.5
        %v5662 = vmul.f32 %v5630, 0.5
        %v5663 = vmul.f32 %v5631, 0.5
        %v5664 = vmul.f32 %v5632, 0.5
        %v5665 = vmul.f32 %v5633, 0.5
        %v5666 = vmul.f32 %v5634, 0.5
        %v5667 = vmul.f32 %v5635, 0.5
        %v5668 = vmul.f32 %v5636, 0.5
        %v5669 = vmul.f32 %v5637, 0.5
        %v5670 = vmul.f32 %v5638, 0.5
        %v5671 = vmul.f32 %v5639, 0.5
        %v5672 = vmul.f32 %v5640, 0.5
        %v5673 = vmul.f32 %v5641, 0.5
        %v5674 = vmul.f32 %v5642, 0.5
        %v5675 = vmul.f32 %v5643, 0.5
        %v5676 = vmul.f32 %v5644, 0.5
        %v5677 = vmul.f32 %v5645, 0.5
        %v5678 = vmul.f32 %v5646, 0.5
        %v5679 = vmul.f32 %v5647, 0.5
        %v5680 = vmul.f32 %v5648, 0.5
        %v5681 = vmul.f32 %v5649, 0.5
        %v5682 = vmul.f32 %v5650, 0.5
        %v5683 = vmul.f32 %v5651, 0.5
        %vm5684 = vcmp.lt.f32.partialorder %v628, 5.0
        %vm5685 = vcmp.lt.f32.partialorder %v629, 5.0
        %vm5686 = vcmp.lt.f32.partialorder %v630, 5.0
        %vm5687 = vcmp.lt.f32.partialorder %v631, 5.0
        %vm5688 = vcmp.lt.f32.partialorder %v632, 5.0
        %vm5689 = vcmp.lt.f32.partialorder %v633, 5.0
        %vm5690 = vcmp.lt.f32.partialorder %v634, 5.0
        %vm5691 = vcmp.lt.f32.partialorder %v635, 5.0
        %vm5692 = vcmp.lt.f32.partialorder %v636, 5.0
        %vm5693 = vcmp.lt.f32.partialorder %v637, 5.0
        %vm5694 = vcmp.lt.f32.partialorder %v638, 5.0
        %vm5695 = vcmp.lt.f32.partialorder %v639, 5.0
        %vm5696 = vcmp.lt.f32.partialorder %v640, 5.0
        %vm5697 = vcmp.lt.f32.partialorder %v641, 5.0
        %vm5698 = vcmp.lt.f32.partialorder %v642, 5.0
        %vm5699 = vcmp.lt.f32.partialorder %v643, 5.0
        %vm5700 = vcmp.lt.f32.partialorder %v644, 5.0
        %vm5701 = vcmp.lt.f32.partialorder %v645, 5.0
        %vm5702 = vcmp.lt.f32.partialorder %v646, 5.0
        %vm5703 = vcmp.lt.f32.partialorder %v647, 5.0
        %vm5704 = vcmp.lt.f32.partialorder %v648, 5.0
        %vm5705 = vcmp.lt.f32.partialorder %v649, 5.0
        %vm5706 = vcmp.lt.f32.partialorder %v650, 5.0
        %vm5707 = vcmp.lt.f32.partialorder %v651, 5.0
        %vm5708 = vcmp.lt.f32.partialorder %v652, 5.0
        %vm5709 = vcmp.lt.f32.partialorder %v653, 5.0
        %vm5710 = vcmp.lt.f32.partialorder %v654, 5.0
        %vm5711 = vcmp.lt.f32.partialorder %v655, 5.0
        %vm5712 = vcmp.lt.f32.partialorder %v656, 5.0
        %vm5713 = vcmp.lt.f32.partialorder %v657, 5.0
        %vm5714 = vcmp.lt.f32.partialorder %v658, 5.0
        %vm5715 = vcmp.lt.f32.partialorder %v659, 5.0
        %v5716 = vsel %vm5684, 1, 0
        %v5717 = vsel %vm5685, 1, 0
        %v5718 = vsel %vm5686, 1, 0
        %v5719 = vsel %vm5687, 1, 0
        %v5720 = vsel %vm5688, 1, 0
        %v5721 = vsel %vm5689, 1, 0
        %v5722 = vsel %vm5690, 1, 0
        %v5723 = vsel %vm5691, 1, 0
        %v5724 = vsel %vm5692, 1, 0
        %v5725 = vsel %vm5693, 1, 0
        %v5726 = vsel %vm5694, 1, 0
        %v5727 = vsel %vm5695, 1, 0
        %v5728 = vsel %vm5696, 1, 0
        %v5729 = vsel %vm5697, 1, 0
        %v5730 = vsel %vm5698, 1, 0
        %v5731 = vsel %vm5699, 1, 0
        %v5732 = vsel %vm5700, 1, 0
        %v5733 = vsel %vm5701, 1, 0
        %v5734 = vsel %vm5702, 1, 0
        %v5735 = vsel %vm5703, 1, 0
        %v5736 = vsel %vm5704, 1, 0
        %v5737 = vsel %vm5705, 1, 0
        %v5738 = vsel %vm5706, 1, 0
        %v5739 = vsel %vm5707, 1, 0
        %v5740 = vsel %vm5708, 1, 0
        %v5741 = vsel %vm5709, 1, 0
        %v5742 = vsel %vm5710, 1, 0
        %v5743 = vsel %vm5711, 1, 0
        %v5744 = vsel %vm5712, 1, 0
        %v5745 = vsel %vm5713, 1, 0
        %v5746 = vsel %vm5714, 1, 0
        %v5747 = vsel %vm5715, 1, 0
        %v5748 = vcvt.s32.f32 %v5716
        %v5749 = vcvt.s32.f32 %v5717
        %v5750 = vcvt.s32.f32 %v5718
        %v5751 = vcvt.s32.f32 %v5719
        %v5752 = vcvt.s32.f32 %v5720
        %v5753 = vcvt.s32.f32 %v5721
        %v5754 = vcvt.s32.f32 %v5722
        %v5755 = vcvt.s32.f32 %v5723
        %v5756 = vcvt.s32.f32 %v5724
        %v5757 = vcvt.s32.f32 %v5725
        %v5758 = vcvt.s32.f32 %v5726
        %v5759 = vcvt.s32.f32 %v5727
        %v5760 = vcvt.s32.f32 %v5728
        %v5761 = vcvt.s32.f32 %v5729
        %v5762 = vcvt.s32.f32 %v5730
        %v5763 = vcvt.s32.f32 %v5731
        %v5764 = vcvt.s32.f32 %v5732
        %v5765 = vcvt.s32.f32 %v5733
        %v5766 = vcvt.s32.f32 %v5734
        %v5767 = vcvt.s32.f32 %v5735
        %v5768 = vcvt.s32.f32 %v5736
        %v5769 = vcvt.s32.f32 %v5737
        %v5770 = vcvt.s32.f32 %v5738
        %v5771 = vcvt.s32.f32 %v5739
        %v5772 = vcvt.s32.f32 %v5740
        %v5773 = vcvt.s32.f32 %v5741
        %v5774 = vcvt.s32.f32 %v5742
        %v5775 = vcvt.s32.f32 %v5743
        %v5776 = vcvt.s32.f32 %v5744
        %v5777 = vcvt.s32.f32 %v5745
        %v5778 = vcvt.s32.f32 %v5746
        %v5779 = vcvt.s32.f32 %v5747
        %v5780 = vmul.f32 %v5652, %v5748
        %v5781 = vmul.f32 %v5653, %v5749
        %v5782 = vmul.f32 %v5654, %v5750
        %v5783 = vmul.f32 %v5655, %v5751
        %v5784 = vmul.f32 %v5656, %v5752
        %v5785 = vmul.f32 %v5657, %v5753
        %v5786 = vmul.f32 %v5658, %v5754
        %v5787 = vmul.f32 %v5659, %v5755
        %v5788 = vmul.f32 %v5660, %v5756
        %v5789 = vmul.f32 %v5661, %v5757
        %v5790 = vmul.f32 %v5662, %v5758
        %v5791 = vmul.f32 %v5663, %v5759
        %v5792 = vmul.f32 %v5664, %v5760
        %v5793 = vmul.f32 %v5665, %v5761
        %v5794 = vmul.f32 %v5666, %v5762
        %v5795 = vmul.f32 %v5667, %v5763
        %v5796 = vmul.f32 %v5668, %v5764
        %v5797 = vmul.f32 %v5669, %v5765
        %v5798 = vmul.f32 %v5670, %v5766
        %v5799 = vmul.f32 %v5671, %v5767
        %v5800 = vmul.f32 %v5672, %v5768
        %v5801 = vmul.f32 %v5673, %v5769
        %v5802 = vmul.f32 %v5674, %v5770
        %v5803 = vmul.f32 %v5675, %v5771
        %v5804 = vmul.f32 %v5676, %v5772
        %v5805 = vmul.f32 %v5677, %v5773
        %v5806 = vmul.f32 %v5678, %v5774
        %v5807 = vmul.f32 %v5679, %v5775
        %v5808 = vmul.f32 %v5680, %v5776
        %v5809 = vmul.f32 %v5681, %v5777
        %v5810 = vmul.f32 %v5682, %v5778
        %v5811 = vmul.f32 %v5683, %v5779
        %v5812 = vld [vmem:[%s6] sm:$0xff]
        %v5813 = vld [vmem:[%s6 + $0x8] sm:$0xff]
        %v5814 = vld [vmem:[%s7] sm:$0x1]
        %v5816 = vperm.slane %v5814, 0
        %5850 = vrot.lane.b32.xlu0 %v628, 124
        %v5851 = vpop.permute.xlu0 %5850
        %5852 = vrot.lane.b32.xlu0 %v629, 124
        %v5853 = vpop.permute.xlu0 %5852
        %5854 = vrot.lane.b32.xlu0 %v630, 124
        %v5855 = vpop.permute.xlu0 %5854
        %5856 = vrot.lane.b32.xlu0 %v631, 124
        %v5857 = vpop.permute.xlu0 %5856
        %5858 = vrot.lane.b32.xlu0 %v632, 124
        %v5859 = vpop.permute.xlu0 %5858
        %5860 = vrot.lane.b32.xlu0 %v633, 124
        %v5861 = vpop.permute.xlu0 %5860
        %5862 = vrot.lane.b32.xlu0 %v634, 124
        %v5863 = vpop.permute.xlu0 %5862
        %5864 = vrot.lane.b32.xlu0 %v635, 124
        %v5865 = vpop.permute.xlu0 %5864
        %5866 = vrot.lane.b32.xlu0 %v636, 124
        %v5867 = vpop.permute.xlu0 %5866
        %5868 = vrot.lane.b32.xlu0 %v637, 124
        %v5869 = vpop.permute.xlu0 %5868
        %5870 = vrot.lane.b32.xlu0 %v638, 124
        %v5871 = vpop.permute.xlu0 %5870
        %5872 = vrot.lane.b32.xlu0 %v639, 124
        %v5873 = vpop.permute.xlu0 %5872
        %5874 = vrot.lane.b32.xlu0 %v640, 124
        %v5875 = vpop.permute.xlu0 %5874
        %5876 = vrot.lane.b32.xlu0 %v641, 124
        %v5877 = vpop.permute.xlu0 %5876
        %5878 = vrot.lane.b32.xlu0 %v642, 124
        %v5879 = vpop.permute.xlu0 %5878
        %5880 = vrot.lane.b32.xlu0 %v643, 124
        %v5881 = vpop.permute.xlu0 %5880
        %5882 = vrot.lane.b32.xlu0 %v644, 124
        %v5883 = vpop.permute.xlu0 %5882
        %5884 = vrot.lane.b32.xlu0 %v645, 124
        %v5885 = vpop.permute.xlu0 %5884
        %5886 = vrot.lane.b32.xlu0 %v646, 124
        %v5887 = vpop.permute.xlu0 %5886
        %5888 = vrot.lane.b32.xlu0 %v647, 124
        %v5889 = vpop.permute.xlu0 %5888
        %5890 = vrot.lane.b32.xlu0 %v648, 124
        %v5891 = vpop.permute.xlu0 %5890
        %5892 = vrot.lane.b32.xlu0 %v649, 124
        %v5893 = vpop.permute.xlu0 %5892
        %5894 = vrot.lane.b32.xlu0 %v650, 124
        %v5895 = vpop.permute.xlu0 %5894
        %5896 = vrot.lane.b32.xlu0 %v651, 124
        %v5897 = vpop.permute.xlu0 %5896
        %5898 = vrot.lane.b32.xlu0 %v652, 124
        %v5899 = vpop.permute.xlu0 %5898
        %5900 = vrot.lane.b32.xlu0 %v653, 124
        %v5901 = vpop.permute.xlu0 %5900
        %5902 = vrot.lane.b32.xlu0 %v654, 124
        %v5903 = vpop.permute.xlu0 %5902
        %5904 = vrot.lane.b32.xlu0 %v655, 124
        %v5905 = vpop.permute.xlu0 %5904
        %5906 = vrot.lane.b32.xlu0 %v656, 124
        %v5907 = vpop.permute.xlu0 %5906
        %5908 = vrot.lane.b32.xlu0 %v657, 124
        %v5909 = vpop.permute.xlu0 %5908
        %5910 = vrot.lane.b32.xlu0 %v658, 124
        %v5911 = vpop.permute.xlu0 %5910
        %5912 = vrot.lane.b32.xlu0 %v659, 124
        %v5913 = vpop.permute.xlu0 %5912
        %vm5914 = vcmask 130048
        %v5915 = vsel %vm5914, %v5851, 0
        %v5917 = vsel %vm5914, %v5853, 0
        %v5919 = vsel %vm5914, %v5855, 0
        %v5921 = vsel %vm5914, %v5857, 0
        %v5923 = vsel %vm5914, %v5859, 0
        %v5925 = vsel %vm5914, %v5861, 0
        %v5927 = vsel %vm5914, %v5863, 0
        %v5929 = vsel %vm5914, %v5865, 0
        %v5931 = vsel %vm5914, %v5867, 0
        %v5933 = vsel %vm5914, %v5869, 0
        %v5935 = vsel %vm5914, %v5871, 0
        %v5937 = vsel %vm5914, %v5873, 0
        %v5939 = vsel %vm5914, %v5875, 0
        %v5941 = vsel %vm5914, %v5877, 0
        %v5943 = vsel %vm5914, %v5879, 0
        %v5945 = vsel %vm5914, %v5881, 0
        %v5947 = vsel %vm5914, %v5883, 0
        %v5949 = vsel %vm5914, %v5885, 0
        %v5951 = vsel %vm5914, %v5887, 0
        %v5953 = vsel %vm5914, %v5889, 0
        %v5955 = vsel %vm5914, %v5891, 0
        %v5957 = vsel %vm5914, %v5893, 0
        %v5959 = vsel %vm5914, %v5895, 0
        %v5961 = vsel %vm5914, %v5897, 0
        %v5963 = vsel %vm5914, %v5899, 0
        %v5965 = vsel %vm5914, %v5901, 0
        %v5967 = vsel %vm5914, %v5903, 0
        %v5969 = vsel %vm5914, %v5905, 0
        %v5971 = vsel %vm5914, %v5907, 0
        %v5973 = vsel %vm5914, %v5909, 0
        %v5975 = vsel %vm5914, %v5911, 0
        %v5977 = vsel %vm5914, %v5913, 0
        %5979 = vmatpush.msra.mxu0 0.0
        %5980 = vmatpush.msra.mxu0 0.0
        %5981 = vmatpush.msra.mxu0 0.0
        %5982 = vmatpush.msra.mxu0 0.0
        %5983 = vmatpush.msra.mxu0 0.0
        %5984 = vmatpush.msra.mxu0 0.0
        %5985 = vmatpush.msra.mxu0 0.0
        %5986 = vmatpush.msra.mxu0 0.0
        %5987 = vmatpush.msra.mxu0 0.0
        %5988 = vmatpush.msra.mxu0 0.0
        %5989 = vmatpush.msra.mxu0 0.0
        %5990 = vmatpush.msra.mxu0 0.0
        %5991 = vmatpush.msra.mxu0 0.0
        %5992 = vmatpush.msra.mxu0 0.0
        %5993 = vmatpush.msra.mxu0 %v5813
        %5994 = vmatpush.msra.mxu0 %v5812
        %5995 = vmatmul.f32.gmra.mxu0 %v5915
        %v5996 = vpop.f32.mrf.mxu0
        %v5997 = vadd.f32 %v5816, %v5996
        %5998 = vmatmul.f32.gmra.mxu0 %v5917
        %v5999 = vpop.f32.mrf.mxu0
        %v6000 = vadd.f32 %v5816, %v5999
        %6001 = vmatmul.f32.gmra.mxu0 %v5919
        %v6002 = vpop.f32.mrf.mxu0
        %v6003 = vadd.f32 %v5816, %v6002
        %6004 = vmatmul.f32.gmra.mxu0 %v5921
        %v6005 = vpop.f32.mrf.mxu0
        %v6006 = vadd.f32 %v5816, %v6005
        %6007 = vmatmul.f32.gmra.mxu0 %v5923
        %v6008 = vpop.f32.mrf.mxu0
        %v6009 = vadd.f32 %v5816, %v6008
        %6010 = vmatmul.f32.gmra.mxu0 %v5925
        %v6011 = vpop.f32.mrf.mxu0
        %v6012 = vadd.f32 %v5816, %v6011
        %6013 = vmatmul.f32.gmra.mxu0 %v5927
        %v6014 = vpop.f32.mrf.mxu0
        %v6015 = vadd.f32 %v5816, %v6014
        %6016 = vmatmul.f32.gmra.mxu0 %v5929
        %v6017 = vpop.f32.mrf.mxu0
        %v6018 = vadd.f32 %v5816, %v6017
        %6019 = vmatmul.f32.gmra.mxu0 %v5931
        %v6020 = vpop.f32.mrf.mxu0
        %v6021 = vadd.f32 %v5816, %v6020
        %6022 = vmatmul.f32.gmra.mxu0 %v5933
        %v6023 = vpop.f32.mrf.mxu0
        %v6024 = vadd.f32 %v5816, %v6023
        %6025 = vmatmul.f32.gmra.mxu0 %v5935
        %v6026 = vpop.f32.mrf.mxu0
        %v6027 = vadd.f32 %v5816, %v6026
        %6028 = vmatmul.f32.gmra.mxu0 %v5937
        %v6029 = vpop.f32.mrf.mxu0
        %v6030 = vadd.f32 %v5816, %v6029
        %6031 = vmatmul.f32.gmra.mxu0 %v5939
        %v6032 = vpop.f32.mrf.mxu0
        %v6033 = vadd.f32 %v5816, %v6032
        %6034 = vmatmul.f32.gmra.mxu0 %v5941
        %v6035 = vpop.f32.mrf.mxu0
        %v6036 = vadd.f32 %v5816, %v6035
        %6037 = vmatmul.f32.gmra.mxu0 %v5943
        %v6038 = vpop.f32.mrf.mxu0
        %v6039 = vadd.f32 %v5816, %v6038
        %6040 = vmatmul.f32.gmra.mxu0 %v5945
        %v6041 = vpop.f32.mrf.mxu0
        %v6042 = vadd.f32 %v5816, %v6041
        %6043 = vmatmul.f32.gmra.mxu0 %v5947
        %v6044 = vpop.f32.mrf.mxu0
        %v6045 = vadd.f32 %v5816, %v6044
        %6046 = vmatmul.f32.gmra.mxu0 %v5949
        %v6047 = vpop.f32.mrf.mxu0
        %v6048 = vadd.f32 %v5816, %v6047
        %6049 = vmatmul.f32.gmra.mxu0 %v5951
        %v6050 = vpop.f32.mrf.mxu0
        %v6051 = vadd.f32 %v5816, %v6050
        %6052 = vmatmul.f32.gmra.mxu0 %v5953
        %v6053 = vpop.f32.mrf.mxu0
        %v6054 = vadd.f32 %v5816, %v6053
        %6055 = vmatmul.f32.gmra.mxu0 %v5955
        %v6056 = vpop.f32.mrf.mxu0
        %v6057 = vadd.f32 %v5816, %v6056
        %6058 = vmatmul.f32.gmra.mxu0 %v5957
        %v6059 = vpop.f32.mrf.mxu0
        %v6060 = vadd.f32 %v5816, %v6059
        %6061 = vmatmul.f32.gmra.mxu0 %v5959
        %v6062 = vpop.f32.mrf.mxu0
        %v6063 = vadd.f32 %v5816, %v6062
        %6064 = vmatmul.f32.gmra.mxu0 %v5961
        %v6065 = vpop.f32.mrf.mxu0
        %v6066 = vadd.f32 %v5816, %v6065
        %6067 = vmatmul.f32.gmra.mxu0 %v5963
        %v6068 = vpop.f32.mrf.mxu0
        %v6069 = vadd.f32 %v5816, %v6068
        %6070 = vmatmul.f32.gmra.mxu0 %v5965
        %v6071 = vpop.f32.mrf.mxu0
        %v6072 = vadd.f32 %v5816, %v6071
        %6073 = vmatmul.f32.gmra.mxu0 %v5967
        %v6074 = vpop.f32.mrf.mxu0
        %v6075 = vadd.f32 %v5816, %v6074
        %6076 = vmatmul.f32.gmra.mxu0 %v5969
        %v6077 = vpop.f32.mrf.mxu0
        %v6078 = vadd.f32 %v5816, %v6077
        %6079 = vmatmul.f32.gmra.mxu0 %v5971
        %v6080 = vpop.f32.mrf.mxu0
        %v6081 = vadd.f32 %v5816, %v6080
        %6082 = vmatmul.f32.gmra.mxu0 %v5973
        %v6083 = vpop.f32.mrf.mxu0
        %v6084 = vadd.f32 %v5816, %v6083
        %6085 = vmatmul.f32.gmra.mxu0 %v5975
        %v6086 = vpop.f32.mrf.mxu0
        %v6087 = vadd.f32 %v5816, %v6086
        %6088 = vmatmul.f32.gmra.mxu0 %v5977
        %v6089 = vpop.f32.mrf.mxu0
        %v6090 = vadd.f32 %v5816, %v6089
        %6091 = vdwg.mxu0
        %6093 = vset.pattern.permute.xlu0 0
        %6094 = vperm.xlu0 %6093, %v5780
        %v6095 = vpop.permute.xlu0 %6094
        %6098 = vset.pattern.permute.xlu0 0
        %6099 = vperm.xlu0 %6098, %v5781
        %v6100 = vpop.permute.xlu0 %6099
        %6103 = vset.pattern.permute.xlu0 0
        %6104 = vperm.xlu0 %6103, %v5782
        %v6105 = vpop.permute.xlu0 %6104
        %6108 = vset.pattern.permute.xlu0 0
        %6109 = vperm.xlu0 %6108, %v5783
        %v6110 = vpop.permute.xlu0 %6109
        %6113 = vset.pattern.permute.xlu0 0
        %6114 = vperm.xlu0 %6113, %v5784
        %v6115 = vpop.permute.xlu0 %6114
        %6118 = vset.pattern.permute.xlu0 0
        %6119 = vperm.xlu0 %6118, %v5785
        %v6120 = vpop.permute.xlu0 %6119
        %6123 = vset.pattern.permute.xlu0 0
        %6124 = vperm.xlu0 %6123, %v5786
        %v6125 = vpop.permute.xlu0 %6124
        %6128 = vset.pattern.permute.xlu0 0
        %6129 = vperm.xlu0 %6128, %v5787
        %v6130 = vpop.permute.xlu0 %6129
        %6133 = vset.pattern.permute.xlu0 0
        %6134 = vperm.xlu0 %6133, %v5788
        %v6135 = vpop.permute.xlu0 %6134
        %6138 = vset.pattern.permute.xlu0 0
        %6139 = vperm.xlu0 %6138, %v5789
        %v6140 = vpop.permute.xlu0 %6139
        %6143 = vset.pattern.permute.xlu0 0
        %6144 = vperm.xlu0 %6143, %v5790
        %v6145 = vpop.permute.xlu0 %6144
        %6148 = vset.pattern.permute.xlu0 0
        %6149 = vperm.xlu0 %6148, %v5791
        %v6150 = vpop.permute.xlu0 %6149
        %6153 = vset.pattern.permute.xlu0 0
        %6154 = vperm.xlu0 %6153, %v5792
        %v6155 = vpop.permute.xlu0 %6154
        %6158 = vset.pattern.permute.xlu0 0
        %6159 = vperm.xlu0 %6158, %v5793
        %v6160 = vpop.permute.xlu0 %6159
        %6163 = vset.pattern.permute.xlu0 0
        %6164 = vperm.xlu0 %6163, %v5794
        %v6165 = vpop.permute.xlu0 %6164
        %6168 = vset.pattern.permute.xlu0 0
        %6169 = vperm.xlu0 %6168, %v5795
        %v6170 = vpop.permute.xlu0 %6169
        %6173 = vset.pattern.permute.xlu0 0
        %6174 = vperm.xlu0 %6173, %v5796
        %v6175 = vpop.permute.xlu0 %6174
        %6178 = vset.pattern.permute.xlu0 0
        %6179 = vperm.xlu0 %6178, %v5797
        %v6180 = vpop.permute.xlu0 %6179
        %6183 = vset.pattern.permute.xlu0 0
        %6184 = vperm.xlu0 %6183, %v5798
        %v6185 = vpop.permute.xlu0 %6184
        %6188 = vset.pattern.permute.xlu0 0
        %6189 = vperm.xlu0 %6188, %v5799
        %v6190 = vpop.permute.xlu0 %6189
        %6193 = vset.pattern.permute.xlu0 0
        %6194 = vperm.xlu0 %6193, %v5800
        %v6195 = vpop.permute.xlu0 %6194
        %6198 = vset.pattern.permute.xlu0 0
        %6199 = vperm.xlu0 %6198, %v5801
        %v6200 = vpop.permute.xlu0 %6199
        %6203 = vset.pattern.permute.xlu0 0
        %6204 = vperm.xlu0 %6203, %v5802
        %v6205 = vpop.permute.xlu0 %6204
        %6208 = vset.pattern.permute.xlu0 0
        %6209 = vperm.xlu0 %6208, %v5803
        %v6210 = vpop.permute.xlu0 %6209
        %6213 = vset.pattern.permute.xlu0 0
        %6214 = vperm.xlu0 %6213, %v5804
        %v6215 = vpop.permute.xlu0 %6214
        %6218 = vset.pattern.permute.xlu0 0
        %6219 = vperm.xlu0 %6218, %v5805
        %v6220 = vpop.permute.xlu0 %6219
        %6223 = vset.pattern.permute.xlu0 0
        %6224 = vperm.xlu0 %6223, %v5806
        %v6225 = vpop.permute.xlu0 %6224
        %6228 = vset.pattern.permute.xlu0 0
        %6229 = vperm.xlu0 %6228, %v5807
        %v6230 = vpop.permute.xlu0 %6229
        %6233 = vset.pattern.permute.xlu0 0
        %6234 = vperm.xlu0 %6233, %v5808
        %v6235 = vpop.permute.xlu0 %6234
        %6238 = vset.pattern.permute.xlu0 0
        %6239 = vperm.xlu0 %6238, %v5809
        %v6240 = vpop.permute.xlu0 %6239
        %6243 = vset.pattern.permute.xlu0 0
        %6244 = vperm.xlu0 %6243, %v5810
        %v6245 = vpop.permute.xlu0 %6244
        %6248 = vset.pattern.permute.xlu0 0
        %6249 = vperm.xlu0 %6248, %v5811
        %v6250 = vpop.permute.xlu0 %6249
        %v6252 = vmul.f32 %v5997, %v6095
        %v6253 = vmul.f32 %v6000, %v6100
        %v6254 = vmul.f32 %v6003, %v6105
        %v6255 = vmul.f32 %v6006, %v6110
        %v6256 = vmul.f32 %v6009, %v6115
        %v6257 = vmul.f32 %v6012, %v6120
        %v6258 = vmul.f32 %v6015, %v6125
        %v6259 = vmul.f32 %v6018, %v6130
        %v6260 = vmul.f32 %v6021, %v6135
        %v6261 = vmul.f32 %v6024, %v6140
        %v6262 = vmul.f32 %v6027, %v6145
        %v6263 = vmul.f32 %v6030, %v6150
        %v6264 = vmul.f32 %v6033, %v6155
        %v6265 = vmul.f32 %v6036, %v6160
        %v6266 = vmul.f32 %v6039, %v6165
        %v6267 = vmul.f32 %v6042, %v6170
        %v6268 = vmul.f32 %v6045, %v6175
        %v6269 = vmul.f32 %v6048, %v6180
        %v6270 = vmul.f32 %v6051, %v6185
        %v6271 = vmul.f32 %v6054, %v6190
        %v6272 = vmul.f32 %v6057, %v6195
        %v6273 = vmul.f32 %v6060, %v6200
        %v6274 = vmul.f32 %v6063, %v6205
        %v6275 = vmul.f32 %v6066, %v6210
        %v6276 = vmul.f32 %v6069, %v6215
        %v6277 = vmul.f32 %v6072, %v6220
        %v6278 = vmul.f32 %v6075, %v6225
        %v6279 = vmul.f32 %v6078, %v6230
        %v6280 = vmul.f32 %v6081, %v6235
        %v6281 = vmul.f32 %v6084, %v6240
        %v6282 = vmul.f32 %v6087, %v6245
        %v6283 = vmul.f32 %v6090, %v6250
        %v6284 = vlaneseq
        %v6285 = vand.u32 %v6284, 127
        %v6286 = vld [vmem:[%s513] sm:$0xff]
        %v6287 = vld [vmem:[%s513 + $0x8] sm:$0xff]
        %v6288 = vld [vmem:[%s513 + $0x10] sm:$0xff]
        %v6289 = vld [vmem:[%s513 + $0x18] sm:$0xff]
        %v6290 = vld [vmem:[%s513 + $0x20] sm:$0xff]
        %v6291 = vld [vmem:[%s513 + $0x28] sm:$0xff]
        %v6292 = vld [vmem:[%s513 + $0x30] sm:$0xff]
        %v6293 = vld [vmem:[%s513 + $0x38] sm:$0xff]
        %v6294 = vld [vmem:[%s513 + $0x40] sm:$0xff]
        %v6295 = vld [vmem:[%s513 + $0x48] sm:$0xff]
        %v6296 = vld [vmem:[%s513 + $0x50] sm:$0xff]
        %v6297 = vld [vmem:[%s513 + $0x58] sm:$0xff]
        %v6298 = vld [vmem:[%s513 + $0x60] sm:$0xff]
        %v6299 = vld [vmem:[%s513 + $0x68] sm:$0xff]
        %v6300 = vld [vmem:[%s513 + $0x70] sm:$0xff]
        %v6301 = vld [vmem:[%s513 + $0x78] sm:$0xff]
        %v6302 = vld [vmem:[%s513 + $0x80] sm:$0xff]
        %v6303 = vld [vmem:[%s513 + $0x88] sm:$0xff]
        %v6304 = vld [vmem:[%s513 + $0x90] sm:$0xff]
        %v6305 = vld [vmem:[%s513 + $0x98] sm:$0xff]
        %v6306 = vld [vmem:[%s513 + $0xa0] sm:$0xff]
        %v6307 = vld [vmem:[%s513 + $0xa8] sm:$0xff]
        %v6308 = vld [vmem:[%s513 + $0xb0] sm:$0xff]
        %v6309 = vld [vmem:[%s513 + $0xb8] sm:$0xff]
        %v6310 = vld [vmem:[%s513 + $0xc0] sm:$0xff]
        %v6311 = vld [vmem:[%s513 + $0xc8] sm:$0xff]
        %v6312 = vld [vmem:[%s513 + $0xd0] sm:$0xff]
        %v6313 = vld [vmem:[%s513 + $0xd8] sm:$0xff]
        %v6314 = vld [vmem:[%s513 + $0xe0] sm:$0xff]
        %v6315 = vld [vmem:[%s513 + $0xe8] sm:$0xff]
        %v6316 = vld [vmem:[%s513 + $0xf0] sm:$0xff]
        %v6317 = vld [vmem:[%s513 + $0xf8] sm:$0xff]
        %6318 = vset.pattern.permute.xlu0 0
        %6319 = vperm.xlu0 %6318, %v6286
        %v6320 = vpop.permute.xlu0 %6319
        %6321 = vset.pattern.permute.xlu0 0
        %6322 = vperm.xlu0 %6321, %v6287
        %v6323 = vpop.permute.xlu0 %6322
        %6324 = vset.pattern.permute.xlu0 0
        %6325 = vperm.xlu0 %6324, %v6288
        %v6326 = vpop.permute.xlu0 %6325
        %6327 = vset.pattern.permute.xlu0 0
        %6328 = vperm.xlu0 %6327, %v6289
        %v6329 = vpop.permute.xlu0 %6328
        %6330 = vset.pattern.permute.xlu0 0
        %6331 = vperm.xlu0 %6330, %v6290
        %v6332 = vpop.permute.xlu0 %6331
        %6333 = vset.pattern.permute.xlu0 0
        %6334 = vperm.xlu0 %6333, %v6291
        %v6335 = vpop.permute.xlu0 %6334
        %6336 = vset.pattern.permute.xlu0 0
        %6337 = vperm.xlu0 %6336, %v6292
        %v6338 = vpop.permute.xlu0 %6337
        %6339 = vset.pattern.permute.xlu0 0
        %6340 = vperm.xlu0 %6339, %v6293
        %v6341 = vpop.permute.xlu0 %6340
        %6342 = vset.pattern.permute.xlu0 0
        %6343 = vperm.xlu0 %6342, %v6294
        %v6344 = vpop.permute.xlu0 %6343
        %6345 = vset.pattern.permute.xlu0 0
        %6346 = vperm.xlu0 %6345, %v6295
        %v6347 = vpop.permute.xlu0 %6346
        %6348 = vset.pattern.permute.xlu0 0
        %6349 = vperm.xlu0 %6348, %v6296
        %v6350 = vpop.permute.xlu0 %6349
        %6351 = vset.pattern.permute.xlu0 0
        %6352 = vperm.xlu0 %6351, %v6297
        %v6353 = vpop.permute.xlu0 %6352
        %6354 = vset.pattern.permute.xlu0 0
        %6355 = vperm.xlu0 %6354, %v6298
        %v6356 = vpop.permute.xlu0 %6355
        %6357 = vset.pattern.permute.xlu0 0
        %6358 = vperm.xlu0 %6357, %v6299
        %v6359 = vpop.permute.xlu0 %6358
        %6360 = vset.pattern.permute.xlu0 0
        %6361 = vperm.xlu0 %6360, %v6300
        %v6362 = vpop.permute.xlu0 %6361
        %6363 = vset.pattern.permute.xlu0 0
        %6364 = vperm.xlu0 %6363, %v6301
        %v6365 = vpop.permute.xlu0 %6364
        %6366 = vset.pattern.permute.xlu0 0
        %6367 = vperm.xlu0 %6366, %v6302
        %v6368 = vpop.permute.xlu0 %6367
        %6369 = vset.pattern.permute.xlu0 0
        %6370 = vperm.xlu0 %6369, %v6303
        %v6371 = vpop.permute.xlu0 %6370
        %6372 = vset.pattern.permute.xlu0 0
        %6373 = vperm.xlu0 %6372, %v6304
        %v6374 = vpop.permute.xlu0 %6373
        %6375 = vset.pattern.permute.xlu0 0
        %6376 = vperm.xlu0 %6375, %v6305
        %v6377 = vpop.permute.xlu0 %6376
        %6378 = vset.pattern.permute.xlu0 0
        %6379 = vperm.xlu0 %6378, %v6306
        %v6380 = vpop.permute.xlu0 %6379
        %6381 = vset.pattern.permute.xlu0 0
        %6382 = vperm.xlu0 %6381, %v6307
        %v6383 = vpop.permute.xlu0 %6382
        %6384 = vset.pattern.permute.xlu0 0
        %6385 = vperm.xlu0 %6384, %v6308
        %v6386 = vpop.permute.xlu0 %6385
        %6387 = vset.pattern.permute.xlu0 0
        %6388 = vperm.xlu0 %6387, %v6309
        %v6389 = vpop.permute.xlu0 %6388
        %6390 = vset.pattern.permute.xlu0 0
        %6391 = vperm.xlu0 %6390, %v6310
        %v6392 = vpop.permute.xlu0 %6391
        %6393 = vset.pattern.permute.xlu0 0
        %6394 = vperm.xlu0 %6393, %v6311
        %v6395 = vpop.permute.xlu0 %6394
        %6396 = vset.pattern.permute.xlu0 0
        %6397 = vperm.xlu0 %6396, %v6312
        %v6398 = vpop.permute.xlu0 %6397
        %6399 = vset.pattern.permute.xlu0 0
        %6400 = vperm.xlu0 %6399, %v6313
        %v6401 = vpop.permute.xlu0 %6400
        %6402 = vset.pattern.permute.xlu0 0
        %6403 = vperm.xlu0 %6402, %v6314
        %v6404 = vpop.permute.xlu0 %6403
        %6405 = vset.pattern.permute.xlu0 0
        %6406 = vperm.xlu0 %6405, %v6315
        %v6407 = vpop.permute.xlu0 %6406
        %6408 = vset.pattern.permute.xlu0 0
        %6409 = vperm.xlu0 %6408, %v6316
        %v6410 = vpop.permute.xlu0 %6409
        %6411 = vset.pattern.permute.xlu0 0
        %6412 = vperm.xlu0 %6411, %v6317
        %v6413 = vpop.permute.xlu0 %6412
        %vm6414 = vcmp.eq.s32.totalorder %v6285, %v6320
        %vm6415 = vcmp.eq.s32.totalorder %v6285, %v6323
        %vm6416 = vcmp.eq.s32.totalorder %v6285, %v6326
        %vm6417 = vcmp.eq.s32.totalorder %v6285, %v6329
        %vm6418 = vcmp.eq.s32.totalorder %v6285, %v6332
        %vm6419 = vcmp.eq.s32.totalorder %v6285, %v6335
        %vm6420 = vcmp.eq.s32.totalorder %v6285, %v6338
        %vm6421 = vcmp.eq.s32.totalorder %v6285, %v6341
        %vm6422 = vcmp.eq.s32.totalorder %v6285, %v6344
        %vm6423 = vcmp.eq.s32.totalorder %v6285, %v6347
        %vm6424 = vcmp.eq.s32.totalorder %v6285, %v6350
        %vm6425 = vcmp.eq.s32.totalorder %v6285, %v6353
        %vm6426 = vcmp.eq.s32.totalorder %v6285, %v6356
        %vm6427 = vcmp.eq.s32.totalorder %v6285, %v6359
        %vm6428 = vcmp.eq.s32.totalorder %v6285, %v6362
        %vm6429 = vcmp.eq.s32.totalorder %v6285, %v6365
        %vm6430 = vcmp.eq.s32.totalorder %v6285, %v6368
        %vm6431 = vcmp.eq.s32.totalorder %v6285, %v6371
        %vm6432 = vcmp.eq.s32.totalorder %v6285, %v6374
        %vm6433 = vcmp.eq.s32.totalorder %v6285, %v6377
        %vm6434 = vcmp.eq.s32.totalorder %v6285, %v6380
        %vm6435 = vcmp.eq.s32.totalorder %v6285, %v6383
        %vm6436 = vcmp.eq.s32.totalorder %v6285, %v6386
        %vm6437 = vcmp.eq.s32.totalorder %v6285, %v6389
        %vm6438 = vcmp.eq.s32.totalorder %v6285, %v6392
        %vm6439 = vcmp.eq.s32.totalorder %v6285, %v6395
        %vm6440 = vcmp.eq.s32.totalorder %v6285, %v6398
        %vm6441 = vcmp.eq.s32.totalorder %v6285, %v6401
        %vm6442 = vcmp.eq.s32.totalorder %v6285, %v6404
        %vm6443 = vcmp.eq.s32.totalorder %v6285, %v6407
        %vm6444 = vcmp.eq.s32.totalorder %v6285, %v6410
        %vm6445 = vcmp.eq.s32.totalorder %v6285, %v6413
        %v6446 = vsel %vm6414, 1, 0
        %v6447 = vsel %vm6415, 1, 0
        %v6448 = vsel %vm6416, 1, 0
        %v6449 = vsel %vm6417, 1, 0
        %v6450 = vsel %vm6418, 1, 0
        %v6451 = vsel %vm6419, 1, 0
        %v6452 = vsel %vm6420, 1, 0
        %v6453 = vsel %vm6421, 1, 0
        %v6454 = vsel %vm6422, 1, 0
        %v6455 = vsel %vm6423, 1, 0
        %v6456 = vsel %vm6424, 1, 0
        %v6457 = vsel %vm6425, 1, 0
        %v6458 = vsel %vm6426, 1, 0
        %v6459 = vsel %vm6427, 1, 0
        %v6460 = vsel %vm6428, 1, 0
        %v6461 = vsel %vm6429, 1, 0
        %v6462 = vsel %vm6430, 1, 0
        %v6463 = vsel %vm6431, 1, 0
        %v6464 = vsel %vm6432, 1, 0
        %v6465 = vsel %vm6433, 1, 0
        %v6466 = vsel %vm6434, 1, 0
        %v6467 = vsel %vm6435, 1, 0
        %v6468 = vsel %vm6436, 1, 0
        %v6469 = vsel %vm6437, 1, 0
        %v6470 = vsel %vm6438, 1, 0
        %v6471 = vsel %vm6439, 1, 0
        %v6472 = vsel %vm6440, 1, 0
        %v6473 = vsel %vm6441, 1, 0
        %v6474 = vsel %vm6442, 1, 0
        %v6475 = vsel %vm6443, 1, 0
        %v6476 = vsel %vm6444, 1, 0
        %v6477 = vsel %vm6445, 1, 0
        %v6478 = vcvt.s32.f32 %v6446
        %v6479 = vcvt.s32.f32 %v6447
        %v6480 = vcvt.s32.f32 %v6448
        %v6481 = vcvt.s32.f32 %v6449
        %v6482 = vcvt.s32.f32 %v6450
        %v6483 = vcvt.s32.f32 %v6451
        %v6484 = vcvt.s32.f32 %v6452
        %v6485 = vcvt.s32.f32 %v6453
        %v6486 = vcvt.s32.f32 %v6454
        %v6487 = vcvt.s32.f32 %v6455
        %v6488 = vcvt.s32.f32 %v6456
        %v6489 = vcvt.s32.f32 %v6457
        %v6490 = vcvt.s32.f32 %v6458
        %v6491 = vcvt.s32.f32 %v6459
        %v6492 = vcvt.s32.f32 %v6460
        %v6493 = vcvt.s32.f32 %v6461
        %v6494 = vcvt.s32.f32 %v6462
        %v6495 = vcvt.s32.f32 %v6463
        %v6496 = vcvt.s32.f32 %v6464
        %v6497 = vcvt.s32.f32 %v6465
        %v6498 = vcvt.s32.f32 %v6466
        %v6499 = vcvt.s32.f32 %v6467
        %v6500 = vcvt.s32.f32 %v6468
        %v6501 = vcvt.s32.f32 %v6469
        %v6502 = vcvt.s32.f32 %v6470
        %v6503 = vcvt.s32.f32 %v6471
        %v6504 = vcvt.s32.f32 %v6472
        %v6505 = vcvt.s32.f32 %v6473
        %v6506 = vcvt.s32.f32 %v6474
        %v6507 = vcvt.s32.f32 %v6475
        %v6508 = vcvt.s32.f32 %v6476
        %v6509 = vcvt.s32.f32 %v6477
        %v6510 = vpack.c.bf16 %v6479, %v6478
        %v6511 = vpack.c.bf16 %v6481, %v6480
        %v6512 = vpack.c.bf16 %v6483, %v6482
        %v6513 = vpack.c.bf16 %v6485, %v6484
        %v6514 = vpack.c.bf16 %v6487, %v6486
        %v6515 = vpack.c.bf16 %v6489, %v6488
        %v6516 = vpack.c.bf16 %v6491, %v6490
        %v6517 = vpack.c.bf16 %v6493, %v6492
        %v6518 = vpack.c.bf16 %v6495, %v6494
        %v6519 = vpack.c.bf16 %v6497, %v6496
        %v6520 = vpack.c.bf16 %v6499, %v6498
        %v6521 = vpack.c.bf16 %v6501, %v6500
        %v6522 = vpack.c.bf16 %v6503, %v6502
        %v6523 = vpack.c.bf16 %v6505, %v6504
        %v6524 = vpack.c.bf16 %v6507, %v6506
        %v6525 = vpack.c.bf16 %v6509, %v6508
        %6526 = vset.pattern.permute.xlu0 1
        %6527 = vperm.xlu0 %6526, %v6286
        %v6528 = vpop.permute.xlu0 %6527
        %6529 = vset.pattern.permute.xlu0 1
        %6530 = vperm.xlu0 %6529, %v6287
        %v6531 = vpop.permute.xlu0 %6530
        %6532 = vset.pattern.permute.xlu0 1
        %6533 = vperm.xlu0 %6532, %v6288
        %v6534 = vpop.permute.xlu0 %6533
        %6535 = vset.pattern.permute.xlu0 1
        %6536 = vperm.xlu0 %6535, %v6289
        %v6537 = vpop.permute.xlu0 %6536
        %6538 = vset.pattern.permute.xlu0 1
        %6539 = vperm.xlu0 %6538, %v6290
        %v6540 = vpop.permute.xlu0 %6539
        %6541 = vset.pattern.permute.xlu0 1
        %6542 = vperm.xlu0 %6541, %v6291
        %v6543 = vpop.permute.xlu0 %6542
        %6544 = vset.pattern.permute.xlu0 1
        %6545 = vperm.xlu0 %6544, %v6292
        %v6546 = vpop.permute.xlu0 %6545
        %6547 = vset.pattern.permute.xlu0 1
        %6548 = vperm.xlu0 %6547, %v6293
        %v6549 = vpop.permute.xlu0 %6548
        %6550 = vset.pattern.permute.xlu0 1
        %6551 = vperm.xlu0 %6550, %v6294
        %v6552 = vpop.permute.xlu0 %6551
        %6553 = vset.pattern.permute.xlu0 1
        %6554 = vperm.xlu0 %6553, %v6295
        %v6555 = vpop.permute.xlu0 %6554
        %6556 = vset.pattern.permute.xlu0 1
        %6557 = vperm.xlu0 %6556, %v6296
        %v6558 = vpop.permute.xlu0 %6557
        %6559 = vset.pattern.permute.xlu0 1
        %6560 = vperm.xlu0 %6559, %v6297
        %v6561 = vpop.permute.xlu0 %6560
        %6562 = vset.pattern.permute.xlu0 1
        %6563 = vperm.xlu0 %6562, %v6298
        %v6564 = vpop.permute.xlu0 %6563
        %6565 = vset.pattern.permute.xlu0 1
        %6566 = vperm.xlu0 %6565, %v6299
        %v6567 = vpop.permute.xlu0 %6566
        %6568 = vset.pattern.permute.xlu0 1
        %6569 = vperm.xlu0 %6568, %v6300
        %v6570 = vpop.permute.xlu0 %6569
        %6571 = vset.pattern.permute.xlu0 1
        %6572 = vperm.xlu0 %6571, %v6301
        %v6573 = vpop.permute.xlu0 %6572
        %6574 = vset.pattern.permute.xlu0 1
        %6575 = vperm.xlu0 %6574, %v6302
        %v6576 = vpop.permute.xlu0 %6575
        %6577 = vset.pattern.permute.xlu0 1
        %6578 = vperm.xlu0 %6577, %v6303
        %v6579 = vpop.permute.xlu0 %6578
        %6580 = vset.pattern.permute.xlu0 1
        %6581 = vperm.xlu0 %6580, %v6304
        %v6582 = vpop.permute.xlu0 %6581
        %6583 = vset.pattern.permute.xlu0 1
        %6584 = vperm.xlu0 %6583, %v6305
        %v6585 = vpop.permute.xlu0 %6584
        %6586 = vset.pattern.permute.xlu0 1
        %6587 = vperm.xlu0 %6586, %v6306
        %v6588 = vpop.permute.xlu0 %6587
        %6589 = vset.pattern.permute.xlu0 1
        %6590 = vperm.xlu0 %6589, %v6307
        %v6591 = vpop.permute.xlu0 %6590
        %6592 = vset.pattern.permute.xlu0 1
        %6593 = vperm.xlu0 %6592, %v6308
        %v6594 = vpop.permute.xlu0 %6593
        %6595 = vset.pattern.permute.xlu0 1
        %6596 = vperm.xlu0 %6595, %v6309
        %v6597 = vpop.permute.xlu0 %6596
        %6598 = vset.pattern.permute.xlu0 1
        %6599 = vperm.xlu0 %6598, %v6310
        %v6600 = vpop.permute.xlu0 %6599
        %6601 = vset.pattern.permute.xlu0 1
        %6602 = vperm.xlu0 %6601, %v6311
        %v6603 = vpop.permute.xlu0 %6602
        %6604 = vset.pattern.permute.xlu0 1
        %6605 = vperm.xlu0 %6604, %v6312
        %v6606 = vpop.permute.xlu0 %6605
        %6607 = vset.pattern.permute.xlu0 1
        %6608 = vperm.xlu0 %6607, %v6313
        %v6609 = vpop.permute.xlu0 %6608
        %6610 = vset.pattern.permute.xlu0 1
        %6611 = vperm.xlu0 %6610, %v6314
        %v6612 = vpop.permute.xlu0 %6611
        %6613 = vset.pattern.permute.xlu0 1
        %6614 = vperm.xlu0 %6613, %v6315
        %v6615 = vpop.permute.xlu0 %6614
        %6616 = vset.pattern.permute.xlu0 1
        %6617 = vperm.xlu0 %6616, %v6316
        %v6618 = vpop.permute.xlu0 %6617
        %6619 = vset.pattern.permute.xlu0 1
        %6620 = vperm.xlu0 %6619, %v6317
        %v6621 = vpop.permute.xlu0 %6620
        %vm6622 = vcmp.eq.s32.totalorder %v6285, %v6528
        %vm6623 = vcmp.eq.s32.totalorder %v6285, %v6531
        %vm6624 = vcmp.eq.s32.totalorder %v6285, %v6534
        %vm6625 = vcmp.eq.s32.totalorder %v6285, %v6537
        %vm6626 = vcmp.eq.s32.totalorder %v6285, %v6540
        %vm6627 = vcmp.eq.s32.totalorder %v6285, %v6543
        %vm6628 = vcmp.eq.s32.totalorder %v6285, %v6546
        %vm6629 = vcmp.eq.s32.totalorder %v6285, %v6549
        %vm6630 = vcmp.eq.s32.totalorder %v6285, %v6552
        %vm6631 = vcmp.eq.s32.totalorder %v6285, %v6555
        %vm6632 = vcmp.eq.s32.totalorder %v6285, %v6558
        %vm6633 = vcmp.eq.s32.totalorder %v6285, %v6561
        %vm6634 = vcmp.eq.s32.totalorder %v6285, %v6564
        %vm6635 = vcmp.eq.s32.totalorder %v6285, %v6567
        %vm6636 = vcmp.eq.s32.totalorder %v6285, %v6570
        %vm6637 = vcmp.eq.s32.totalorder %v6285, %v6573
        %vm6638 = vcmp.eq.s32.totalorder %v6285, %v6576
        %vm6639 = vcmp.eq.s32.totalorder %v6285, %v6579
        %vm6640 = vcmp.eq.s32.totalorder %v6285, %v6582
        %vm6641 = vcmp.eq.s32.totalorder %v6285, %v6585
        %vm6642 = vcmp.eq.s32.totalorder %v6285, %v6588
        %vm6643 = vcmp.eq.s32.totalorder %v6285, %v6591
        %vm6644 = vcmp.eq.s32.totalorder %v6285, %v6594
        %vm6645 = vcmp.eq.s32.totalorder %v6285, %v6597
        %vm6646 = vcmp.eq.s32.totalorder %v6285, %v6600
        %vm6647 = vcmp.eq.s32.totalorder %v6285, %v6603
        %vm6648 = vcmp.eq.s32.totalorder %v6285, %v6606
        %vm6649 = vcmp.eq.s32.totalorder %v6285, %v6609
        %vm6650 = vcmp.eq.s32.totalorder %v6285, %v6612
        %vm6651 = vcmp.eq.s32.totalorder %v6285, %v6615
        %vm6652 = vcmp.eq.s32.totalorder %v6285, %v6618
        %vm6653 = vcmp.eq.s32.totalorder %v6285, %v6621
        %v6654 = vsel %vm6622, 1, 0
        %v6655 = vsel %vm6623, 1, 0
        %v6656 = vsel %vm6624, 1, 0
        %v6657 = vsel %vm6625, 1, 0
        %v6658 = vsel %vm6626, 1, 0
        %v6659 = vsel %vm6627, 1, 0
        %v6660 = vsel %vm6628, 1, 0
        %v6661 = vsel %vm6629, 1, 0
        %v6662 = vsel %vm6630, 1, 0
        %v6663 = vsel %vm6631, 1, 0
        %v6664 = vsel %vm6632, 1, 0
        %v6665 = vsel %vm6633, 1, 0
        %v6666 = vsel %vm6634, 1, 0
        %v6667 = vsel %vm6635, 1, 0
        %v6668 = vsel %vm6636, 1, 0
        %v6669 = vsel %vm6637, 1, 0
        %v6670 = vsel %vm6638, 1, 0
        %v6671 = vsel %vm6639, 1, 0
        %v6672 = vsel %vm6640, 1, 0
        %v6673 = vsel %vm6641, 1, 0
        %v6674 = vsel %vm6642, 1, 0
        %v6675 = vsel %vm6643, 1, 0
        %v6676 = vsel %vm6644, 1, 0
        %v6677 = vsel %vm6645, 1, 0
        %v6678 = vsel %vm6646, 1, 0
        %v6679 = vsel %vm6647, 1, 0
        %v6680 = vsel %vm6648, 1, 0
        %v6681 = vsel %vm6649, 1, 0
        %v6682 = vsel %vm6650, 1, 0
        %v6683 = vsel %vm6651, 1, 0
        %v6684 = vsel %vm6652, 1, 0
        %v6685 = vsel %vm6653, 1, 0
        %v6686 = vcvt.s32.f32 %v6654
        %v6687 = vcvt.s32.f32 %v6655
        %v6688 = vcvt.s32.f32 %v6656
        %v6689 = vcvt.s32.f32 %v6657
        %v6690 = vcvt.s32.f32 %v6658
        %v6691 = vcvt.s32.f32 %v6659
        %v6692 = vcvt.s32.f32 %v6660
        %v6693 = vcvt.s32.f32 %v6661
        %v6694 = vcvt.s32.f32 %v6662
        %v6695 = vcvt.s32.f32 %v6663
        %v6696 = vcvt.s32.f32 %v6664
        %v6697 = vcvt.s32.f32 %v6665
        %v6698 = vcvt.s32.f32 %v6666
        %v6699 = vcvt.s32.f32 %v6667
        %v6700 = vcvt.s32.f32 %v6668
        %v6701 = vcvt.s32.f32 %v6669
        %v6702 = vcvt.s32.f32 %v6670
        %v6703 = vcvt.s32.f32 %v6671
        %v6704 = vcvt.s32.f32 %v6672
        %v6705 = vcvt.s32.f32 %v6673
        %v6706 = vcvt.s32.f32 %v6674
        %v6707 = vcvt.s32.f32 %v6675
        %v6708 = vcvt.s32.f32 %v6676
        %v6709 = vcvt.s32.f32 %v6677
        %v6710 = vcvt.s32.f32 %v6678
        %v6711 = vcvt.s32.f32 %v6679
        %v6712 = vcvt.s32.f32 %v6680
        %v6713 = vcvt.s32.f32 %v6681
        %v6714 = vcvt.s32.f32 %v6682
        %v6715 = vcvt.s32.f32 %v6683
        %v6716 = vcvt.s32.f32 %v6684
        %v6717 = vcvt.s32.f32 %v6685
        %v6718 = vpack.c.bf16 %v6687, %v6686
        %v6719 = vpack.c.bf16 %v6689, %v6688
        %v6720 = vpack.c.bf16 %v6691, %v6690
        %v6721 = vpack.c.bf16 %v6693, %v6692
        %v6722 = vpack.c.bf16 %v6695, %v6694
        %v6723 = vpack.c.bf16 %v6697, %v6696
        %v6724 = vpack.c.bf16 %v6699, %v6698
        %v6725 = vpack.c.bf16 %v6701, %v6700
        %v6726 = vpack.c.bf16 %v6703, %v6702
        %v6727 = vpack.c.bf16 %v6705, %v6704
        %v6728 = vpack.c.bf16 %v6707, %v6706
        %v6729 = vpack.c.bf16 %v6709, %v6708
        %v6730 = vpack.c.bf16 %v6711, %v6710
        %v6731 = vpack.c.bf16 %v6713, %v6712
        %v6732 = vpack.c.bf16 %v6715, %v6714
        %v6733 = vpack.c.bf16 %v6717, %v6716
        %v6734 = vld [vmem:[#allocation2] sm:$0xff]
        %v6735 = vld [vmem:[#allocation2 + $0x8] sm:$0xff]
        %v6736 = vld [vmem:[#allocation2 + $0x10] sm:$0xff]
        %v6737 = vpack.c.bf16 %v6735, %v6734
        %v6738 = vpack.c.bf16 %v6736, %v6736
        %6741 = vrot.lane.b32.xlu0 %v6737, 96
        %v6742 = vpop.permute.xlu0 %6741
        %6743 = vrot.lane.b32.xlu0 %v6738, 96
        %v6744 = vpop.permute.xlu0 %6743
        %vm6746 = vcmask 195584
        %v6748 = vsel %vm6746, %v6718, 0
        %v6751 = vsel %vm6746, %v6719, 0
        %v6754 = vsel %vm6746, %v6720, 0
        %v6757 = vsel %vm6746, %v6721, 0
        %v6760 = vsel %vm6746, %v6722, 0
        %v6763 = vsel %vm6746, %v6723, 0
        %v6766 = vsel %vm6746, %v6724, 0
        %v6769 = vsel %vm6746, %v6725, 0
        %v6772 = vsel %vm6746, %v6726, 0
        %v6775 = vsel %vm6746, %v6727, 0
        %v6778 = vsel %vm6746, %v6728, 0
        %v6781 = vsel %vm6746, %v6729, 0
        %v6784 = vsel %vm6746, %v6730, 0
        %v6787 = vsel %vm6746, %v6731, 0
        %v6790 = vsel %vm6746, %v6732, 0
        %v6793 = vsel %vm6746, %v6733, 0
        %vm6795 = vcmask 1043456
        %v6797 = vsel %vm6795, %v6744, 0
        %6799 = vmatpush.bf16.msra.mxu0 0
        %6800 = vmatpush.bf16.msra.mxu0 0
        %6801 = vmatpush.bf16.msra.mxu0 0
        %6802 = vmatpush.bf16.msra.mxu0 0
        %6803 = vmatpush.bf16.msra.mxu0 0
        %6804 = vmatpush.bf16.msra.mxu0 0
        %6805 = vmatpush.bf16.msra.mxu0 %v6797
        %6806 = vmatpush.bf16.msra.mxu0 %v6742
        %6807 = vmatmul.bf16.gmra.mxu0 %v6748
        %v6808 = vpop.f32.mrf.mxu0
        %v6809 = vadd.f32 0.0, %v6808
        %v6810 = vpop.f32.mrf.mxu0
        %v6811 = vadd.f32 0.0, %v6810
        %6812 = vmatmul.bf16.gmra.mxu0 %v6751
        %v6813 = vpop.f32.mrf.mxu0
        %v6814 = vadd.f32 0.0, %v6813
        %v6815 = vpop.f32.mrf.mxu0
        %v6816 = vadd.f32 0.0, %v6815
        %6817 = vmatmul.bf16.gmra.mxu0 %v6754
        %v6818 = vpop.f32.mrf.mxu0
        %v6819 = vadd.f32 0.0, %v6818
        %v6820 = vpop.f32.mrf.mxu0
        %v6821 = vadd.f32 0.0, %v6820
        %6822 = vmatmul.bf16.gmra.mxu0 %v6757
        %v6823 = vpop.f32.mrf.mxu0
        %v6824 = vadd.f32 0.0, %v6823
        %v6825 = vpop.f32.mrf.mxu0
        %v6826 = vadd.f32 0.0, %v6825
        %6827 = vmatmul.bf16.gmra.mxu0 %v6760
        %v6828 = vpop.f32.mrf.mxu0
        %v6829 = vadd.f32 0.0, %v6828
        %v6830 = vpop.f32.mrf.mxu0
        %v6831 = vadd.f32 0.0, %v6830
        %6832 = vmatmul.bf16.gmra.mxu0 %v6763
        %v6833 = vpop.f32.mrf.mxu0
        %v6834 = vadd.f32 0.0, %v6833
        %v6835 = vpop.f32.mrf.mxu0
        %v6836 = vadd.f32 0.0, %v6835
        %6837 = vmatmul.bf16.gmra.mxu0 %v6766
        %v6838 = vpop.f32.mrf.mxu0
        %v6839 = vadd.f32 0.0, %v6838
        %v6840 = vpop.f32.mrf.mxu0
        %v6841 = vadd.f32 0.0, %v6840
        %6842 = vmatmul.bf16.gmra.mxu0 %v6769
        %v6843 = vpop.f32.mrf.mxu0
        %v6844 = vadd.f32 0.0, %v6843
        %v6845 = vpop.f32.mrf.mxu0
        %v6846 = vadd.f32 0.0, %v6845
        %6847 = vmatmul.bf16.gmra.mxu0 %v6772
        %v6848 = vpop.f32.mrf.mxu0
        %v6849 = vadd.f32 0.0, %v6848
        %v6850 = vpop.f32.mrf.mxu0
        %v6851 = vadd.f32 0.0, %v6850
        %6852 = vmatmul.bf16.gmra.mxu0 %v6775
        %v6853 = vpop.f32.mrf.mxu0
        %v6854 = vadd.f32 0.0, %v6853
        %v6855 = vpop.f32.mrf.mxu0
        %v6856 = vadd.f32 0.0, %v6855
        %6857 = vmatmul.bf16.gmra.mxu0 %v6778
        %v6858 = vpop.f32.mrf.mxu0
        %v6859 = vadd.f32 0.0, %v6858
        %v6860 = vpop.f32.mrf.mxu0
        %v6861 = vadd.f32 0.0, %v6860
        %6862 = vmatmul.bf16.gmra.mxu0 %v6781
        %v6863 = vpop.f32.mrf.mxu0
        %v6864 = vadd.f32 0.0, %v6863
        %v6865 = vpop.f32.mrf.mxu0
        %v6866 = vadd.f32 0.0, %v6865
        %6867 = vmatmul.bf16.gmra.mxu0 %v6784
        %v6868 = vpop.f32.mrf.mxu0
        %v6869 = vadd.f32 0.0, %v6868
        %v6870 = vpop.f32.mrf.mxu0
        %v6871 = vadd.f32 0.0, %v6870
        %6872 = vmatmul.bf16.gmra.mxu0 %v6787
        %v6873 = vpop.f32.mrf.mxu0
        %v6874 = vadd.f32 0.0, %v6873
        %v6875 = vpop.f32.mrf.mxu0
        %v6876 = vadd.f32 0.0, %v6875
        %6877 = vmatmul.bf16.gmra.mxu0 %v6790
        %v6878 = vpop.f32.mrf.mxu0
        %v6879 = vadd.f32 0.0, %v6878
        %v6880 = vpop.f32.mrf.mxu0
        %v6881 = vadd.f32 0.0, %v6880
        %6882 = vmatmul.bf16.gmra.mxu0 %v6793
        %v6883 = vpop.f32.mrf.mxu0
        %v6884 = vadd.f32 0.0, %v6883
        %v6885 = vpop.f32.mrf.mxu0
        %v6886 = vadd.f32 0.0, %v6885
        %6887 = vdwg.mxu0
        %v6889 = vsel %vm6746, %v6510, 0
        %v6892 = vsel %vm6746, %v6511, 0
        %v6895 = vsel %vm6746, %v6512, 0
        %v6898 = vsel %vm6746, %v6513, 0
        %v6901 = vsel %vm6746, %v6514, 0
        %v6904 = vsel %vm6746, %v6515, 0
        %v6907 = vsel %vm6746, %v6516, 0
        %v6910 = vsel %vm6746, %v6517, 0
        %v6913 = vsel %vm6746, %v6518, 0
        %v6916 = vsel %vm6746, %v6519, 0
        %v6919 = vsel %vm6746, %v6520, 0
        %v6922 = vsel %vm6746, %v6521, 0
        %v6925 = vsel %vm6746, %v6522, 0
        %v6928 = vsel %vm6746, %v6523, 0
        %v6931 = vsel %vm6746, %v6524, 0
        %v6934 = vsel %vm6746, %v6525, 0
        %v6937 = vsel %vm6795, %v6738, 0
        %6939 = vmatpush.bf16.msra.mxu0 0
        %6940 = vmatpush.bf16.msra.mxu0 0
        %6941 = vmatpush.bf16.msra.mxu0 0
        %6942 = vmatpush.bf16.msra.mxu0 0
        %6943 = vmatpush.bf16.msra.mxu0 0
        %6944 = vmatpush.bf16.msra.mxu0 0
        %6945 = vmatpush.bf16.msra.mxu0 %v6937
        %6946 = vmatpush.bf16.msra.mxu0 %v6737
        %6947 = vmatmul.bf16.gmra.mxu0 %v6889
        %v6948 = vpop.f32.mrf.mxu0
        %v6949 = vadd.f32 %v6809, %v6948
        %v6950 = vpop.f32.mrf.mxu0
        %v6951 = vadd.f32 %v6811, %v6950
        %6952 = vmatmul.bf16.gmra.mxu0 %v6892
        %v6953 = vpop.f32.mrf.mxu0
        %v6954 = vadd.f32 %v6814, %v6953
        %v6955 = vpop.f32.mrf.mxu0
        %v6956 = vadd.f32 %v6816, %v6955
        %6957 = vmatmul.bf16.gmra.mxu0 %v6895
        %v6958 = vpop.f32.mrf.mxu0
        %v6959 = vadd.f32 %v6819, %v6958
        %v6960 = vpop.f32.mrf.mxu0
        %v6961 = vadd.f32 %v6821, %v6960
        %6962 = vmatmul.bf16.gmra.mxu0 %v6898
        %v6963 = vpop.f32.mrf.mxu0
        %v6964 = vadd.f32 %v6824, %v6963
        %v6965 = vpop.f32.mrf.mxu0
        %v6966 = vadd.f32 %v6826, %v6965
        %6967 = vmatmul.bf16.gmra.mxu0 %v6901
        %v6968 = vpop.f32.mrf.mxu0
        %v6969 = vadd.f32 %v6829, %v6968
        %v6970 = vpop.f32.mrf.mxu0
        %v6971 = vadd.f32 %v6831, %v6970
        %6972 = vmatmul.bf16.gmra.mxu0 %v6904
        %v6973 = vpop.f32.mrf.mxu0
        %v6974 = vadd.f32 %v6834, %v6973
        %v6975 = vpop.f32.mrf.mxu0
        %v6976 = vadd.f32 %v6836, %v6975
        %6977 = vmatmul.bf16.gmra.mxu0 %v6907
        %v6978 = vpop.f32.mrf.mxu0
        %v6979 = vadd.f32 %v6839, %v6978
        %v6980 = vpop.f32.mrf.mxu0
        %v6981 = vadd.f32 %v6841, %v6980
        %6982 = vmatmul.bf16.gmra.mxu0 %v6910
        %v6983 = vpop.f32.mrf.mxu0
        %v6984 = vadd.f32 %v6844, %v6983
        %v6985 = vpop.f32.mrf.mxu0
        %v6986 = vadd.f32 %v6846, %v6985
        %6987 = vmatmul.bf16.gmra.mxu0 %v6913
        %v6988 = vpop.f32.mrf.mxu0
        %v6989 = vadd.f32 %v6849, %v6988
        %v6990 = vpop.f32.mrf.mxu0
        %v6991 = vadd.f32 %v6851, %v6990
        %6992 = vmatmul.bf16.gmra.mxu0 %v6916
        %v6993 = vpop.f32.mrf.mxu0
        %v6994 = vadd.f32 %v6854, %v6993
        %v6995 = vpop.f32.mrf.mxu0
        %v6996 = vadd.f32 %v6856, %v6995
        %6997 = vmatmul.bf16.gmra.mxu0 %v6919
        %v6998 = vpop.f32.mrf.mxu0
        %v6999 = vadd.f32 %v6859, %v6998
        %v7000 = vpop.f32.mrf.mxu0
        %v7001 = vadd.f32 %v6861, %v7000
        %7002 = vmatmul.bf16.gmra.mxu0 %v6922
        %v7003 = vpop.f32.mrf.mxu0
        %v7004 = vadd.f32 %v6864, %v7003
        %v7005 = vpop.f32.mrf.mxu0
        %v7006 = vadd.f32 %v6866, %v7005
        %7007 = vmatmul.bf16.gmra.mxu0 %v6925
        %v7008 = vpop.f32.mrf.mxu0
        %v7009 = vadd.f32 %v6869, %v7008
        %v7010 = vpop.f32.mrf.mxu0
        %v7011 = vadd.f32 %v6871, %v7010
        %7012 = vmatmul.bf16.gmra.mxu0 %v6928
        %v7013 = vpop.f32.mrf.mxu0
        %v7014 = vadd.f32 %v6874, %v7013
        %v7015 = vpop.f32.mrf.mxu0
        %v7016 = vadd.f32 %v6876, %v7015
        %7017 = vmatmul.bf16.gmra.mxu0 %v6931
        %v7018 = vpop.f32.mrf.mxu0
        %v7019 = vadd.f32 %v6879, %v7018
        %v7020 = vpop.f32.mrf.mxu0
        %v7021 = vadd.f32 %v6881, %v7020
        %7022 = vmatmul.bf16.gmra.mxu0 %v6934
        %v7023 = vpop.f32.mrf.mxu0
        %v7024 = vadd.f32 %v6884, %v7023
        %v7025 = vpop.f32.mrf.mxu0
        %v7026 = vadd.f32 %v6886, %v7025
        %7027 = vdwg.mxu0
        %v7028 = vld [vmem:[%s5] sm:$0x1]
        %v7030 = vperm.slane %v7028, 0
        %v7032 = vadd.f32 %v6949, %v7030
        %v7033 = vadd.f32 %v6951, %v7030
        %v7034 = vadd.f32 %v6954, %v7030
        %v7035 = vadd.f32 %v6956, %v7030
        %v7036 = vadd.f32 %v6959, %v7030
        %v7037 = vadd.f32 %v6961, %v7030
        %v7038 = vadd.f32 %v6964, %v7030
        %v7039 = vadd.f32 %v6966, %v7030
        %v7040 = vadd.f32 %v6969, %v7030
        %v7041 = vadd.f32 %v6971, %v7030
        %v7042 = vadd.f32 %v6974, %v7030
        %v7043 = vadd.f32 %v6976, %v7030
        %v7044 = vadd.f32 %v6979, %v7030
        %v7045 = vadd.f32 %v6981, %v7030
        %v7046 = vadd.f32 %v6984, %v7030
        %v7047 = vadd.f32 %v6986, %v7030
        %v7048 = vadd.f32 %v6989, %v7030
        %v7049 = vadd.f32 %v6991, %v7030
        %v7050 = vadd.f32 %v6994, %v7030
        %v7051 = vadd.f32 %v6996, %v7030
        %v7052 = vadd.f32 %v6999, %v7030
        %v7053 = vadd.f32 %v7001, %v7030
        %v7054 = vadd.f32 %v7004, %v7030
        %v7055 = vadd.f32 %v7006, %v7030
        %v7056 = vadd.f32 %v7009, %v7030
        %v7057 = vadd.f32 %v7011, %v7030
        %v7058 = vadd.f32 %v7014, %v7030
        %v7059 = vadd.f32 %v7016, %v7030
        %v7060 = vadd.f32 %v7019, %v7030
        %v7061 = vadd.f32 %v7021, %v7030
        %v7062 = vadd.f32 %v7024, %v7030
        %v7063 = vadd.f32 %v7026, %v7030
        %v7064 = vpack.c.bf16 %v7033, %v7032
        %v7065 = vpack.c.bf16 %v7035, %v7034
        %v7066 = vpack.c.bf16 %v7037, %v7036
        %v7067 = vpack.c.bf16 %v7039, %v7038
        %v7068 = vpack.c.bf16 %v7041, %v7040
        %v7069 = vpack.c.bf16 %v7043, %v7042
        %v7070 = vpack.c.bf16 %v7045, %v7044
        %v7071 = vpack.c.bf16 %v7047, %v7046
        %v7072 = vpack.c.bf16 %v7049, %v7048
        %v7073 = vpack.c.bf16 %v7051, %v7050
        %v7074 = vpack.c.bf16 %v7053, %v7052
        %v7075 = vpack.c.bf16 %v7055, %v7054
        %v7076 = vpack.c.bf16 %v7057, %v7056
        %v7077 = vpack.c.bf16 %v7059, %v7058
        %v7078 = vpack.c.bf16 %v7061, %v7060
        %v7079 = vpack.c.bf16 %v7063, %v7062
        %v7080 = vld [vmem:[%s8] sm:$0xf]
        %v7081 = vld [vmem:[%s8 + $0x4] sm:$0xf]
        %v7082 = vld [vmem:[%s8 + $0x8] sm:$0xf]
        %v7083 = vld [vmem:[%s8 + $0xc] sm:$0xf]
        %v7088 = vunpack.c.l.b16 %v7080
        %v7089 = vunpack.c.l.b16 %v7081
        %v7090 = vunpack.c.l.b16 %v7082
        %v7091 = vunpack.c.l.b16 %v7083
        %v7092 = vpack.c.b16 %v7089, %v7088
        %v7093 = vpack.c.b16 %v7091, %v7090
        %vm7096 = vcmask 261120
        %v7098 = vsel %vm7096, %v7064, 0
        %v7101 = vsel %vm7096, %v7065, 0
        %v7104 = vsel %vm7096, %v7066, 0
        %v7107 = vsel %vm7096, %v7067, 0
        %v7110 = vsel %vm7096, %v7068, 0
        %v7113 = vsel %vm7096, %v7069, 0
        %v7116 = vsel %vm7096, %v7070, 0
        %v7119 = vsel %vm7096, %v7071, 0
        %v7122 = vsel %vm7096, %v7072, 0
        %v7125 = vsel %vm7096, %v7073, 0
        %v7128 = vsel %vm7096, %v7074, 0
        %v7131 = vsel %vm7096, %v7075, 0
        %v7134 = vsel %vm7096, %v7076, 0
        %v7137 = vsel %vm7096, %v7077, 0
        %v7140 = vsel %vm7096, %v7078, 0
        %v7143 = vsel %vm7096, %v7079, 0
        %7145 = vmatpush.bf16.msra.mxu0 0
        %7146 = vmatpush.bf16.msra.mxu0 0
        %7147 = vmatpush.bf16.msra.mxu0 0
        %7148 = vmatpush.bf16.msra.mxu0 0
        %7149 = vmatpush.bf16.msra.mxu0 0
        %7150 = vmatpush.bf16.msra.mxu0 0
        %7151 = vmatpush.bf16.msra.mxu0 %v7093
        %7152 = vmatpush.bf16.msra.mxu0 %v7092
        %7153 = vmatmul.bf16.gmra.mxu0 %v7098
        %v7154 = vpop.f32.mrf.mxu0
        %v7155 = vadd.f32 0.0, %v7154
        %v7156 = vpop.f32.mrf.mxu0
        %v7157 = vadd.f32 0.0, %v7156
        %7158 = vmatmul.bf16.gmra.mxu0 %v7101
        %v7159 = vpop.f32.mrf.mxu0
        %v7160 = vadd.f32 0.0, %v7159
        %v7161 = vpop.f32.mrf.mxu0
        %v7162 = vadd.f32 0.0, %v7161
        %7163 = vmatmul.bf16.gmra.mxu0 %v7104
        %v7164 = vpop.f32.mrf.mxu0
        %v7165 = vadd.f32 0.0, %v7164
        %v7166 = vpop.f32.mrf.mxu0
        %v7167 = vadd.f32 0.0, %v7166
        %7168 = vmatmul.bf16.gmra.mxu0 %v7107
        %v7169 = vpop.f32.mrf.mxu0
        %v7170 = vadd.f32 0.0, %v7169
        %v7171 = vpop.f32.mrf.mxu0
        %v7172 = vadd.f32 0.0, %v7171
        %7173 = vmatmul.bf16.gmra.mxu0 %v7110
        %v7174 = vpop.f32.mrf.mxu0
        %v7175 = vadd.f32 0.0, %v7174
        %v7176 = vpop.f32.mrf.mxu0
        %v7177 = vadd.f32 0.0, %v7176
        %7178 = vmatmul.bf16.gmra.mxu0 %v7113
        %v7179 = vpop.f32.mrf.mxu0
        %v7180 = vadd.f32 0.0, %v7179
        %v7181 = vpop.f32.mrf.mxu0
        %v7182 = vadd.f32 0.0, %v7181
        %7183 = vmatmul.bf16.gmra.mxu0 %v7116
        %v7184 = vpop.f32.mrf.mxu0
        %v7185 = vadd.f32 0.0, %v7184
        %v7186 = vpop.f32.mrf.mxu0
        %v7187 = vadd.f32 0.0, %v7186
        %7188 = vmatmul.bf16.gmra.mxu0 %v7119
        %v7189 = vpop.f32.mrf.mxu0
        %v7190 = vadd.f32 0.0, %v7189
        %v7191 = vpop.f32.mrf.mxu0
        %v7192 = vadd.f32 0.0, %v7191
        %7193 = vmatmul.bf16.gmra.mxu0 %v7122
        %v7194 = vpop.f32.mrf.mxu0
        %v7195 = vadd.f32 0.0, %v7194
        %v7196 = vpop.f32.mrf.mxu0
        %v7197 = vadd.f32 0.0, %v7196
        %7198 = vmatmul.bf16.gmra.mxu0 %v7125
        %v7199 = vpop.f32.mrf.mxu0
        %v7200 = vadd.f32 0.0, %v7199
        %v7201 = vpop.f32.mrf.mxu0
        %v7202 = vadd.f32 0.0, %v7201
        %7203 = vmatmul.bf16.gmra.mxu0 %v7128
        %v7204 = vpop.f32.mrf.mxu0
        %v7205 = vadd.f32 0.0, %v7204
        %v7206 = vpop.f32.mrf.mxu0
        %v7207 = vadd.f32 0.0, %v7206
        %7208 = vmatmul.bf16.gmra.mxu0 %v7131
        %v7209 = vpop.f32.mrf.mxu0
        %v7210 = vadd.f32 0.0, %v7209
        %v7211 = vpop.f32.mrf.mxu0
        %v7212 = vadd.f32 0.0, %v7211
        %7213 = vmatmul.bf16.gmra.mxu0 %v7134
        %v7214 = vpop.f32.mrf.mxu0
        %v7215 = vadd.f32 0.0, %v7214
        %v7216 = vpop.f32.mrf.mxu0
        %v7217 = vadd.f32 0.0, %v7216
        %7218 = vmatmul.bf16.gmra.mxu0 %v7137
        %v7219 = vpop.f32.mrf.mxu0
        %v7220 = vadd.f32 0.0, %v7219
        %v7221 = vpop.f32.mrf.mxu0
        %v7222 = vadd.f32 0.0, %v7221
        %7223 = vmatmul.bf16.gmra.mxu0 %v7140
        %v7224 = vpop.f32.mrf.mxu0
        %v7225 = vadd.f32 0.0, %v7224
        %v7226 = vpop.f32.mrf.mxu0
        %v7227 = vadd.f32 0.0, %v7226
        %7228 = vmatmul.bf16.gmra.mxu0 %v7143
        %v7229 = vpop.f32.mrf.mxu0
        %v7230 = vadd.f32 0.0, %v7229
        %v7231 = vpop.f32.mrf.mxu0
        %v7232 = vadd.f32 0.0, %v7231
        %7233 = vdwg.mxu0
        %v7234 = vmul.f32 %v6252, %v7155
        %v7235 = vmul.f32 %v6253, %v7157
        %v7236 = vmul.f32 %v6254, %v7160
        %v7237 = vmul.f32 %v6255, %v7162
        %v7238 = vmul.f32 %v6256, %v7165
        %v7239 = vmul.f32 %v6257, %v7167
        %v7240 = vmul.f32 %v6258, %v7170
        %v7241 = vmul.f32 %v6259, %v7172
        %v7242 = vmul.f32 %v6260, %v7175
        %v7243 = vmul.f32 %v6261, %v7177
        %v7244 = vmul.f32 %v6262, %v7180
        %v7245 = vmul.f32 %v6263, %v7182
        %v7246 = vmul.f32 %v6264, %v7185
        %v7247 = vmul.f32 %v6265, %v7187
        %v7248 = vmul.f32 %v6266, %v7190
        %v7249 = vmul.f32 %v6267, %v7192
        %v7250 = vmul.f32 %v6268, %v7195
        %v7251 = vmul.f32 %v6269, %v7197
        %v7252 = vmul.f32 %v6270, %v7200
        %v7253 = vmul.f32 %v6271, %v7202
        %v7254 = vmul.f32 %v6272, %v7205
        %v7255 = vmul.f32 %v6273, %v7207
        %v7256 = vmul.f32 %v6274, %v7210
        %v7257 = vmul.f32 %v6275, %v7212
        %v7258 = vmul.f32 %v6276, %v7215
        %v7259 = vmul.f32 %v6277, %v7217
        %v7260 = vmul.f32 %v6278, %v7220
        %v7261 = vmul.f32 %v6279, %v7222
        %v7262 = vmul.f32 %v6280, %v7225
        %v7263 = vmul.f32 %v6281, %v7227
        %v7264 = vmul.f32 %v6282, %v7230
        %v7265 = vmul.f32 %v6283, %v7232
        %v7266 = vpack.c.bf16 %v7235, %v7234
        %v7267 = vpack.c.bf16 %v7237, %v7236
        %v7268 = vpack.c.bf16 %v7239, %v7238
        %v7269 = vpack.c.bf16 %v7241, %v7240
        %v7270 = vpack.c.bf16 %v7243, %v7242
        %v7271 = vpack.c.bf16 %v7245, %v7244
        %v7272 = vpack.c.bf16 %v7247, %v7246
        %v7273 = vpack.c.bf16 %v7249, %v7248
        %v7274 = vpack.c.bf16 %v7251, %v7250
        %v7275 = vpack.c.bf16 %v7253, %v7252
        %v7276 = vpack.c.bf16 %v7255, %v7254
        %v7277 = vpack.c.bf16 %v7257, %v7256
        %v7278 = vpack.c.bf16 %v7259, %v7258
        %v7279 = vpack.c.bf16 %v7261, %v7260
        %v7280 = vpack.c.bf16 %v7263, %v7262
        %v7281 = vpack.c.bf16 %v7265, %v7264
        %v7282 = vld [vmem:[%s9] sm:$0xff]
        %v7283 = vld [vmem:[%s9 + $0x8] sm:$0xff]
        %v7284 = vld [vmem:[%s9 + $0x10] sm:$0xf]
        %v7285 = vld [vmem:[%s9 + $0x14] sm:$0xff]
        %v7286 = vld [vmem:[%s9 + $0x1c] sm:$0xff]
        %v7287 = vld [vmem:[%s9 + $0x24] sm:$0xf]
        %v7288 = vld [vmem:[%s9 + $0x28] sm:$0xff]
        %v7289 = vld [vmem:[%s9 + $0x30] sm:$0xff]
        %v7290 = vld [vmem:[%s9 + $0x38] sm:$0xf]
        %v7291 = vld [vmem:[%s9 + $0x3c] sm:$0xff]
        %v7292 = vld [vmem:[%s9 + $0x44] sm:$0xff]
        %v7293 = vld [vmem:[%s9 + $0x4c] sm:$0xf]
        %v7294 = vld [vmem:[%s9 + $0x50] sm:$0xff]
        %v7295 = vld [vmem:[%s9 + $0x58] sm:$0xff]
        %v7296 = vld [vmem:[%s9 + $0x60] sm:$0xf]
        %v7297 = vld [vmem:[%s9 + $0x64] sm:$0xff]
        %v7298 = vld [vmem:[%s9 + $0x6c] sm:$0xff]
        %v7299 = vld [vmem:[%s9 + $0x74] sm:$0xf]
        %v7300 = vld [vmem:[%s9 + $0x78] sm:$0xff]
        %v7301 = vld [vmem:[%s9 + $0x80] sm:$0xff]
        %v7302 = vld [vmem:[%s9 + $0x88] sm:$0xf]
        %v7303 = vld [vmem:[%s9 + $0x8c] sm:$0xff]
        %v7304 = vld [vmem:[%s9 + $0x94] sm:$0xff]
        %v7305 = vld [vmem:[%s9 + $0x9c] sm:$0xf]
        %v7306 = vld [vmem:[%s9 + $0xa0] sm:$0xff]
        %v7307 = vld [vmem:[%s9 + $0xa8] sm:$0xff]
        %v7308 = vld [vmem:[%s9 + $0xb0] sm:$0xf]
        %v7309 = vld [vmem:[%s9 + $0xb4] sm:$0xff]
        %v7310 = vld [vmem:[%s9 + $0xbc] sm:$0xff]
        %v7311 = vld [vmem:[%s9 + $0xc4] sm:$0xf]
        %v7312 = vld [vmem:[%s9 + $0xc8] sm:$0xff]
        %v7313 = vld [vmem:[%s9 + $0xd0] sm:$0xff]
        %v7314 = vld [vmem:[%s9 + $0xd8] sm:$0xf]
        %v7315 = vld [vmem:[%s9 + $0xdc] sm:$0xff]
        %v7316 = vld [vmem:[%s9 + $0xe4] sm:$0xff]
        %v7317 = vld [vmem:[%s9 + $0xec] sm:$0xf]
        %v7354 = vunpack.c.l.b16 %v7282
        %v7355 = vunpack.c.h.b16 %v7282
        %v7356 = vunpack.c.l.b16 %v7283
        %v7357 = vunpack.c.h.b16 %v7283
        %v7358 = vunpack.c.l.b16 %v7284
        %v7359 = vunpack.c.l.b16 %v7285
        %v7360 = vunpack.c.h.b16 %v7285
        %v7361 = vunpack.c.l.b16 %v7286
        %v7362 = vunpack.c.h.b16 %v7286
        %v7363 = vunpack.c.l.b16 %v7287
        %v7364 = vunpack.c.l.b16 %v7288
        %v7365 = vunpack.c.h.b16 %v7288
        %v7366 = vunpack.c.l.b16 %v7289
        %v7367 = vunpack.c.h.b16 %v7289
        %v7368 = vunpack.c.l.b16 %v7290
        %v7369 = vunpack.c.l.b16 %v7291
        %v7370 = vunpack.c.h.b16 %v7291
        %v7371 = vunpack.c.l.b16 %v7292
        %v7372 = vunpack.c.h.b16 %v7292
        %v7373 = vunpack.c.l.b16 %v7293
        %v7374 = vunpack.c.l.b16 %v7294
        %v7375 = vunpack.c.h.b16 %v7294
        %v7376 = vunpack.c.l.b16 %v7295
        %v7377 = vunpack.c.h.b16 %v7295
        %v7378 = vunpack.c.l.b16 %v7296
        %v7379 = vunpack.c.l.b16 %v7297
        %v7380 = vunpack.c.h.b16 %v7297
        %v7381 = vunpack.c.l.b16 %v7298
        %v7382 = vunpack.c.h.b16 %v7298
        %v7383 = vunpack.c.l.b16 %v7299
        %v7384 = vunpack.c.l.b16 %v7300
        %v7385 = vunpack.c.h.b16 %v7300
        %v7386 = vunpack.c.l.b16 %v7301
        %v7387 = vunpack.c.h.b16 %v7301
        %v7388 = vunpack.c.l.b16 %v7302
        %v7389 = vunpack.c.l.b16 %v7303
        %v7390 = vunpack.c.h.b16 %v7303
        %v7391 = vunpack.c.l.b16 %v7304
        %v7392 = vunpack.c.h.b16 %v7304
        %v7393 = vunpack.c.l.b16 %v7305
        %v7394 = vunpack.c.l.b16 %v7306
        %v7395 = vunpack.c.h.b16 %v7306
        %v7396 = vunpack.c.l.b16 %v7307
        %v7397 = vunpack.c.h.b16 %v7307
        %v7398 = vunpack.c.l.b16 %v7308
        %v7399 = vunpack.c.l.b16 %v7309
        %v7400 = vunpack.c.h.b16 %v7309
        %v7401 = vunpack.c.l.b16 %v7310
        %v7402 = vunpack.c.h.b16 %v7310
        %v7403 = vunpack.c.l.b16 %v7311
        %v7404 = vunpack.c.l.b16 %v7312
        %v7405 = vunpack.c.h.b16 %v7312
        %v7406 = vunpack.c.l.b16 %v7313
        %v7407 = vunpack.c.h.b16 %v7313
        %v7408 = vunpack.c.l.b16 %v7314
        %v7409 = vunpack.c.l.b16 %v7315
        %v7410 = vunpack.c.h.b16 %v7315
        %v7411 = vunpack.c.l.b16 %v7316
        %v7412 = vunpack.c.h.b16 %v7316
        %v7413 = vunpack.c.l.b16 %v7317
        %v7414 = vpack.c.b16 %v7359, %v7354
        %v7415 = vpack.c.b16 %v7360, %v7355
        %v7416 = vpack.c.b16 %v7361, %v7356
        %v7417 = vpack.c.b16 %v7362, %v7357
        %v7418 = vpack.c.b16 %v7363, %v7358
        %v7419 = vpack.c.b16 %v7369, %v7364
        %v7420 = vpack.c.b16 %v7370, %v7365
        %v7421 = vpack.c.b16 %v7371, %v7366
        %v7422 = vpack.c.b16 %v7372, %v7367
        %v7423 = vpack.c.b16 %v7373, %v7368
        %v7424 = vpack.c.b16 %v7379, %v7374
        %v7425 = vpack.c.b16 %v7380, %v7375
        %v7426 = vpack.c.b16 %v7381, %v7376
        %v7427 = vpack.c.b16 %v7382, %v7377
        %v7428 = vpack.c.b16 %v7383, %v7378
        %v7429 = vpack.c.b16 %v7389, %v7384
        %v7430 = vpack.c.b16 %v7390, %v7385
        %v7431 = vpack.c.b16 %v7391, %v7386
        %v7432 = vpack.c.b16 %v7392, %v7387
        %v7433 = vpack.c.b16 %v7393, %v7388
        %v7434 = vpack.c.b16 %v7399, %v7394
        %v7435 = vpack.c.b16 %v7400, %v7395
        %v7436 = vpack.c.b16 %v7401, %v7396
        %v7437 = vpack.c.b16 %v7402, %v7397
        %v7438 = vpack.c.b16 %v7403, %v7398
        %v7439 = vpack.c.b16 %v7409, %v7404
        %v7440 = vpack.c.b16 %v7410, %v7405
        %v7441 = vpack.c.b16 %v7411, %v7406
        %v7442 = vpack.c.b16 %v7412, %v7407
        %v7443 = vpack.c.b16 %v7413, %v7408
        %vm7474 = vcmask 785408
        %v7476 = vsel %vm7474, %v7266, 0
        %v7479 = vsel %vm7474, %v7267, 0
        %v7482 = vsel %vm7474, %v7268, 0
        %v7485 = vsel %vm7474, %v7269, 0
        %v7488 = vsel %vm7474, %v7270, 0
        %v7491 = vsel %vm7474, %v7271, 0
        %v7494 = vsel %vm7474, %v7272, 0
        %v7497 = vsel %vm7474, %v7273, 0
        %v7500 = vsel %vm7474, %v7274, 0
        %v7503 = vsel %vm7474, %v7275, 0
        %v7506 = vsel %vm7474, %v7276, 0
        %v7509 = vsel %vm7474, %v7277, 0
        %v7512 = vsel %vm7474, %v7278, 0
        %v7515 = vsel %vm7474, %v7279, 0
        %v7518 = vsel %vm7474, %v7280, 0
        %v7521 = vsel %vm7474, %v7281, 0
        %7523 = vmatpush.bf16.msra.mxu0 0
        %7524 = vmatpush.bf16.msra.mxu0 0
        %7525 = vmatpush.bf16.msra.mxu0 %v7439
        %7526 = vmatpush.bf16.msra.mxu0 %v7434
        %7527 = vmatpush.bf16.msra.mxu0 %v7429
        %7528 = vmatpush.bf16.msra.mxu0 %v7424
        %7529 = vmatpush.bf16.msra.mxu0 %v7419
        %7530 = vmatpush.bf16.msra.mxu0 %v7414
        %7531 = vmatmul.bf16.gmra.mxu0 %v7476
        %v7532 = vpop.f32.mrf.mxu0
        %v7533 = vadd.f32 0.0, %v7532
        %v7534 = vpop.f32.mrf.mxu0
        %v7535 = vadd.f32 0.0, %v7534
        %7536 = vmatmul.bf16.gmra.mxu0 %v7479
        %v7537 = vpop.f32.mrf.mxu0
        %v7538 = vadd.f32 0.0, %v7537
        %v7539 = vpop.f32.mrf.mxu0
        %v7540 = vadd.f32 0.0, %v7539
        %7541 = vmatmul.bf16.gmra.mxu0 %v7482
        %v7542 = vpop.f32.mrf.mxu0
        %v7543 = vadd.f32 0.0, %v7542
        %v7544 = vpop.f32.mrf.mxu0
        %v7545 = vadd.f32 0.0, %v7544
        %7546 = vmatmul.bf16.gmra.mxu0 %v7485
        %v7547 = vpop.f32.mrf.mxu0
        %v7548 = vadd.f32 0.0, %v7547
        %v7549 = vpop.f32.mrf.mxu0
        %v7550 = vadd.f32 0.0, %v7549
        %7551 = vmatmul.bf16.gmra.mxu0 %v7488
        %v7552 = vpop.f32.mrf.mxu0
        %v7553 = vadd.f32 0.0, %v7552
        %v7554 = vpop.f32.mrf.mxu0
        %v7555 = vadd.f32 0.0, %v7554
        %7556 = vmatmul.bf16.gmra.mxu0 %v7491
        %v7557 = vpop.f32.mrf.mxu0
        %v7558 = vadd.f32 0.0, %v7557
        %v7559 = vpop.f32.mrf.mxu0
        %v7560 = vadd.f32 0.0, %v7559
        %7561 = vmatmul.bf16.gmra.mxu0 %v7494
        %v7562 = vpop.f32.mrf.mxu0
        %v7563 = vadd.f32 0.0, %v7562
        %v7564 = vpop.f32.mrf.mxu0
        %v7565 = vadd.f32 0.0, %v7564
        %7566 = vmatmul.bf16.gmra.mxu0 %v7497
        %v7567 = vpop.f32.mrf.mxu0
        %v7568 = vadd.f32 0.0, %v7567
        %v7569 = vpop.f32.mrf.mxu0
        %v7570 = vadd.f32 0.0, %v7569
        %7571 = vmatmul.bf16.gmra.mxu0 %v7500
        %v7572 = vpop.f32.mrf.mxu0
        %v7573 = vadd.f32 0.0, %v7572
        %v7574 = vpop.f32.mrf.mxu0
        %v7575 = vadd.f32 0.0, %v7574
        %7576 = vmatmul.bf16.gmra.mxu0 %v7503
        %v7577 = vpop.f32.mrf.mxu0
        %v7578 = vadd.f32 0.0, %v7577
        %v7579 = vpop.f32.mrf.mxu0
        %v7580 = vadd.f32 0.0, %v7579
        %7581 = vmatmul.bf16.gmra.mxu0 %v7506
        %v7582 = vpop.f32.mrf.mxu0
        %v7583 = vadd.f32 0.0, %v7582
        %v7584 = vpop.f32.mrf.mxu0
        %v7585 = vadd.f32 0.0, %v7584
        %7586 = vmatmul.bf16.gmra.mxu0 %v7509
        %v7587 = vpop.f32.mrf.mxu0
        %v7588 = vadd.f32 0.0, %v7587
        %v7589 = vpop.f32.mrf.mxu0
        %v7590 = vadd.f32 0.0, %v7589
        %7591 = vmatmul.bf16.gmra.mxu0 %v7512
        %v7592 = vpop.f32.mrf.mxu0
        %v7593 = vadd.f32 0.0, %v7592
        %v7594 = vpop.f32.mrf.mxu0
        %v7595 = vadd.f32 0.0, %v7594
        %7596 = vmatmul.bf16.gmra.mxu0 %v7515
        %v7597 = vpop.f32.mrf.mxu0
        %v7598 = vadd.f32 0.0, %v7597
        %v7599 = vpop.f32.mrf.mxu0
        %v7600 = vadd.f32 0.0, %v7599
        %7601 = vmatmul.bf16.gmra.mxu0 %v7518
        %v7602 = vpop.f32.mrf.mxu0
        %v7603 = vadd.f32 0.0, %v7602
        %v7604 = vpop.f32.mrf.mxu0
        %v7605 = vadd.f32 0.0, %v7604
        %7606 = vmatmul.bf16.gmra.mxu0 %v7521
        %v7607 = vpop.f32.mrf.mxu0
        %v7608 = vadd.f32 0.0, %v7607
        %v7609 = vpop.f32.mrf.mxu0
        %v7610 = vadd.f32 0.0, %v7609
        %7611 = vdwg.mxu0
        %7612 = vmatpush.bf16.msra.mxu0 0
        %7613 = vmatpush.bf16.msra.mxu0 0
        %7614 = vmatpush.bf16.msra.mxu0 %v7440
        %7615 = vmatpush.bf16.msra.mxu0 %v7435
        %7616 = vmatpush.bf16.msra.mxu0 %v7430
        %7617 = vmatpush.bf16.msra.mxu0 %v7425
        %7618 = vmatpush.bf16.msra.mxu0 %v7420
        %7619 = vmatpush.bf16.msra.mxu0 %v7415
        %7620 = vmatmul.bf16.gmra.mxu0 %v7476
        %v7621 = vpop.f32.mrf.mxu0
        %v7622 = vadd.f32 0.0, %v7621
        %v7623 = vpop.f32.mrf.mxu0
        %v7624 = vadd.f32 0.0, %v7623
        %7625 = vmatmul.bf16.gmra.mxu0 %v7479
        %v7626 = vpop.f32.mrf.mxu0
        %v7627 = vadd.f32 0.0, %v7626
        %v7628 = vpop.f32.mrf.mxu0
        %v7629 = vadd.f32 0.0, %v7628
        %7630 = vmatmul.bf16.gmra.mxu0 %v7482
        %v7631 = vpop.f32.mrf.mxu0
        %v7632 = vadd.f32 0.0, %v7631
        %v7633 = vpop.f32.mrf.mxu0
        %v7634 = vadd.f32 0.0, %v7633
        %7635 = vmatmul.bf16.gmra.mxu0 %v7485
        %v7636 = vpop.f32.mrf.mxu0
        %v7637 = vadd.f32 0.0, %v7636
        %v7638 = vpop.f32.mrf.mxu0
        %v7639 = vadd.f32 0.0, %v7638
        %7640 = vmatmul.bf16.gmra.mxu0 %v7488
        %v7641 = vpop.f32.mrf.mxu0
        %v7642 = vadd.f32 0.0, %v7641
        %v7643 = vpop.f32.mrf.mxu0
        %v7644 = vadd.f32 0.0, %v7643
        %7645 = vmatmul.bf16.gmra.mxu0 %v7491
        %v7646 = vpop.f32.mrf.mxu0
        %v7647 = vadd.f32 0.0, %v7646
        %v7648 = vpop.f32.mrf.mxu0
        %v7649 = vadd.f32 0.0, %v7648
        %7650 = vmatmul.bf16.gmra.mxu0 %v7494
        %v7651 = vpop.f32.mrf.mxu0
        %v7652 = vadd.f32 0.0, %v7651
        %v7653 = vpop.f32.mrf.mxu0
        %v7654 = vadd.f32 0.0, %v7653
        %7655 = vmatmul.bf16.gmra.mxu0 %v7497
        %v7656 = vpop.f32.mrf.mxu0
        %v7657 = vadd.f32 0.0, %v7656
        %v7658 = vpop.f32.mrf.mxu0
        %v7659 = vadd.f32 0.0, %v7658
        %7660 = vmatmul.bf16.gmra.mxu0 %v7500
        %v7661 = vpop.f32.mrf.mxu0
        %v7662 = vadd.f32 0.0, %v7661
        %v7663 = vpop.f32.mrf.mxu0
        %v7664 = vadd.f32 0.0, %v7663
        %7665 = vmatmul.bf16.gmra.mxu0 %v7503
        %v7666 = vpop.f32.mrf.mxu0
        %v7667 = vadd.f32 0.0, %v7666
        %v7668 = vpop.f32.mrf.mxu0
        %v7669 = vadd.f32 0.0, %v7668
        %7670 = vmatmul.bf16.gmra.mxu0 %v7506
        %v7671 = vpop.f32.mrf.mxu0
        %v7672 = vadd.f32 0.0, %v7671
        %v7673 = vpop.f32.mrf.mxu0
        %v7674 = vadd.f32 0.0, %v7673
        %7675 = vmatmul.bf16.gmra.mxu0 %v7509
        %v7676 = vpop.f32.mrf.mxu0
        %v7677 = vadd.f32 0.0, %v7676
        %v7678 = vpop.f32.mrf.mxu0
        %v7679 = vadd.f32 0.0, %v7678
        %7680 = vmatmul.bf16.gmra.mxu0 %v7512
        %v7681 = vpop.f32.mrf.mxu0
        %v7682 = vadd.f32 0.0, %v7681
        %v7683 = vpop.f32.mrf.mxu0
        %v7684 = vadd.f32 0.0, %v7683
        %7685 = vmatmul.bf16.gmra.mxu0 %v7515
        %v7686 = vpop.f32.mrf.mxu0
        %v7687 = vadd.f32 0.0, %v7686
        %v7688 = vpop.f32.mrf.mxu0
        %v7689 = vadd.f32 0.0, %v7688
        %7690 = vmatmul.bf16.gmra.mxu0 %v7518
        %v7691 = vpop.f32.mrf.mxu0
        %v7692 = vadd.f32 0.0, %v7691
        %v7693 = vpop.f32.mrf.mxu0
        %v7694 = vadd.f32 0.0, %v7693
        %7695 = vmatmul.bf16.gmra.mxu0 %v7521
        %v7696 = vpop.f32.mrf.mxu0
        %v7697 = vadd.f32 0.0, %v7696
        %v7698 = vpop.f32.mrf.mxu0
        %v7699 = vadd.f32 0.0, %v7698
        %7700 = vdwg.mxu0
        %7701 = vmatpush.bf16.msra.mxu0 0
        %7702 = vmatpush.bf16.msra.mxu0 0
        %7703 = vmatpush.bf16.msra.mxu0 %v7441
        %7704 = vmatpush.bf16.msra.mxu0 %v7436
        %7705 = vmatpush.bf16.msra.mxu0 %v7431
        %7706 = vmatpush.bf16.msra.mxu0 %v7426
        %7707 = vmatpush.bf16.msra.mxu0 %v7421
        %7708 = vmatpush.bf16.msra.mxu0 %v7416
        %7709 = vmatmul.bf16.gmra.mxu0 %v7476
        %v7710 = vpop.f32.mrf.mxu0
        %v7711 = vadd.f32 0.0, %v7710
        %v7712 = vpop.f32.mrf.mxu0
        %v7713 = vadd.f32 0.0, %v7712
        %7714 = vmatmul.bf16.gmra.mxu0 %v7479
        %v7715 = vpop.f32.mrf.mxu0
        %v7716 = vadd.f32 0.0, %v7715
        %v7717 = vpop.f32.mrf.mxu0
        %v7718 = vadd.f32 0.0, %v7717
        %7719 = vmatmul.bf16.gmra.mxu0 %v7482
        %v7720 = vpop.f32.mrf.mxu0
        %v7721 = vadd.f32 0.0, %v7720
        %v7722 = vpop.f32.mrf.mxu0
        %v7723 = vadd.f32 0.0, %v7722
        %7724 = vmatmul.bf16.gmra.mxu0 %v7485
        %v7725 = vpop.f32.mrf.mxu0
        %v7726 = vadd.f32 0.0, %v7725
        %v7727 = vpop.f32.mrf.mxu0
        %v7728 = vadd.f32 0.0, %v7727
        %7729 = vmatmul.bf16.gmra.mxu0 %v7488
        %v7730 = vpop.f32.mrf.mxu0
        %v7731 = vadd.f32 0.0, %v7730
        %v7732 = vpop.f32.mrf.mxu0
        %v7733 = vadd.f32 0.0, %v7732
        %7734 = vmatmul.bf16.gmra.mxu0 %v7491
        %v7735 = vpop.f32.mrf.mxu0
        %v7736 = vadd.f32 0.0, %v7735
        %v7737 = vpop.f32.mrf.mxu0
        %v7738 = vadd.f32 0.0, %v7737
        %7739 = vmatmul.bf16.gmra.mxu0 %v7494
        %v7740 = vpop.f32.mrf.mxu0
        %v7741 = vadd.f32 0.0, %v7740
        %v7742 = vpop.f32.mrf.mxu0
        %v7743 = vadd.f32 0.0, %v7742
        %7744 = vmatmul.bf16.gmra.mxu0 %v7497
        %v7745 = vpop.f32.mrf.mxu0
        %v7746 = vadd.f32 0.0, %v7745
        %v7747 = vpop.f32.mrf.mxu0
        %v7748 = vadd.f32 0.0, %v7747
        %7749 = vmatmul.bf16.gmra.mxu0 %v7500
        %v7750 = vpop.f32.mrf.mxu0
        %v7751 = vadd.f32 0.0, %v7750
        %v7752 = vpop.f32.mrf.mxu0
        %v7753 = vadd.f32 0.0, %v7752
        %7754 = vmatmul.bf16.gmra.mxu0 %v7503
        %v7755 = vpop.f32.mrf.mxu0
        %v7756 = vadd.f32 0.0, %v7755
        %v7757 = vpop.f32.mrf.mxu0
        %v7758 = vadd.f32 0.0, %v7757
        %7759 = vmatmul.bf16.gmra.mxu0 %v7506
        %v7760 = vpop.f32.mrf.mxu0
        %v7761 = vadd.f32 0.0, %v7760
        %v7762 = vpop.f32.mrf.mxu0
        %v7763 = vadd.f32 0.0, %v7762
        %7764 = vmatmul.bf16.gmra.mxu0 %v7509
        %v7765 = vpop.f32.mrf.mxu0
        %v7766 = vadd.f32 0.0, %v7765
        %v7767 = vpop.f32.mrf.mxu0
        %v7768 = vadd.f32 0.0, %v7767
        %7769 = vmatmul.bf16.gmra.mxu0 %v7512
        %v7770 = vpop.f32.mrf.mxu0
        %v7771 = vadd.f32 0.0, %v7770
        %v7772 = vpop.f32.mrf.mxu0
        %v7773 = vadd.f32 0.0, %v7772
        %7774 = vmatmul.bf16.gmra.mxu0 %v7515
        %v7775 = vpop.f32.mrf.mxu0
        %v7776 = vadd.f32 0.0, %v7775
        %v7777 = vpop.f32.mrf.mxu0
        %v7778 = vadd.f32 0.0, %v7777
        %7779 = vmatmul.bf16.gmra.mxu0 %v7518
        %v7780 = vpop.f32.mrf.mxu0
        %v7781 = vadd.f32 0.0, %v7780
        %v7782 = vpop.f32.mrf.mxu0
        %v7783 = vadd.f32 0.0, %v7782
        %7784 = vmatmul.bf16.gmra.mxu0 %v7521
        %v7785 = vpop.f32.mrf.mxu0
        %v7786 = vadd.f32 0.0, %v7785
        %v7787 = vpop.f32.mrf.mxu0
        %v7788 = vadd.f32 0.0, %v7787
        %7789 = vdwg.mxu0
        %7790 = vmatpush.bf16.msra.mxu0 0
        %7791 = vmatpush.bf16.msra.mxu0 0
        %7792 = vmatpush.bf16.msra.mxu0 %v7442
        %7793 = vmatpush.bf16.msra.mxu0 %v7437
        %7794 = vmatpush.bf16.msra.mxu0 %v7432
        %7795 = vmatpush.bf16.msra.mxu0 %v7427
        %7796 = vmatpush.bf16.msra.mxu0 %v7422
        %7797 = vmatpush.bf16.msra.mxu0 %v7417
        %7798 = vmatmul.bf16.gmra.mxu0 %v7476
        %v7799 = vpop.f32.mrf.mxu0
        %v7800 = vadd.f32 0.0, %v7799
        %v7801 = vpop.f32.mrf.mxu0
        %v7802 = vadd.f32 0.0, %v7801
        %7803 = vmatmul.bf16.gmra.mxu0 %v7479
        %v7804 = vpop.f32.mrf.mxu0
        %v7805 = vadd.f32 0.0, %v7804
        %v7806 = vpop.f32.mrf.mxu0
        %v7807 = vadd.f32 0.0, %v7806
        %7808 = vmatmul.bf16.gmra.mxu0 %v7482
        %v7809 = vpop.f32.mrf.mxu0
        %v7810 = vadd.f32 0.0, %v7809
        %v7811 = vpop.f32.mrf.mxu0
        %v7812 = vadd.f32 0.0, %v7811
        %7813 = vmatmul.bf16.gmra.mxu0 %v7485
        %v7814 = vpop.f32.mrf.mxu0
        %v7815 = vadd.f32 0.0, %v7814
        %v7816 = vpop.f32.mrf.mxu0
        %v7817 = vadd.f32 0.0, %v7816
        %7818 = vmatmul.bf16.gmra.mxu0 %v7488
        %v7819 = vpop.f32.mrf.mxu0
        %v7820 = vadd.f32 0.0, %v7819
        %v7821 = vpop.f32.mrf.mxu0
        %v7822 = vadd.f32 0.0, %v7821
        %7823 = vmatmul.bf16.gmra.mxu0 %v7491
        %v7824 = vpop.f32.mrf.mxu0
        %v7825 = vadd.f32 0.0, %v7824
        %v7826 = vpop.f32.mrf.mxu0
        %v7827 = vadd.f32 0.0, %v7826
        %7828 = vmatmul.bf16.gmra.mxu0 %v7494
        %v7829 = vpop.f32.mrf.mxu0
        %v7830 = vadd.f32 0.0, %v7829
        %v7831 = vpop.f32.mrf.mxu0
        %v7832 = vadd.f32 0.0, %v7831
        %7833 = vmatmul.bf16.gmra.mxu0 %v7497
        %v7834 = vpop.f32.mrf.mxu0
        %v7835 = vadd.f32 0.0, %v7834
        %v7836 = vpop.f32.mrf.mxu0
        %v7837 = vadd.f32 0.0, %v7836
        %7838 = vmatmul.bf16.gmra.mxu0 %v7500
        %v7839 = vpop.f32.mrf.mxu0
        %v7840 = vadd.f32 0.0, %v7839
        %v7841 = vpop.f32.mrf.mxu0
        %v7842 = vadd.f32 0.0, %v7841
        %7843 = vmatmul.bf16.gmra.mxu0 %v7503
        %v7844 = vpop.f32.mrf.mxu0
        %v7845 = vadd.f32 0.0, %v7844
        %v7846 = vpop.f32.mrf.mxu0
        %v7847 = vadd.f32 0.0, %v7846
        %7848 = vmatmul.bf16.gmra.mxu0 %v7506
        %v7849 = vpop.f32.mrf.mxu0
        %v7850 = vadd.f32 0.0, %v7849
        %v7851 = vpop.f32.mrf.mxu0
        %v7852 = vadd.f32 0.0, %v7851
        %7853 = vmatmul.bf16.gmra.mxu0 %v7509
        %v7854 = vpop.f32.mrf.mxu0
        %v7855 = vadd.f32 0.0, %v7854
        %v7856 = vpop.f32.mrf.mxu0
        %v7857 = vadd.f32 0.0, %v7856
        %7858 = vmatmul.bf16.gmra.mxu0 %v7512
        %v7859 = vpop.f32.mrf.mxu0
        %v7860 = vadd.f32 0.0, %v7859
        %v7861 = vpop.f32.mrf.mxu0
        %v7862 = vadd.f32 0.0, %v7861
        %7863 = vmatmul.bf16.gmra.mxu0 %v7515
        %v7864 = vpop.f32.mrf.mxu0
        %v7865 = vadd.f32 0.0, %v7864
        %v7866 = vpop.f32.mrf.mxu0
        %v7867 = vadd.f32 0.0, %v7866
        %7868 = vmatmul.bf16.gmra.mxu0 %v7518
        %v7869 = vpop.f32.mrf.mxu0
        %v7870 = vadd.f32 0.0, %v7869
        %v7871 = vpop.f32.mrf.mxu0
        %v7872 = vadd.f32 0.0, %v7871
        %7873 = vmatmul.bf16.gmra.mxu0 %v7521
        %v7874 = vpop.f32.mrf.mxu0
        %v7875 = vadd.f32 0.0, %v7874
        %v7876 = vpop.f32.mrf.mxu0
        %v7877 = vadd.f32 0.0, %v7876
        %7878 = vdwg.mxu0
        %7879 = vmatpush.bf16.msra.mxu0 0
        %7880 = vmatpush.bf16.msra.mxu0 0
        %7881 = vmatpush.bf16.msra.mxu0 %v7443
        %7882 = vmatpush.bf16.msra.mxu0 %v7438
        %7883 = vmatpush.bf16.msra.mxu0 %v7433
        %7884 = vmatpush.bf16.msra.mxu0 %v7428
        %7885 = vmatpush.bf16.msra.mxu0 %v7423
        %7886 = vmatpush.bf16.msra.mxu0 %v7418
        %7887 = vmatmul.bf16.gmra.mxu0 %v7476
        %v7888 = vpop.f32.mrf.mxu0
        %v7889 = vadd.f32 0.0, %v7888
        %v7890 = vpop.f32.mrf.mxu0
        %v7891 = vadd.f32 0.0, %v7890
        %7892 = vmatmul.bf16.gmra.mxu0 %v7479
        %v7893 = vpop.f32.mrf.mxu0
        %v7894 = vadd.f32 0.0, %v7893
        %v7895 = vpop.f32.mrf.mxu0
        %v7896 = vadd.f32 0.0, %v7895
        %7897 = vmatmul.bf16.gmra.mxu0 %v7482
        %v7898 = vpop.f32.mrf.mxu0
        %v7899 = vadd.f32 0.0, %v7898
        %v7900 = vpop.f32.mrf.mxu0
        %v7901 = vadd.f32 0.0, %v7900
        %7902 = vmatmul.bf16.gmra.mxu0 %v7485
        %v7903 = vpop.f32.mrf.mxu0
        %v7904 = vadd.f32 0.0, %v7903
        %v7905 = vpop.f32.mrf.mxu0
        %v7906 = vadd.f32 0.0, %v7905
        %7907 = vmatmul.bf16.gmra.mxu0 %v7488
        %v7908 = vpop.f32.mrf.mxu0
        %v7909 = vadd.f32 0.0, %v7908
        %v7910 = vpop.f32.mrf.mxu0
        %v7911 = vadd.f32 0.0, %v7910
        %7912 = vmatmul.bf16.gmra.mxu0 %v7491
        %v7913 = vpop.f32.mrf.mxu0
        %v7914 = vadd.f32 0.0, %v7913
        %v7915 = vpop.f32.mrf.mxu0
        %v7916 = vadd.f32 0.0, %v7915
        %7917 = vmatmul.bf16.gmra.mxu0 %v7494
        %v7918 = vpop.f32.mrf.mxu0
        %v7919 = vadd.f32 0.0, %v7918
        %v7920 = vpop.f32.mrf.mxu0
        %v7921 = vadd.f32 0.0, %v7920
        %7922 = vmatmul.bf16.gmra.mxu0 %v7497
        %v7923 = vpop.f32.mrf.mxu0
        %v7924 = vadd.f32 0.0, %v7923
        %v7925 = vpop.f32.mrf.mxu0
        %v7926 = vadd.f32 0.0, %v7925
        %7927 = vmatmul.bf16.gmra.mxu0 %v7500
        %v7928 = vpop.f32.mrf.mxu0
        %v7929 = vadd.f32 0.0, %v7928
        %v7930 = vpop.f32.mrf.mxu0
        %v7931 = vadd.f32 0.0, %v7930
        %7932 = vmatmul.bf16.gmra.mxu0 %v7503
        %v7933 = vpop.f32.mrf.mxu0
        %v7934 = vadd.f32 0.0, %v7933
        %v7935 = vpop.f32.mrf.mxu0
        %v7936 = vadd.f32 0.0, %v7935
        %7937 = vmatmul.bf16.gmra.mxu0 %v7506
        %v7938 = vpop.f32.mrf.mxu0
        %v7939 = vadd.f32 0.0, %v7938
        %v7940 = vpop.f32.mrf.mxu0
        %v7941 = vadd.f32 0.0, %v7940
        %7942 = vmatmul.bf16.gmra.mxu0 %v7509
        %v7943 = vpop.f32.mrf.mxu0
        %v7944 = vadd.f32 0.0, %v7943
        %v7945 = vpop.f32.mrf.mxu0
        %v7946 = vadd.f32 0.0, %v7945
        %7947 = vmatmul.bf16.gmra.mxu0 %v7512
        %v7948 = vpop.f32.mrf.mxu0
        %v7949 = vadd.f32 0.0, %v7948
        %v7950 = vpop.f32.mrf.mxu0
        %v7951 = vadd.f32 0.0, %v7950
        %7952 = vmatmul.bf16.gmra.mxu0 %v7515
        %v7953 = vpop.f32.mrf.mxu0
        %v7954 = vadd.f32 0.0, %v7953
        %v7955 = vpop.f32.mrf.mxu0
        %v7956 = vadd.f32 0.0, %v7955
        %7957 = vmatmul.bf16.gmra.mxu0 %v7518
        %v7958 = vpop.f32.mrf.mxu0
        %v7959 = vadd.f32 0.0, %v7958
        %v7960 = vpop.f32.mrf.mxu0
        %v7961 = vadd.f32 0.0, %v7960
        %7962 = vmatmul.bf16.gmra.mxu0 %v7521
        %v7963 = vpop.f32.mrf.mxu0
        %v7964 = vadd.f32 0.0, %v7963
        %v7965 = vpop.f32.mrf.mxu0
        %v7966 = vadd.f32 0.0, %v7965
        %7967 = vdwg.mxu0
        %v7968 = vmul.f32 %v628, %v628
        %v7969 = vmul.f32 %v629, %v629
        %v7970 = vmul.f32 %v630, %v630
        %v7971 = vmul.f32 %v631, %v631
        %v7972 = vmul.f32 %v632, %v632
        %v7973 = vmul.f32 %v633, %v633
        %v7974 = vmul.f32 %v634, %v634
        %v7975 = vmul.f32 %v635, %v635
        %v7976 = vmul.f32 %v636, %v636
        %v7977 = vmul.f32 %v637, %v637
        %v7978 = vmul.f32 %v638, %v638
        %v7979 = vmul.f32 %v639, %v639
        %v7980 = vmul.f32 %v640, %v640
        %v7981 = vmul.f32 %v641, %v641
        %v7982 = vmul.f32 %v642, %v642
        %v7983 = vmul.f32 %v643, %v643
        %v7984 = vmul.f32 %v644, %v644
        %v7985 = vmul.f32 %v645, %v645
        %v7986 = vmul.f32 %v646, %v646
        %v7987 = vmul.f32 %v647, %v647
        %v7988 = vmul.f32 %v648, %v648
        %v7989 = vmul.f32 %v649, %v649
        %v7990 = vmul.f32 %v650, %v650
        %v7991 = vmul.f32 %v651, %v651
        %v7992 = vmul.f32 %v652, %v652
        %v7993 = vmul.f32 %v653, %v653
        %v7994 = vmul.f32 %v654, %v654
        %v7995 = vmul.f32 %v655, %v655
        %v7996 = vmul.f32 %v656, %v656
        %v7997 = vmul.f32 %v657, %v657
        %v7998 = vmul.f32 %v658, %v658
        %v7999 = vmul.f32 %v659, %v659
        %8032 = vrot.lane.b32.xlu0 %v7968, 127
        %v8033 = vpop.permute.xlu0 %8032
        %8034 = vrot.lane.b32.xlu0 %v7969, 127
        %v8035 = vpop.permute.xlu0 %8034
        %8036 = vrot.lane.b32.xlu0 %v7970, 127
        %v8037 = vpop.permute.xlu0 %8036
        %8038 = vrot.lane.b32.xlu0 %v7971, 127
        %v8039 = vpop.permute.xlu0 %8038
        %8040 = vrot.lane.b32.xlu0 %v7972, 127
        %v8041 = vpop.permute.xlu0 %8040
        %8042 = vrot.lane.b32.xlu0 %v7973, 127
        %v8043 = vpop.permute.xlu0 %8042
        %8044 = vrot.lane.b32.xlu0 %v7974, 127
        %v8045 = vpop.permute.xlu0 %8044
        %8046 = vrot.lane.b32.xlu0 %v7975, 127
        %v8047 = vpop.permute.xlu0 %8046
        %8048 = vrot.lane.b32.xlu0 %v7976, 127
        %v8049 = vpop.permute.xlu0 %8048
        %8050 = vrot.lane.b32.xlu0 %v7977, 127
        %v8051 = vpop.permute.xlu0 %8050
        %8052 = vrot.lane.b32.xlu0 %v7978, 127
        %v8053 = vpop.permute.xlu0 %8052
        %8054 = vrot.lane.b32.xlu0 %v7979, 127
        %v8055 = vpop.permute.xlu0 %8054
        %8056 = vrot.lane.b32.xlu0 %v7980, 127
        %v8057 = vpop.permute.xlu0 %8056
        %8058 = vrot.lane.b32.xlu0 %v7981, 127
        %v8059 = vpop.permute.xlu0 %8058
        %8060 = vrot.lane.b32.xlu0 %v7982, 127
        %v8061 = vpop.permute.xlu0 %8060
        %8062 = vrot.lane.b32.xlu0 %v7983, 127
        %v8063 = vpop.permute.xlu0 %8062
        %8064 = vrot.lane.b32.xlu0 %v7984, 127
        %v8065 = vpop.permute.xlu0 %8064
        %8066 = vrot.lane.b32.xlu0 %v7985, 127
        %v8067 = vpop.permute.xlu0 %8066
        %8068 = vrot.lane.b32.xlu0 %v7986, 127
        %v8069 = vpop.permute.xlu0 %8068
        %8070 = vrot.lane.b32.xlu0 %v7987, 127
        %v8071 = vpop.permute.xlu0 %8070
        %8072 = vrot.lane.b32.xlu0 %v7988, 127
        %v8073 = vpop.permute.xlu0 %8072
        %8074 = vrot.lane.b32.xlu0 %v7989, 127
        %v8075 = vpop.permute.xlu0 %8074
        %8076 = vrot.lane.b32.xlu0 %v7990, 127
        %v8077 = vpop.permute.xlu0 %8076
        %8078 = vrot.lane.b32.xlu0 %v7991, 127
        %v8079 = vpop.permute.xlu0 %8078
        %8080 = vrot.lane.b32.xlu0 %v7992, 127
        %v8081 = vpop.permute.xlu0 %8080
        %8082 = vrot.lane.b32.xlu0 %v7993, 127
        %v8083 = vpop.permute.xlu0 %8082
        %8084 = vrot.lane.b32.xlu0 %v7994, 127
        %v8085 = vpop.permute.xlu0 %8084
        %8086 = vrot.lane.b32.xlu0 %v7995, 127
        %v8087 = vpop.permute.xlu0 %8086
        %8088 = vrot.lane.b32.xlu0 %v7996, 127
        %v8089 = vpop.permute.xlu0 %8088
        %8090 = vrot.lane.b32.xlu0 %v7997, 127
        %v8091 = vpop.permute.xlu0 %8090
        %8092 = vrot.lane.b32.xlu0 %v7998, 127
        %v8093 = vpop.permute.xlu0 %8092
        %8094 = vrot.lane.b32.xlu0 %v7999, 127
        %v8095 = vpop.permute.xlu0 %8094
        %vm8128 = vcmask 23552
        %v8129 = vsel %vm8128, %v8033, 0.0
        %8130 = vadd.xlane.f32.xlu0 %v8129
        %v8131 = vpop.xlane.xlu0 %8130
        %v8132 = vsel %vm8128, %v8035, 0.0
        %8133 = vadd.xlane.f32.xlu0 %v8132
        %v8134 = vpop.xlane.xlu0 %8133
        %v8135 = vsel %vm8128, %v8037, 0.0
        %8136 = vadd.xlane.f32.xlu0 %v8135
        %v8137 = vpop.xlane.xlu0 %8136
        %v8138 = vsel %vm8128, %v8039, 0.0
        %8139 = vadd.xlane.f32.xlu0 %v8138
        %v8140 = vpop.xlane.xlu0 %8139
        %v8141 = vsel %vm8128, %v8041, 0.0
        %8142 = vadd.xlane.f32.xlu0 %v8141
        %v8143 = vpop.xlane.xlu0 %8142
        %v8144 = vsel %vm8128, %v8043, 0.0
        %8145 = vadd.xlane.f32.xlu0 %v8144
        %v8146 = vpop.xlane.xlu0 %8145
        %v8147 = vsel %vm8128, %v8045, 0.0
        %8148 = vadd.xlane.f32.xlu0 %v8147
        %v8149 = vpop.xlane.xlu0 %8148
        %v8150 = vsel %vm8128, %v8047, 0.0
        %8151 = vadd.xlane.f32.xlu0 %v8150
        %v8152 = vpop.xlane.xlu0 %8151
        %v8153 = vsel %vm8128, %v8049, 0.0
        %8154 = vadd.xlane.f32.xlu0 %v8153
        %v8155 = vpop.xlane.xlu0 %8154
        %v8156 = vsel %vm8128, %v8051, 0.0
        %8157 = vadd.xlane.f32.xlu0 %v8156
        %v8158 = vpop.xlane.xlu0 %8157
        %v8159 = vsel %vm8128, %v8053, 0.0
        %8160 = vadd.xlane.f32.xlu0 %v8159
        %v8161 = vpop.xlane.xlu0 %8160
        %v8162 = vsel %vm8128, %v8055, 0.0
        %8163 = vadd.xlane.f32.xlu0 %v8162
        %v8164 = vpop.xlane.xlu0 %8163
        %v8165 = vsel %vm8128, %v8057, 0.0
        %8166 = vadd.xlane.f32.xlu0 %v8165
        %v8167 = vpop.xlane.xlu0 %8166
        %v8168 = vsel %vm8128, %v8059, 0.0
        %8169 = vadd.xlane.f32.xlu0 %v8168
        %v8170 = vpop.xlane.xlu0 %8169
        %v8171 = vsel %vm8128, %v8061, 0.0
        %8172 = vadd.xlane.f32.xlu0 %v8171
        %v8173 = vpop.xlane.xlu0 %8172
        %v8174 = vsel %vm8128, %v8063, 0.0
        %8175 = vadd.xlane.f32.xlu0 %v8174
        %v8176 = vpop.xlane.xlu0 %8175
        %v8177 = vsel %vm8128, %v8065, 0.0
        %8178 = vadd.xlane.f32.xlu0 %v8177
        %v8179 = vpop.xlane.xlu0 %8178
        %v8180 = vsel %vm8128, %v8067, 0.0
        %8181 = vadd.xlane.f32.xlu0 %v8180
        %v8182 = vpop.xlane.xlu0 %8181
        %v8183 = vsel %vm8128, %v8069, 0.0
        %8184 = vadd.xlane.f32.xlu0 %v8183
        %v8185 = vpop.xlane.xlu0 %8184
        %v8186 = vsel %vm8128, %v8071, 0.0
        %8187 = vadd.xlane.f32.xlu0 %v8186
        %v8188 = vpop.xlane.xlu0 %8187
        %v8189 = vsel %vm8128, %v8073, 0.0
        %8190 = vadd.xlane.f32.xlu0 %v8189
        %v8191 = vpop.xlane.xlu0 %8190
        %v8192 = vsel %vm8128, %v8075, 0.0
        %8193 = vadd.xlane.f32.xlu0 %v8192
        %v8194 = vpop.xlane.xlu0 %8193
        %v8195 = vsel %vm8128, %v8077, 0.0
        %8196 = vadd.xlane.f32.xlu0 %v8195
        %v8197 = vpop.xlane.xlu0 %8196
        %v8198 = vsel %vm8128, %v8079, 0.0
        %8199 = vadd.xlane.f32.xlu0 %v8198
        %v8200 = vpop.xlane.xlu0 %8199
        %v8201 = vsel %vm8128, %v8081, 0.0
        %8202 = vadd.xlane.f32.xlu0 %v8201
        %v8203 = vpop.xlane.xlu0 %8202
        %v8204 = vsel %vm8128, %v8083, 0.0
        %8205 = vadd.xlane.f32.xlu0 %v8204
        %v8206 = vpop.xlane.xlu0 %8205
        %v8207 = vsel %vm8128, %v8085, 0.0
        %8208 = vadd.xlane.f32.xlu0 %v8207
        %v8209 = vpop.xlane.xlu0 %8208
        %v8210 = vsel %vm8128, %v8087, 0.0
        %8211 = vadd.xlane.f32.xlu0 %v8210
        %v8212 = vpop.xlane.xlu0 %8211
        %v8213 = vsel %vm8128, %v8089, 0.0
        %8214 = vadd.xlane.f32.xlu0 %v8213
        %v8215 = vpop.xlane.xlu0 %8214
        %v8216 = vsel %vm8128, %v8091, 0.0
        %8217 = vadd.xlane.f32.xlu0 %v8216
        %v8218 = vpop.xlane.xlu0 %8217
        %v8219 = vsel %vm8128, %v8093, 0.0
        %8220 = vadd.xlane.f32.xlu0 %v8219
        %v8221 = vpop.xlane.xlu0 %8220
        %v8222 = vsel %vm8128, %v8095, 0.0
        %8223 = vadd.xlane.f32.xlu0 %v8222
        %v8224 = vpop.xlane.xlu0 %8223
        %v8225 = vmul.f32 %v8131, 0.33333334
        %v8226 = vmul.f32 %v8134, 0.33333334
        %v8227 = vmul.f32 %v8137, 0.33333334
        %v8228 = vmul.f32 %v8140, 0.33333334
        %v8229 = vmul.f32 %v8143, 0.33333334
        %v8230 = vmul.f32 %v8146, 0.33333334
        %v8231 = vmul.f32 %v8149, 0.33333334
        %v8232 = vmul.f32 %v8152, 0.33333334
        %v8233 = vmul.f32 %v8155, 0.33333334
        %v8234 = vmul.f32 %v8158, 0.33333334
        %v8235 = vmul.f32 %v8161, 0.33333334
        %v8236 = vmul.f32 %v8164, 0.33333334
        %v8237 = vmul.f32 %v8167, 0.33333334
        %v8238 = vmul.f32 %v8170, 0.33333334
        %v8239 = vmul.f32 %v8173, 0.33333334
        %v8240 = vmul.f32 %v8176, 0.33333334
        %v8241 = vmul.f32 %v8179, 0.33333334
        %v8242 = vmul.f32 %v8182, 0.33333334
        %v8243 = vmul.f32 %v8185, 0.33333334
        %v8244 = vmul.f32 %v8188, 0.33333334
        %v8245 = vmul.f32 %v8191, 0.33333334
        %v8246 = vmul.f32 %v8194, 0.33333334
        %v8247 = vmul.f32 %v8197, 0.33333334
        %v8248 = vmul.f32 %v8200, 0.33333334
        %v8249 = vmul.f32 %v8203, 0.33333334
        %v8250 = vmul.f32 %v8206, 0.33333334
        %v8251 = vmul.f32 %v8209, 0.33333334
        %v8252 = vmul.f32 %v8212, 0.33333334
        %v8253 = vmul.f32 %v8215, 0.33333334
        %v8254 = vmul.f32 %v8218, 0.33333334
        %v8255 = vmul.f32 %v8221, 0.33333334
        %v8256 = vmul.f32 %v8224, 0.33333334
        %8257 = vrot.lane.b32.xlu0 %v628, 127
        %v8258 = vpop.permute.xlu0 %8257
        %8259 = vrot.lane.b32.xlu0 %v629, 127
        %v8260 = vpop.permute.xlu0 %8259
        %8261 = vrot.lane.b32.xlu0 %v630, 127
        %v8262 = vpop.permute.xlu0 %8261
        %8263 = vrot.lane.b32.xlu0 %v631, 127
        %v8264 = vpop.permute.xlu0 %8263
        %8265 = vrot.lane.b32.xlu0 %v632, 127
        %v8266 = vpop.permute.xlu0 %8265
        %8267 = vrot.lane.b32.xlu0 %v633, 127
        %v8268 = vpop.permute.xlu0 %8267
        %8269 = vrot.lane.b32.xlu0 %v634, 127
        %v8270 = vpop.permute.xlu0 %8269
        %8271 = vrot.lane.b32.xlu0 %v635, 127
        %v8272 = vpop.permute.xlu0 %8271
        %8273 = vrot.lane.b32.xlu0 %v636, 127
        %v8274 = vpop.permute.xlu0 %8273
        %8275 = vrot.lane.b32.xlu0 %v637, 127
        %v8276 = vpop.permute.xlu0 %8275
        %8277 = vrot.lane.b32.xlu0 %v638, 127
        %v8278 = vpop.permute.xlu0 %8277
        %8279 = vrot.lane.b32.xlu0 %v639, 127
        %v8280 = vpop.permute.xlu0 %8279
        %8281 = vrot.lane.b32.xlu0 %v640, 127
        %v8282 = vpop.permute.xlu0 %8281
        %8283 = vrot.lane.b32.xlu0 %v641, 127
        %v8284 = vpop.permute.xlu0 %8283
        %8285 = vrot.lane.b32.xlu0 %v642, 127
        %v8286 = vpop.permute.xlu0 %8285
        %8287 = vrot.lane.b32.xlu0 %v643, 127
        %v8288 = vpop.permute.xlu0 %8287
        %8289 = vrot.lane.b32.xlu0 %v644, 127
        %v8290 = vpop.permute.xlu0 %8289
        %8291 = vrot.lane.b32.xlu0 %v645, 127
        %v8292 = vpop.permute.xlu0 %8291
        %8293 = vrot.lane.b32.xlu0 %v646, 127
        %v8294 = vpop.permute.xlu0 %8293
        %8295 = vrot.lane.b32.xlu0 %v647, 127
        %v8296 = vpop.permute.xlu0 %8295
        %8297 = vrot.lane.b32.xlu0 %v648, 127
        %v8298 = vpop.permute.xlu0 %8297
        %8299 = vrot.lane.b32.xlu0 %v649, 127
        %v8300 = vpop.permute.xlu0 %8299
        %8301 = vrot.lane.b32.xlu0 %v650, 127
        %v8302 = vpop.permute.xlu0 %8301
        %8303 = vrot.lane.b32.xlu0 %v651, 127
        %v8304 = vpop.permute.xlu0 %8303
        %8305 = vrot.lane.b32.xlu0 %v652, 127
        %v8306 = vpop.permute.xlu0 %8305
        %8307 = vrot.lane.b32.xlu0 %v653, 127
        %v8308 = vpop.permute.xlu0 %8307
        %8309 = vrot.lane.b32.xlu0 %v654, 127
        %v8310 = vpop.permute.xlu0 %8309
        %8311 = vrot.lane.b32.xlu0 %v655, 127
        %v8312 = vpop.permute.xlu0 %8311
        %8313 = vrot.lane.b32.xlu0 %v656, 127
        %v8314 = vpop.permute.xlu0 %8313
        %8315 = vrot.lane.b32.xlu0 %v657, 127
        %v8316 = vpop.permute.xlu0 %8315
        %8317 = vrot.lane.b32.xlu0 %v658, 127
        %v8318 = vpop.permute.xlu0 %8317
        %8319 = vrot.lane.b32.xlu0 %v659, 127
        %v8320 = vpop.permute.xlu0 %8319
        %v8353 = vsel %vm8128, %v8258, %v8225
        %v8354 = vsel %vm8128, %v8260, %v8226
        %v8355 = vsel %vm8128, %v8262, %v8227
        %v8356 = vsel %vm8128, %v8264, %v8228
        %v8357 = vsel %vm8128, %v8266, %v8229
        %v8358 = vsel %vm8128, %v8268, %v8230
        %v8359 = vsel %vm8128, %v8270, %v8231
        %v8360 = vsel %vm8128, %v8272, %v8232
        %v8361 = vsel %vm8128, %v8274, %v8233
        %v8362 = vsel %vm8128, %v8276, %v8234
        %v8363 = vsel %vm8128, %v8278, %v8235
        %v8364 = vsel %vm8128, %v8280, %v8236
        %v8365 = vsel %vm8128, %v8282, %v8237
        %v8366 = vsel %vm8128, %v8284, %v8238
        %v8367 = vsel %vm8128, %v8286, %v8239
        %v8368 = vsel %vm8128, %v8288, %v8240
        %v8369 = vsel %vm8128, %v8290, %v8241
        %v8370 = vsel %vm8128, %v8292, %v8242
        %v8371 = vsel %vm8128, %v8294, %v8243
        %v8372 = vsel %vm8128, %v8296, %v8244
        %v8373 = vsel %vm8128, %v8298, %v8245
        %v8374 = vsel %vm8128, %v8300, %v8246
        %v8375 = vsel %vm8128, %v8302, %v8247
        %v8376 = vsel %vm8128, %v8304, %v8248
        %v8377 = vsel %vm8128, %v8306, %v8249
        %v8378 = vsel %vm8128, %v8308, %v8250
        %v8379 = vsel %vm8128, %v8310, %v8251
        %v8380 = vsel %vm8128, %v8312, %v8252
        %v8381 = vsel %vm8128, %v8314, %v8253
        %v8382 = vsel %vm8128, %v8316, %v8254
        %v8383 = vsel %vm8128, %v8318, %v8255
        %v8384 = vsel %vm8128, %v8320, %v8256
        %vm8385 = vcmask 31744
        %v8386 = vsel %vm8385, %v8353, 1.0
        %v8387 = vsel %vm8385, %v8354, 1.0
        %v8388 = vsel %vm8385, %v8355, 1.0
        %v8389 = vsel %vm8385, %v8356, 1.0
        %v8390 = vsel %vm8385, %v8357, 1.0
        %v8391 = vsel %vm8385, %v8358, 1.0
        %v8392 = vsel %vm8385, %v8359, 1.0
        %v8393 = vsel %vm8385, %v8360, 1.0
        %v8394 = vsel %vm8385, %v8361, 1.0
        %v8395 = vsel %vm8385, %v8362, 1.0
        %v8396 = vsel %vm8385, %v8363, 1.0
        %v8397 = vsel %vm8385, %v8364, 1.0
        %v8398 = vsel %vm8385, %v8365, 1.0
        %v8399 = vsel %vm8385, %v8366, 1.0
        %v8400 = vsel %vm8385, %v8367, 1.0
        %v8401 = vsel %vm8385, %v8368, 1.0
        %v8402 = vsel %vm8385, %v8369, 1.0
        %v8403 = vsel %vm8385, %v8370, 1.0
        %v8404 = vsel %vm8385, %v8371, 1.0
        %v8405 = vsel %vm8385, %v8372, 1.0
        %v8406 = vsel %vm8385, %v8373, 1.0
        %v8407 = vsel %vm8385, %v8374, 1.0
        %v8408 = vsel %vm8385, %v8375, 1.0
        %v8409 = vsel %vm8385, %v8376, 1.0
        %v8410 = vsel %vm8385, %v8377, 1.0
        %v8411 = vsel %vm8385, %v8378, 1.0
        %v8412 = vsel %vm8385, %v8379, 1.0
        %v8413 = vsel %vm8385, %v8380, 1.0
        %v8414 = vsel %vm8385, %v8381, 1.0
        %v8415 = vsel %vm8385, %v8382, 1.0
        %v8416 = vsel %vm8385, %v8383, 1.0
        %v8417 = vsel %vm8385, %v8384, 1.0
        %v8418 = vld [vmem:[%s10] sm:$0x1f]
        %v8419 = vld [vmem:[%s10 + $0x8] sm:$0x1f]
        %v8420 = vld [vmem:[%s10 + $0x10] sm:$0x1f]
        %v8421 = vld [vmem:[%s10 + $0x18] sm:$0x1f]
        %v8422 = vld [vmem:[%s10 + $0x20] sm:$0x1f]
        %v8423 = vld [vmem:[%s11] sm:$0x77]
        %v8424 = vld [vmem:[%s11 + $0x8] sm:$0x77]
        %v8425 = vld [vmem:[%s11 + $0x10] sm:$0x7]
        %8429 = vst [vmem:[#allocation1] ss:$2 sm:$0xff] %v8423
        %s8430 = scalar_lea.vmem [#allocation1], 16
        %8431 = vst [vmem:[%s8430] ss:$2 sm:$0xff] %v8424
        %s8432 = scalar_lea.vmem [#allocation1], 32
        %8433 = vst [vmem:[%s8432] ss:$2 sm:$0xff] %v8425
        %v8434 = vld.sshfl [vmem:[#allocation1] sm:$0xff pattern:$0x75316420]
        %v8435 = vld.sshfl [vmem:[#allocation1 + $0x8] sm:$0xff pattern:$0x75316420]
        %v8436 = vld.sshfl [vmem:[#allocation1 + $0x10] sm:$0xff pattern:$0x75316420]
        %v8437 = vld.sshfl [vmem:[#allocation1 + $0x18] sm:$0xff pattern:$0x75316420]
        %v8438 = vld.sshfl [vmem:[#allocation1 + $0x20] sm:$0xff pattern:$0x75316420]
        %v8439 = vsel %vm8128, %v8258, 0
        %v8441 = vsel %vm8128, %v8260, 0
        %v8443 = vsel %vm8128, %v8262, 0
        %v8445 = vsel %vm8128, %v8264, 0
        %v8447 = vsel %vm8128, %v8266, 0
        %v8449 = vsel %vm8128, %v8268, 0
        %v8451 = vsel %vm8128, %v8270, 0
        %v8453 = vsel %vm8128, %v8272, 0
        %v8455 = vsel %vm8128, %v8274, 0
        %v8457 = vsel %vm8128, %v8276, 0
        %v8459 = vsel %vm8128, %v8278, 0
        %v8461 = vsel %vm8128, %v8280, 0
        %v8463 = vsel %vm8128, %v8282, 0
        %v8465 = vsel %vm8128, %v8284, 0
        %v8467 = vsel %vm8128, %v8286, 0
        %v8469 = vsel %vm8128, %v8288, 0
        %v8471 = vsel %vm8128, %v8290, 0
        %v8473 = vsel %vm8128, %v8292, 0
        %v8475 = vsel %vm8128, %v8294, 0
        %v8477 = vsel %vm8128, %v8296, 0
        %v8479 = vsel %vm8128, %v8298, 0
        %v8481 = vsel %vm8128, %v8300, 0
        %v8483 = vsel %vm8128, %v8302, 0
        %v8485 = vsel %vm8128, %v8304, 0
        %v8487 = vsel %vm8128, %v8306, 0
        %v8489 = vsel %vm8128, %v8308, 0
        %v8491 = vsel %vm8128, %v8310, 0
        %v8493 = vsel %vm8128, %v8312, 0
        %v8495 = vsel %vm8128, %v8314, 0
        %v8497 = vsel %vm8128, %v8316, 0
        %v8499 = vsel %vm8128, %v8318, 0
        %v8501 = vsel %vm8128, %v8320, 0
        %vm8503 = vcmask 1042432
        %v8504 = vsel %vm8503, %v8434, 0
        %v8506 = vsel %vm8503, %v8435, 0
        %v8508 = vsel %vm8503, %v8436, 0
        %v8510 = vsel %vm8503, %v8437, 0
        %v8512 = vsel %vm8503, %v8438, 0
        %8514 = vmatpush.msra.mxu0 0.0
        %8515 = vmatpush.msra.mxu0 0.0
        %8516 = vmatpush.msra.mxu0 0.0
        %8517 = vmatpush.msra.mxu0 0.0
        %8518 = vmatpush.msra.mxu0 0.0
        %8519 = vmatpush.msra.mxu0 0.0
        %8520 = vmatpush.msra.mxu0 0.0
        %8521 = vmatpush.msra.mxu0 0.0
        %8522 = vmatpush.msra.mxu0 0.0
        %8523 = vmatpush.msra.mxu0 0.0
        %8524 = vmatpush.msra.mxu0 0.0
        %8525 = vmatpush.msra.mxu0 0.0
        %8526 = vmatpush.msra.mxu0 0.0
        %8527 = vmatpush.msra.mxu0 0.0
        %8528 = vmatpush.msra.mxu0 0.0
        %8529 = vmatpush.msra.mxu0 %v8504
        %8530 = vmatmul.f32.gmra.mxu0 %v8439
        %v8531 = vpop.f32.mrf.mxu0
        %v8532 = vadd.f32 0.0, %v8531
        %8533 = vmatmul.f32.gmra.mxu0 %v8441
        %v8534 = vpop.f32.mrf.mxu0
        %v8535 = vadd.f32 0.0, %v8534
        %8536 = vmatmul.f32.gmra.mxu0 %v8443
        %v8537 = vpop.f32.mrf.mxu0
        %v8538 = vadd.f32 0.0, %v8537
        %8539 = vmatmul.f32.gmra.mxu0 %v8445
        %v8540 = vpop.f32.mrf.mxu0
        %v8541 = vadd.f32 0.0, %v8540
        %8542 = vmatmul.f32.gmra.mxu0 %v8447
        %v8543 = vpop.f32.mrf.mxu0
        %v8544 = vadd.f32 0.0, %v8543
        %8545 = vmatmul.f32.gmra.mxu0 %v8449
        %v8546 = vpop.f32.mrf.mxu0
        %v8547 = vadd.f32 0.0, %v8546
        %8548 = vmatmul.f32.gmra.mxu0 %v8451
        %v8549 = vpop.f32.mrf.mxu0
        %v8550 = vadd.f32 0.0, %v8549
        %8551 = vmatmul.f32.gmra.mxu0 %v8453
        %v8552 = vpop.f32.mrf.mxu0
        %v8553 = vadd.f32 0.0, %v8552
        %8554 = vmatmul.f32.gmra.mxu0 %v8455
        %v8555 = vpop.f32.mrf.mxu0
        %v8556 = vadd.f32 0.0, %v8555
        %8557 = vmatmul.f32.gmra.mxu0 %v8457
        %v8558 = vpop.f32.mrf.mxu0
        %v8559 = vadd.f32 0.0, %v8558
        %8560 = vmatmul.f32.gmra.mxu0 %v8459
        %v8561 = vpop.f32.mrf.mxu0
        %v8562 = vadd.f32 0.0, %v8561
        %8563 = vmatmul.f32.gmra.mxu0 %v8461
        %v8564 = vpop.f32.mrf.mxu0
        %v8565 = vadd.f32 0.0, %v8564
        %8566 = vmatmul.f32.gmra.mxu0 %v8463
        %v8567 = vpop.f32.mrf.mxu0
        %v8568 = vadd.f32 0.0, %v8567
        %8569 = vmatmul.f32.gmra.mxu0 %v8465
        %v8570 = vpop.f32.mrf.mxu0
        %v8571 = vadd.f32 0.0, %v8570
        %8572 = vmatmul.f32.gmra.mxu0 %v8467
        %v8573 = vpop.f32.mrf.mxu0
        %v8574 = vadd.f32 0.0, %v8573
        %8575 = vmatmul.f32.gmra.mxu0 %v8469
        %v8576 = vpop.f32.mrf.mxu0
        %v8577 = vadd.f32 0.0, %v8576
        %8578 = vmatmul.f32.gmra.mxu0 %v8471
        %v8579 = vpop.f32.mrf.mxu0
        %v8580 = vadd.f32 0.0, %v8579
        %8581 = vmatmul.f32.gmra.mxu0 %v8473
        %v8582 = vpop.f32.mrf.mxu0
        %v8583 = vadd.f32 0.0, %v8582
        %8584 = vmatmul.f32.gmra.mxu0 %v8475
        %v8585 = vpop.f32.mrf.mxu0
        %v8586 = vadd.f32 0.0, %v8585
        %8587 = vmatmul.f32.gmra.mxu0 %v8477
        %v8588 = vpop.f32.mrf.mxu0
        %v8589 = vadd.f32 0.0, %v8588
        %8590 = vmatmul.f32.gmra.mxu0 %v8479
        %v8591 = vpop.f32.mrf.mxu0
        %v8592 = vadd.f32 0.0, %v8591
        %8593 = vmatmul.f32.gmra.mxu0 %v8481
        %v8594 = vpop.f32.mrf.mxu0
        %v8595 = vadd.f32 0.0, %v8594
        %8596 = vmatmul.f32.gmra.mxu0 %v8483
        %v8597 = vpop.f32.mrf.mxu0
        %v8598 = vadd.f32 0.0, %v8597
        %8599 = vmatmul.f32.gmra.mxu0 %v8485
        %v8600 = vpop.f32.mrf.mxu0
        %v8601 = vadd.f32 0.0, %v8600
        %8602 = vmatmul.f32.gmra.mxu0 %v8487
        %v8603 = vpop.f32.mrf.mxu0
        %v8604 = vadd.f32 0.0, %v8603
        %8605 = vmatmul.f32.gmra.mxu0 %v8489
        %v8606 = vpop.f32.mrf.mxu0
        %v8607 = vadd.f32 0.0, %v8606
        %8608 = vmatmul.f32.gmra.mxu0 %v8491
        %v8609 = vpop.f32.mrf.mxu0
        %v8610 = vadd.f32 0.0, %v8609
        %8611 = vmatmul.f32.gmra.mxu0 %v8493
        %v8612 = vpop.f32.mrf.mxu0
        %v8613 = vadd.f32 0.0, %v8612
        %8614 = vmatmul.f32.gmra.mxu0 %v8495
        %v8615 = vpop.f32.mrf.mxu0
        %v8616 = vadd.f32 0.0, %v8615
        %8617 = vmatmul.f32.gmra.mxu0 %v8497
        %v8618 = vpop.f32.mrf.mxu0
        %v8619 = vadd.f32 0.0, %v8618
        %8620 = vmatmul.f32.gmra.mxu0 %v8499
        %v8621 = vpop.f32.mrf.mxu0
        %v8622 = vadd.f32 0.0, %v8621
        %8623 = vmatmul.f32.gmra.mxu0 %v8501
        %v8624 = vpop.f32.mrf.mxu0
        %v8625 = vadd.f32 0.0, %v8624
        %8626 = vdwg.mxu0
        %8627 = vmatpush.msra.mxu0 0.0
        %8628 = vmatpush.msra.mxu0 0.0
        %8629 = vmatpush.msra.mxu0 0.0
        %8630 = vmatpush.msra.mxu0 0.0
        %8631 = vmatpush.msra.mxu0 0.0
        %8632 = vmatpush.msra.mxu0 0.0
        %8633 = vmatpush.msra.mxu0 0.0
        %8634 = vmatpush.msra.mxu0 0.0
        %8635 = vmatpush.msra.mxu0 0.0
        %8636 = vmatpush.msra.mxu0 0.0
        %8637 = vmatpush.msra.mxu0 0.0
        %8638 = vmatpush.msra.mxu0 0.0
        %8639 = vmatpush.msra.mxu0 0.0
        %8640 = vmatpush.msra.mxu0 0.0
        %8641 = vmatpush.msra.mxu0 0.0
        %8642 = vmatpush.msra.mxu0 %v8506
        %8643 = vmatmul.f32.gmra.mxu0 %v8439
        %v8644 = vpop.f32.mrf.mxu0
        %v8645 = vadd.f32 0.0, %v8644
        %8646 = vmatmul.f32.gmra.mxu0 %v8441
        %v8647 = vpop.f32.mrf.mxu0
        %v8648 = vadd.f32 0.0, %v8647
        %8649 = vmatmul.f32.gmra.mxu0 %v8443
        %v8650 = vpop.f32.mrf.mxu0
        %v8651 = vadd.f32 0.0, %v8650
        %8652 = vmatmul.f32.gmra.mxu0 %v8445
        %v8653 = vpop.f32.mrf.mxu0
        %v8654 = vadd.f32 0.0, %v8653
        %8655 = vmatmul.f32.gmra.mxu0 %v8447
        %v8656 = vpop.f32.mrf.mxu0
        %v8657 = vadd.f32 0.0, %v8656
        %8658 = vmatmul.f32.gmra.mxu0 %v8449
        %v8659 = vpop.f32.mrf.mxu0
        %v8660 = vadd.f32 0.0, %v8659
        %8661 = vmatmul.f32.gmra.mxu0 %v8451
        %v8662 = vpop.f32.mrf.mxu0
        %v8663 = vadd.f32 0.0, %v8662
        %8664 = vmatmul.f32.gmra.mxu0 %v8453
        %v8665 = vpop.f32.mrf.mxu0
        %v8666 = vadd.f32 0.0, %v8665
        %8667 = vmatmul.f32.gmra.mxu0 %v8455
        %v8668 = vpop.f32.mrf.mxu0
        %v8669 = vadd.f32 0.0, %v8668
        %8670 = vmatmul.f32.gmra.mxu0 %v8457
        %v8671 = vpop.f32.mrf.mxu0
        %v8672 = vadd.f32 0.0, %v8671
        %8673 = vmatmul.f32.gmra.mxu0 %v8459
        %v8674 = vpop.f32.mrf.mxu0
        %v8675 = vadd.f32 0.0, %v8674
        %8676 = vmatmul.f32.gmra.mxu0 %v8461
        %v8677 = vpop.f32.mrf.mxu0
        %v8678 = vadd.f32 0.0, %v8677
        %8679 = vmatmul.f32.gmra.mxu0 %v8463
        %v8680 = vpop.f32.mrf.mxu0
        %v8681 = vadd.f32 0.0, %v8680
        %8682 = vmatmul.f32.gmra.mxu0 %v8465
        %v8683 = vpop.f32.mrf.mxu0
        %v8684 = vadd.f32 0.0, %v8683
        %8685 = vmatmul.f32.gmra.mxu0 %v8467
        %v8686 = vpop.f32.mrf.mxu0
        %v8687 = vadd.f32 0.0, %v8686
        %8688 = vmatmul.f32.gmra.mxu0 %v8469
        %v8689 = vpop.f32.mrf.mxu0
        %v8690 = vadd.f32 0.0, %v8689
        %8691 = vmatmul.f32.gmra.mxu0 %v8471
        %v8692 = vpop.f32.mrf.mxu0
        %v8693 = vadd.f32 0.0, %v8692
        %8694 = vmatmul.f32.gmra.mxu0 %v8473
        %v8695 = vpop.f32.mrf.mxu0
        %v8696 = vadd.f32 0.0, %v8695
        %8697 = vmatmul.f32.gmra.mxu0 %v8475
        %v8698 = vpop.f32.mrf.mxu0
        %v8699 = vadd.f32 0.0, %v8698
        %8700 = vmatmul.f32.gmra.mxu0 %v8477
        %v8701 = vpop.f32.mrf.mxu0
        %v8702 = vadd.f32 0.0, %v8701
        %8703 = vmatmul.f32.gmra.mxu0 %v8479
        %v8704 = vpop.f32.mrf.mxu0
        %v8705 = vadd.f32 0.0, %v8704
        %8706 = vmatmul.f32.gmra.mxu0 %v8481
        %v8707 = vpop.f32.mrf.mxu0
        %v8708 = vadd.f32 0.0, %v8707
        %8709 = vmatmul.f32.gmra.mxu0 %v8483
        %v8710 = vpop.f32.mrf.mxu0
        %v8711 = vadd.f32 0.0, %v8710
        %8712 = vmatmul.f32.gmra.mxu0 %v8485
        %v8713 = vpop.f32.mrf.mxu0
        %v8714 = vadd.f32 0.0, %v8713
        %8715 = vmatmul.f32.gmra.mxu0 %v8487
        %v8716 = vpop.f32.mrf.mxu0
        %v8717 = vadd.f32 0.0, %v8716
        %8718 = vmatmul.f32.gmra.mxu0 %v8489
        %v8719 = vpop.f32.mrf.mxu0
        %v8720 = vadd.f32 0.0, %v8719
        %8721 = vmatmul.f32.gmra.mxu0 %v8491
        %v8722 = vpop.f32.mrf.mxu0
        %v8723 = vadd.f32 0.0, %v8722
        %8724 = vmatmul.f32.gmra.mxu0 %v8493
        %v8725 = vpop.f32.mrf.mxu0
        %v8726 = vadd.f32 0.0, %v8725
        %8727 = vmatmul.f32.gmra.mxu0 %v8495
        %v8728 = vpop.f32.mrf.mxu0
        %v8729 = vadd.f32 0.0, %v8728
        %8730 = vmatmul.f32.gmra.mxu0 %v8497
        %v8731 = vpop.f32.mrf.mxu0
        %v8732 = vadd.f32 0.0, %v8731
        %8733 = vmatmul.f32.gmra.mxu0 %v8499
        %v8734 = vpop.f32.mrf.mxu0
        %v8735 = vadd.f32 0.0, %v8734
        %8736 = vmatmul.f32.gmra.mxu0 %v8501
        %v8737 = vpop.f32.mrf.mxu0
        %v8738 = vadd.f32 0.0, %v8737
        %8739 = vdwg.mxu0
        %8740 = vmatpush.msra.mxu0 0.0
        %8741 = vmatpush.msra.mxu0 0.0
        %8742 = vmatpush.msra.mxu0 0.0
        %8743 = vmatpush.msra.mxu0 0.0
        %8744 = vmatpush.msra.mxu0 0.0
        %8745 = vmatpush.msra.mxu0 0.0
        %8746 = vmatpush.msra.mxu0 0.0
        %8747 = vmatpush.msra.mxu0 0.0
        %8748 = vmatpush.msra.mxu0 0.0
        %8749 = vmatpush.msra.mxu0 0.0
        %8750 = vmatpush.msra.mxu0 0.0
        %8751 = vmatpush.msra.mxu0 0.0
        %8752 = vmatpush.msra.mxu0 0.0
        %8753 = vmatpush.msra.mxu0 0.0
        %8754 = vmatpush.msra.mxu0 0.0
        %8755 = vmatpush.msra.mxu0 %v8508
        %8756 = vmatmul.f32.gmra.mxu0 %v8439
        %v8757 = vpop.f32.mrf.mxu0
        %v8758 = vadd.f32 0.0, %v8757
        %8759 = vmatmul.f32.gmra.mxu0 %v8441
        %v8760 = vpop.f32.mrf.mxu0
        %v8761 = vadd.f32 0.0, %v8760
        %8762 = vmatmul.f32.gmra.mxu0 %v8443
        %v8763 = vpop.f32.mrf.mxu0
        %v8764 = vadd.f32 0.0, %v8763
        %8765 = vmatmul.f32.gmra.mxu0 %v8445
        %v8766 = vpop.f32.mrf.mxu0
        %v8767 = vadd.f32 0.0, %v8766
        %8768 = vmatmul.f32.gmra.mxu0 %v8447
        %v8769 = vpop.f32.mrf.mxu0
        %v8770 = vadd.f32 0.0, %v8769
        %8771 = vmatmul.f32.gmra.mxu0 %v8449
        %v8772 = vpop.f32.mrf.mxu0
        %v8773 = vadd.f32 0.0, %v8772
        %8774 = vmatmul.f32.gmra.mxu0 %v8451
        %v8775 = vpop.f32.mrf.mxu0
        %v8776 = vadd.f32 0.0, %v8775
        %8777 = vmatmul.f32.gmra.mxu0 %v8453
        %v8778 = vpop.f32.mrf.mxu0
        %v8779 = vadd.f32 0.0, %v8778
        %8780 = vmatmul.f32.gmra.mxu0 %v8455
        %v8781 = vpop.f32.mrf.mxu0
        %v8782 = vadd.f32 0.0, %v8781
        %8783 = vmatmul.f32.gmra.mxu0 %v8457
        %v8784 = vpop.f32.mrf.mxu0
        %v8785 = vadd.f32 0.0, %v8784
        %8786 = vmatmul.f32.gmra.mxu0 %v8459
        %v8787 = vpop.f32.mrf.mxu0
        %v8788 = vadd.f32 0.0, %v8787
        %8789 = vmatmul.f32.gmra.mxu0 %v8461
        %v8790 = vpop.f32.mrf.mxu0
        %v8791 = vadd.f32 0.0, %v8790
        %8792 = vmatmul.f32.gmra.mxu0 %v8463
        %v8793 = vpop.f32.mrf.mxu0
        %v8794 = vadd.f32 0.0, %v8793
        %8795 = vmatmul.f32.gmra.mxu0 %v8465
        %v8796 = vpop.f32.mrf.mxu0
        %v8797 = vadd.f32 0.0, %v8796
        %8798 = vmatmul.f32.gmra.mxu0 %v8467
        %v8799 = vpop.f32.mrf.mxu0
        %v8800 = vadd.f32 0.0, %v8799
        %8801 = vmatmul.f32.gmra.mxu0 %v8469
        %v8802 = vpop.f32.mrf.mxu0
        %v8803 = vadd.f32 0.0, %v8802
        %8804 = vmatmul.f32.gmra.mxu0 %v8471
        %v8805 = vpop.f32.mrf.mxu0
        %v8806 = vadd.f32 0.0, %v8805
        %8807 = vmatmul.f32.gmra.mxu0 %v8473
        %v8808 = vpop.f32.mrf.mxu0
        %v8809 = vadd.f32 0.0, %v8808
        %8810 = vmatmul.f32.gmra.mxu0 %v8475
        %v8811 = vpop.f32.mrf.mxu0
        %v8812 = vadd.f32 0.0, %v8811
        %8813 = vmatmul.f32.gmra.mxu0 %v8477
        %v8814 = vpop.f32.mrf.mxu0
        %v8815 = vadd.f32 0.0, %v8814
        %8816 = vmatmul.f32.gmra.mxu0 %v8479
        %v8817 = vpop.f32.mrf.mxu0
        %v8818 = vadd.f32 0.0, %v8817
        %8819 = vmatmul.f32.gmra.mxu0 %v8481
        %v8820 = vpop.f32.mrf.mxu0
        %v8821 = vadd.f32 0.0, %v8820
        %8822 = vmatmul.f32.gmra.mxu0 %v8483
        %v8823 = vpop.f32.mrf.mxu0
        %v8824 = vadd.f32 0.0, %v8823
        %8825 = vmatmul.f32.gmra.mxu0 %v8485
        %v8826 = vpop.f32.mrf.mxu0
        %v8827 = vadd.f32 0.0, %v8826
        %8828 = vmatmul.f32.gmra.mxu0 %v8487
        %v8829 = vpop.f32.mrf.mxu0
        %v8830 = vadd.f32 0.0, %v8829
        %8831 = vmatmul.f32.gmra.mxu0 %v8489
        %v8832 = vpop.f32.mrf.mxu0
        %v8833 = vadd.f32 0.0, %v8832
        %8834 = vmatmul.f32.gmra.mxu0 %v8491
        %v8835 = vpop.f32.mrf.mxu0
        %v8836 = vadd.f32 0.0, %v8835
        %8837 = vmatmul.f32.gmra.mxu0 %v8493
        %v8838 = vpop.f32.mrf.mxu0
        %v8839 = vadd.f32 0.0, %v8838
        %8840 = vmatmul.f32.gmra.mxu0 %v8495
        %v8841 = vpop.f32.mrf.mxu0
        %v8842 = vadd.f32 0.0, %v8841
        %8843 = vmatmul.f32.gmra.mxu0 %v8497
        %v8844 = vpop.f32.mrf.mxu0
        %v8845 = vadd.f32 0.0, %v8844
        %8846 = vmatmul.f32.gmra.mxu0 %v8499
        %v8847 = vpop.f32.mrf.mxu0
        %v8848 = vadd.f32 0.0, %v8847
        %8849 = vmatmul.f32.gmra.mxu0 %v8501
        %v8850 = vpop.f32.mrf.mxu0
        %v8851 = vadd.f32 0.0, %v8850
        %8852 = vdwg.mxu0
        %8853 = vmatpush.msra.mxu0 0.0
        %8854 = vmatpush.msra.mxu0 0.0
        %8855 = vmatpush.msra.mxu0 0.0
        %8856 = vmatpush.msra.mxu0 0.0
        %8857 = vmatpush.msra.mxu0 0.0
        %8858 = vmatpush.msra.mxu0 0.0
        %8859 = vmatpush.msra.mxu0 0.0
        %8860 = vmatpush.msra.mxu0 0.0
        %8861 = vmatpush.msra.mxu0 0.0
        %8862 = vmatpush.msra.mxu0 0.0
        %8863 = vmatpush.msra.mxu0 0.0
        %8864 = vmatpush.msra.mxu0 0.0
        %8865 = vmatpush.msra.mxu0 0.0
        %8866 = vmatpush.msra.mxu0 0.0
        %8867 = vmatpush.msra.mxu0 0.0
        %8868 = vmatpush.msra.mxu0 %v8510
        %8869 = vmatmul.f32.gmra.mxu0 %v8439
        %v8870 = vpop.f32.mrf.mxu0
        %v8871 = vadd.f32 0.0, %v8870
        %8872 = vmatmul.f32.gmra.mxu0 %v8441
        %v8873 = vpop.f32.mrf.mxu0
        %v8874 = vadd.f32 0.0, %v8873
        %8875 = vmatmul.f32.gmra.mxu0 %v8443
        %v8876 = vpop.f32.mrf.mxu0
        %v8877 = vadd.f32 0.0, %v8876
        %8878 = vmatmul.f32.gmra.mxu0 %v8445
        %v8879 = vpop.f32.mrf.mxu0
        %v8880 = vadd.f32 0.0, %v8879
        %8881 = vmatmul.f32.gmra.mxu0 %v8447
        %v8882 = vpop.f32.mrf.mxu0
        %v8883 = vadd.f32 0.0, %v8882
        %8884 = vmatmul.f32.gmra.mxu0 %v8449
        %v8885 = vpop.f32.mrf.mxu0
        %v8886 = vadd.f32 0.0, %v8885
        %8887 = vmatmul.f32.gmra.mxu0 %v8451
        %v8888 = vpop.f32.mrf.mxu0
        %v8889 = vadd.f32 0.0, %v8888
        %8890 = vmatmul.f32.gmra.mxu0 %v8453
        %v8891 = vpop.f32.mrf.mxu0
        %v8892 = vadd.f32 0.0, %v8891
        %8893 = vmatmul.f32.gmra.mxu0 %v8455
        %v8894 = vpop.f32.mrf.mxu0
        %v8895 = vadd.f32 0.0, %v8894
        %8896 = vmatmul.f32.gmra.mxu0 %v8457
        %v8897 = vpop.f32.mrf.mxu0
        %v8898 = vadd.f32 0.0, %v8897
        %8899 = vmatmul.f32.gmra.mxu0 %v8459
        %v8900 = vpop.f32.mrf.mxu0
        %v8901 = vadd.f32 0.0, %v8900
        %8902 = vmatmul.f32.gmra.mxu0 %v8461
        %v8903 = vpop.f32.mrf.mxu0
        %v8904 = vadd.f32 0.0, %v8903
        %8905 = vmatmul.f32.gmra.mxu0 %v8463
        %v8906 = vpop.f32.mrf.mxu0
        %v8907 = vadd.f32 0.0, %v8906
        %8908 = vmatmul.f32.gmra.mxu0 %v8465
        %v8909 = vpop.f32.mrf.mxu0
        %v8910 = vadd.f32 0.0, %v8909
        %8911 = vmatmul.f32.gmra.mxu0 %v8467
        %v8912 = vpop.f32.mrf.mxu0
        %v8913 = vadd.f32 0.0, %v8912
        %8914 = vmatmul.f32.gmra.mxu0 %v8469
        %v8915 = vpop.f32.mrf.mxu0
        %v8916 = vadd.f32 0.0, %v8915
        %8917 = vmatmul.f32.gmra.mxu0 %v8471
        %v8918 = vpop.f32.mrf.mxu0
        %v8919 = vadd.f32 0.0, %v8918
        %8920 = vmatmul.f32.gmra.mxu0 %v8473
        %v8921 = vpop.f32.mrf.mxu0
        %v8922 = vadd.f32 0.0, %v8921
        %8923 = vmatmul.f32.gmra.mxu0 %v8475
        %v8924 = vpop.f32.mrf.mxu0
        %v8925 = vadd.f32 0.0, %v8924
        %8926 = vmatmul.f32.gmra.mxu0 %v8477
        %v8927 = vpop.f32.mrf.mxu0
        %v8928 = vadd.f32 0.0, %v8927
        %8929 = vmatmul.f32.gmra.mxu0 %v8479
        %v8930 = vpop.f32.mrf.mxu0
        %v8931 = vadd.f32 0.0, %v8930
        %8932 = vmatmul.f32.gmra.mxu0 %v8481
        %v8933 = vpop.f32.mrf.mxu0
        %v8934 = vadd.f32 0.0, %v8933
        %8935 = vmatmul.f32.gmra.mxu0 %v8483
        %v8936 = vpop.f32.mrf.mxu0
        %v8937 = vadd.f32 0.0, %v8936
        %8938 = vmatmul.f32.gmra.mxu0 %v8485
        %v8939 = vpop.f32.mrf.mxu0
        %v8940 = vadd.f32 0.0, %v8939
        %8941 = vmatmul.f32.gmra.mxu0 %v8487
        %v8942 = vpop.f32.mrf.mxu0
        %v8943 = vadd.f32 0.0, %v8942
        %8944 = vmatmul.f32.gmra.mxu0 %v8489
        %v8945 = vpop.f32.mrf.mxu0
        %v8946 = vadd.f32 0.0, %v8945
        %8947 = vmatmul.f32.gmra.mxu0 %v8491
        %v8948 = vpop.f32.mrf.mxu0
        %v8949 = vadd.f32 0.0, %v8948
        %8950 = vmatmul.f32.gmra.mxu0 %v8493
        %v8951 = vpop.f32.mrf.mxu0
        %v8952 = vadd.f32 0.0, %v8951
        %8953 = vmatmul.f32.gmra.mxu0 %v8495
        %v8954 = vpop.f32.mrf.mxu0
        %v8955 = vadd.f32 0.0, %v8954
        %8956 = vmatmul.f32.gmra.mxu0 %v8497
        %v8957 = vpop.f32.mrf.mxu0
        %v8958 = vadd.f32 0.0, %v8957
        %8959 = vmatmul.f32.gmra.mxu0 %v8499
        %v8960 = vpop.f32.mrf.mxu0
        %v8961 = vadd.f32 0.0, %v8960
        %8962 = vmatmul.f32.gmra.mxu0 %v8501
        %v8963 = vpop.f32.mrf.mxu0
        %v8964 = vadd.f32 0.0, %v8963
        %8965 = vdwg.mxu0
        %8966 = vmatpush.msra.mxu0 0.0
        %8967 = vmatpush.msra.mxu0 0.0
        %8968 = vmatpush.msra.mxu0 0.0
        %8969 = vmatpush.msra.mxu0 0.0
        %8970 = vmatpush.msra.mxu0 0.0
        %8971 = vmatpush.msra.mxu0 0.0
        %8972 = vmatpush.msra.mxu0 0.0
        %8973 = vmatpush.msra.mxu0 0.0
        %8974 = vmatpush.msra.mxu0 0.0
        %8975 = vmatpush.msra.mxu0 0.0
        %8976 = vmatpush.msra.mxu0 0.0
        %8977 = vmatpush.msra.mxu0 0.0
        %8978 = vmatpush.msra.mxu0 0.0
        %8979 = vmatpush.msra.mxu0 0.0
        %8980 = vmatpush.msra.mxu0 0.0
        %8981 = vmatpush.msra.mxu0 %v8512
        %8982 = vmatmul.f32.gmra.mxu0 %v8439
        %v8983 = vpop.f32.mrf.mxu0
        %v8984 = vadd.f32 0.0, %v8983
        %8985 = vmatmul.f32.gmra.mxu0 %v8441
        %v8986 = vpop.f32.mrf.mxu0
        %v8987 = vadd.f32 0.0, %v8986
        %8988 = vmatmul.f32.gmra.mxu0 %v8443
        %v8989 = vpop.f32.mrf.mxu0
        %v8990 = vadd.f32 0.0, %v8989
        %8991 = vmatmul.f32.gmra.mxu0 %v8445
        %v8992 = vpop.f32.mrf.mxu0
        %v8993 = vadd.f32 0.0, %v8992
        %8994 = vmatmul.f32.gmra.mxu0 %v8447
        %v8995 = vpop.f32.mrf.mxu0
        %v8996 = vadd.f32 0.0, %v8995
        %8997 = vmatmul.f32.gmra.mxu0 %v8449
        %v8998 = vpop.f32.mrf.mxu0
        %v8999 = vadd.f32 0.0, %v8998
        %9000 = vmatmul.f32.gmra.mxu0 %v8451
        %v9001 = vpop.f32.mrf.mxu0
        %v9002 = vadd.f32 0.0, %v9001
        %9003 = vmatmul.f32.gmra.mxu0 %v8453
        %v9004 = vpop.f32.mrf.mxu0
        %v9005 = vadd.f32 0.0, %v9004
        %9006 = vmatmul.f32.gmra.mxu0 %v8455
        %v9007 = vpop.f32.mrf.mxu0
        %v9008 = vadd.f32 0.0, %v9007
        %9009 = vmatmul.f32.gmra.mxu0 %v8457
        %v9010 = vpop.f32.mrf.mxu0
        %v9011 = vadd.f32 0.0, %v9010
        %9012 = vmatmul.f32.gmra.mxu0 %v8459
        %v9013 = vpop.f32.mrf.mxu0
        %v9014 = vadd.f32 0.0, %v9013
        %9015 = vmatmul.f32.gmra.mxu0 %v8461
        %v9016 = vpop.f32.mrf.mxu0
        %v9017 = vadd.f32 0.0, %v9016
        %9018 = vmatmul.f32.gmra.mxu0 %v8463
        %v9019 = vpop.f32.mrf.mxu0
        %v9020 = vadd.f32 0.0, %v9019
        %9021 = vmatmul.f32.gmra.mxu0 %v8465
        %v9022 = vpop.f32.mrf.mxu0
        %v9023 = vadd.f32 0.0, %v9022
        %9024 = vmatmul.f32.gmra.mxu0 %v8467
        %v9025 = vpop.f32.mrf.mxu0
        %v9026 = vadd.f32 0.0, %v9025
        %9027 = vmatmul.f32.gmra.mxu0 %v8469
        %v9028 = vpop.f32.mrf.mxu0
        %v9029 = vadd.f32 0.0, %v9028
        %9030 = vmatmul.f32.gmra.mxu0 %v8471
        %v9031 = vpop.f32.mrf.mxu0
        %v9032 = vadd.f32 0.0, %v9031
        %9033 = vmatmul.f32.gmra.mxu0 %v8473
        %v9034 = vpop.f32.mrf.mxu0
        %v9035 = vadd.f32 0.0, %v9034
        %9036 = vmatmul.f32.gmra.mxu0 %v8475
        %v9037 = vpop.f32.mrf.mxu0
        %v9038 = vadd.f32 0.0, %v9037
        %9039 = vmatmul.f32.gmra.mxu0 %v8477
        %v9040 = vpop.f32.mrf.mxu0
        %v9041 = vadd.f32 0.0, %v9040
        %9042 = vmatmul.f32.gmra.mxu0 %v8479
        %v9043 = vpop.f32.mrf.mxu0
        %v9044 = vadd.f32 0.0, %v9043
        %9045 = vmatmul.f32.gmra.mxu0 %v8481
        %v9046 = vpop.f32.mrf.mxu0
        %v9047 = vadd.f32 0.0, %v9046
        %9048 = vmatmul.f32.gmra.mxu0 %v8483
        %v9049 = vpop.f32.mrf.mxu0
        %v9050 = vadd.f32 0.0, %v9049
        %9051 = vmatmul.f32.gmra.mxu0 %v8485
        %v9052 = vpop.f32.mrf.mxu0
        %v9053 = vadd.f32 0.0, %v9052
        %9054 = vmatmul.f32.gmra.mxu0 %v8487
        %v9055 = vpop.f32.mrf.mxu0
        %v9056 = vadd.f32 0.0, %v9055
        %9057 = vmatmul.f32.gmra.mxu0 %v8489
        %v9058 = vpop.f32.mrf.mxu0
        %v9059 = vadd.f32 0.0, %v9058
        %9060 = vmatmul.f32.gmra.mxu0 %v8491
        %v9061 = vpop.f32.mrf.mxu0
        %v9062 = vadd.f32 0.0, %v9061
        %9063 = vmatmul.f32.gmra.mxu0 %v8493
        %v9064 = vpop.f32.mrf.mxu0
        %v9065 = vadd.f32 0.0, %v9064
        %9066 = vmatmul.f32.gmra.mxu0 %v8495
        %v9067 = vpop.f32.mrf.mxu0
        %v9068 = vadd.f32 0.0, %v9067
        %9069 = vmatmul.f32.gmra.mxu0 %v8497
        %v9070 = vpop.f32.mrf.mxu0
        %v9071 = vadd.f32 0.0, %v9070
        %9072 = vmatmul.f32.gmra.mxu0 %v8499
        %v9073 = vpop.f32.mrf.mxu0
        %v9074 = vadd.f32 0.0, %v9073
        %9075 = vmatmul.f32.gmra.mxu0 %v8501
        %v9076 = vpop.f32.mrf.mxu0
        %v9077 = vadd.f32 0.0, %v9076
        %9078 = vdwg.mxu0
        %v9079 = vld [vmem:[%s12] sm:$0x77]
        %v9080 = vld [vmem:[%s12 + $0x8] sm:$0x77]
        %v9081 = vld [vmem:[%s12 + $0x10] sm:$0x7]
        %9085 = vst [vmem:[#allocation1] ss:$2 sm:$0xff] %v9079
        %s9086 = scalar_lea.vmem [#allocation1], 16
        %9087 = vst [vmem:[%s9086] ss:$2 sm:$0xff] %v9080
        %s9088 = scalar_lea.vmem [#allocation1], 32
        %9089 = vst [vmem:[%s9088] ss:$2 sm:$0xff] %v9081
        %v9090 = vld.sshfl [vmem:[#allocation1] sm:$0xff pattern:$0x75316420]
        %v9091 = vld.sshfl [vmem:[#allocation1 + $0x8] sm:$0xff pattern:$0x75316420]
        %v9092 = vld.sshfl [vmem:[#allocation1 + $0x10] sm:$0xff pattern:$0x75316420]
        %v9093 = vld.sshfl [vmem:[#allocation1 + $0x18] sm:$0xff pattern:$0x75316420]
        %v9094 = vld.sshfl [vmem:[#allocation1 + $0x20] sm:$0xff pattern:$0x75316420]
        %v9095 = vsel %vm8503, %v9090, 0
        %v9097 = vsel %vm8503, %v9091, 0
        %v9099 = vsel %vm8503, %v9092, 0
        %v9101 = vsel %vm8503, %v9093, 0
        %v9103 = vsel %vm8503, %v9094, 0
        %9105 = vmatpush.msra.mxu0 0.0
        %9106 = vmatpush.msra.mxu0 0.0
        %9107 = vmatpush.msra.mxu0 0.0
        %9108 = vmatpush.msra.mxu0 0.0
        %9109 = vmatpush.msra.mxu0 0.0
        %9110 = vmatpush.msra.mxu0 0.0
        %9111 = vmatpush.msra.mxu0 0.0
        %9112 = vmatpush.msra.mxu0 0.0
        %9113 = vmatpush.msra.mxu0 0.0
        %9114 = vmatpush.msra.mxu0 0.0
        %9115 = vmatpush.msra.mxu0 0.0
        %9116 = vmatpush.msra.mxu0 0.0
        %9117 = vmatpush.msra.mxu0 0.0
        %9118 = vmatpush.msra.mxu0 0.0
        %9119 = vmatpush.msra.mxu0 0.0
        %9120 = vmatpush.msra.mxu0 %v9095
        %9121 = vmatmul.f32.gmra.mxu0 %v8439
        %v9122 = vpop.f32.mrf.mxu0
        %v9123 = vadd.f32 0.0, %v9122
        %9124 = vmatmul.f32.gmra.mxu0 %v8441
        %v9125 = vpop.f32.mrf.mxu0
        %v9126 = vadd.f32 0.0, %v9125
        %9127 = vmatmul.f32.gmra.mxu0 %v8443
        %v9128 = vpop.f32.mrf.mxu0
        %v9129 = vadd.f32 0.0, %v9128
        %9130 = vmatmul.f32.gmra.mxu0 %v8445
        %v9131 = vpop.f32.mrf.mxu0
        %v9132 = vadd.f32 0.0, %v9131
        %9133 = vmatmul.f32.gmra.mxu0 %v8447
        %v9134 = vpop.f32.mrf.mxu0
        %v9135 = vadd.f32 0.0, %v9134
        %9136 = vmatmul.f32.gmra.mxu0 %v8449
        %v9137 = vpop.f32.mrf.mxu0
        %v9138 = vadd.f32 0.0, %v9137
        %9139 = vmatmul.f32.gmra.mxu0 %v8451
        %v9140 = vpop.f32.mrf.mxu0
        %v9141 = vadd.f32 0.0, %v9140
        %9142 = vmatmul.f32.gmra.mxu0 %v8453
        %v9143 = vpop.f32.mrf.mxu0
        %v9144 = vadd.f32 0.0, %v9143
        %9145 = vmatmul.f32.gmra.mxu0 %v8455
        %v9146 = vpop.f32.mrf.mxu0
        %v9147 = vadd.f32 0.0, %v9146
        %9148 = vmatmul.f32.gmra.mxu0 %v8457
        %v9149 = vpop.f32.mrf.mxu0
        %v9150 = vadd.f32 0.0, %v9149
        %9151 = vmatmul.f32.gmra.mxu0 %v8459
        %v9152 = vpop.f32.mrf.mxu0
        %v9153 = vadd.f32 0.0, %v9152
        %9154 = vmatmul.f32.gmra.mxu0 %v8461
        %v9155 = vpop.f32.mrf.mxu0
        %v9156 = vadd.f32 0.0, %v9155
        %9157 = vmatmul.f32.gmra.mxu0 %v8463
        %v9158 = vpop.f32.mrf.mxu0
        %v9159 = vadd.f32 0.0, %v9158
        %9160 = vmatmul.f32.gmra.mxu0 %v8465
        %v9161 = vpop.f32.mrf.mxu0
        %v9162 = vadd.f32 0.0, %v9161
        %9163 = vmatmul.f32.gmra.mxu0 %v8467
        %v9164 = vpop.f32.mrf.mxu0
        %v9165 = vadd.f32 0.0, %v9164
        %9166 = vmatmul.f32.gmra.mxu0 %v8469
        %v9167 = vpop.f32.mrf.mxu0
        %v9168 = vadd.f32 0.0, %v9167
        %9169 = vmatmul.f32.gmra.mxu0 %v8471
        %v9170 = vpop.f32.mrf.mxu0
        %v9171 = vadd.f32 0.0, %v9170
        %9172 = vmatmul.f32.gmra.mxu0 %v8473
        %v9173 = vpop.f32.mrf.mxu0
        %v9174 = vadd.f32 0.0, %v9173
        %9175 = vmatmul.f32.gmra.mxu0 %v8475
        %v9176 = vpop.f32.mrf.mxu0
        %v9177 = vadd.f32 0.0, %v9176
        %9178 = vmatmul.f32.gmra.mxu0 %v8477
        %v9179 = vpop.f32.mrf.mxu0
        %v9180 = vadd.f32 0.0, %v9179
        %9181 = vmatmul.f32.gmra.mxu0 %v8479
        %v9182 = vpop.f32.mrf.mxu0
        %v9183 = vadd.f32 0.0, %v9182
        %9184 = vmatmul.f32.gmra.mxu0 %v8481
        %v9185 = vpop.f32.mrf.mxu0
        %v9186 = vadd.f32 0.0, %v9185
        %9187 = vmatmul.f32.gmra.mxu0 %v8483
        %v9188 = vpop.f32.mrf.mxu0
        %v9189 = vadd.f32 0.0, %v9188
        %9190 = vmatmul.f32.gmra.mxu0 %v8485
        %v9191 = vpop.f32.mrf.mxu0
        %v9192 = vadd.f32 0.0, %v9191
        %9193 = vmatmul.f32.gmra.mxu0 %v8487
        %v9194 = vpop.f32.mrf.mxu0
        %v9195 = vadd.f32 0.0, %v9194
        %9196 = vmatmul.f32.gmra.mxu0 %v8489
        %v9197 = vpop.f32.mrf.mxu0
        %v9198 = vadd.f32 0.0, %v9197
        %9199 = vmatmul.f32.gmra.mxu0 %v8491
        %v9200 = vpop.f32.mrf.mxu0
        %v9201 = vadd.f32 0.0, %v9200
        %9202 = vmatmul.f32.gmra.mxu0 %v8493
        %v9203 = vpop.f32.mrf.mxu0
        %v9204 = vadd.f32 0.0, %v9203
        %9205 = vmatmul.f32.gmra.mxu0 %v8495
        %v9206 = vpop.f32.mrf.mxu0
        %v9207 = vadd.f32 0.0, %v9206
        %9208 = vmatmul.f32.gmra.mxu0 %v8497
        %v9209 = vpop.f32.mrf.mxu0
        %v9210 = vadd.f32 0.0, %v9209
        %9211 = vmatmul.f32.gmra.mxu0 %v8499
        %v9212 = vpop.f32.mrf.mxu0
        %v9213 = vadd.f32 0.0, %v9212
        %9214 = vmatmul.f32.gmra.mxu0 %v8501
        %v9215 = vpop.f32.mrf.mxu0
        %v9216 = vadd.f32 0.0, %v9215
        %9217 = vdwg.mxu0
        %9218 = vmatpush.msra.mxu0 0.0
        %9219 = vmatpush.msra.mxu0 0.0
        %9220 = vmatpush.msra.mxu0 0.0
        %9221 = vmatpush.msra.mxu0 0.0
        %9222 = vmatpush.msra.mxu0 0.0
        %9223 = vmatpush.msra.mxu0 0.0
        %9224 = vmatpush.msra.mxu0 0.0
        %9225 = vmatpush.msra.mxu0 0.0
        %9226 = vmatpush.msra.mxu0 0.0
        %9227 = vmatpush.msra.mxu0 0.0
        %9228 = vmatpush.msra.mxu0 0.0
        %9229 = vmatpush.msra.mxu0 0.0
        %9230 = vmatpush.msra.mxu0 0.0
        %9231 = vmatpush.msra.mxu0 0.0
        %9232 = vmatpush.msra.mxu0 0.0
        %9233 = vmatpush.msra.mxu0 %v9097
        %9234 = vmatmul.f32.gmra.mxu0 %v8439
        %v9235 = vpop.f32.mrf.mxu0
        %v9236 = vadd.f32 0.0, %v9235
        %9237 = vmatmul.f32.gmra.mxu0 %v8441
        %v9238 = vpop.f32.mrf.mxu0
        %v9239 = vadd.f32 0.0, %v9238
        %9240 = vmatmul.f32.gmra.mxu0 %v8443
        %v9241 = vpop.f32.mrf.mxu0
        %v9242 = vadd.f32 0.0, %v9241
        %9243 = vmatmul.f32.gmra.mxu0 %v8445
        %v9244 = vpop.f32.mrf.mxu0
        %v9245 = vadd.f32 0.0, %v9244
        %9246 = vmatmul.f32.gmra.mxu0 %v8447
        %v9247 = vpop.f32.mrf.mxu0
        %v9248 = vadd.f32 0.0, %v9247
        %9249 = vmatmul.f32.gmra.mxu0 %v8449
        %v9250 = vpop.f32.mrf.mxu0
        %v9251 = vadd.f32 0.0, %v9250
        %9252 = vmatmul.f32.gmra.mxu0 %v8451
        %v9253 = vpop.f32.mrf.mxu0
        %v9254 = vadd.f32 0.0, %v9253
        %9255 = vmatmul.f32.gmra.mxu0 %v8453
        %v9256 = vpop.f32.mrf.mxu0
        %v9257 = vadd.f32 0.0, %v9256
        %9258 = vmatmul.f32.gmra.mxu0 %v8455
        %v9259 = vpop.f32.mrf.mxu0
        %v9260 = vadd.f32 0.0, %v9259
        %9261 = vmatmul.f32.gmra.mxu0 %v8457
        %v9262 = vpop.f32.mrf.mxu0
        %v9263 = vadd.f32 0.0, %v9262
        %9264 = vmatmul.f32.gmra.mxu0 %v8459
        %v9265 = vpop.f32.mrf.mxu0
        %v9266 = vadd.f32 0.0, %v9265
        %9267 = vmatmul.f32.gmra.mxu0 %v8461
        %v9268 = vpop.f32.mrf.mxu0
        %v9269 = vadd.f32 0.0, %v9268
        %9270 = vmatmul.f32.gmra.mxu0 %v8463
        %v9271 = vpop.f32.mrf.mxu0
        %v9272 = vadd.f32 0.0, %v9271
        %9273 = vmatmul.f32.gmra.mxu0 %v8465
        %v9274 = vpop.f32.mrf.mxu0
        %v9275 = vadd.f32 0.0, %v9274
        %9276 = vmatmul.f32.gmra.mxu0 %v8467
        %v9277 = vpop.f32.mrf.mxu0
        %v9278 = vadd.f32 0.0, %v9277
        %9279 = vmatmul.f32.gmra.mxu0 %v8469
        %v9280 = vpop.f32.mrf.mxu0
        %v9281 = vadd.f32 0.0, %v9280
        %9282 = vmatmul.f32.gmra.mxu0 %v8471
        %v9283 = vpop.f32.mrf.mxu0
        %v9284 = vadd.f32 0.0, %v9283
        %9285 = vmatmul.f32.gmra.mxu0 %v8473
        %v9286 = vpop.f32.mrf.mxu0
        %v9287 = vadd.f32 0.0, %v9286
        %9288 = vmatmul.f32.gmra.mxu0 %v8475
        %v9289 = vpop.f32.mrf.mxu0
        %v9290 = vadd.f32 0.0, %v9289
        %9291 = vmatmul.f32.gmra.mxu0 %v8477
        %v9292 = vpop.f32.mrf.mxu0
        %v9293 = vadd.f32 0.0, %v9292
        %9294 = vmatmul.f32.gmra.mxu0 %v8479
        %v9295 = vpop.f32.mrf.mxu0
        %v9296 = vadd.f32 0.0, %v9295
        %9297 = vmatmul.f32.gmra.mxu0 %v8481
        %v9298 = vpop.f32.mrf.mxu0
        %v9299 = vadd.f32 0.0, %v9298
        %9300 = vmatmul.f32.gmra.mxu0 %v8483
        %v9301 = vpop.f32.mrf.mxu0
        %v9302 = vadd.f32 0.0, %v9301
        %9303 = vmatmul.f32.gmra.mxu0 %v8485
        %v9304 = vpop.f32.mrf.mxu0
        %v9305 = vadd.f32 0.0, %v9304
        %9306 = vmatmul.f32.gmra.mxu0 %v8487
        %v9307 = vpop.f32.mrf.mxu0
        %v9308 = vadd.f32 0.0, %v9307
        %9309 = vmatmul.f32.gmra.mxu0 %v8489
        %v9310 = vpop.f32.mrf.mxu0
        %v9311 = vadd.f32 0.0, %v9310
        %9312 = vmatmul.f32.gmra.mxu0 %v8491
        %v9313 = vpop.f32.mrf.mxu0
        %v9314 = vadd.f32 0.0, %v9313
        %9315 = vmatmul.f32.gmra.mxu0 %v8493
        %v9316 = vpop.f32.mrf.mxu0
        %v9317 = vadd.f32 0.0, %v9316
        %9318 = vmatmul.f32.gmra.mxu0 %v8495
        %v9319 = vpop.f32.mrf.mxu0
        %v9320 = vadd.f32 0.0, %v9319
        %9321 = vmatmul.f32.gmra.mxu0 %v8497
        %v9322 = vpop.f32.mrf.mxu0
        %v9323 = vadd.f32 0.0, %v9322
        %9324 = vmatmul.f32.gmra.mxu0 %v8499
        %v9325 = vpop.f32.mrf.mxu0
        %v9326 = vadd.f32 0.0, %v9325
        %9327 = vmatmul.f32.gmra.mxu0 %v8501
        %v9328 = vpop.f32.mrf.mxu0
        %v9329 = vadd.f32 0.0, %v9328
        %9330 = vdwg.mxu0
        %9331 = vmatpush.msra.mxu0 0.0
        %9332 = vmatpush.msra.mxu0 0.0
        %9333 = vmatpush.msra.mxu0 0.0
        %9334 = vmatpush.msra.mxu0 0.0
        %9335 = vmatpush.msra.mxu0 0.0
        %9336 = vmatpush.msra.mxu0 0.0
        %9337 = vmatpush.msra.mxu0 0.0
        %9338 = vmatpush.msra.mxu0 0.0
        %9339 = vmatpush.msra.mxu0 0.0
        %9340 = vmatpush.msra.mxu0 0.0
        %9341 = vmatpush.msra.mxu0 0.0
        %9342 = vmatpush.msra.mxu0 0.0
        %9343 = vmatpush.msra.mxu0 0.0
        %9344 = vmatpush.msra.mxu0 0.0
        %9345 = vmatpush.msra.mxu0 0.0
        %9346 = vmatpush.msra.mxu0 %v9099
        %9347 = vmatmul.f32.gmra.mxu0 %v8439
        %v9348 = vpop.f32.mrf.mxu0
        %v9349 = vadd.f32 0.0, %v9348
        %9350 = vmatmul.f32.gmra.mxu0 %v8441
        %v9351 = vpop.f32.mrf.mxu0
        %v9352 = vadd.f32 0.0, %v9351
        %9353 = vmatmul.f32.gmra.mxu0 %v8443
        %v9354 = vpop.f32.mrf.mxu0
        %v9355 = vadd.f32 0.0, %v9354
        %9356 = vmatmul.f32.gmra.mxu0 %v8445
        %v9357 = vpop.f32.mrf.mxu0
        %v9358 = vadd.f32 0.0, %v9357
        %9359 = vmatmul.f32.gmra.mxu0 %v8447
        %v9360 = vpop.f32.mrf.mxu0
        %v9361 = vadd.f32 0.0, %v9360
        %9362 = vmatmul.f32.gmra.mxu0 %v8449
        %v9363 = vpop.f32.mrf.mxu0
        %v9364 = vadd.f32 0.0, %v9363
        %9365 = vmatmul.f32.gmra.mxu0 %v8451
        %v9366 = vpop.f32.mrf.mxu0
        %v9367 = vadd.f32 0.0, %v9366
        %9368 = vmatmul.f32.gmra.mxu0 %v8453
        %v9369 = vpop.f32.mrf.mxu0
        %v9370 = vadd.f32 0.0, %v9369
        %9371 = vmatmul.f32.gmra.mxu0 %v8455
        %v9372 = vpop.f32.mrf.mxu0
        %v9373 = vadd.f32 0.0, %v9372
        %9374 = vmatmul.f32.gmra.mxu0 %v8457
        %v9375 = vpop.f32.mrf.mxu0
        %v9376 = vadd.f32 0.0, %v9375
        %9377 = vmatmul.f32.gmra.mxu0 %v8459
        %v9378 = vpop.f32.mrf.mxu0
        %v9379 = vadd.f32 0.0, %v9378
        %9380 = vmatmul.f32.gmra.mxu0 %v8461
        %v9381 = vpop.f32.mrf.mxu0
        %v9382 = vadd.f32 0.0, %v9381
        %9383 = vmatmul.f32.gmra.mxu0 %v8463
        %v9384 = vpop.f32.mrf.mxu0
        %v9385 = vadd.f32 0.0, %v9384
        %9386 = vmatmul.f32.gmra.mxu0 %v8465
        %v9387 = vpop.f32.mrf.mxu0
        %v9388 = vadd.f32 0.0, %v9387
        %9389 = vmatmul.f32.gmra.mxu0 %v8467
        %v9390 = vpop.f32.mrf.mxu0
        %v9391 = vadd.f32 0.0, %v9390
        %9392 = vmatmul.f32.gmra.mxu0 %v8469
        %v9393 = vpop.f32.mrf.mxu0
        %v9394 = vadd.f32 0.0, %v9393
        %9395 = vmatmul.f32.gmra.mxu0 %v8471
        %v9396 = vpop.f32.mrf.mxu0
        %v9397 = vadd.f32 0.0, %v9396
        %9398 = vmatmul.f32.gmra.mxu0 %v8473
        %v9399 = vpop.f32.mrf.mxu0
        %v9400 = vadd.f32 0.0, %v9399
        %9401 = vmatmul.f32.gmra.mxu0 %v8475
        %v9402 = vpop.f32.mrf.mxu0
        %v9403 = vadd.f32 0.0, %v9402
        %9404 = vmatmul.f32.gmra.mxu0 %v8477
        %v9405 = vpop.f32.mrf.mxu0
        %v9406 = vadd.f32 0.0, %v9405
        %9407 = vmatmul.f32.gmra.mxu0 %v8479
        %v9408 = vpop.f32.mrf.mxu0
        %v9409 = vadd.f32 0.0, %v9408
        %9410 = vmatmul.f32.gmra.mxu0 %v8481
        %v9411 = vpop.f32.mrf.mxu0
        %v9412 = vadd.f32 0.0, %v9411
        %9413 = vmatmul.f32.gmra.mxu0 %v8483
        %v9414 = vpop.f32.mrf.mxu0
        %v9415 = vadd.f32 0.0, %v9414
        %9416 = vmatmul.f32.gmra.mxu0 %v8485
        %v9417 = vpop.f32.mrf.mxu0
        %v9418 = vadd.f32 0.0, %v9417
        %9419 = vmatmul.f32.gmra.mxu0 %v8487
        %v9420 = vpop.f32.mrf.mxu0
        %v9421 = vadd.f32 0.0, %v9420
        %9422 = vmatmul.f32.gmra.mxu0 %v8489
        %v9423 = vpop.f32.mrf.mxu0
        %v9424 = vadd.f32 0.0, %v9423
        %9425 = vmatmul.f32.gmra.mxu0 %v8491
        %v9426 = vpop.f32.mrf.mxu0
        %v9427 = vadd.f32 0.0, %v9426
        %9428 = vmatmul.f32.gmra.mxu0 %v8493
        %v9429 = vpop.f32.mrf.mxu0
        %v9430 = vadd.f32 0.0, %v9429
        %9431 = vmatmul.f32.gmra.mxu0 %v8495
        %v9432 = vpop.f32.mrf.mxu0
        %v9433 = vadd.f32 0.0, %v9432
        %9434 = vmatmul.f32.gmra.mxu0 %v8497
        %v9435 = vpop.f32.mrf.mxu0
        %v9436 = vadd.f32 0.0, %v9435
        %9437 = vmatmul.f32.gmra.mxu0 %v8499
        %v9438 = vpop.f32.mrf.mxu0
        %v9439 = vadd.f32 0.0, %v9438
        %9440 = vmatmul.f32.gmra.mxu0 %v8501
        %v9441 = vpop.f32.mrf.mxu0
        %v9442 = vadd.f32 0.0, %v9441
        %9443 = vdwg.mxu0
        %9444 = vmatpush.msra.mxu0 0.0
        %9445 = vmatpush.msra.mxu0 0.0
        %9446 = vmatpush.msra.mxu0 0.0
        %9447 = vmatpush.msra.mxu0 0.0
        %9448 = vmatpush.msra.mxu0 0.0
        %9449 = vmatpush.msra.mxu0 0.0
        %9450 = vmatpush.msra.mxu0 0.0
        %9451 = vmatpush.msra.mxu0 0.0
        %9452 = vmatpush.msra.mxu0 0.0
        %9453 = vmatpush.msra.mxu0 0.0
        %9454 = vmatpush.msra.mxu0 0.0
        %9455 = vmatpush.msra.mxu0 0.0
        %9456 = vmatpush.msra.mxu0 0.0
        %9457 = vmatpush.msra.mxu0 0.0
        %9458 = vmatpush.msra.mxu0 0.0
        %9459 = vmatpush.msra.mxu0 %v9101
        %9460 = vmatmul.f32.gmra.mxu0 %v8439
        %v9461 = vpop.f32.mrf.mxu0
        %v9462 = vadd.f32 0.0, %v9461
        %9463 = vmatmul.f32.gmra.mxu0 %v8441
        %v9464 = vpop.f32.mrf.mxu0
        %v9465 = vadd.f32 0.0, %v9464
        %9466 = vmatmul.f32.gmra.mxu0 %v8443
        %v9467 = vpop.f32.mrf.mxu0
        %v9468 = vadd.f32 0.0, %v9467
        %9469 = vmatmul.f32.gmra.mxu0 %v8445
        %v9470 = vpop.f32.mrf.mxu0
        %v9471 = vadd.f32 0.0, %v9470
        %9472 = vmatmul.f32.gmra.mxu0 %v8447
        %v9473 = vpop.f32.mrf.mxu0
        %v9474 = vadd.f32 0.0, %v9473
        %9475 = vmatmul.f32.gmra.mxu0 %v8449
        %v9476 = vpop.f32.mrf.mxu0
        %v9477 = vadd.f32 0.0, %v9476
        %9478 = vmatmul.f32.gmra.mxu0 %v8451
        %v9479 = vpop.f32.mrf.mxu0
        %v9480 = vadd.f32 0.0, %v9479
        %9481 = vmatmul.f32.gmra.mxu0 %v8453
        %v9482 = vpop.f32.mrf.mxu0
        %v9483 = vadd.f32 0.0, %v9482
        %9484 = vmatmul.f32.gmra.mxu0 %v8455
        %v9485 = vpop.f32.mrf.mxu0
        %v9486 = vadd.f32 0.0, %v9485
        %9487 = vmatmul.f32.gmra.mxu0 %v8457
        %v9488 = vpop.f32.mrf.mxu0
        %v9489 = vadd.f32 0.0, %v9488
        %9490 = vmatmul.f32.gmra.mxu0 %v8459
        %v9491 = vpop.f32.mrf.mxu0
        %v9492 = vadd.f32 0.0, %v9491
        %9493 = vmatmul.f32.gmra.mxu0 %v8461
        %v9494 = vpop.f32.mrf.mxu0
        %v9495 = vadd.f32 0.0, %v9494
        %9496 = vmatmul.f32.gmra.mxu0 %v8463
        %v9497 = vpop.f32.mrf.mxu0
        %v9498 = vadd.f32 0.0, %v9497
        %9499 = vmatmul.f32.gmra.mxu0 %v8465
        %v9500 = vpop.f32.mrf.mxu0
        %v9501 = vadd.f32 0.0, %v9500
        %9502 = vmatmul.f32.gmra.mxu0 %v8467
        %v9503 = vpop.f32.mrf.mxu0
        %v9504 = vadd.f32 0.0, %v9503
        %9505 = vmatmul.f32.gmra.mxu0 %v8469
        %v9506 = vpop.f32.mrf.mxu0
        %v9507 = vadd.f32 0.0, %v9506
        %9508 = vmatmul.f32.gmra.mxu0 %v8471
        %v9509 = vpop.f32.mrf.mxu0
        %v9510 = vadd.f32 0.0, %v9509
        %9511 = vmatmul.f32.gmra.mxu0 %v8473
        %v9512 = vpop.f32.mrf.mxu0
        %v9513 = vadd.f32 0.0, %v9512
        %9514 = vmatmul.f32.gmra.mxu0 %v8475
        %v9515 = vpop.f32.mrf.mxu0
        %v9516 = vadd.f32 0.0, %v9515
        %9517 = vmatmul.f32.gmra.mxu0 %v8477
        %v9518 = vpop.f32.mrf.mxu0
        %v9519 = vadd.f32 0.0, %v9518
        %9520 = vmatmul.f32.gmra.mxu0 %v8479
        %v9521 = vpop.f32.mrf.mxu0
        %v9522 = vadd.f32 0.0, %v9521
        %9523 = vmatmul.f32.gmra.mxu0 %v8481
        %v9524 = vpop.f32.mrf.mxu0
        %v9525 = vadd.f32 0.0, %v9524
        %9526 = vmatmul.f32.gmra.mxu0 %v8483
        %v9527 = vpop.f32.mrf.mxu0
        %v9528 = vadd.f32 0.0, %v9527
        %9529 = vmatmul.f32.gmra.mxu0 %v8485
        %v9530 = vpop.f32.mrf.mxu0
        %v9531 = vadd.f32 0.0, %v9530
        %9532 = vmatmul.f32.gmra.mxu0 %v8487
        %v9533 = vpop.f32.mrf.mxu0
        %v9534 = vadd.f32 0.0, %v9533
        %9535 = vmatmul.f32.gmra.mxu0 %v8489
        %v9536 = vpop.f32.mrf.mxu0
        %v9537 = vadd.f32 0.0, %v9536
        %9538 = vmatmul.f32.gmra.mxu0 %v8491
        %v9539 = vpop.f32.mrf.mxu0
        %v9540 = vadd.f32 0.0, %v9539
        %9541 = vmatmul.f32.gmra.mxu0 %v8493
        %v9542 = vpop.f32.mrf.mxu0
        %v9543 = vadd.f32 0.0, %v9542
        %9544 = vmatmul.f32.gmra.mxu0 %v8495
        %v9545 = vpop.f32.mrf.mxu0
        %v9546 = vadd.f32 0.0, %v9545
        %9547 = vmatmul.f32.gmra.mxu0 %v8497
        %v9548 = vpop.f32.mrf.mxu0
        %v9549 = vadd.f32 0.0, %v9548
        %9550 = vmatmul.f32.gmra.mxu0 %v8499
        %v9551 = vpop.f32.mrf.mxu0
        %v9552 = vadd.f32 0.0, %v9551
        %9553 = vmatmul.f32.gmra.mxu0 %v8501
        %v9554 = vpop.f32.mrf.mxu0
        %v9555 = vadd.f32 0.0, %v9554
        %9556 = vdwg.mxu0
        %9557 = vmatpush.msra.mxu0 0.0
        %9558 = vmatpush.msra.mxu0 0.0
        %9559 = vmatpush.msra.mxu0 0.0
        %9560 = vmatpush.msra.mxu0 0.0
        %9561 = vmatpush.msra.mxu0 0.0
        %9562 = vmatpush.msra.mxu0 0.0
        %9563 = vmatpush.msra.mxu0 0.0
        %9564 = vmatpush.msra.mxu0 0.0
        %9565 = vmatpush.msra.mxu0 0.0
        %9566 = vmatpush.msra.mxu0 0.0
        %9567 = vmatpush.msra.mxu0 0.0
        %9568 = vmatpush.msra.mxu0 0.0
        %9569 = vmatpush.msra.mxu0 0.0
        %9570 = vmatpush.msra.mxu0 0.0
        %9571 = vmatpush.msra.mxu0 0.0
        %9572 = vmatpush.msra.mxu0 %v9103
        %9573 = vmatmul.f32.gmra.mxu0 %v8439
        %v9574 = vpop.f32.mrf.mxu0
        %v9575 = vadd.f32 0.0, %v9574
        %9576 = vmatmul.f32.gmra.mxu0 %v8441
        %v9577 = vpop.f32.mrf.mxu0
        %v9578 = vadd.f32 0.0, %v9577
        %9579 = vmatmul.f32.gmra.mxu0 %v8443
        %v9580 = vpop.f32.mrf.mxu0
        %v9581 = vadd.f32 0.0, %v9580
        %9582 = vmatmul.f32.gmra.mxu0 %v8445
        %v9583 = vpop.f32.mrf.mxu0
        %v9584 = vadd.f32 0.0, %v9583
        %9585 = vmatmul.f32.gmra.mxu0 %v8447
        %v9586 = vpop.f32.mrf.mxu0
        %v9587 = vadd.f32 0.0, %v9586
        %9588 = vmatmul.f32.gmra.mxu0 %v8449
        %v9589 = vpop.f32.mrf.mxu0
        %v9590 = vadd.f32 0.0, %v9589
        %9591 = vmatmul.f32.gmra.mxu0 %v8451
        %v9592 = vpop.f32.mrf.mxu0
        %v9593 = vadd.f32 0.0, %v9592
        %9594 = vmatmul.f32.gmra.mxu0 %v8453
        %v9595 = vpop.f32.mrf.mxu0
        %v9596 = vadd.f32 0.0, %v9595
        %9597 = vmatmul.f32.gmra.mxu0 %v8455
        %v9598 = vpop.f32.mrf.mxu0
        %v9599 = vadd.f32 0.0, %v9598
        %9600 = vmatmul.f32.gmra.mxu0 %v8457
        %v9601 = vpop.f32.mrf.mxu0
        %v9602 = vadd.f32 0.0, %v9601
        %9603 = vmatmul.f32.gmra.mxu0 %v8459
        %v9604 = vpop.f32.mrf.mxu0
        %v9605 = vadd.f32 0.0, %v9604
        %9606 = vmatmul.f32.gmra.mxu0 %v8461
        %v9607 = vpop.f32.mrf.mxu0
        %v9608 = vadd.f32 0.0, %v9607
        %9609 = vmatmul.f32.gmra.mxu0 %v8463
        %v9610 = vpop.f32.mrf.mxu0
        %v9611 = vadd.f32 0.0, %v9610
        %9612 = vmatmul.f32.gmra.mxu0 %v8465
        %v9613 = vpop.f32.mrf.mxu0
        %v9614 = vadd.f32 0.0, %v9613
        %9615 = vmatmul.f32.gmra.mxu0 %v8467
        %v9616 = vpop.f32.mrf.mxu0
        %v9617 = vadd.f32 0.0, %v9616
        %9618 = vmatmul.f32.gmra.mxu0 %v8469
        %v9619 = vpop.f32.mrf.mxu0
        %v9620 = vadd.f32 0.0, %v9619
        %9621 = vmatmul.f32.gmra.mxu0 %v8471
        %v9622 = vpop.f32.mrf.mxu0
        %v9623 = vadd.f32 0.0, %v9622
        %9624 = vmatmul.f32.gmra.mxu0 %v8473
        %v9625 = vpop.f32.mrf.mxu0
        %v9626 = vadd.f32 0.0, %v9625
        %9627 = vmatmul.f32.gmra.mxu0 %v8475
        %v9628 = vpop.f32.mrf.mxu0
        %v9629 = vadd.f32 0.0, %v9628
        %9630 = vmatmul.f32.gmra.mxu0 %v8477
        %v9631 = vpop.f32.mrf.mxu0
        %v9632 = vadd.f32 0.0, %v9631
        %9633 = vmatmul.f32.gmra.mxu0 %v8479
        %v9634 = vpop.f32.mrf.mxu0
        %v9635 = vadd.f32 0.0, %v9634
        %9636 = vmatmul.f32.gmra.mxu0 %v8481
        %v9637 = vpop.f32.mrf.mxu0
        %v9638 = vadd.f32 0.0, %v9637
        %9639 = vmatmul.f32.gmra.mxu0 %v8483
        %v9640 = vpop.f32.mrf.mxu0
        %v9641 = vadd.f32 0.0, %v9640
        %9642 = vmatmul.f32.gmra.mxu0 %v8485
        %v9643 = vpop.f32.mrf.mxu0
        %v9644 = vadd.f32 0.0, %v9643
        %9645 = vmatmul.f32.gmra.mxu0 %v8487
        %v9646 = vpop.f32.mrf.mxu0
        %v9647 = vadd.f32 0.0, %v9646
        %9648 = vmatmul.f32.gmra.mxu0 %v8489
        %v9649 = vpop.f32.mrf.mxu0
        %v9650 = vadd.f32 0.0, %v9649
        %9651 = vmatmul.f32.gmra.mxu0 %v8491
        %v9652 = vpop.f32.mrf.mxu0
        %v9653 = vadd.f32 0.0, %v9652
        %9654 = vmatmul.f32.gmra.mxu0 %v8493
        %v9655 = vpop.f32.mrf.mxu0
        %v9656 = vadd.f32 0.0, %v9655
        %9657 = vmatmul.f32.gmra.mxu0 %v8495
        %v9658 = vpop.f32.mrf.mxu0
        %v9659 = vadd.f32 0.0, %v9658
        %9660 = vmatmul.f32.gmra.mxu0 %v8497
        %v9661 = vpop.f32.mrf.mxu0
        %v9662 = vadd.f32 0.0, %v9661
        %9663 = vmatmul.f32.gmra.mxu0 %v8499
        %v9664 = vpop.f32.mrf.mxu0
        %v9665 = vadd.f32 0.0, %v9664
        %9666 = vmatmul.f32.gmra.mxu0 %v8501
        %v9667 = vpop.f32.mrf.mxu0
        %v9668 = vadd.f32 0.0, %v9667
        %9669 = vdwg.mxu0
        %v9670 = vmul.f32 %v8532, %v9123
        %v9671 = vmul.f32 %v8645, %v9236
        %v9672 = vmul.f32 %v8758, %v9349
        %v9673 = vmul.f32 %v8871, %v9462
        %v9674 = vmul.f32 %v8984, %v9575
        %v9675 = vmul.f32 %v8535, %v9126
        %v9676 = vmul.f32 %v8648, %v9239
        %v9677 = vmul.f32 %v8761, %v9352
        %v9678 = vmul.f32 %v8874, %v9465
        %v9679 = vmul.f32 %v8987, %v9578
        %v9680 = vmul.f32 %v8538, %v9129
        %v9681 = vmul.f32 %v8651, %v9242
        %v9682 = vmul.f32 %v8764, %v9355
        %v9683 = vmul.f32 %v8877, %v9468
        %v9684 = vmul.f32 %v8990, %v9581
        %v9685 = vmul.f32 %v8541, %v9132
        %v9686 = vmul.f32 %v8654, %v9245
        %v9687 = vmul.f32 %v8767, %v9358
        %v9688 = vmul.f32 %v8880, %v9471
        %v9689 = vmul.f32 %v8993, %v9584
        %v9690 = vmul.f32 %v8544, %v9135
        %v9691 = vmul.f32 %v8657, %v9248
        %v9692 = vmul.f32 %v8770, %v9361
        %v9693 = vmul.f32 %v8883, %v9474
        %v9694 = vmul.f32 %v8996, %v9587
        %v9695 = vmul.f32 %v8547, %v9138
        %v9696 = vmul.f32 %v8660, %v9251
        %v9697 = vmul.f32 %v8773, %v9364
        %v9698 = vmul.f32 %v8886, %v9477
        %v9699 = vmul.f32 %v8999, %v9590
        %v9700 = vmul.f32 %v8550, %v9141
        %v9701 = vmul.f32 %v8663, %v9254
        %v9702 = vmul.f32 %v8776, %v9367
        %v9703 = vmul.f32 %v8889, %v9480
        %v9704 = vmul.f32 %v9002, %v9593
        %v9705 = vmul.f32 %v8553, %v9144
        %v9706 = vmul.f32 %v8666, %v9257
        %v9707 = vmul.f32 %v8779, %v9370
        %v9708 = vmul.f32 %v8892, %v9483
        %v9709 = vmul.f32 %v9005, %v9596
        %v9710 = vmul.f32 %v8556, %v9147
        %v9711 = vmul.f32 %v8669, %v9260
        %v9712 = vmul.f32 %v8782, %v9373
        %v9713 = vmul.f32 %v8895, %v9486
        %v9714 = vmul.f32 %v9008, %v9599
        %v9715 = vmul.f32 %v8559, %v9150
        %v9716 = vmul.f32 %v8672, %v9263
        %v9717 = vmul.f32 %v8785, %v9376
        %v9718 = vmul.f32 %v8898, %v9489
        %v9719 = vmul.f32 %v9011, %v9602
        %v9720 = vmul.f32 %v8562, %v9153
        %v9721 = vmul.f32 %v8675, %v9266
        %v9722 = vmul.f32 %v8788, %v9379
        %v9723 = vmul.f32 %v8901, %v9492
        %v9724 = vmul.f32 %v9014, %v9605
        %v9725 = vmul.f32 %v8565, %v9156
        %v9726 = vmul.f32 %v8678, %v9269
        %v9727 = vmul.f32 %v8791, %v9382
        %v9728 = vmul.f32 %v8904, %v9495
        %v9729 = vmul.f32 %v9017, %v9608
        %v9730 = vmul.f32 %v8568, %v9159
        %v9731 = vmul.f32 %v8681, %v9272
        %v9732 = vmul.f32 %v8794, %v9385
        %v9733 = vmul.f32 %v8907, %v9498
        %v9734 = vmul.f32 %v9020, %v9611
        %v9735 = vmul.f32 %v8571, %v9162
        %v9736 = vmul.f32 %v8684, %v9275
        %v9737 = vmul.f32 %v8797, %v9388
        %v9738 = vmul.f32 %v8910, %v9501
        %v9739 = vmul.f32 %v9023, %v9614
        %v9740 = vmul.f32 %v8574, %v9165
        %v9741 = vmul.f32 %v8687, %v9278
        %v9742 = vmul.f32 %v8800, %v9391
        %v9743 = vmul.f32 %v8913, %v9504
        %v9744 = vmul.f32 %v9026, %v9617
        %v9745 = vmul.f32 %v8577, %v9168
        %v9746 = vmul.f32 %v8690, %v9281
        %v9747 = vmul.f32 %v8803, %v9394
        %v9748 = vmul.f32 %v8916, %v9507
        %v9749 = vmul.f32 %v9029, %v9620
        %v9750 = vmul.f32 %v8580, %v9171
        %v9751 = vmul.f32 %v8693, %v9284
        %v9752 = vmul.f32 %v8806, %v9397
        %v9753 = vmul.f32 %v8919, %v9510
        %v9754 = vmul.f32 %v9032, %v9623
        %v9755 = vmul.f32 %v8583, %v9174
        %v9756 = vmul.f32 %v8696, %v9287
        %v9757 = vmul.f32 %v8809, %v9400
        %v9758 = vmul.f32 %v8922, %v9513
        %v9759 = vmul.f32 %v9035, %v9626
        %v9760 = vmul.f32 %v8586, %v9177
        %v9761 = vmul.f32 %v8699, %v9290
        %v9762 = vmul.f32 %v8812, %v9403
        %v9763 = vmul.f32 %v8925, %v9516
        %v9764 = vmul.f32 %v9038, %v9629
        %v9765 = vmul.f32 %v8589, %v9180
        %v9766 = vmul.f32 %v8702, %v9293
        %v9767 = vmul.f32 %v8815, %v9406
        %v9768 = vmul.f32 %v8928, %v9519
        %v9769 = vmul.f32 %v9041, %v9632
        %v9770 = vmul.f32 %v8592, %v9183
        %v9771 = vmul.f32 %v8705, %v9296
        %v9772 = vmul.f32 %v8818, %v9409
        %v9773 = vmul.f32 %v8931, %v9522
        %v9774 = vmul.f32 %v9044, %v9635
        %v9775 = vmul.f32 %v8595, %v9186
        %v9776 = vmul.f32 %v8708, %v9299
        %v9777 = vmul.f32 %v8821, %v9412
        %v9778 = vmul.f32 %v8934, %v9525
        %v9779 = vmul.f32 %v9047, %v9638
        %v9780 = vmul.f32 %v8598, %v9189
        %v9781 = vmul.f32 %v8711, %v9302
        %v9782 = vmul.f32 %v8824, %v9415
        %v9783 = vmul.f32 %v8937, %v9528
        %v9784 = vmul.f32 %v9050, %v9641
        %v9785 = vmul.f32 %v8601, %v9192
        %v9786 = vmul.f32 %v8714, %v9305
        %v9787 = vmul.f32 %v8827, %v9418
        %v9788 = vmul.f32 %v8940, %v9531
        %v9789 = vmul.f32 %v9053, %v9644
        %v9790 = vmul.f32 %v8604, %v9195
        %v9791 = vmul.f32 %v8717, %v9308
        %v9792 = vmul.f32 %v8830, %v9421
        %v9793 = vmul.f32 %v8943, %v9534
        %v9794 = vmul.f32 %v9056, %v9647
        %v9795 = vmul.f32 %v8607, %v9198
        %v9796 = vmul.f32 %v8720, %v9311
        %v9797 = vmul.f32 %v8833, %v9424
        %v9798 = vmul.f32 %v8946, %v9537
        %v9799 = vmul.f32 %v9059, %v9650
        %v9800 = vmul.f32 %v8610, %v9201
        %v9801 = vmul.f32 %v8723, %v9314
        %v9802 = vmul.f32 %v8836, %v9427
        %v9803 = vmul.f32 %v8949, %v9540
        %v9804 = vmul.f32 %v9062, %v9653
        %v9805 = vmul.f32 %v8613, %v9204
        %v9806 = vmul.f32 %v8726, %v9317
        %v9807 = vmul.f32 %v8839, %v9430
        %v9808 = vmul.f32 %v8952, %v9543
        %v9809 = vmul.f32 %v9065, %v9656
        %v9810 = vmul.f32 %v8616, %v9207
        %v9811 = vmul.f32 %v8729, %v9320
        %v9812 = vmul.f32 %v8842, %v9433
        %v9813 = vmul.f32 %v8955, %v9546
        %v9814 = vmul.f32 %v9068, %v9659
        %v9815 = vmul.f32 %v8619, %v9210
        %v9816 = vmul.f32 %v8732, %v9323
        %v9817 = vmul.f32 %v8845, %v9436
        %v9818 = vmul.f32 %v8958, %v9549
        %v9819 = vmul.f32 %v9071, %v9662
        %v9820 = vmul.f32 %v8622, %v9213
        %v9821 = vmul.f32 %v8735, %v9326
        %v9822 = vmul.f32 %v8848, %v9439
        %v9823 = vmul.f32 %v8961, %v9552
        %v9824 = vmul.f32 %v9074, %v9665
        %v9825 = vmul.f32 %v8625, %v9216
        %v9826 = vmul.f32 %v8738, %v9329
        %v9827 = vmul.f32 %v8851, %v9442
        %v9828 = vmul.f32 %v8964, %v9555
        %v9829 = vmul.f32 %v9077, %v9668
        %vm9830 = vcmask 39936
        %v9832 = vsel %vm9830, %v8386, 0
        %v9835 = vsel %vm9830, %v8387, 0
        %v9838 = vsel %vm9830, %v8388, 0
        %v9841 = vsel %vm9830, %v8389, 0
        %v9844 = vsel %vm9830, %v8390, 0
        %v9847 = vsel %vm9830, %v8391, 0
        %v9850 = vsel %vm9830, %v8392, 0
        %v9853 = vsel %vm9830, %v8393, 0
        %v9856 = vsel %vm9830, %v8394, 0
        %v9859 = vsel %vm9830, %v8395, 0
        %v9862 = vsel %vm9830, %v8396, 0
        %v9865 = vsel %vm9830, %v8397, 0
        %v9868 = vsel %vm9830, %v8398, 0
        %v9871 = vsel %vm9830, %v8399, 0
        %v9874 = vsel %vm9830, %v8400, 0
        %v9877 = vsel %vm9830, %v8401, 0
        %v9880 = vsel %vm9830, %v8402, 0
        %v9883 = vsel %vm9830, %v8403, 0
        %v9886 = vsel %vm9830, %v8404, 0
        %v9889 = vsel %vm9830, %v8405, 0
        %v9892 = vsel %vm9830, %v8406, 0
        %v9895 = vsel %vm9830, %v8407, 0
        %v9898 = vsel %vm9830, %v8408, 0
        %v9901 = vsel %vm9830, %v8409, 0
        %v9904 = vsel %vm9830, %v8410, 0
        %v9907 = vsel %vm9830, %v8411, 0
        %v9910 = vsel %vm9830, %v8412, 0
        %v9913 = vsel %vm9830, %v8413, 0
        %v9916 = vsel %vm9830, %v8414, 0
        %v9919 = vsel %vm9830, %v8415, 0
        %v9922 = vsel %vm9830, %v8416, 0
        %v9925 = vsel %vm9830, %v8417, 0
        %vm9927 = vcmask 1044480
        %v9929 = vsel %vm9927, %v8418, 0
        %v9932 = vsel %vm9927, %v8419, 0
        %v9935 = vsel %vm9927, %v8420, 0
        %v9938 = vsel %vm9927, %v8421, 0
        %v9941 = vsel %vm9927, %v8422, 0
        %9943 = vmatpush.msra.mxu0 0.0
        %9944 = vmatpush.msra.mxu0 0.0
        %9945 = vmatpush.msra.mxu0 0.0
        %9946 = vmatpush.msra.mxu0 0.0
        %9947 = vmatpush.msra.mxu0 0.0
        %9948 = vmatpush.msra.mxu0 0.0
        %9949 = vmatpush.msra.mxu0 0.0
        %9950 = vmatpush.msra.mxu0 0.0
        %9951 = vmatpush.msra.mxu0 0.0
        %9952 = vmatpush.msra.mxu0 0.0
        %9953 = vmatpush.msra.mxu0 0.0
        %9954 = vmatpush.msra.mxu0 0.0
        %9955 = vmatpush.msra.mxu0 0.0
        %9956 = vmatpush.msra.mxu0 0.0
        %9957 = vmatpush.msra.mxu0 0.0
        %9958 = vmatpush.msra.mxu0 %v9929
        %9959 = vmatmul.f32.gmra.mxu0 %v9832
        %v9960 = vpop.f32.mrf.mxu0
        %v9961 = vadd.f32 %v9670, %v9960
        %9962 = vmatmul.f32.gmra.mxu0 %v9835
        %v9963 = vpop.f32.mrf.mxu0
        %v9964 = vadd.f32 %v9675, %v9963
        %9965 = vmatmul.f32.gmra.mxu0 %v9838
        %v9966 = vpop.f32.mrf.mxu0
        %v9967 = vadd.f32 %v9680, %v9966
        %9968 = vmatmul.f32.gmra.mxu0 %v9841
        %v9969 = vpop.f32.mrf.mxu0
        %v9970 = vadd.f32 %v9685, %v9969
        %9971 = vmatmul.f32.gmra.mxu0 %v9844
        %v9972 = vpop.f32.mrf.mxu0
        %v9973 = vadd.f32 %v9690, %v9972
        %9974 = vmatmul.f32.gmra.mxu0 %v9847
        %v9975 = vpop.f32.mrf.mxu0
        %v9976 = vadd.f32 %v9695, %v9975
        %9977 = vmatmul.f32.gmra.mxu0 %v9850
        %v9978 = vpop.f32.mrf.mxu0
        %v9979 = vadd.f32 %v9700, %v9978
        %9980 = vmatmul.f32.gmra.mxu0 %v9853
        %v9981 = vpop.f32.mrf.mxu0
        %v9982 = vadd.f32 %v9705, %v9981
        %9983 = vmatmul.f32.gmra.mxu0 %v9856
        %v9984 = vpop.f32.mrf.mxu0
        %v9985 = vadd.f32 %v9710, %v9984
        %9986 = vmatmul.f32.gmra.mxu0 %v9859
        %v9987 = vpop.f32.mrf.mxu0
        %v9988 = vadd.f32 %v9715, %v9987
        %9989 = vmatmul.f32.gmra.mxu0 %v9862
        %v9990 = vpop.f32.mrf.mxu0
        %v9991 = vadd.f32 %v9720, %v9990
        %9992 = vmatmul.f32.gmra.mxu0 %v9865
        %v9993 = vpop.f32.mrf.mxu0
        %v9994 = vadd.f32 %v9725, %v9993
        %9995 = vmatmul.f32.gmra.mxu0 %v9868
        %v9996 = vpop.f32.mrf.mxu0
        %v9997 = vadd.f32 %v9730, %v9996
        %9998 = vmatmul.f32.gmra.mxu0 %v9871
        %v9999 = vpop.f32.mrf.mxu0
        %v10000 = vadd.f32 %v9735, %v9999
        %10001 = vmatmul.f32.gmra.mxu0 %v9874
        %v10002 = vpop.f32.mrf.mxu0
        %v10003 = vadd.f32 %v9740, %v10002
        %10004 = vmatmul.f32.gmra.mxu0 %v9877
        %v10005 = vpop.f32.mrf.mxu0
        %v10006 = vadd.f32 %v9745, %v10005
        %10007 = vmatmul.f32.gmra.mxu0 %v9880
        %v10008 = vpop.f32.mrf.mxu0
        %v10009 = vadd.f32 %v9750, %v10008
        %10010 = vmatmul.f32.gmra.mxu0 %v9883
        %v10011 = vpop.f32.mrf.mxu0
        %v10012 = vadd.f32 %v9755, %v10011
        %10013 = vmatmul.f32.gmra.mxu0 %v9886
        %v10014 = vpop.f32.mrf.mxu0
        %v10015 = vadd.f32 %v9760, %v10014
        %10016 = vmatmul.f32.gmra.mxu0 %v9889
        %v10017 = vpop.f32.mrf.mxu0
        %v10018 = vadd.f32 %v9765, %v10017
        %10019 = vmatmul.f32.gmra.mxu0 %v9892
        %v10020 = vpop.f32.mrf.mxu0
        %v10021 = vadd.f32 %v9770, %v10020
        %10022 = vmatmul.f32.gmra.mxu0 %v9895
        %v10023 = vpop.f32.mrf.mxu0
        %v10024 = vadd.f32 %v9775, %v10023
        %10025 = vmatmul.f32.gmra.mxu0 %v9898
        %v10026 = vpop.f32.mrf.mxu0
        %v10027 = vadd.f32 %v9780, %v10026
        %10028 = vmatmul.f32.gmra.mxu0 %v9901
        %v10029 = vpop.f32.mrf.mxu0
        %v10030 = vadd.f32 %v9785, %v10029
        %10031 = vmatmul.f32.gmra.mxu0 %v9904
        %v10032 = vpop.f32.mrf.mxu0
        %v10033 = vadd.f32 %v9790, %v10032
        %10034 = vmatmul.f32.gmra.mxu0 %v9907
        %v10035 = vpop.f32.mrf.mxu0
        %v10036 = vadd.f32 %v9795, %v10035
        %10037 = vmatmul.f32.gmra.mxu0 %v9910
        %v10038 = vpop.f32.mrf.mxu0
        %v10039 = vadd.f32 %v9800, %v10038
        %10040 = vmatmul.f32.gmra.mxu0 %v9913
        %v10041 = vpop.f32.mrf.mxu0
        %v10042 = vadd.f32 %v9805, %v10041
        %10043 = vmatmul.f32.gmra.mxu0 %v9916
        %v10044 = vpop.f32.mrf.mxu0
        %v10045 = vadd.f32 %v9810, %v10044
        %10046 = vmatmul.f32.gmra.mxu0 %v9919
        %v10047 = vpop.f32.mrf.mxu0
        %v10048 = vadd.f32 %v9815, %v10047
        %10049 = vmatmul.f32.gmra.mxu0 %v9922
        %v10050 = vpop.f32.mrf.mxu0
        %v10051 = vadd.f32 %v9820, %v10050
        %10052 = vmatmul.f32.gmra.mxu0 %v9925
        %v10053 = vpop.f32.mrf.mxu0
        %v10054 = vadd.f32 %v9825, %v10053
        %10055 = vdwg.mxu0
        %10056 = vmatpush.msra.mxu0 0.0
        %10057 = vmatpush.msra.mxu0 0.0
        %10058 = vmatpush.msra.mxu0 0.0
        %10059 = vmatpush.msra.mxu0 0.0
        %10060 = vmatpush.msra.mxu0 0.0
        %10061 = vmatpush.msra.mxu0 0.0
        %10062 = vmatpush.msra.mxu0 0.0
        %10063 = vmatpush.msra.mxu0 0.0
        %10064 = vmatpush.msra.mxu0 0.0
        %10065 = vmatpush.msra.mxu0 0.0
        %10066 = vmatpush.msra.mxu0 0.0
        %10067 = vmatpush.msra.mxu0 0.0
        %10068 = vmatpush.msra.mxu0 0.0
        %10069 = vmatpush.msra.mxu0 0.0
        %10070 = vmatpush.msra.mxu0 0.0
        %10071 = vmatpush.msra.mxu0 %v9932
        %10072 = vmatmul.f32.gmra.mxu0 %v9832
        %v10073 = vpop.f32.mrf.mxu0
        %v10074 = vadd.f32 %v9671, %v10073
        %10075 = vmatmul.f32.gmra.mxu0 %v9835
        %v10076 = vpop.f32.mrf.mxu0
        %v10077 = vadd.f32 %v9676, %v10076
        %10078 = vmatmul.f32.gmra.mxu0 %v9838
        %v10079 = vpop.f32.mrf.mxu0
        %v10080 = vadd.f32 %v9681, %v10079
        %10081 = vmatmul.f32.gmra.mxu0 %v9841
        %v10082 = vpop.f32.mrf.mxu0
        %v10083 = vadd.f32 %v9686, %v10082
        %10084 = vmatmul.f32.gmra.mxu0 %v9844
        %v10085 = vpop.f32.mrf.mxu0
        %v10086 = vadd.f32 %v9691, %v10085
        %10087 = vmatmul.f32.gmra.mxu0 %v9847
        %v10088 = vpop.f32.mrf.mxu0
        %v10089 = vadd.f32 %v9696, %v10088
        %10090 = vmatmul.f32.gmra.mxu0 %v9850
        %v10091 = vpop.f32.mrf.mxu0
        %v10092 = vadd.f32 %v9701, %v10091
        %10093 = vmatmul.f32.gmra.mxu0 %v9853
        %v10094 = vpop.f32.mrf.mxu0
        %v10095 = vadd.f32 %v9706, %v10094
        %10096 = vmatmul.f32.gmra.mxu0 %v9856
        %v10097 = vpop.f32.mrf.mxu0
        %v10098 = vadd.f32 %v9711, %v10097
        %10099 = vmatmul.f32.gmra.mxu0 %v9859
        %v10100 = vpop.f32.mrf.mxu0
        %v10101 = vadd.f32 %v9716, %v10100
        %10102 = vmatmul.f32.gmra.mxu0 %v9862
        %v10103 = vpop.f32.mrf.mxu0
        %v10104 = vadd.f32 %v9721, %v10103
        %10105 = vmatmul.f32.gmra.mxu0 %v9865
        %v10106 = vpop.f32.mrf.mxu0
        %v10107 = vadd.f32 %v9726, %v10106
        %10108 = vmatmul.f32.gmra.mxu0 %v9868
        %v10109 = vpop.f32.mrf.mxu0
        %v10110 = vadd.f32 %v9731, %v10109
        %10111 = vmatmul.f32.gmra.mxu0 %v9871
        %v10112 = vpop.f32.mrf.mxu0
        %v10113 = vadd.f32 %v9736, %v10112
        %10114 = vmatmul.f32.gmra.mxu0 %v9874
        %v10115 = vpop.f32.mrf.mxu0
        %v10116 = vadd.f32 %v9741, %v10115
        %10117 = vmatmul.f32.gmra.mxu0 %v9877
        %v10118 = vpop.f32.mrf.mxu0
        %v10119 = vadd.f32 %v9746, %v10118
        %10120 = vmatmul.f32.gmra.mxu0 %v9880
        %v10121 = vpop.f32.mrf.mxu0
        %v10122 = vadd.f32 %v9751, %v10121
        %10123 = vmatmul.f32.gmra.mxu0 %v9883
        %v10124 = vpop.f32.mrf.mxu0
        %v10125 = vadd.f32 %v9756, %v10124
        %10126 = vmatmul.f32.gmra.mxu0 %v9886
        %v10127 = vpop.f32.mrf.mxu0
        %v10128 = vadd.f32 %v9761, %v10127
        %10129 = vmatmul.f32.gmra.mxu0 %v9889
        %v10130 = vpop.f32.mrf.mxu0
        %v10131 = vadd.f32 %v9766, %v10130
        %10132 = vmatmul.f32.gmra.mxu0 %v9892
        %v10133 = vpop.f32.mrf.mxu0
        %v10134 = vadd.f32 %v9771, %v10133
        %10135 = vmatmul.f32.gmra.mxu0 %v9895
        %v10136 = vpop.f32.mrf.mxu0
        %v10137 = vadd.f32 %v9776, %v10136
        %10138 = vmatmul.f32.gmra.mxu0 %v9898
        %v10139 = vpop.f32.mrf.mxu0
        %v10140 = vadd.f32 %v9781, %v10139
        %10141 = vmatmul.f32.gmra.mxu0 %v9901
        %v10142 = vpop.f32.mrf.mxu0
        %v10143 = vadd.f32 %v9786, %v10142
        %10144 = vmatmul.f32.gmra.mxu0 %v9904
        %v10145 = vpop.f32.mrf.mxu0
        %v10146 = vadd.f32 %v9791, %v10145
        %10147 = vmatmul.f32.gmra.mxu0 %v9907
        %v10148 = vpop.f32.mrf.mxu0
        %v10149 = vadd.f32 %v9796, %v10148
        %10150 = vmatmul.f32.gmra.mxu0 %v9910
        %v10151 = vpop.f32.mrf.mxu0
        %v10152 = vadd.f32 %v9801, %v10151
        %10153 = vmatmul.f32.gmra.mxu0 %v9913
        %v10154 = vpop.f32.mrf.mxu0
        %v10155 = vadd.f32 %v9806, %v10154
        %10156 = vmatmul.f32.gmra.mxu0 %v9916
        %v10157 = vpop.f32.mrf.mxu0
        %v10158 = vadd.f32 %v9811, %v10157
        %10159 = vmatmul.f32.gmra.mxu0 %v9919
        %v10160 = vpop.f32.mrf.mxu0
        %v10161 = vadd.f32 %v9816, %v10160
        %10162 = vmatmul.f32.gmra.mxu0 %v9922
        %v10163 = vpop.f32.mrf.mxu0
        %v10164 = vadd.f32 %v9821, %v10163
        %10165 = vmatmul.f32.gmra.mxu0 %v9925
        %v10166 = vpop.f32.mrf.mxu0
        %v10167 = vadd.f32 %v9826, %v10166
        %10168 = vdwg.mxu0
        %10169 = vmatpush.msra.mxu0 0.0
        %10170 = vmatpush.msra.mxu0 0.0
        %10171 = vmatpush.msra.mxu0 0.0
        %10172 = vmatpush.msra.mxu0 0.0
        %10173 = vmatpush.msra.mxu0 0.0
        %10174 = vmatpush.msra.mxu0 0.0
        %10175 = vmatpush.msra.mxu0 0.0
        %10176 = vmatpush.msra.mxu0 0.0
        %10177 = vmatpush.msra.mxu0 0.0
        %10178 = vmatpush.msra.mxu0 0.0
        %10179 = vmatpush.msra.mxu0 0.0
        %10180 = vmatpush.msra.mxu0 0.0
        %10181 = vmatpush.msra.mxu0 0.0
        %10182 = vmatpush.msra.mxu0 0.0
        %10183 = vmatpush.msra.mxu0 0.0
        %10184 = vmatpush.msra.mxu0 %v9935
        %10185 = vmatmul.f32.gmra.mxu0 %v9832
        %v10186 = vpop.f32.mrf.mxu0
        %v10187 = vadd.f32 %v9672, %v10186
        %10188 = vmatmul.f32.gmra.mxu0 %v9835
        %v10189 = vpop.f32.mrf.mxu0
        %v10190 = vadd.f32 %v9677, %v10189
        %10191 = vmatmul.f32.gmra.mxu0 %v9838
        %v10192 = vpop.f32.mrf.mxu0
        %v10193 = vadd.f32 %v9682, %v10192
        %10194 = vmatmul.f32.gmra.mxu0 %v9841
        %v10195 = vpop.f32.mrf.mxu0
        %v10196 = vadd.f32 %v9687, %v10195
        %10197 = vmatmul.f32.gmra.mxu0 %v9844
        %v10198 = vpop.f32.mrf.mxu0
        %v10199 = vadd.f32 %v9692, %v10198
        %10200 = vmatmul.f32.gmra.mxu0 %v9847
        %v10201 = vpop.f32.mrf.mxu0
        %v10202 = vadd.f32 %v9697, %v10201
        %10203 = vmatmul.f32.gmra.mxu0 %v9850
        %v10204 = vpop.f32.mrf.mxu0
        %v10205 = vadd.f32 %v9702, %v10204
        %10206 = vmatmul.f32.gmra.mxu0 %v9853
        %v10207 = vpop.f32.mrf.mxu0
        %v10208 = vadd.f32 %v9707, %v10207
        %10209 = vmatmul.f32.gmra.mxu0 %v9856
        %v10210 = vpop.f32.mrf.mxu0
        %v10211 = vadd.f32 %v9712, %v10210
        %10212 = vmatmul.f32.gmra.mxu0 %v9859
        %v10213 = vpop.f32.mrf.mxu0
        %v10214 = vadd.f32 %v9717, %v10213
        %10215 = vmatmul.f32.gmra.mxu0 %v9862
        %v10216 = vpop.f32.mrf.mxu0
        %v10217 = vadd.f32 %v9722, %v10216
        %10218 = vmatmul.f32.gmra.mxu0 %v9865
        %v10219 = vpop.f32.mrf.mxu0
        %v10220 = vadd.f32 %v9727, %v10219
        %10221 = vmatmul.f32.gmra.mxu0 %v9868
        %v10222 = vpop.f32.mrf.mxu0
        %v10223 = vadd.f32 %v9732, %v10222
        %10224 = vmatmul.f32.gmra.mxu0 %v9871
        %v10225 = vpop.f32.mrf.mxu0
        %v10226 = vadd.f32 %v9737, %v10225
        %10227 = vmatmul.f32.gmra.mxu0 %v9874
        %v10228 = vpop.f32.mrf.mxu0
        %v10229 = vadd.f32 %v9742, %v10228
        %10230 = vmatmul.f32.gmra.mxu0 %v9877
        %v10231 = vpop.f32.mrf.mxu0
        %v10232 = vadd.f32 %v9747, %v10231
        %10233 = vmatmul.f32.gmra.mxu0 %v9880
        %v10234 = vpop.f32.mrf.mxu0
        %v10235 = vadd.f32 %v9752, %v10234
        %10236 = vmatmul.f32.gmra.mxu0 %v9883
        %v10237 = vpop.f32.mrf.mxu0
        %v10238 = vadd.f32 %v9757, %v10237
        %10239 = vmatmul.f32.gmra.mxu0 %v9886
        %v10240 = vpop.f32.mrf.mxu0
        %v10241 = vadd.f32 %v9762, %v10240
        %10242 = vmatmul.f32.gmra.mxu0 %v9889
        %v10243 = vpop.f32.mrf.mxu0
        %v10244 = vadd.f32 %v9767, %v10243
        %10245 = vmatmul.f32.gmra.mxu0 %v9892
        %v10246 = vpop.f32.mrf.mxu0
        %v10247 = vadd.f32 %v9772, %v10246
        %10248 = vmatmul.f32.gmra.mxu0 %v9895
        %v10249 = vpop.f32.mrf.mxu0
        %v10250 = vadd.f32 %v9777, %v10249
        %10251 = vmatmul.f32.gmra.mxu0 %v9898
        %v10252 = vpop.f32.mrf.mxu0
        %v10253 = vadd.f32 %v9782, %v10252
        %10254 = vmatmul.f32.gmra.mxu0 %v9901
        %v10255 = vpop.f32.mrf.mxu0
        %v10256 = vadd.f32 %v9787, %v10255
        %10257 = vmatmul.f32.gmra.mxu0 %v9904
        %v10258 = vpop.f32.mrf.mxu0
        %v10259 = vadd.f32 %v9792, %v10258
        %10260 = vmatmul.f32.gmra.mxu0 %v9907
        %v10261 = vpop.f32.mrf.mxu0
        %v10262 = vadd.f32 %v9797, %v10261
        %10263 = vmatmul.f32.gmra.mxu0 %v9910
        %v10264 = vpop.f32.mrf.mxu0
        %v10265 = vadd.f32 %v9802, %v10264
        %10266 = vmatmul.f32.gmra.mxu0 %v9913
        %v10267 = vpop.f32.mrf.mxu0
        %v10268 = vadd.f32 %v9807, %v10267
        %10269 = vmatmul.f32.gmra.mxu0 %v9916
        %v10270 = vpop.f32.mrf.mxu0
        %v10271 = vadd.f32 %v9812, %v10270
        %10272 = vmatmul.f32.gmra.mxu0 %v9919
        %v10273 = vpop.f32.mrf.mxu0
        %v10274 = vadd.f32 %v9817, %v10273
        %10275 = vmatmul.f32.gmra.mxu0 %v9922
        %v10276 = vpop.f32.mrf.mxu0
        %v10277 = vadd.f32 %v9822, %v10276
        %10278 = vmatmul.f32.gmra.mxu0 %v9925
        %v10279 = vpop.f32.mrf.mxu0
        %v10280 = vadd.f32 %v9827, %v10279
        %10281 = vdwg.mxu0
        %10282 = vmatpush.msra.mxu0 0.0
        %10283 = vmatpush.msra.mxu0 0.0
        %10284 = vmatpush.msra.mxu0 0.0
        %10285 = vmatpush.msra.mxu0 0.0
        %10286 = vmatpush.msra.mxu0 0.0
        %10287 = vmatpush.msra.mxu0 0.0
        %10288 = vmatpush.msra.mxu0 0.0
        %10289 = vmatpush.msra.mxu0 0.0
        %10290 = vmatpush.msra.mxu0 0.0
        %10291 = vmatpush.msra.mxu0 0.0
        %10292 = vmatpush.msra.mxu0 0.0
        %10293 = vmatpush.msra.mxu0 0.0
        %10294 = vmatpush.msra.mxu0 0.0
        %10295 = vmatpush.msra.mxu0 0.0
        %10296 = vmatpush.msra.mxu0 0.0
        %10297 = vmatpush.msra.mxu0 %v9938
        %10298 = vmatmul.f32.gmra.mxu0 %v9832
        %v10299 = vpop.f32.mrf.mxu0
        %v10300 = vadd.f32 %v9673, %v10299
        %10301 = vmatmul.f32.gmra.mxu0 %v9835
        %v10302 = vpop.f32.mrf.mxu0
        %v10303 = vadd.f32 %v9678, %v10302
        %10304 = vmatmul.f32.gmra.mxu0 %v9838
        %v10305 = vpop.f32.mrf.mxu0
        %v10306 = vadd.f32 %v9683, %v10305
        %10307 = vmatmul.f32.gmra.mxu0 %v9841
        %v10308 = vpop.f32.mrf.mxu0
        %v10309 = vadd.f32 %v9688, %v10308
        %10310 = vmatmul.f32.gmra.mxu0 %v9844
        %v10311 = vpop.f32.mrf.mxu0
        %v10312 = vadd.f32 %v9693, %v10311
        %10313 = vmatmul.f32.gmra.mxu0 %v9847
        %v10314 = vpop.f32.mrf.mxu0
        %v10315 = vadd.f32 %v9698, %v10314
        %10316 = vmatmul.f32.gmra.mxu0 %v9850
        %v10317 = vpop.f32.mrf.mxu0
        %v10318 = vadd.f32 %v9703, %v10317
        %10319 = vmatmul.f32.gmra.mxu0 %v9853
        %v10320 = vpop.f32.mrf.mxu0
        %v10321 = vadd.f32 %v9708, %v10320
        %10322 = vmatmul.f32.gmra.mxu0 %v9856
        %v10323 = vpop.f32.mrf.mxu0
        %v10324 = vadd.f32 %v9713, %v10323
        %10325 = vmatmul.f32.gmra.mxu0 %v9859
        %v10326 = vpop.f32.mrf.mxu0
        %v10327 = vadd.f32 %v9718, %v10326
        %10328 = vmatmul.f32.gmra.mxu0 %v9862
        %v10329 = vpop.f32.mrf.mxu0
        %v10330 = vadd.f32 %v9723, %v10329
        %10331 = vmatmul.f32.gmra.mxu0 %v9865
        %v10332 = vpop.f32.mrf.mxu0
        %v10333 = vadd.f32 %v9728, %v10332
        %10334 = vmatmul.f32.gmra.mxu0 %v9868
        %v10335 = vpop.f32.mrf.mxu0
        %v10336 = vadd.f32 %v9733, %v10335
        %10337 = vmatmul.f32.gmra.mxu0 %v9871
        %v10338 = vpop.f32.mrf.mxu0
        %v10339 = vadd.f32 %v9738, %v10338
        %10340 = vmatmul.f32.gmra.mxu0 %v9874
        %v10341 = vpop.f32.mrf.mxu0
        %v10342 = vadd.f32 %v9743, %v10341
        %10343 = vmatmul.f32.gmra.mxu0 %v9877
        %v10344 = vpop.f32.mrf.mxu0
        %v10345 = vadd.f32 %v9748, %v10344
        %10346 = vmatmul.f32.gmra.mxu0 %v9880
        %v10347 = vpop.f32.mrf.mxu0
        %v10348 = vadd.f32 %v9753, %v10347
        %10349 = vmatmul.f32.gmra.mxu0 %v9883
        %v10350 = vpop.f32.mrf.mxu0
        %v10351 = vadd.f32 %v9758, %v10350
        %10352 = vmatmul.f32.gmra.mxu0 %v9886
        %v10353 = vpop.f32.mrf.mxu0
        %v10354 = vadd.f32 %v9763, %v10353
        %10355 = vmatmul.f32.gmra.mxu0 %v9889
        %v10356 = vpop.f32.mrf.mxu0
        %v10357 = vadd.f32 %v9768, %v10356
        %10358 = vmatmul.f32.gmra.mxu0 %v9892
        %v10359 = vpop.f32.mrf.mxu0
        %v10360 = vadd.f32 %v9773, %v10359
        %10361 = vmatmul.f32.gmra.mxu0 %v9895
        %v10362 = vpop.f32.mrf.mxu0
        %v10363 = vadd.f32 %v9778, %v10362
        %10364 = vmatmul.f32.gmra.mxu0 %v9898
        %v10365 = vpop.f32.mrf.mxu0
        %v10366 = vadd.f32 %v9783, %v10365
        %10367 = vmatmul.f32.gmra.mxu0 %v9901
        %v10368 = vpop.f32.mrf.mxu0
        %v10369 = vadd.f32 %v9788, %v10368
        %10370 = vmatmul.f32.gmra.mxu0 %v9904
        %v10371 = vpop.f32.mrf.mxu0
        %v10372 = vadd.f32 %v9793, %v10371
        %10373 = vmatmul.f32.gmra.mxu0 %v9907
        %v10374 = vpop.f32.mrf.mxu0
        %v10375 = vadd.f32 %v9798, %v10374
        %10376 = vmatmul.f32.gmra.mxu0 %v9910
        %v10377 = vpop.f32.mrf.mxu0
        %v10378 = vadd.f32 %v9803, %v10377
        %10379 = vmatmul.f32.gmra.mxu0 %v9913
        %v10380 = vpop.f32.mrf.mxu0
        %v10381 = vadd.f32 %v9808, %v10380
        %10382 = vmatmul.f32.gmra.mxu0 %v9916
        %v10383 = vpop.f32.mrf.mxu0
        %v10384 = vadd.f32 %v9813, %v10383
        %10385 = vmatmul.f32.gmra.mxu0 %v9919
        %v10386 = vpop.f32.mrf.mxu0
        %v10387 = vadd.f32 %v9818, %v10386
        %10388 = vmatmul.f32.gmra.mxu0 %v9922
        %v10389 = vpop.f32.mrf.mxu0
        %v10390 = vadd.f32 %v9823, %v10389
        %10391 = vmatmul.f32.gmra.mxu0 %v9925
        %v10392 = vpop.f32.mrf.mxu0
        %v10393 = vadd.f32 %v9828, %v10392
        %10394 = vdwg.mxu0
        %10395 = vmatpush.msra.mxu0 0.0
        %10396 = vmatpush.msra.mxu0 0.0
        %10397 = vmatpush.msra.mxu0 0.0
        %10398 = vmatpush.msra.mxu0 0.0
        %10399 = vmatpush.msra.mxu0 0.0
        %10400 = vmatpush.msra.mxu0 0.0
        %10401 = vmatpush.msra.mxu0 0.0
        %10402 = vmatpush.msra.mxu0 0.0
        %10403 = vmatpush.msra.mxu0 0.0
        %10404 = vmatpush.msra.mxu0 0.0
        %10405 = vmatpush.msra.mxu0 0.0
        %10406 = vmatpush.msra.mxu0 0.0
        %10407 = vmatpush.msra.mxu0 0.0
        %10408 = vmatpush.msra.mxu0 0.0
        %10409 = vmatpush.msra.mxu0 0.0
        %10410 = vmatpush.msra.mxu0 %v9941
        %10411 = vmatmul.f32.gmra.mxu0 %v9832
        %v10412 = vpop.f32.mrf.mxu0
        %v10413 = vadd.f32 %v9674, %v10412
        %10414 = vmatmul.f32.gmra.mxu0 %v9835
        %v10415 = vpop.f32.mrf.mxu0
        %v10416 = vadd.f32 %v9679, %v10415
        %10417 = vmatmul.f32.gmra.mxu0 %v9838
        %v10418 = vpop.f32.mrf.mxu0
        %v10419 = vadd.f32 %v9684, %v10418
        %10420 = vmatmul.f32.gmra.mxu0 %v9841
        %v10421 = vpop.f32.mrf.mxu0
        %v10422 = vadd.f32 %v9689, %v10421
        %10423 = vmatmul.f32.gmra.mxu0 %v9844
        %v10424 = vpop.f32.mrf.mxu0
        %v10425 = vadd.f32 %v9694, %v10424
        %10426 = vmatmul.f32.gmra.mxu0 %v9847
        %v10427 = vpop.f32.mrf.mxu0
        %v10428 = vadd.f32 %v9699, %v10427
        %10429 = vmatmul.f32.gmra.mxu0 %v9850
        %v10430 = vpop.f32.mrf.mxu0
        %v10431 = vadd.f32 %v9704, %v10430
        %10432 = vmatmul.f32.gmra.mxu0 %v9853
        %v10433 = vpop.f32.mrf.mxu0
        %v10434 = vadd.f32 %v9709, %v10433
        %10435 = vmatmul.f32.gmra.mxu0 %v9856
        %v10436 = vpop.f32.mrf.mxu0
        %v10437 = vadd.f32 %v9714, %v10436
        %10438 = vmatmul.f32.gmra.mxu0 %v9859
        %v10439 = vpop.f32.mrf.mxu0
        %v10440 = vadd.f32 %v9719, %v10439
        %10441 = vmatmul.f32.gmra.mxu0 %v9862
        %v10442 = vpop.f32.mrf.mxu0
        %v10443 = vadd.f32 %v9724, %v10442
        %10444 = vmatmul.f32.gmra.mxu0 %v9865
        %v10445 = vpop.f32.mrf.mxu0
        %v10446 = vadd.f32 %v9729, %v10445
        %10447 = vmatmul.f32.gmra.mxu0 %v9868
        %v10448 = vpop.f32.mrf.mxu0
        %v10449 = vadd.f32 %v9734, %v10448
        %10450 = vmatmul.f32.gmra.mxu0 %v9871
        %v10451 = vpop.f32.mrf.mxu0
        %v10452 = vadd.f32 %v9739, %v10451
        %10453 = vmatmul.f32.gmra.mxu0 %v9874
        %v10454 = vpop.f32.mrf.mxu0
        %v10455 = vadd.f32 %v9744, %v10454
        %10456 = vmatmul.f32.gmra.mxu0 %v9877
        %v10457 = vpop.f32.mrf.mxu0
        %v10458 = vadd.f32 %v9749, %v10457
        %10459 = vmatmul.f32.gmra.mxu0 %v9880
        %v10460 = vpop.f32.mrf.mxu0
        %v10461 = vadd.f32 %v9754, %v10460
        %10462 = vmatmul.f32.gmra.mxu0 %v9883
        %v10463 = vpop.f32.mrf.mxu0
        %v10464 = vadd.f32 %v9759, %v10463
        %10465 = vmatmul.f32.gmra.mxu0 %v9886
        %v10466 = vpop.f32.mrf.mxu0
        %v10467 = vadd.f32 %v9764, %v10466
        %10468 = vmatmul.f32.gmra.mxu0 %v9889
        %v10469 = vpop.f32.mrf.mxu0
        %v10470 = vadd.f32 %v9769, %v10469
        %10471 = vmatmul.f32.gmra.mxu0 %v9892
        %v10472 = vpop.f32.mrf.mxu0
        %v10473 = vadd.f32 %v9774, %v10472
        %10474 = vmatmul.f32.gmra.mxu0 %v9895
        %v10475 = vpop.f32.mrf.mxu0
        %v10476 = vadd.f32 %v9779, %v10475
        %10477 = vmatmul.f32.gmra.mxu0 %v9898
        %v10478 = vpop.f32.mrf.mxu0
        %v10479 = vadd.f32 %v9784, %v10478
        %10480 = vmatmul.f32.gmra.mxu0 %v9901
        %v10481 = vpop.f32.mrf.mxu0
        %v10482 = vadd.f32 %v9789, %v10481
        %10483 = vmatmul.f32.gmra.mxu0 %v9904
        %v10484 = vpop.f32.mrf.mxu0
        %v10485 = vadd.f32 %v9794, %v10484
        %10486 = vmatmul.f32.gmra.mxu0 %v9907
        %v10487 = vpop.f32.mrf.mxu0
        %v10488 = vadd.f32 %v9799, %v10487
        %10489 = vmatmul.f32.gmra.mxu0 %v9910
        %v10490 = vpop.f32.mrf.mxu0
        %v10491 = vadd.f32 %v9804, %v10490
        %10492 = vmatmul.f32.gmra.mxu0 %v9913
        %v10493 = vpop.f32.mrf.mxu0
        %v10494 = vadd.f32 %v9809, %v10493
        %10495 = vmatmul.f32.gmra.mxu0 %v9916
        %v10496 = vpop.f32.mrf.mxu0
        %v10497 = vadd.f32 %v9814, %v10496
        %10498 = vmatmul.f32.gmra.mxu0 %v9919
        %v10499 = vpop.f32.mrf.mxu0
        %v10500 = vadd.f32 %v9819, %v10499
        %10501 = vmatmul.f32.gmra.mxu0 %v9922
        %v10502 = vpop.f32.mrf.mxu0
        %v10503 = vadd.f32 %v9824, %v10502
        %10504 = vmatmul.f32.gmra.mxu0 %v9925
        %v10505 = vpop.f32.mrf.mxu0
        %v10506 = vadd.f32 %v9829, %v10505
        %10507 = vdwg.mxu0
        %v10508 = vmul.f32 %v7533, %v9961
        %v10509 = vmul.f32 %v7622, %v10074
        %v10510 = vmul.f32 %v7711, %v10187
        %v10511 = vmul.f32 %v7800, %v10300
        %v10512 = vmul.f32 %v7889, %v10413
        %v10513 = vmul.f32 %v7535, %v9964
        %v10514 = vmul.f32 %v7624, %v10077
        %v10515 = vmul.f32 %v7713, %v10190
        %v10516 = vmul.f32 %v7802, %v10303
        %v10517 = vmul.f32 %v7891, %v10416
        %v10518 = vmul.f32 %v7538, %v9967
        %v10519 = vmul.f32 %v7627, %v10080
        %v10520 = vmul.f32 %v7716, %v10193
        %v10521 = vmul.f32 %v7805, %v10306
        %v10522 = vmul.f32 %v7894, %v10419
        %v10523 = vmul.f32 %v7540, %v9970
        %v10524 = vmul.f32 %v7629, %v10083
        %v10525 = vmul.f32 %v7718, %v10196
        %v10526 = vmul.f32 %v7807, %v10309
        %v10527 = vmul.f32 %v7896, %v10422
        %v10528 = vmul.f32 %v7543, %v9973
        %v10529 = vmul.f32 %v7632, %v10086
        %v10530 = vmul.f32 %v7721, %v10199
        %v10531 = vmul.f32 %v7810, %v10312
        %v10532 = vmul.f32 %v7899, %v10425
        %v10533 = vmul.f32 %v7545, %v9976
        %v10534 = vmul.f32 %v7634, %v10089
        %v10535 = vmul.f32 %v7723, %v10202
        %v10536 = vmul.f32 %v7812, %v10315
        %v10537 = vmul.f32 %v7901, %v10428
        %v10538 = vmul.f32 %v7548, %v9979
        %v10539 = vmul.f32 %v7637, %v10092
        %v10540 = vmul.f32 %v7726, %v10205
        %v10541 = vmul.f32 %v7815, %v10318
        %v10542 = vmul.f32 %v7904, %v10431
        %v10543 = vmul.f32 %v7550, %v9982
        %v10544 = vmul.f32 %v7639, %v10095
        %v10545 = vmul.f32 %v7728, %v10208
        %v10546 = vmul.f32 %v7817, %v10321
        %v10547 = vmul.f32 %v7906, %v10434
        %v10548 = vmul.f32 %v7553, %v9985
        %v10549 = vmul.f32 %v7642, %v10098
        %v10550 = vmul.f32 %v7731, %v10211
        %v10551 = vmul.f32 %v7820, %v10324
        %v10552 = vmul.f32 %v7909, %v10437
        %v10553 = vmul.f32 %v7555, %v9988
        %v10554 = vmul.f32 %v7644, %v10101
        %v10555 = vmul.f32 %v7733, %v10214
        %v10556 = vmul.f32 %v7822, %v10327
        %v10557 = vmul.f32 %v7911, %v10440
        %v10558 = vmul.f32 %v7558, %v9991
        %v10559 = vmul.f32 %v7647, %v10104
        %v10560 = vmul.f32 %v7736, %v10217
        %v10561 = vmul.f32 %v7825, %v10330
        %v10562 = vmul.f32 %v7914, %v10443
        %v10563 = vmul.f32 %v7560, %v9994
        %v10564 = vmul.f32 %v7649, %v10107
        %v10565 = vmul.f32 %v7738, %v10220
        %v10566 = vmul.f32 %v7827, %v10333
        %v10567 = vmul.f32 %v7916, %v10446
        %v10568 = vmul.f32 %v7563, %v9997
        %v10569 = vmul.f32 %v7652, %v10110
        %v10570 = vmul.f32 %v7741, %v10223
        %v10571 = vmul.f32 %v7830, %v10336
        %v10572 = vmul.f32 %v7919, %v10449
        %v10573 = vmul.f32 %v7565, %v10000
        %v10574 = vmul.f32 %v7654, %v10113
        %v10575 = vmul.f32 %v7743, %v10226
        %v10576 = vmul.f32 %v7832, %v10339
        %v10577 = vmul.f32 %v7921, %v10452
        %v10578 = vmul.f32 %v7568, %v10003
        %v10579 = vmul.f32 %v7657, %v10116
        %v10580 = vmul.f32 %v7746, %v10229
        %v10581 = vmul.f32 %v7835, %v10342
        %v10582 = vmul.f32 %v7924, %v10455
        %v10583 = vmul.f32 %v7570, %v10006
        %v10584 = vmul.f32 %v7659, %v10119
        %v10585 = vmul.f32 %v7748, %v10232
        %v10586 = vmul.f32 %v7837, %v10345
        %v10587 = vmul.f32 %v7926, %v10458
        %v10588 = vmul.f32 %v7573, %v10009
        %v10589 = vmul.f32 %v7662, %v10122
        %v10590 = vmul.f32 %v7751, %v10235
        %v10591 = vmul.f32 %v7840, %v10348
        %v10592 = vmul.f32 %v7929, %v10461
        %v10593 = vmul.f32 %v7575, %v10012
        %v10594 = vmul.f32 %v7664, %v10125
        %v10595 = vmul.f32 %v7753, %v10238
        %v10596 = vmul.f32 %v7842, %v10351
        %v10597 = vmul.f32 %v7931, %v10464
        %v10598 = vmul.f32 %v7578, %v10015
        %v10599 = vmul.f32 %v7667, %v10128
        %v10600 = vmul.f32 %v7756, %v10241
        %v10601 = vmul.f32 %v7845, %v10354
        %v10602 = vmul.f32 %v7934, %v10467
        %v10603 = vmul.f32 %v7580, %v10018
        %v10604 = vmul.f32 %v7669, %v10131
        %v10605 = vmul.f32 %v7758, %v10244
        %v10606 = vmul.f32 %v7847, %v10357
        %v10607 = vmul.f32 %v7936, %v10470
        %v10608 = vmul.f32 %v7583, %v10021
        %v10609 = vmul.f32 %v7672, %v10134
        %v10610 = vmul.f32 %v7761, %v10247
        %v10611 = vmul.f32 %v7850, %v10360
        %v10612 = vmul.f32 %v7939, %v10473
        %v10613 = vmul.f32 %v7585, %v10024
        %v10614 = vmul.f32 %v7674, %v10137
        %v10615 = vmul.f32 %v7763, %v10250
        %v10616 = vmul.f32 %v7852, %v10363
        %v10617 = vmul.f32 %v7941, %v10476
        %v10618 = vmul.f32 %v7588, %v10027
        %v10619 = vmul.f32 %v7677, %v10140
        %v10620 = vmul.f32 %v7766, %v10253
        %v10621 = vmul.f32 %v7855, %v10366
        %v10622 = vmul.f32 %v7944, %v10479
        %v10623 = vmul.f32 %v7590, %v10030
        %v10624 = vmul.f32 %v7679, %v10143
        %v10625 = vmul.f32 %v7768, %v10256
        %v10626 = vmul.f32 %v7857, %v10369
        %v10627 = vmul.f32 %v7946, %v10482
        %v10628 = vmul.f32 %v7593, %v10033
        %v10629 = vmul.f32 %v7682, %v10146
        %v10630 = vmul.f32 %v7771, %v10259
        %v10631 = vmul.f32 %v7860, %v10372
        %v10632 = vmul.f32 %v7949, %v10485
        %v10633 = vmul.f32 %v7595, %v10036
        %v10634 = vmul.f32 %v7684, %v10149
        %v10635 = vmul.f32 %v7773, %v10262
        %v10636 = vmul.f32 %v7862, %v10375
        %v10637 = vmul.f32 %v7951, %v10488
        %v10638 = vmul.f32 %v7598, %v10039
        %v10639 = vmul.f32 %v7687, %v10152
        %v10640 = vmul.f32 %v7776, %v10265
        %v10641 = vmul.f32 %v7865, %v10378
        %v10642 = vmul.f32 %v7954, %v10491
        %v10643 = vmul.f32 %v7600, %v10042
        %v10644 = vmul.f32 %v7689, %v10155
        %v10645 = vmul.f32 %v7778, %v10268
        %v10646 = vmul.f32 %v7867, %v10381
        %v10647 = vmul.f32 %v7956, %v10494
        %v10648 = vmul.f32 %v7603, %v10045
        %v10649 = vmul.f32 %v7692, %v10158
        %v10650 = vmul.f32 %v7781, %v10271
        %v10651 = vmul.f32 %v7870, %v10384
        %v10652 = vmul.f32 %v7959, %v10497
        %v10653 = vmul.f32 %v7605, %v10048
        %v10654 = vmul.f32 %v7694, %v10161
        %v10655 = vmul.f32 %v7783, %v10274
        %v10656 = vmul.f32 %v7872, %v10387
        %v10657 = vmul.f32 %v7961, %v10500
        %v10658 = vmul.f32 %v7608, %v10051
        %v10659 = vmul.f32 %v7697, %v10164
        %v10660 = vmul.f32 %v7786, %v10277
        %v10661 = vmul.f32 %v7875, %v10390
        %v10662 = vmul.f32 %v7964, %v10503
        %v10663 = vmul.f32 %v7610, %v10054
        %v10664 = vmul.f32 %v7699, %v10167
        %v10665 = vmul.f32 %v7788, %v10280
        %v10666 = vmul.f32 %v7877, %v10393
        %v10667 = vmul.f32 %v7966, %v10506
        %v10668 = vpack.c.bf16 %v10513, %v10508
        %v10669 = vpack.c.bf16 %v10514, %v10509
        %v10670 = vpack.c.bf16 %v10515, %v10510
        %v10671 = vpack.c.bf16 %v10516, %v10511
        %v10672 = vpack.c.bf16 %v10517, %v10512
        %v10673 = vpack.c.bf16 %v10523, %v10518
        %v10674 = vpack.c.bf16 %v10524, %v10519
        %v10675 = vpack.c.bf16 %v10525, %v10520
        %v10676 = vpack.c.bf16 %v10526, %v10521
        %v10677 = vpack.c.bf16 %v10527, %v10522
        %v10678 = vpack.c.bf16 %v10533, %v10528
        %v10679 = vpack.c.bf16 %v10534, %v10529
        %v10680 = vpack.c.bf16 %v10535, %v10530
        %v10681 = vpack.c.bf16 %v10536, %v10531
        %v10682 = vpack.c.bf16 %v10537, %v10532
        %v10683 = vpack.c.bf16 %v10543, %v10538
        %v10684 = vpack.c.bf16 %v10544, %v10539
        %v10685 = vpack.c.bf16 %v10545, %v10540
        %v10686 = vpack.c.bf16 %v10546, %v10541
        %v10687 = vpack.c.bf16 %v10547, %v10542
        %v10688 = vpack.c.bf16 %v10553, %v10548
        %v10689 = vpack.c.bf16 %v10554, %v10549
        %v10690 = vpack.c.bf16 %v10555, %v10550
        %v10691 = vpack.c.bf16 %v10556, %v10551
        %v10692 = vpack.c.bf16 %v10557, %v10552
        %v10693 = vpack.c.bf16 %v10563, %v10558
        %v10694 = vpack.c.bf16 %v10564, %v10559
        %v10695 = vpack.c.bf16 %v10565, %v10560
        %v10696 = vpack.c.bf16 %v10566, %v10561
        %v10697 = vpack.c.bf16 %v10567, %v10562
        %v10698 = vpack.c.bf16 %v10573, %v10568
        %v10699 = vpack.c.bf16 %v10574, %v10569
        %v10700 = vpack.c.bf16 %v10575, %v10570
        %v10701 = vpack.c.bf16 %v10576, %v10571
        %v10702 = vpack.c.bf16 %v10577, %v10572
        %v10703 = vpack.c.bf16 %v10583, %v10578
        %v10704 = vpack.c.bf16 %v10584, %v10579
        %v10705 = vpack.c.bf16 %v10585, %v10580
        %v10706 = vpack.c.bf16 %v10586, %v10581
        %v10707 = vpack.c.bf16 %v10587, %v10582
        %v10708 = vpack.c.bf16 %v10593, %v10588
        %v10709 = vpack.c.bf16 %v10594, %v10589
        %v10710 = vpack.c.bf16 %v10595, %v10590
        %v10711 = vpack.c.bf16 %v10596, %v10591
        %v10712 = vpack.c.bf16 %v10597, %v10592
        %v10713 = vpack.c.bf16 %v10603, %v10598
        %v10714 = vpack.c.bf16 %v10604, %v10599
        %v10715 = vpack.c.bf16 %v10605, %v10600
        %v10716 = vpack.c.bf16 %v10606, %v10601
        %v10717 = vpack.c.bf16 %v10607, %v10602
        %v10718 = vpack.c.bf16 %v10613, %v10608
        %v10719 = vpack.c.bf16 %v10614, %v10609
        %v10720 = vpack.c.bf16 %v10615, %v10610
        %v10721 = vpack.c.bf16 %v10616, %v10611
        %v10722 = vpack.c.bf16 %v10617, %v10612
        %v10723 = vpack.c.bf16 %v10623, %v10618
        %v10724 = vpack.c.bf16 %v10624, %v10619
        %v10725 = vpack.c.bf16 %v10625, %v10620
        %v10726 = vpack.c.bf16 %v10626, %v10621
        %v10727 = vpack.c.bf16 %v10627, %v10622
        %v10728 = vpack.c.bf16 %v10633, %v10628
        %v10729 = vpack.c.bf16 %v10634, %v10629
        %v10730 = vpack.c.bf16 %v10635, %v10630
        %v10731 = vpack.c.bf16 %v10636, %v10631
        %v10732 = vpack.c.bf16 %v10637, %v10632
        %v10733 = vpack.c.bf16 %v10643, %v10638
        %v10734 = vpack.c.bf16 %v10644, %v10639
        %v10735 = vpack.c.bf16 %v10645, %v10640
        %v10736 = vpack.c.bf16 %v10646, %v10641
        %v10737 = vpack.c.bf16 %v10647, %v10642
        %v10738 = vpack.c.bf16 %v10653, %v10648
        %v10739 = vpack.c.bf16 %v10654, %v10649
        %v10740 = vpack.c.bf16 %v10655, %v10650
        %v10741 = vpack.c.bf16 %v10656, %v10651
        %v10742 = vpack.c.bf16 %v10657, %v10652
        %v10743 = vpack.c.bf16 %v10663, %v10658
        %v10744 = vpack.c.bf16 %v10664, %v10659
        %v10745 = vpack.c.bf16 %v10665, %v10660
        %v10746 = vpack.c.bf16 %v10666, %v10661
        %v10747 = vpack.c.bf16 %v10667, %v10662
        %v10748 = vlaneseq
        %v10749 = vshrl.u32 %v10748, 7
        %v10750 = vadd.s32 %v10749, 8
        %v10751 = vadd.s32 %v10749, 16
        %v10752 = vld [vmem:[%s532] sm:$0x3]
        %v10753 = vperm.slane %v10752, 0
        %v10754 = vperm.slane %v10752, 1
        %vm10755 = vcmp.eq.s32.totalorder %v10749, %v10753
        %vm10756 = vcmp.eq.s32.totalorder %v10749, %v10754
        %vm10757 = vcmp.eq.s32.totalorder %v10750, %v10753
        %vm10758 = vcmp.eq.s32.totalorder %v10750, %v10754
        %vm10759 = vcmp.eq.s32.totalorder %v10751, %v10753
        %vm10760 = vcmp.eq.s32.totalorder %v10751, %v10754
        %v10761 = vsel %vm10755, 1, 0
        %v10762 = vsel %vm10756, 1, 0
        %v10763 = vsel %vm10757, 1, 0
        %v10764 = vsel %vm10758, 1, 0
        %v10765 = vsel %vm10759, 1, 0
        %v10766 = vsel %vm10760, 1, 0
        %v10767 = vcvt.s32.f32 %v10761
        %v10768 = vcvt.s32.f32 %v10762
        %v10769 = vcvt.s32.f32 %v10763
        %v10770 = vcvt.s32.f32 %v10764
        %v10771 = vcvt.s32.f32 %v10765
        %v10772 = vcvt.s32.f32 %v10766
        %v10773 = vpack.c.bf16 %v10769, %v10767
        %v10774 = vpack.c.bf16 %v10770, %v10768
        %v10775 = vpack.c.bf16 %v10771, %v10771
        %v10776 = vpack.c.bf16 %v10772, %v10772
        %v10777 = vld [vmem:[%s506] sm:$0xff]
        %v10778 = vld [vmem:[%s506 + $0x8] sm:$0xff]
        %v10779 = vld [vmem:[%s506 + $0x10] sm:$0xff]
        %v10780 = vld [vmem:[%s506 + $0x18] sm:$0xff]
        %v10781 = vld [vmem:[%s506 + $0x20] sm:$0xff]
        %v10782 = vld [vmem:[%s506 + $0x28] sm:$0xff]
        %v10783 = vld [vmem:[%s506 + $0x30] sm:$0xff]
        %v10784 = vld [vmem:[%s506 + $0x38] sm:$0xff]
        %v10785 = vld [vmem:[%s506 + $0x40] sm:$0xff]
        %v10786 = vld [vmem:[%s506 + $0x48] sm:$0xff]
        %v10787 = vld [vmem:[%s506 + $0x50] sm:$0xff]
        %v10788 = vld [vmem:[%s506 + $0x58] sm:$0xff]
        %v10789 = vld [vmem:[%s506 + $0x60] sm:$0xff]
        %v10790 = vld [vmem:[%s506 + $0x68] sm:$0xff]
        %v10791 = vld [vmem:[%s506 + $0x70] sm:$0xff]
        %10792 = vmatpush.bf16.msra.mxu0 %v10703
        %10793 = vmatpush.bf16.msra.mxu0 %v10698
        %10794 = vmatpush.bf16.msra.mxu0 %v10693
        %10795 = vmatpush.bf16.msra.mxu0 %v10688
        %10796 = vmatpush.bf16.msra.mxu0 %v10683
        %10797 = vmatpush.bf16.msra.mxu0 %v10678
        %10798 = vmatpush.bf16.msra.mxu0 %v10673
        %10799 = vmatpush.bf16.msra.mxu0 %v10668
        %10800 = vmatmul.bf16.gmra.mxu0 %v10773
        %v10801 = vpop.f32.mrf.mxu0
        %v10802 = vadd.f32 0.0, %v10801
        %v10803 = vpop.f32.mrf.mxu0
        %v10804 = vadd.f32 0.0, %v10803
        %10805 = vmatmul.bf16.gmra.mxu0 %v10775
        %v10806 = vpop.f32.mrf.mxu0
        %v10807 = vadd.f32 0.0, %v10806
        %v10808 = vpop.f32.mrf.mxu0
        %10809 = vdwg.mxu0
        %10810 = vmatpush.bf16.msra.mxu0 %v10743
        %10811 = vmatpush.bf16.msra.mxu0 %v10738
        %10812 = vmatpush.bf16.msra.mxu0 %v10733
        %10813 = vmatpush.bf16.msra.mxu0 %v10728
        %10814 = vmatpush.bf16.msra.mxu0 %v10723
        %10815 = vmatpush.bf16.msra.mxu0 %v10718
        %10816 = vmatpush.bf16.msra.mxu0 %v10713
        %10817 = vmatpush.bf16.msra.mxu0 %v10708
        %10818 = vmatmul.bf16.gmra.mxu0 %v10774
        %v10819 = vpop.f32.mrf.mxu0
        %v10820 = vadd.f32 %v10802, %v10819
        %v10821 = vpop.f32.mrf.mxu0
        %v10822 = vadd.f32 %v10804, %v10821
        %10823 = vmatmul.bf16.gmra.mxu0 %v10776
        %v10824 = vpop.f32.mrf.mxu0
        %v10825 = vadd.f32 %v10807, %v10824
        %v10826 = vpop.f32.mrf.mxu0
        %10827 = vdwg.mxu0
        %10828 = vmatpush.bf16.msra.mxu0 %v10704
        %10829 = vmatpush.bf16.msra.mxu0 %v10699
        %10830 = vmatpush.bf16.msra.mxu0 %v10694
        %10831 = vmatpush.bf16.msra.mxu0 %v10689
        %10832 = vmatpush.bf16.msra.mxu0 %v10684
        %10833 = vmatpush.bf16.msra.mxu0 %v10679
        %10834 = vmatpush.bf16.msra.mxu0 %v10674
        %10835 = vmatpush.bf16.msra.mxu0 %v10669
        %10836 = vmatmul.bf16.gmra.mxu0 %v10773
        %v10837 = vpop.f32.mrf.mxu0
        %v10838 = vadd.f32 0.0, %v10837
        %v10839 = vpop.f32.mrf.mxu0
        %v10840 = vadd.f32 0.0, %v10839
        %10841 = vmatmul.bf16.gmra.mxu0 %v10775
        %v10842 = vpop.f32.mrf.mxu0
        %v10843 = vadd.f32 0.0, %v10842
        %v10844 = vpop.f32.mrf.mxu0
        %10845 = vdwg.mxu0
        %10846 = vmatpush.bf16.msra.mxu0 %v10744
        %10847 = vmatpush.bf16.msra.mxu0 %v10739
        %10848 = vmatpush.bf16.msra.mxu0 %v10734
        %10849 = vmatpush.bf16.msra.mxu0 %v10729
        %10850 = vmatpush.bf16.msra.mxu0 %v10724
        %10851 = vmatpush.bf16.msra.mxu0 %v10719
        %10852 = vmatpush.bf16.msra.mxu0 %v10714
        %10853 = vmatpush.bf16.msra.mxu0 %v10709
        %10854 = vmatmul.bf16.gmra.mxu0 %v10774
        %v10855 = vpop.f32.mrf.mxu0
        %v10856 = vadd.f32 %v10838, %v10855
        %v10857 = vpop.f32.mrf.mxu0
        %v10858 = vadd.f32 %v10840, %v10857
        %10859 = vmatmul.bf16.gmra.mxu0 %v10776
        %v10860 = vpop.f32.mrf.mxu0
        %v10861 = vadd.f32 %v10843, %v10860
        %v10862 = vpop.f32.mrf.mxu0
        %10863 = vdwg.mxu0
        %10864 = vmatpush.bf16.msra.mxu0 %v10705
        %10865 = vmatpush.bf16.msra.mxu0 %v10700
        %10866 = vmatpush.bf16.msra.mxu0 %v10695
        %10867 = vmatpush.bf16.msra.mxu0 %v10690
        %10868 = vmatpush.bf16.msra.mxu0 %v10685
        %10869 = vmatpush.bf16.msra.mxu0 %v10680
        %10870 = vmatpush.bf16.msra.mxu0 %v10675
        %10871 = vmatpush.bf16.msra.mxu0 %v10670
        %10872 = vmatmul.bf16.gmra.mxu0 %v10773
        %v10873 = vpop.f32.mrf.mxu0
        %v10874 = vadd.f32 0.0, %v10873
        %v10875 = vpop.f32.mrf.mxu0
        %v10876 = vadd.f32 0.0, %v10875
        %10877 = vmatmul.bf16.gmra.mxu0 %v10775
        %v10878 = vpop.f32.mrf.mxu0
        %v10879 = vadd.f32 0.0, %v10878
        %v10880 = vpop.f32.mrf.mxu0
        %10881 = vdwg.mxu0
        %10882 = vmatpush.bf16.msra.mxu0 %v10745
        %10883 = vmatpush.bf16.msra.mxu0 %v10740
        %10884 = vmatpush.bf16.msra.mxu0 %v10735
        %10885 = vmatpush.bf16.msra.mxu0 %v10730
        %10886 = vmatpush.bf16.msra.mxu0 %v10725
        %10887 = vmatpush.bf16.msra.mxu0 %v10720
        %10888 = vmatpush.bf16.msra.mxu0 %v10715
        %10889 = vmatpush.bf16.msra.mxu0 %v10710
        %10890 = vmatmul.bf16.gmra.mxu0 %v10774
        %v10891 = vpop.f32.mrf.mxu0
        %v10892 = vadd.f32 %v10874, %v10891
        %v10893 = vpop.f32.mrf.mxu0
        %v10894 = vadd.f32 %v10876, %v10893
        %10895 = vmatmul.bf16.gmra.mxu0 %v10776
        %v10896 = vpop.f32.mrf.mxu0
        %v10897 = vadd.f32 %v10879, %v10896
        %v10898 = vpop.f32.mrf.mxu0
        %10899 = vdwg.mxu0
        %10900 = vmatpush.bf16.msra.mxu0 %v10706
        %10901 = vmatpush.bf16.msra.mxu0 %v10701
        %10902 = vmatpush.bf16.msra.mxu0 %v10696
        %10903 = vmatpush.bf16.msra.mxu0 %v10691
        %10904 = vmatpush.bf16.msra.mxu0 %v10686
        %10905 = vmatpush.bf16.msra.mxu0 %v10681
        %10906 = vmatpush.bf16.msra.mxu0 %v10676
        %10907 = vmatpush.bf16.msra.mxu0 %v10671
        %10908 = vmatmul.bf16.gmra.mxu0 %v10773
        %v10909 = vpop.f32.mrf.mxu0
        %v10910 = vadd.f32 0.0, %v10909
        %v10911 = vpop.f32.mrf.mxu0
        %v10912 = vadd.f32 0.0, %v10911
        %10913 = vmatmul.bf16.gmra.mxu0 %v10775
        %v10914 = vpop.f32.mrf.mxu0
        %v10915 = vadd.f32 0.0, %v10914
        %v10916 = vpop.f32.mrf.mxu0
        %10917 = vdwg.mxu0
        %10918 = vmatpush.bf16.msra.mxu0 %v10746
        %10919 = vmatpush.bf16.msra.mxu0 %v10741
        %10920 = vmatpush.bf16.msra.mxu0 %v10736
        %10921 = vmatpush.bf16.msra.mxu0 %v10731
        %10922 = vmatpush.bf16.msra.mxu0 %v10726
        %10923 = vmatpush.bf16.msra.mxu0 %v10721
        %10924 = vmatpush.bf16.msra.mxu0 %v10716
        %10925 = vmatpush.bf16.msra.mxu0 %v10711
        %10926 = vmatmul.bf16.gmra.mxu0 %v10774
        %v10927 = vpop.f32.mrf.mxu0
        %v10928 = vadd.f32 %v10910, %v10927
        %v10929 = vpop.f32.mrf.mxu0
        %v10930 = vadd.f32 %v10912, %v10929
        %10931 = vmatmul.bf16.gmra.mxu0 %v10776
        %v10932 = vpop.f32.mrf.mxu0
        %v10933 = vadd.f32 %v10915, %v10932
        %v10934 = vpop.f32.mrf.mxu0
        %10935 = vdwg.mxu0
        %10936 = vmatpush.bf16.msra.mxu0 %v10707
        %10937 = vmatpush.bf16.msra.mxu0 %v10702
        %10938 = vmatpush.bf16.msra.mxu0 %v10697
        %10939 = vmatpush.bf16.msra.mxu0 %v10692
        %10940 = vmatpush.bf16.msra.mxu0 %v10687
        %10941 = vmatpush.bf16.msra.mxu0 %v10682
        %10942 = vmatpush.bf16.msra.mxu0 %v10677
        %10943 = vmatpush.bf16.msra.mxu0 %v10672
        %10944 = vmatmul.bf16.gmra.mxu0 %v10773
        %v10945 = vpop.f32.mrf.mxu0
        %v10946 = vadd.f32 0.0, %v10945
        %v10947 = vpop.f32.mrf.mxu0
        %v10948 = vadd.f32 0.0, %v10947
        %10949 = vmatmul.bf16.gmra.mxu0 %v10775
        %v10950 = vpop.f32.mrf.mxu0
        %v10951 = vadd.f32 0.0, %v10950
        %v10952 = vpop.f32.mrf.mxu0
        %10953 = vdwg.mxu0
        %10954 = vmatpush.bf16.msra.mxu0 %v10747
        %10955 = vmatpush.bf16.msra.mxu0 %v10742
        %10956 = vmatpush.bf16.msra.mxu0 %v10737
        %10957 = vmatpush.bf16.msra.mxu0 %v10732
        %10958 = vmatpush.bf16.msra.mxu0 %v10727
        %10959 = vmatpush.bf16.msra.mxu0 %v10722
        %10960 = vmatpush.bf16.msra.mxu0 %v10717
        %10961 = vmatpush.bf16.msra.mxu0 %v10712
        %10962 = vmatmul.bf16.gmra.mxu0 %v10774
        %v10963 = vpop.f32.mrf.mxu0
        %v10964 = vadd.f32 %v10946, %v10963
        %v10965 = vpop.f32.mrf.mxu0
        %v10966 = vadd.f32 %v10948, %v10965
        %10967 = vmatmul.bf16.gmra.mxu0 %v10776
        %v10968 = vpop.f32.mrf.mxu0
        %v10969 = vadd.f32 %v10951, %v10968
        %v10970 = vpop.f32.mrf.mxu0
        %10971 = vdwg.mxu0
        %v10972 = vadd.f32 %v10777, %v10820
        %v10973 = vadd.f32 %v10778, %v10856
        %v10974 = vadd.f32 %v10779, %v10892
        %v10975 = vadd.f32 %v10780, %v10928
        %v10976 = vadd.f32 %v10781, %v10964
        %v10977 = vadd.f32 %v10782, %v10822
        %v10978 = vadd.f32 %v10783, %v10858
        %v10979 = vadd.f32 %v10784, %v10894
        %v10980 = vadd.f32 %v10785, %v10930
        %v10981 = vadd.f32 %v10786, %v10966
        %v10982 = vadd.f32 %v10787, %v10825
        %v10983 = vadd.f32 %v10788, %v10861
        %v10984 = vadd.f32 %v10789, %v10897
        %v10985 = vadd.f32 %v10790, %v10933
        %v10986 = vadd.f32 %v10791, %v10969
        %10987 = vst [vmem:[%s506] sm:$0xff] %v10972
        %10988 = vst [vmem:[%s506 + $0x8] sm:$0xff] %v10973
        %10989 = vst [vmem:[%s506 + $0x10] sm:$0xff] %v10974
        %10990 = vst [vmem:[%s506 + $0x18] sm:$0xff] %v10975
        %10991 = vst.msk [vmem:[%s506 + $0x20] sm:$0xff] %vm7474, %v10976
        %10992 = vst [vmem:[%s506 + $0x28] sm:$0xff] %v10977
        %10993 = vst [vmem:[%s506 + $0x30] sm:$0xff] %v10978
        %10994 = vst [vmem:[%s506 + $0x38] sm:$0xff] %v10979
        %10995 = vst [vmem:[%s506 + $0x40] sm:$0xff] %v10980
        %10996 = vst.msk [vmem:[%s506 + $0x48] sm:$0xff] %vm7474, %v10981
        %10997 = vst [vmem:[%s506 + $0x50] sm:$0xff] %v10982
        %10998 = vst [vmem:[%s506 + $0x58] sm:$0xff] %v10983
        %10999 = vst [vmem:[%s506 + $0x60] sm:$0xff] %v10984
        %11000 = vst [vmem:[%s506 + $0x68] sm:$0xff] %v10985
        %11001 = vst.msk [vmem:[%s506 + $0x70] sm:$0xff] %vm7474, %v10986
        %s11002 = sand.u32 %s347, 1
        %s11003 = scalar_lea.sflag [#allocation4], %s11002
        %s11004 = sand.u32 %s347, 1
        %s11005 = smul.addr %s11004, 120
        %s11006 = scalar_lea.vmem [#allocation3], %s11005
        // Predicated region
        $region77: #{tpu_custom_call.1} parent=71 // pred_check
          %p11007 = pneg %p357
        $region78: #{tpu_custom_call.1} parent=71 // pred_check_branch
          %11009 = sbr.rel (%p11007) target = $region80
        $region79: #{tpu_custom_call.1} parent=71 // pred_region
          %11011 = vsyncadd %s11003, 0
          %s11012 = smul.addr %s31, 15
          %s11013 = smul.addr %s11012, 8
          %s11014 = scalar_lea.hbm %s13, %s11013
          %s11015 = sshll.u32 %s11006, 4
          %s11016 = int_to_ptr.vmem [resolvable:$true] %s11015
          %s11017 = sshll.u32 %s11014, 4
          %s11018 = int_to_ptr.hbm [resolvable:$true] %s11017
          %11023 = dma.vmem_to_hbm [thread:$0]  %s11016, 1920, %s11018, %s11003, 640, 640, 40
        $region80: #{tpu_custom_call.1} parent=71 // pred_fallthru
          _
      $region72: #{tpu_custom_call.1} parent=5 // pred_fallthru
        _
      %p11024 = scmp.le.s32.totalorder 2, %s22
      // Predicated region
      $region81: #{tpu_custom_call.1} parent=5 // pred_check
        %p11025 = pneg %p11024
      $region82: #{tpu_custom_call.1} parent=5 // pred_check_branch
        %11027 = sbr.rel (%p11025) target = $region84
      $region83: #{tpu_custom_call.1} parent=5 // pred_region
        %s11028 = ssub.s32 %s22, 2
        // Predicated region
        $region85: #{tpu_custom_call.1} parent=83 // pred_check
          %p11029 = pneg %p363
        $region86: #{tpu_custom_call.1} parent=83 // pred_check_branch
          %11031 = sbr.rel (%p11029) target = $region88
        $region87: #{tpu_custom_call.1} parent=83 // pred_region
          %s11032 = sand.u32 %s348, 1
          %s11033 = scalar_lea.sflag [#allocation4], %s11032
          %s11034 = sand.u32 %s348, 1
          %s11035 = smul.addr %s11034, 120
          %s11036 = scalar_lea.vmem [#allocation3], %s11035
          %11038 = dma.done %s11033, 1920
        $region88: #{tpu_custom_call.1} parent=83 // pred_fallthru
          _
      $region84: #{tpu_custom_call.1} parent=5 // pred_fallthru
        _
    $region6: #{tpu_custom_call.1} parent=1 // loop_footer
      %s26 = sadd.s32 1, %s22
    $region7: #{tpu_custom_call.1} parent=1 // loop_footer_branch
      %21 = sbr.rel target = $region3
    $region8: #{tpu_custom_call.1} parent=1 // loop_exit
      _
    %11039 = vsyncpa [#allocation4], 1
    %s11040 = scalar_lea.sflag [#allocation4], 1
    %11041 = vsyncpa %s11040, 1

</llo_original>
